<compile_context>
chip_gen: v7x
topology: tpu7x:2x2x1
jax: 0.10.0
libtpu: 0.0.40
codegen_flags: <defaults>
</compile_context>

<pallas_src>
import math
import functools
import numpy as np

import jax
import jax.numpy as jnp
from jax import lax
from jax.experimental import pallas as pl
from jax.experimental.pallas import tpu as pltpu

# ----------------------------- config (small shapes) -----------------------------
B = 2            # batch
IMG = 16         # img_size
PATCH = 4        # patch_size  (split='non-overlap')
IN_CH = 3        # in_channels
D = 32           # embed_size
NUM_HEADS = 4
NUM_LAYERS = 2
MLP = 64         # mlp_dim
ATTR = 8         # attr_size
FINAL = 32       # final_embed_size
RATIO = 2        # reduction_rate

NP = (IMG // PATCH) * (IMG // PATCH)      # 16 patches
SEQ = NP + 1                              # +cls token
CPP = IN_CH * PATCH * PATCH               # flattened patch length
FR = FINAL // RATIO


# ------------------------------ shared math helpers ------------------------------
def _erf(x):
    # Abramowitz & Stegun 7.1.26 rational approximation (|err| < 1.5e-7, i.e.
    # float32-exact) built only from exp/div so it always lowers in Mosaic.
    a1, a2, a3, a4, a5 = 0.254829592, -0.284496736, 1.421413741, -1.453152027, 1.061405429
    p = 0.3275911
    s = jnp.where(x < 0.0, -1.0, 1.0)
    ax = jnp.abs(x)
    t = 1.0 / (1.0 + p * ax)
    poly = ((((a5 * t + a4) * t + a3) * t + a2) * t + a1) * t
    return s * (1.0 - poly * jnp.exp(-ax * ax))


def _gelu(x):
    # exact (erf-based) GELU, matching torch.nn.functional.gelu default
    return 0.5 * x * (1.0 + _erf(x * 0.7071067811865476))


def _layernorm_ref(x, w, b, eps=1e-6):
    mu = jnp.mean(x, axis=-1, keepdims=True)
    var = jnp.mean(jnp.square(x - mu), axis=-1, keepdims=True)
    return (x - mu) * jax.lax.rsqrt(var + eps) * w + b


# --------------------------------- fused Pallas kernel ----------------------------
def fused_forward_kernel(tokens_ref, a_ref, smask_ref, xmask_ref, wbuf_ref, o_ref,
                         *, offs, num_heads, num_layers, dm):
    dh = dm // num_heads
    scale = 1.0 / math.sqrt(dh)

    def W(name):
        # static-offset slice out of the single packed weight buffer
        o, r, c = offs[name]
        return wbuf_ref[o:o + r, 0:c]

    def layernorm(x, wn, bn, eps=1e-6):
        # two independent lane reductions (overlap on the XLU ports)
        mu = jnp.mean(x, axis=-1, keepdims=True)
        ms = jnp.mean(x * x, axis=-1, keepdims=True)
        return (x - mu) * lax.rsqrt((ms - mu * mu) + eps) * W(wn) + W(bn)

    def softmax(x):
        m = jnp.max(x, axis=-1, keepdims=True)
        e = jnp.exp(x - m)
        # one reciprocal per row (exact to stay within the 1e-4 tolerance)
        return e * pl.reciprocal(jnp.sum(e, axis=-1, keepdims=True), approx=False)

    def mha(q_mat, kv_mat, wo_name, bo_name, mask):
        # q_mat: (Rq, D); kv_mat: (Rk, 2D) packed [K | V]; `mask` is additive
        # (-1e30 for blocked keys).  Each head's context is accumulated straight
        # through its wo row-slice -- no lane-offset scratch stores.
        wo = W(wo_name)
        acc = None
        for h in range(num_heads):
            qh = q_mat[:, h * dh:(h + 1) * dh]
            kh = kv_mat[:, h * dh:(h + 1) * dh]
            vh = kv_mat[:, dm + h * dh: dm + (h + 1) * dh]
            s = lax.dot_general(qh, kh, (((1,), (1,)), ((), ())),
                                preferred_element_type=jnp.float32) * scale + mask
            p = softmax(s)
            # TODO(synk): the torch Attention module also returns these attention
            # probabilities; no downstream consumer needs them, so they are not
            # written back to HBM.
            ctx = jnp.dot(p, vh, preferred_element_type=jnp.float32)
            part = jnp.dot(ctx, wo[h * dh:(h + 1) * dh, :],
                           preferred_element_type=jnp.float32)
            acc = part if acc is None else acc + part
        return acc + W(bo_name)

    tokens = tokens_ref[0]            # (bb*SEQ, CPP), row 0 of each sequence is zeros
    attrs = a_ref[0]                  # (bb, ATTR)
    smask = smask_ref[...]            # (bb*SEQ, bb*SEQ) additive block-diag mask
    xmask = xmask_ref[...]            # (bb, bb*SEQ) additive mask (cls + other batch)

    # ---- attr2query ----
    a_emb = jnp.dot(attrs, W('attr_w'), preferred_element_type=jnp.float32) + W('attr_b')

    # ---- patch embedding (== Conv2d k==stride); cls token & conv bias folded into 'pos' ----
    h = jnp.dot(tokens, W('conv_w'), preferred_element_type=jnp.float32) + W('pos')
    # TODO(synk): Dropout layers are identity in inference; not implemented.

    # ---- encoder: pre-LN blocks (statically unrolled) ----
    for l in range(num_layers):
        res = h
        xn = layernorm(h, f'ln1w{l}', f'ln1b{l}')
        qkv = jnp.dot(xn, W(f'wqkv{l}'), preferred_element_type=jnp.float32) + W(f'bqkv{l}')
        h = mha(qkv[:, 0:dm], qkv[:, dm:3 * dm], f'wo{l}', f'bo{l}', smask) + res
        res = h
        xn2 = layernorm(h, f'ln2w{l}', f'ln2b{l}')
        y = _gelu(jnp.dot(xn2, W(f'w1{l}'), preferred_element_type=jnp.float32) + W(f'b1{l}'))
        h = jnp.dot(y, W(f'w2{l}'), preferred_element_type=jnp.float32) + W(f'b2{l}') + res

    # ---- type embeddings ----
    a_emb = a_emb + W('type0')
    h = h + W('type1')

    # ---- cross encoder (shared LN, 1-token query per batch element) + final LN ----
    xn = layernorm(h, 'clnw', 'clnb')
    an = layernorm(a_emb, 'clnw', 'clnb')
    q = jnp.dot(an, W('cwq'), preferred_element_type=jnp.float32) + W('cbq')       # (bb, D)
    kv = jnp.dot(xn, W('cwkv'), preferred_element_type=jnp.float32) + W('cbkv')    # (bb*SEQ, 2D)
    attn_out = mha(q, kv, 'cwo', 'cbo', xmask)                                     # (bb, D)

    feat = jnp.dot(attn_out, W('wfc'), preferred_element_type=jnp.float32) + W('bfc')
    res = feat
    fn = layernorm(feat, 'flnw', 'flnb')
    m = _gelu(jnp.dot(fn, W('wf1'), preferred_element_type=jnp.float32) + W('bf1'))
    m = jnp.dot(m, W('wf2'), preferred_element_type=jnp.float32) + W('bf2')
    feat = m + res
    o_ref[0] = layernorm(feat, 'nw', 'nb').astype(o_ref.dtype)


# ------------------------------------ glue ----------------------------------------
def extract_patches(x, p):
    """(B, C, H, W) NCHW -> (B, n_patches, C*p*p); flatten order (C, ph, pw)
    matches Conv2d(kernel=stride=p) with OIHW weights."""
    b, c, h, w = x.shape
    nh, nw = h // p, w // p
    x = x.reshape(b, c, nh, p, nw, p)
    x = x.transpose(0, 2, 4, 1, 3, 5)          # (B, nh, nw, C, p, p)
    return x.reshape(b, nh * nw, c * p * p)


def pack_params(params, bb):
    """Pack every weight/bias into ONE (rows, 128) f32 buffer, each entry
    starting at a sublane offset that is a multiple of 8.  cls_token and conv_b
    are folded into the 'pos' slab (row 0 of each padded sequence is zeros, so
    pos row0 = cls_token + pos_emb[0]; other rows carry pos_emb + conv_b)."""
    pos = params['pos_emb'][0] + params['conv_b']                           # (SEQ, D)
    pos = pos.at[0].set(params['pos_emb'][0, 0] + params['cls_token'][0, 0])
    entries = [
        ('conv_w', params['conv_w']),
        ('attr_w', params['attr_w']),
        ('pos', jnp.tile(pos, (bb, 1))),                                    # (bb*SEQ, D)
        ('attr_b', params['attr_b']),
        ('type0', params['type_embed'][:, 0]),
        ('type1', params['type_embed'][:, 1]),
    ]
    for l, lp in enumerate(params['layers']):
        entries += [
            (f'wqkv{l}', jnp.concatenate([lp['wq'], lp['wk'], lp['wv']], axis=1)),
            (f'bqkv{l}', jnp.concatenate([lp['bq'], lp['bk'], lp['bv']], axis=1)),
            (f'wo{l}', lp['wo']), (f'bo{l}', lp['bo']),
            (f'ln1w{l}', lp['ln1w']), (f'ln1b{l}', lp['ln1b']),
            (f'ln2w{l}', lp['ln2w']), (f'ln2b{l}', lp['ln2b']),
            (f'w1{l}', lp['w1']), (f'b1{l}', lp['b1']),
            (f'w2{l}', lp['w2']), (f'b2{l}', lp['b2']),
        ]
    cp = params['cross']
    entries += [
        ('clnw', cp['clnw']), ('clnb', cp['clnb']),
        ('cwq', cp['cwq']), ('cbq', cp['cbq']),
        ('cwkv', jnp.concatenate([cp['cwk'], cp['cwv']], axis=1)),
        ('cbkv', jnp.concatenate([cp['cbk'], cp['cbv']], axis=1)),
        ('cwo', cp['cwo']), ('cbo', cp['cbo']),
        ('wfc', cp['wfc']), ('bfc', cp['bfc']),
        ('flnw', cp['flnw']), ('flnb', cp['flnb']),
        ('wf1', cp['wf1']), ('bf1', cp['bf1']),
        ('wf2', cp['wf2']), ('bf2', cp['bf2']),
        ('nw', cp['nw']), ('nb', cp['nb']),
    ]
    offs, row = {}, 0
    for name, arr in entries:
        r, c = int(arr.shape[0]), int(arr.shape[1])
        offs[name] = (row, r, c)
        row += ((r + 7) // 8) * 8
    buf = jnp.zeros((row, 128), jnp.float32)
    for name, arr in entries:
        o, r, c = offs[name]
        buf = buf.at[o:o + r, 0:c].set(arr.astype(jnp.float32))
    return buf, offs


def build_forward(batch, bb):
    """bb = batch elements fused per grid step (stacked along sublanes).
    bb == batch  -> grid=(1,)  (single-TC v5e/v6e: halve op/grid overhead).
    bb == 1      -> grid=(batch,) parallel (v7x: one sequence per TensorCore)."""
    assert batch % bb == 0
    steps = batch // bb
    rows = bb * SEQ

    # additive masks (keep the constant at -1e30, not -inf)
    smask_np = np.full((rows, rows), -1e30, np.float32)
    xmask_np = np.full((bb, rows), -1e30, np.float32)
    for b in range(bb):
        smask_np[b * SEQ:(b + 1) * SEQ, b * SEQ:(b + 1) * SEQ] = 0.0     # block-diag self-attn
        xmask_np[b, b * SEQ + 1:(b + 1) * SEQ] = 0.0                      # own batch, cls masked
    smask = jnp.asarray(smask_np)
    xmask = jnp.asarray(xmask_np)

    @jax.jit
    def fwd(params, x, a):
        wbuf, offs = pack_params(params, bb)
        patches = extract_patches(x, PATCH)                    # (B, NP, CPP)
        tokens = jnp.pad(patches, ((0, 0), (1, 0), (0, 0)))    # (B, SEQ, CPP), row 0 = cls slot
        tokens = tokens.reshape(steps, rows, CPP)
        a3 = a.reshape(steps, bb, ATTR)

        kernel = functools.partial(fused_forward_kernel, offs=offs,
                                   num_heads=NUM_HEADS, num_layers=NUM_LAYERS, dm=D)

        out = pl.pallas_call(
            kernel,
            out_shape=jax.ShapeDtypeStruct((steps, bb, FINAL), jnp.float32),
            grid=(steps,),
            in_specs=[
                pl.BlockSpec((1, rows, CPP), lambda i: (i, 0, 0)),
                pl.BlockSpec((1, bb, ATTR), lambda i: (i, 0, 0)),
                pl.BlockSpec((rows, rows), lambda i: (0, 0)),
                pl.BlockSpec((bb, rows), lambda i: (0, 0)),
                pl.BlockSpec(wbuf.shape, lambda i: (0, 0)),
            ],
            out_specs=pl.BlockSpec((1, bb, FINAL), lambda i: (i, 0, 0)),
            compiler_params=pltpu.CompilerParams(dimension_semantics=("parallel",)),
        )(tokens, a3, smask, xmask, wbuf)
        return out.reshape(batch, FINAL)     # torch: fc(...).squeeze() with B>1 -> (B, F)

    return fwd


# ----------------------------- deterministic parameters ---------------------------
def init_params(key):
    keys = iter(jax.random.split(key, 64))

    def w(shape, std=0.02):
        return jax.random.normal(next(keys), shape, dtype=jnp.float32) * std

    def zeros(shape):
        return jnp.zeros(shape, jnp.float32)

    def ones(shape):
        return jnp.ones(shape, jnp.float32)

    params = {
        'attr_w': w((ATTR, D)), 'attr_b': zeros((1, D)),
        'conv_w': w((CPP, D)), 'conv_b': w((1, D), 0.01),
        'cls_token': w((1, 1, D)),
        'pos_emb': w((1, SEQ, D)),
        'type_embed': w((1, 2, D)),
    }
    layers = []
    for _ in range(NUM_LAYERS):
        layers.append(dict(
            ln1w=ones((1, D)), ln1b=zeros((1, D)),
            wq=w((D, D)), bq=zeros((1, D)),
            wk=w((D, D)), bk=zeros((1, D)),
            wv=w((D, D)), bv=zeros((1, D)),
            wo=w((D, D)), bo=zeros((1, D)),
            ln2w=ones((1, D)), ln2b=zeros((1, D)),
            w1=w((D, MLP)), b1=zeros((1, MLP)),
            w2=w((MLP, D)), b2=zeros((1, D)),
        ))
    params['layers'] = layers
    params['cross'] = dict(
        clnw=ones((1, D)), clnb=zeros((1, D)),
        cwq=w((D, D)), cbq=zeros((1, D)),
        cwk=w((D, D)), cbk=zeros((1, D)),
        cwv=w((D, D)), cbv=zeros((1, D)),
        cwo=w((D, D)), cbo=zeros((1, D)),
        wfc=w((D, FINAL)), bfc=zeros((1, FINAL)),
        flnw=ones((1, FINAL)), flnb=zeros((1, FINAL)),
        wf1=w((FINAL, FR)), bf1=zeros((1, FR)),
        wf2=w((FR, FINAL)), bf2=zeros((1, FINAL)),
        nw=ones((1, FINAL)), nb=zeros((1, FINAL)),
    )
    return params


# ------------------------------- pure-JAX reference -------------------------------
def _ref_mha(q, k, v, num_heads):
    bsz, sq, dm = q.shape
    dh = dm // num_heads
    qh = q.reshape(bsz, sq, num_heads, dh).transpose(0, 2, 1, 3)
    kh = k.reshape(bsz, -1, num_heads, dh).transpose(0, 2, 1, 3)
    vh = v.reshape(bsz, -1, num_heads, dh).transpose(0, 2, 1, 3)
    s = jnp.einsum('bhqd,bhkd->bhqk', qh, kh) / math.sqrt(dh)
    p = jax.nn.softmax(s, axis=-1)
    c = jnp.einsum('bhqk,bhkd->bhqd', p, vh)
    return c.transpose(0, 2, 1, 3).reshape(bsz, sq, dm)


def ref_forward(params, x, a):
    bsz = x.shape[0]
    a_emb = (a @ params['attr_w'] + params['attr_b'])[:, None, :]
    patches = extract_patches(x, PATCH)
    pe = patches @ params['conv_w'] + params['conv_b']
    cls = jnp.broadcast_to(params['cls_token'], (bsz, 1, D))
    h = jnp.concatenate([cls, pe], axis=1) + params['pos_emb']
    for lp in params['layers']:
        r = h
        xn = _layernorm_ref(h, lp['ln1w'], lp['ln1b'])
        q = xn @ lp['wq'] + lp['bq']
        k = xn @ lp['wk'] + lp['bk']
        v = xn @ lp['wv'] + lp['bv']
        h = _ref_mha(q, k, v, NUM_HEADS) @ lp['wo'] + lp['bo'] + r
        r = h
        xn2 = _layernorm_ref(h, lp['ln2w'], lp['ln2b'])
        h = _gelu(xn2 @ lp['w1'] + lp['b1']) @ lp['w2'] + lp['b2'] + r
    a_emb = a_emb + params['type_embed'][:, 0]
    h = h + params['type_embed'][:, 1]
    cp = params['cross']
    xc = h[:, 1:]
    xn = _layernorm_ref(xc, cp['clnw'], cp['clnb'])
    an = _layernorm_ref(a_emb, cp['clnw'], cp['clnb'])
    q = an @ cp['cwq'] + cp['cbq']
    k = xn @ cp['cwk'] + cp['cbk']
    v = xn @ cp['cwv'] + cp['cbv']
    attn_out = _ref_mha(q, k, v, NUM_HEADS) @ cp['cwo'] + cp['cbo']
    feat = (attn_out @ cp['wfc'] + cp['bfc'])[:, 0]      # squeeze -> (B, F)
    res = feat
    fn = _layernorm_ref(feat, cp['flnw'], cp['flnb'])
    feat = _gelu(fn @ cp['wf1'] + cp['bf1']) @ cp['wf2'] + cp['bf2'] + res
    return _layernorm_ref(feat, cp['nw'], cp['nb'])


# ------------------------------------- main ----------------------------------------
if __name__ == "__main__":
    key = jax.random.PRNGKey(0)
    kx, ka, kp = jax.random.split(key, 3)
    x = jax.random.normal(kx, (B, IN_CH, IMG, IMG), dtype=jnp.float32)
    a = jax.random.normal(ka, (B, ATTR), dtype=jnp.float32)
    params = init_params(kp)

    # Chip-aware batch placement: v7x has 2 TensorCores -> one batch element per
    # parallel grid step; single-TC v5e/v6e -> fuse the whole batch into one step.
    kind = jax.devices()[0].device_kind.lower()
    bb = 1 if "v7" in kind else B
    forward = build_forward(B, bb)

    out = jax.block_until_ready(forward(params, x, a))
    assert out.shape == (B, FINAL), out.shape

    ref = jax.block_until_ready(ref_forward(params, x, a))
    np.testing.assert_allclose(np.asarray(out), np.asarray(ref), rtol=1e-4, atol=1e-4)

    print("KERNEL_OK")
</pallas_src>

<mosaic_0001>
module attributes {stable_mosaic.version = 11 : i64} {
  func.func @fused_forward_kernel(%arg0: i32, %arg1: memref<1x34x48xf32, #tpu.memory_space<vmem>>, %arg2: memref<1x2x8xf32, #tpu.memory_space<vmem>>, %arg3: memref<34x34xf32, #tpu.memory_space<vmem>>, %arg4: memref<2x34xf32, #tpu.memory_space<vmem>>, %arg5: memref<840x128xf32, #tpu.memory_space<vmem>>, %arg6: memref<1x2x32xf32, #tpu.memory_space<vmem>>) attributes {dimension_semantics = [#tpu.dimension_semantics<parallel>], iteration_bounds = array<i64: 1>, scalar_prefetch = 0 : i64, scratch_operands = 0 : i64, tpu.core_type = #tpu.core_type<tc>, window_params = [{transform_indices = @transform_0, window_bounds = array<i64: 1, 34, 48>}, {transform_indices = @transform_1, window_bounds = array<i64: 1, 2, 8>}, {pipeline_mode = #tpu.pipeline_mode<synchronous>, transform_indices = @transform_2, window_bounds = array<i64: 34, 34>}, {pipeline_mode = #tpu.pipeline_mode<synchronous>, transform_indices = @transform_3, window_bounds = array<i64: 2, 34>}, {pipeline_mode = #tpu.pipeline_mode<synchronous>, transform_indices = @transform_4, window_bounds = array<i64: 840, 128>}, {transform_indices = @transform_5, window_bounds = array<i64: 1, 2, 32>}]} {
    %c0 = arith.constant 0 : index
    %c0_0 = arith.constant 0 : index
    %c0_1 = arith.constant 0 : index
    %0 = vector.load %arg1[%c0, %c0_0, %c0_1] : memref<1x34x48xf32, #tpu.memory_space<vmem>>, vector<1x34x48xf32>
    %1 = vector.shape_cast %0 : vector<1x34x48xf32> to vector<34x48xf32>
    %c0_2 = arith.constant 0 : index
    %c0_3 = arith.constant 0 : index
    %c0_4 = arith.constant 0 : index
    %2 = vector.load %arg2[%c0_2, %c0_3, %c0_4] : memref<1x2x8xf32, #tpu.memory_space<vmem>>, vector<1x2x8xf32>
    %3 = vector.shape_cast %2 : vector<1x2x8xf32> to vector<2x8xf32>
    %c0_5 = arith.constant 0 : index
    %c0_6 = arith.constant 0 : index
    %4 = vector.load %arg3[%c0_5, %c0_6] : memref<34x34xf32, #tpu.memory_space<vmem>>, vector<34x34xf32>
    %c0_7 = arith.constant 0 : index
    %c0_8 = arith.constant 0 : index
    %5 = vector.load %arg4[%c0_7, %c0_8] : memref<2x34xf32, #tpu.memory_space<vmem>>, vector<2x34xf32>
    %c48 = arith.constant 48 : index
    %c0_9 = arith.constant 0 : index
    %6 = vector.load %arg5[%c48, %c0_9] : memref<840x128xf32, #tpu.memory_space<vmem>>, vector<8x32xf32>
    %cst = arith.constant dense<0.000000e+00> : vector<2x32xf32>
    %7 = tpu.matmul %3, %6, %cst {dimension_numbers = #tpu.dot_dimension_numbers<[1], [0], [0], [1], [0, 0, 1, 1], [], []>} : vector<2x8xf32>, vector<8x32xf32>, vector<2x32xf32> -> vector<2x32xf32>
    %c96 = arith.constant 96 : index
    %c0_10 = arith.constant 0 : index
    %8 = vector.load %arg5[%c96, %c0_10] : memref<840x128xf32, #tpu.memory_space<vmem>>, vector<1x32xf32>
    %9 = vector.broadcast %8 : vector<1x32xf32> to vector<2x32xf32>
    %10 = arith.addf %7, %9 : vector<2x32xf32>
    %c0_11 = arith.constant 0 : index
    %c0_12 = arith.constant 0 : index
    %11 = vector.load %arg5[%c0_11, %c0_12] : memref<840x128xf32, #tpu.memory_space<vmem>>, vector<48x32xf32>
    %cst_13 = arith.constant dense<0.000000e+00> : vector<34x32xf32>
    %12 = tpu.matmul %1, %11, %cst_13 {dimension_numbers = #tpu.dot_dimension_numbers<[1], [0], [0], [1], [0, 0, 1, 1], [], []>} : vector<34x48xf32>, vector<48x32xf32>, vector<34x32xf32> -> vector<34x32xf32>
    %c56 = arith.constant 56 : index
    %c0_14 = arith.constant 0 : index
    %13 = vector.load %arg5[%c56, %c0_14] : memref<840x128xf32, #tpu.memory_space<vmem>>, vector<34x32xf32>
    %14 = arith.addf %12, %13 : vector<34x32xf32>
    %cst_15 = arith.constant dense<0.000000e+00> : vector<34xf32>
    %15 = vector.multi_reduction <add>, %14, %cst_15 [1] : vector<34x32xf32> to vector<34xf32>
    %16 = vector.shape_cast %15 : vector<34xf32> to vector<34x1xf32>
    %cst_16 = arith.constant 3.200000e+01 : f32
    %17 = vector.broadcast %cst_16 : f32 to vector<34x1xf32>
    %18 = arith.divf %16, %17 : vector<34x1xf32>
    %19 = arith.mulf %14, %14 : vector<34x32xf32>
    %cst_17 = arith.constant dense<0.000000e+00> : vector<34xf32>
    %20 = vector.multi_reduction <add>, %19, %cst_17 [1] : vector<34x32xf32> to vector<34xf32>
    %21 = vector.shape_cast %20 : vector<34xf32> to vector<34x1xf32>
    %cst_18 = arith.constant 3.200000e+01 : f32
    %22 = vector.broadcast %cst_18 : f32 to vector<34x1xf32>
    %23 = arith.divf %21, %22 : vector<34x1xf32>
    %24 = vector.broadcast %18 : vector<34x1xf32> to vector<34x32xf32>
    %25 = arith.subf %14, %24 : vector<34x32xf32>
    %26 = arith.mulf %18, %18 : vector<34x1xf32>
    %27 = arith.subf %23, %26 : vector<34x1xf32>
    %cst_19 = arith.constant 9.99999997E-7 : f32
    %28 = vector.broadcast %cst_19 : f32 to vector<34x1xf32>
    %29 = arith.addf %27, %28 : vector<34x1xf32>
    %30 = math.rsqrt %29 : vector<34x1xf32>
    %31 = vector.broadcast %30 : vector<34x1xf32> to vector<34x32xf32>
    %32 = arith.mulf %25, %31 : vector<34x32xf32>
    %c200 = arith.constant 200 : index
    %c0_20 = arith.constant 0 : index
    %33 = vector.load %arg5[%c200, %c0_20] : memref<840x128xf32, #tpu.memory_space<vmem>>, vector<1x32xf32>
    %34 = vector.broadcast %33 : vector<1x32xf32> to vector<34x32xf32>
    %35 = arith.mulf %32, %34 : vector<34x32xf32>
    %c208 = arith.constant 208 : index
    %c0_21 = arith.constant 0 : index
    %36 = vector.load %arg5[%c208, %c0_21] : memref<840x128xf32, #tpu.memory_space<vmem>>, vector<1x32xf32>
    %37 = vector.broadcast %36 : vector<1x32xf32> to vector<34x32xf32>
    %38 = arith.addf %35, %37 : vector<34x32xf32>
    %c120 = arith.constant 120 : index
    %c0_22 = arith.constant 0 : index
    %39 = vector.load %arg5[%c120, %c0_22] : memref<840x128xf32, #tpu.memory_space<vmem>>, vector<32x96xf32>
    %cst_23 = arith.constant dense<0.000000e+00> : vector<34x96xf32>
    %40 = tpu.matmul %38, %39, %cst_23 {dimension_numbers = #tpu.dot_dimension_numbers<[1], [0], [0], [1], [0, 0, 1, 1], [], []>} : vector<34x32xf32>, vector<32x96xf32>, vector<34x96xf32> -> vector<34x96xf32>
    %c152 = arith.constant 152 : index
    %c0_24 = arith.constant 0 : index
    %41 = vector.load %arg5[%c152, %c0_24] : memref<840x128xf32, #tpu.memory_space<vmem>>, vector<1x96xf32>
    %42 = vector.broadcast %41 : vector<1x96xf32> to vector<34x96xf32>
    %43 = arith.addf %40, %42 : vector<34x96xf32>
    %44 = vector.extract_strided_slice %43 {offsets = [0, 0], sizes = [34, 32], strides = [1, 1]} : vector<34x96xf32> to vector<34x32xf32>
    %45 = vector.extract_strided_slice %43 {offsets = [0, 32], sizes = [34, 64], strides = [1, 1]} : vector<34x96xf32> to vector<34x64xf32>
    %c160 = arith.constant 160 : index
    %c0_25 = arith.constant 0 : index
    %46 = vector.load %arg5[%c160, %c0_25] : memref<840x128xf32, #tpu.memory_space<vmem>>, vector<32x32xf32>
    %47 = vector.extract_strided_slice %44 {offsets = [0, 0], sizes = [34, 8], strides = [1, 1]} : vector<34x32xf32> to vector<34x8xf32>
    %48 = vector.extract_strided_slice %45 {offsets = [0, 0], sizes = [34, 8], strides = [1, 1]} : vector<34x64xf32> to vector<34x8xf32>
    %49 = vector.extract_strided_slice %45 {offsets = [0, 32], sizes = [34, 8], strides = [1, 1]} : vector<34x64xf32> to vector<34x8xf32>
    %cst_26 = arith.constant dense<0.000000e+00> : vector<34x34xf32>
    %50 = tpu.matmul %47, %48, %cst_26 {dimension_numbers = #tpu.dot_dimension_numbers<[1], [1], [0], [0], [0, 0, 1, 0], [], []>} : vector<34x8xf32>, vector<34x8xf32>, vector<34x34xf32> -> vector<34x34xf32>
    %cst_27 = arith.constant 0.353553385 : f32
    %51 = vector.broadcast %cst_27 : f32 to vector<34x34xf32>
    %52 = arith.mulf %50, %51 : vector<34x34xf32>
    %53 = arith.addf %52, %4 : vector<34x34xf32>
    %cst_28 = arith.constant dense<0xFF800000> : vector<34xf32>
    %54 = vector.multi_reduction <maximumf>, %53, %cst_28 [1] : vector<34x34xf32> to vector<34xf32>
    %55 = vector.shape_cast %54 : vector<34xf32> to vector<34x1xf32>
    %56 = vector.broadcast %55 : vector<34x1xf32> to vector<34x34xf32>
    %57 = arith.subf %53, %56 : vector<34x34xf32>
    %58 = math.exp %57 : vector<34x34xf32>
    %cst_29 = arith.constant dense<0.000000e+00> : vector<34xf32>
    %59 = vector.multi_reduction <add>, %58, %cst_29 [1] : vector<34x34xf32> to vector<34xf32>
    %60 = vector.shape_cast %59 : vector<34xf32> to vector<34x1xf32>
    %61 = tpu.reciprocal %60 : vector<34x1xf32> -> vector<34x1xf32>
    %62 = vector.broadcast %61 : vector<34x1xf32> to vector<34x34xf32>
    %63 = arith.mulf %58, %62 : vector<34x34xf32>
    %cst_30 = arith.constant dense<0.000000e+00> : vector<34x8xf32>
    %64 = tpu.matmul %63, %49, %cst_30 {dimension_numbers = #tpu.dot_dimension_numbers<[1], [0], [0], [1], [0, 0, 1, 1], [], []>} : vector<34x34xf32>, vector<34x8xf32>, vector<34x8xf32> -> vector<34x8xf32>
    %65 = vector.extract_strided_slice %46 {offsets = [0, 0], sizes = [8, 32], strides = [1, 1]} : vector<32x32xf32> to vector<8x32xf32>
    %cst_31 = arith.constant dense<0.000000e+00> : vector<34x32xf32>
    %66 = tpu.matmul %64, %65, %cst_31 {dimension_numbers = #tpu.dot_dimension_numbers<[1], [0], [0], [1], [0, 0, 1, 1], [], []>} : vector<34x8xf32>, vector<8x32xf32>, vector<34x32xf32> -> vector<34x32xf32>
    %67 = vector.extract_strided_slice %44 {offsets = [0, 8], sizes = [34, 8], strides = [1, 1]} : vector<34x32xf32> to vector<34x8xf32>
    %68 = vector.extract_strided_slice %45 {offsets = [0, 8], sizes = [34, 8], strides = [1, 1]} : vector<34x64xf32> to vector<34x8xf32>
    %69 = vector.extract_strided_slice %45 {offsets = [0, 40], sizes = [34, 8], strides = [1, 1]} : vector<34x64xf32> to vector<34x8xf32>
    %cst_32 = arith.constant dense<0.000000e+00> : vector<34x34xf32>
    %70 = tpu.matmul %67, %68, %cst_32 {dimension_numbers = #tpu.dot_dimension_numbers<[1], [1], [0], [0], [0, 0, 1, 0], [], []>} : vector<34x8xf32>, vector<34x8xf32>, vector<34x34xf32> -> vector<34x34xf32>
    %cst_33 = arith.constant 0.353553385 : f32
    %71 = vector.broadcast %cst_33 : f32 to vector<34x34xf32>
    %72 = arith.mulf %70, %71 : vector<34x34xf32>
    %73 = arith.addf %72, %4 : vector<34x34xf32>
    %cst_34 = arith.constant dense<0xFF800000> : vector<34xf32>
    %74 = vector.multi_reduction <maximumf>, %73, %cst_34 [1] : vector<34x34xf32> to vector<34xf32>
    %75 = vector.shape_cast %74 : vector<34xf32> to vector<34x1xf32>
    %76 = vector.broadcast %75 : vector<34x1xf32> to vector<34x34xf32>
    %77 = arith.subf %73, %76 : vector<34x34xf32>
    %78 = math.exp %77 : vector<34x34xf32>
    %cst_35 = arith.constant dense<0.000000e+00> : vector<34xf32>
    %79 = vector.multi_reduction <add>, %78, %cst_35 [1] : vector<34x34xf32> to vector<34xf32>
    %80 = vector.shape_cast %79 : vector<34xf32> to vector<34x1xf32>
    %81 = tpu.reciprocal %80 : vector<34x1xf32> -> vector<34x1xf32>
    %82 = vector.broadcast %81 : vector<34x1xf32> to vector<34x34xf32>
    %83 = arith.mulf %78, %82 : vector<34x34xf32>
    %cst_36 = arith.constant dense<0.000000e+00> : vector<34x8xf32>
    %84 = tpu.matmul %83, %69, %cst_36 {dimension_numbers = #tpu.dot_dimension_numbers<[1], [0], [0], [1], [0, 0, 1, 1], [], []>} : vector<34x34xf32>, vector<34x8xf32>, vector<34x8xf32> -> vector<34x8xf32>
    %85 = vector.extract_strided_slice %46 {offsets = [8, 0], sizes = [8, 32], strides = [1, 1]} : vector<32x32xf32> to vector<8x32xf32>
    %cst_37 = arith.constant dense<0.000000e+00> : vector<34x32xf32>
    %86 = tpu.matmul %84, %85, %cst_37 {dimension_numbers = #tpu.dot_dimension_numbers<[1], [0], [0], [1], [0, 0, 1, 1], [], []>} : vector<34x8xf32>, vector<8x32xf32>, vector<34x32xf32> -> vector<34x32xf32>
    %87 = arith.addf %66, %86 : vector<34x32xf32>
    %88 = vector.extract_strided_slice %44 {offsets = [0, 16], sizes = [34, 8], strides = [1, 1]} : vector<34x32xf32> to vector<34x8xf32>
    %89 = vector.extract_strided_slice %45 {offsets = [0, 16], sizes = [34, 8], strides = [1, 1]} : vector<34x64xf32> to vector<34x8xf32>
    %90 = vector.extract_strided_slice %45 {offsets = [0, 48], sizes = [34, 8], strides = [1, 1]} : vector<34x64xf32> to vector<34x8xf32>
    %cst_38 = arith.constant dense<0.000000e+00> : vector<34x34xf32>
    %91 = tpu.matmul %88, %89, %cst_38 {dimension_numbers = #tpu.dot_dimension_numbers<[1], [1], [0], [0], [0, 0, 1, 0], [], []>} : vector<34x8xf32>, vector<34x8xf32>, vector<34x34xf32> -> vector<34x34xf32>
    %cst_39 = arith.constant 0.353553385 : f32
    %92 = vector.broadcast %cst_39 : f32 to vector<34x34xf32>
    %93 = arith.mulf %91, %92 : vector<34x34xf32>
    %94 = arith.addf %93, %4 : vector<34x34xf32>
    %cst_40 = arith.constant dense<0xFF800000> : vector<34xf32>
    %95 = vector.multi_reduction <maximumf>, %94, %cst_40 [1] : vector<34x34xf32> to vector<34xf32>
    %96 = vector.shape_cast %95 : vector<34xf32> to vector<34x1xf32>
    %97 = vector.broadcast %96 : vector<34x1xf32> to vector<34x34xf32>
    %98 = arith.subf %94, %97 : vector<34x34xf32>
    %99 = math.exp %98 : vector<34x34xf32>
    %cst_41 = arith.constant dense<0.000000e+00> : vector<34xf32>
    %100 = vector.multi_reduction <add>, %99, %cst_41 [1] : vector<34x34xf32> to vector<34xf32>
    %101 = vector.shape_cast %100 : vector<34xf32> to vector<34x1xf32>
    %102 = tpu.reciprocal %101 : vector<34x1xf32> -> vector<34x1xf32>
    %103 = vector.broadcast %102 : vector<34x1xf32> to vector<34x34xf32>
    %104 = arith.mulf %99, %103 : vector<34x34xf32>
    %cst_42 = arith.constant dense<0.000000e+00> : vector<34x8xf32>
    %105 = tpu.matmul %104, %90, %cst_42 {dimension_numbers = #tpu.dot_dimension_numbers<[1], [0], [0], [1], [0, 0, 1, 1], [], []>} : vector<34x34xf32>, vector<34x8xf32>, vector<34x8xf32> -> vector<34x8xf32>
    %106 = vector.extract_strided_slice %46 {offsets = [16, 0], sizes = [8, 32], strides = [1, 1]} : vector<32x32xf32> to vector<8x32xf32>
    %cst_43 = arith.constant dense<0.000000e+00> : vector<34x32xf32>
    %107 = tpu.matmul %105, %106, %cst_43 {dimension_numbers = #tpu.dot_dimension_numbers<[1], [0], [0], [1], [0, 0, 1, 1], [], []>} : vector<34x8xf32>, vector<8x32xf32>, vector<34x32xf32> -> vector<34x32xf32>
    %108 = arith.addf %87, %107 : vector<34x32xf32>
    %109 = vector.extract_strided_slice %44 {offsets = [0, 24], sizes = [34, 8], strides = [1, 1]} : vector<34x32xf32> to vector<34x8xf32>
    %110 = vector.extract_strided_slice %45 {offsets = [0, 24], sizes = [34, 8], strides = [1, 1]} : vector<34x64xf32> to vector<34x8xf32>
    %111 = vector.extract_strided_slice %45 {offsets = [0, 56], sizes = [34, 8], strides = [1, 1]} : vector<34x64xf32> to vector<34x8xf32>
    %cst_44 = arith.constant dense<0.000000e+00> : vector<34x34xf32>
    %112 = tpu.matmul %109, %110, %cst_44 {dimension_numbers = #tpu.dot_dimension_numbers<[1], [1], [0], [0], [0, 0, 1, 0], [], []>} : vector<34x8xf32>, vector<34x8xf32>, vector<34x34xf32> -> vector<34x34xf32>
    %cst_45 = arith.constant 0.353553385 : f32
    %113 = vector.broadcast %cst_45 : f32 to vector<34x34xf32>
    %114 = arith.mulf %112, %113 : vector<34x34xf32>
    %115 = arith.addf %114, %4 : vector<34x34xf32>
    %cst_46 = arith.constant dense<0xFF800000> : vector<34xf32>
    %116 = vector.multi_reduction <maximumf>, %115, %cst_46 [1] : vector<34x34xf32> to vector<34xf32>
    %117 = vector.shape_cast %116 : vector<34xf32> to vector<34x1xf32>
    %118 = vector.broadcast %117 : vector<34x1xf32> to vector<34x34xf32>
    %119 = arith.subf %115, %118 : vector<34x34xf32>
    %120 = math.exp %119 : vector<34x34xf32>
    %cst_47 = arith.constant dense<0.000000e+00> : vector<34xf32>
    %121 = vector.multi_reduction <add>, %120, %cst_47 [1] : vector<34x34xf32> to vector<34xf32>
    %122 = vector.shape_cast %121 : vector<34xf32> to vector<34x1xf32>
    %123 = tpu.reciprocal %122 : vector<34x1xf32> -> vector<34x1xf32>
    %124 = vector.broadcast %123 : vector<34x1xf32> to vector<34x34xf32>
    %125 = arith.mulf %120, %124 : vector<34x34xf32>
    %cst_48 = arith.constant dense<0.000000e+00> : vector<34x8xf32>
    %126 = tpu.matmul %125, %111, %cst_48 {dimension_numbers = #tpu.dot_dimension_numbers<[1], [0], [0], [1], [0, 0, 1, 1], [], []>} : vector<34x34xf32>, vector<34x8xf32>, vector<34x8xf32> -> vector<34x8xf32>
    %127 = vector.extract_strided_slice %46 {offsets = [24, 0], sizes = [8, 32], strides = [1, 1]} : vector<32x32xf32> to vector<8x32xf32>
    %cst_49 = arith.constant dense<0.000000e+00> : vector<34x32xf32>
    %128 = tpu.matmul %126, %127, %cst_49 {dimension_numbers = #tpu.dot_dimension_numbers<[1], [0], [0], [1], [0, 0, 1, 1], [], []>} : vector<34x8xf32>, vector<8x32xf32>, vector<34x32xf32> -> vector<34x32xf32>
    %129 = arith.addf %108, %128 : vector<34x32xf32>
    %c192 = arith.constant 192 : index
    %c0_50 = arith.constant 0 : index
    %130 = vector.load %arg5[%c192, %c0_50] : memref<840x128xf32, #tpu.memory_space<vmem>>, vector<1x32xf32>
    %131 = vector.broadcast %130 : vector<1x32xf32> to vector<34x32xf32>
    %132 = arith.addf %129, %131 : vector<34x32xf32>
    %133 = arith.addf %132, %14 : vector<34x32xf32>
    %cst_51 = arith.constant dense<0.000000e+00> : vector<34xf32>
    %134 = vector.multi_reduction <add>, %133, %cst_51 [1] : vector<34x32xf32> to vector<34xf32>
    %135 = vector.shape_cast %134 : vector<34xf32> to vector<34x1xf32>
    %cst_52 = arith.constant 3.200000e+01 : f32
    %136 = vector.broadcast %cst_52 : f32 to vector<34x1xf32>
    %137 = arith.divf %135, %136 : vector<34x1xf32>
    %138 = arith.mulf %133, %133 : vector<34x32xf32>
    %cst_53 = arith.constant dense<0.000000e+00> : vector<34xf32>
    %139 = vector.multi_reduction <add>, %138, %cst_53 [1] : vector<34x32xf32> to vector<34xf32>
    %140 = vector.shape_cast %139 : vector<34xf32> to vector<34x1xf32>
    %cst_54 = arith.constant 3.200000e+01 : f32
    %141 = vector.broadcast %cst_54 : f32 to vector<34x1xf32>
    %142 = arith.divf %140, %141 : vector<34x1xf32>
    %143 = vector.broadcast %137 : vector<34x1xf32> to vector<34x32xf32>
    %144 = arith.subf %133, %143 : vector<34x32xf32>
    %145 = arith.mulf %137, %137 : vector<34x1xf32>
    %146 = arith.subf %142, %145 : vector<34x1xf32>
    %cst_55 = arith.constant 9.99999997E-7 : f32
    %147 = vector.broadcast %cst_55 : f32 to vector<34x1xf32>
    %148 = arith.addf %146, %147 : vector<34x1xf32>
    %149 = math.rsqrt %148 : vector<34x1xf32>
    %150 = vector.broadcast %149 : vector<34x1xf32> to vector<34x32xf32>
    %151 = arith.mulf %144, %150 : vector<34x32xf32>
    %c216 = arith.constant 216 : index
    %c0_56 = arith.constant 0 : index
    %152 = vector.load %arg5[%c216, %c0_56] : memref<840x128xf32, #tpu.memory_space<vmem>>, vector<1x32xf32>
    %153 = vector.broadcast %152 : vector<1x32xf32> to vector<34x32xf32>
    %154 = arith.mulf %151, %153 : vector<34x32xf32>
    %c224 = arith.constant 224 : index
    %c0_57 = arith.constant 0 : index
    %155 = vector.load %arg5[%c224, %c0_57] : memref<840x128xf32, #tpu.memory_space<vmem>>, vector<1x32xf32>
    %156 = vector.broadcast %155 : vector<1x32xf32> to vector<34x32xf32>
    %157 = arith.addf %154, %156 : vector<34x32xf32>
    %c232 = arith.constant 232 : index
    %c0_58 = arith.constant 0 : index
    %158 = vector.load %arg5[%c232, %c0_58] : memref<840x128xf32, #tpu.memory_space<vmem>>, vector<32x64xf32>
    %cst_59 = arith.constant dense<0.000000e+00> : vector<34x64xf32>
    %159 = tpu.matmul %157, %158, %cst_59 {dimension_numbers = #tpu.dot_dimension_numbers<[1], [0], [0], [1], [0, 0, 1, 1], [], []>} : vector<34x32xf32>, vector<32x64xf32>, vector<34x64xf32> -> vector<34x64xf32>
    %c264 = arith.constant 264 : index
    %c0_60 = arith.constant 0 : index
    %160 = vector.load %arg5[%c264, %c0_60] : memref<840x128xf32, #tpu.memory_space<vmem>>, vector<1x64xf32>
    %161 = vector.broadcast %160 : vector<1x64xf32> to vector<34x64xf32>
    %162 = arith.addf %159, %161 : vector<34x64xf32>
    %cst_61 = arith.constant 5.000000e-01 : f32
    %163 = vector.broadcast %cst_61 : f32 to vector<34x64xf32>
    %164 = arith.mulf %163, %162 : vector<34x64xf32>
    %cst_62 = arith.constant 0.707106769 : f32
    %165 = vector.broadcast %cst_62 : f32 to vector<34x64xf32>
    %166 = arith.mulf %162, %165 : vector<34x64xf32>
    %cst_63 = arith.constant 0.000000e+00 : f32
    %167 = vector.broadcast %cst_63 : f32 to vector<34x64xf32>
    %168 = arith.cmpf olt, %166, %167 : vector<34x64xf32>
    %cst_64 = arith.constant -1.000000e+00 : f32
    %cst_65 = arith.constant 1.000000e+00 : f32
    %169 = vector.broadcast %cst_64 : f32 to vector<34x64xf32>
    %170 = vector.broadcast %cst_65 : f32 to vector<34x64xf32>
    %171 = arith.select %168, %169, %170 : vector<34x64xi1>, vector<34x64xf32>
    %172 = math.absf %166 : vector<34x64xf32>
    %cst_66 = arith.constant 0.327591091 : f32
    %173 = vector.broadcast %cst_66 : f32 to vector<34x64xf32>
    %174 = arith.mulf %173, %172 : vector<34x64xf32>
    %cst_67 = arith.constant 1.000000e+00 : f32
    %175 = vector.broadcast %cst_67 : f32 to vector<34x64xf32>
    %176 = arith.addf %175, %174 : vector<34x64xf32>
    %cst_68 = arith.constant 1.000000e+00 : f32
    %177 = vector.broadcast %cst_68 : f32 to vector<34x64xf32>
    %178 = arith.divf %177, %176 : vector<34x64xf32>
    %cst_69 = arith.constant 1.06140542 : f32
    %179 = vector.broadcast %cst_69 : f32 to vector<34x64xf32>
    %180 = arith.mulf %179, %178 : vector<34x64xf32>
    %cst_70 = arith.constant -1.45315206 : f32
    %181 = vector.broadcast %cst_70 : f32 to vector<34x64xf32>
    %182 = arith.addf %180, %181 : vector<34x64xf32>
    %183 = arith.mulf %182, %178 : vector<34x64xf32>
    %cst_71 = arith.constant 1.42141378 : f32
    %184 = vector.broadcast %cst_71 : f32 to vector<34x64xf32>
    %185 = arith.addf %183, %184 : vector<34x64xf32>
    %186 = arith.mulf %185, %178 : vector<34x64xf32>
    %cst_72 = arith.constant -0.284496725 : f32
    %187 = vector.broadcast %cst_72 : f32 to vector<34x64xf32>
    %188 = arith.addf %186, %187 : vector<34x64xf32>
    %189 = arith.mulf %188, %178 : vector<34x64xf32>
    %cst_73 = arith.constant 0.254829586 : f32
    %190 = vector.broadcast %cst_73 : f32 to vector<34x64xf32>
    %191 = arith.addf %189, %190 : vector<34x64xf32>
    %192 = arith.mulf %191, %178 : vector<34x64xf32>
    %cst_74 = arith.constant 0.000000e+00 : f32
    %193 = vector.broadcast %cst_74 : f32 to vector<34x64xf32>
    %194 = arith.subf %193, %172 : vector<34x64xf32>
    %195 = arith.mulf %194, %172 : vector<34x64xf32>
    %196 = math.exp %195 : vector<34x64xf32>
    %197 = arith.mulf %192, %196 : vector<34x64xf32>
    %cst_75 = arith.constant 1.000000e+00 : f32
    %198 = vector.broadcast %cst_75 : f32 to vector<34x64xf32>
    %199 = arith.subf %198, %197 : vector<34x64xf32>
    %200 = arith.mulf %171, %199 : vector<34x64xf32>
    %cst_76 = arith.constant 1.000000e+00 : f32
    %201 = vector.broadcast %cst_76 : f32 to vector<34x64xf32>
    %202 = arith.addf %201, %200 : vector<34x64xf32>
    %203 = arith.mulf %164, %202 : vector<34x64xf32>
    %c272 = arith.constant 272 : index
    %c0_77 = arith.constant 0 : index
    %204 = vector.load %arg5[%c272, %c0_77] : memref<840x128xf32, #tpu.memory_space<vmem>>, vector<64x32xf32>
    %cst_78 = arith.constant dense<0.000000e+00> : vector<34x32xf32>
    %205 = tpu.matmul %203, %204, %cst_78 {dimension_numbers = #tpu.dot_dimension_numbers<[1], [0], [0], [1], [0, 0, 1, 1], [], []>} : vector<34x64xf32>, vector<64x32xf32>, vector<34x32xf32> -> vector<34x32xf32>
    %c336 = arith.constant 336 : index
    %c0_79 = arith.constant 0 : index
    %206 = vector.load %arg5[%c336, %c0_79] : memref<840x128xf32, #tpu.memory_space<vmem>>, vector<1x32xf32>
    %207 = vector.broadcast %206 : vector<1x32xf32> to vector<34x32xf32>
    %208 = arith.addf %205, %207 : vector<34x32xf32>
    %209 = arith.addf %208, %133 : vector<34x32xf32>
    %cst_80 = arith.constant dense<0.000000e+00> : vector<34xf32>
    %210 = vector.multi_reduction <add>, %209, %cst_80 [1] : vector<34x32xf32> to vector<34xf32>
    %211 = vector.shape_cast %210 : vector<34xf32> to vector<34x1xf32>
    %cst_81 = arith.constant 3.200000e+01 : f32
    %212 = vector.broadcast %cst_81 : f32 to vector<34x1xf32>
    %213 = arith.divf %211, %212 : vector<34x1xf32>
    %214 = arith.mulf %209, %209 : vector<34x32xf32>
    %cst_82 = arith.constant dense<0.000000e+00> : vector<34xf32>
    %215 = vector.multi_reduction <add>, %214, %cst_82 [1] : vector<34x32xf32> to vector<34xf32>
    %216 = vector.shape_cast %215 : vector<34xf32> to vector<34x1xf32>
    %cst_83 = arith.constant 3.200000e+01 : f32
    %217 = vector.broadcast %cst_83 : f32 to vector<34x1xf32>
    %218 = arith.divf %216, %217 : vector<34x1xf32>
    %219 = vector.broadcast %213 : vector<34x1xf32> to vector<34x32xf32>
    %220 = arith.subf %209, %219 : vector<34x32xf32>
    %221 = arith.mulf %213, %213 : vector<34x1xf32>
    %222 = arith.subf %218, %221 : vector<34x1xf32>
    %cst_84 = arith.constant 9.99999997E-7 : f32
    %223 = vector.broadcast %cst_84 : f32 to vector<34x1xf32>
    %224 = arith.addf %222, %223 : vector<34x1xf32>
    %225 = math.rsqrt %224 : vector<34x1xf32>
    %226 = vector.broadcast %225 : vector<34x1xf32> to vector<34x32xf32>
    %227 = arith.mulf %220, %226 : vector<34x32xf32>
    %c424 = arith.constant 424 : index
    %c0_85 = arith.constant 0 : index
    %228 = vector.load %arg5[%c424, %c0_85] : memref<840x128xf32, #tpu.memory_space<vmem>>, vector<1x32xf32>
    %229 = vector.broadcast %228 : vector<1x32xf32> to vector<34x32xf32>
    %230 = arith.mulf %227, %229 : vector<34x32xf32>
    %c432 = arith.constant 432 : index
    %c0_86 = arith.constant 0 : index
    %231 = vector.load %arg5[%c432, %c0_86] : memref<840x128xf32, #tpu.memory_space<vmem>>, vector<1x32xf32>
    %232 = vector.broadcast %231 : vector<1x32xf32> to vector<34x32xf32>
    %233 = arith.addf %230, %232 : vector<34x32xf32>
    %c344 = arith.constant 344 : index
    %c0_87 = arith.constant 0 : index
    %234 = vector.load %arg5[%c344, %c0_87] : memref<840x128xf32, #tpu.memory_space<vmem>>, vector<32x96xf32>
    %cst_88 = arith.constant dense<0.000000e+00> : vector<34x96xf32>
    %235 = tpu.matmul %233, %234, %cst_88 {dimension_numbers = #tpu.dot_dimension_numbers<[1], [0], [0], [1], [0, 0, 1, 1], [], []>} : vector<34x32xf32>, vector<32x96xf32>, vector<34x96xf32> -> vector<34x96xf32>
    %c376 = arith.constant 376 : index
    %c0_89 = arith.constant 0 : index
    %236 = vector.load %arg5[%c376, %c0_89] : memref<840x128xf32, #tpu.memory_space<vmem>>, vector<1x96xf32>
    %237 = vector.broadcast %236 : vector<1x96xf32> to vector<34x96xf32>
    %238 = arith.addf %235, %237 : vector<34x96xf32>
    %239 = vector.extract_strided_slice %238 {offsets = [0, 0], sizes = [34, 32], strides = [1, 1]} : vector<34x96xf32> to vector<34x32xf32>
    %240 = vector.extract_strided_slice %238 {offsets = [0, 32], sizes = [34, 64], strides = [1, 1]} : vector<34x96xf32> to vector<34x64xf32>
    %c384 = arith.constant 384 : index
    %c0_90 = arith.constant 0 : index
    %241 = vector.load %arg5[%c384, %c0_90] : memref<840x128xf32, #tpu.memory_space<vmem>>, vector<32x32xf32>
    %242 = vector.extract_strided_slice %239 {offsets = [0, 0], sizes = [34, 8], strides = [1, 1]} : vector<34x32xf32> to vector<34x8xf32>
    %243 = vector.extract_strided_slice %240 {offsets = [0, 0], sizes = [34, 8], strides = [1, 1]} : vector<34x64xf32> to vector<34x8xf32>
    %244 = vector.extract_strided_slice %240 {offsets = [0, 32], sizes = [34, 8], strides = [1, 1]} : vector<34x64xf32> to vector<34x8xf32>
    %cst_91 = arith.constant dense<0.000000e+00> : vector<34x34xf32>
    %245 = tpu.matmul %242, %243, %cst_91 {dimension_numbers = #tpu.dot_dimension_numbers<[1], [1], [0], [0], [0, 0, 1, 0], [], []>} : vector<34x8xf32>, vector<34x8xf32>, vector<34x34xf32> -> vector<34x34xf32>
    %cst_92 = arith.constant 0.353553385 : f32
    %246 = vector.broadcast %cst_92 : f32 to vector<34x34xf32>
    %247 = arith.mulf %245, %246 : vector<34x34xf32>
    %248 = arith.addf %247, %4 : vector<34x34xf32>
    %cst_93 = arith.constant dense<0xFF800000> : vector<34xf32>
    %249 = vector.multi_reduction <maximumf>, %248, %cst_93 [1] : vector<34x34xf32> to vector<34xf32>
    %250 = vector.shape_cast %249 : vector<34xf32> to vector<34x1xf32>
    %251 = vector.broadcast %250 : vector<34x1xf32> to vector<34x34xf32>
    %252 = arith.subf %248, %251 : vector<34x34xf32>
    %253 = math.exp %252 : vector<34x34xf32>
    %cst_94 = arith.constant dense<0.000000e+00> : vector<34xf32>
    %254 = vector.multi_reduction <add>, %253, %cst_94 [1] : vector<34x34xf32> to vector<34xf32>
    %255 = vector.shape_cast %254 : vector<34xf32> to vector<34x1xf32>
    %256 = tpu.reciprocal %255 : vector<34x1xf32> -> vector<34x1xf32>
    %257 = vector.broadcast %256 : vector<34x1xf32> to vector<34x34xf32>
    %258 = arith.mulf %253, %257 : vector<34x34xf32>
    %cst_95 = arith.constant dense<0.000000e+00> : vector<34x8xf32>
    %259 = tpu.matmul %258, %244, %cst_95 {dimension_numbers = #tpu.dot_dimension_numbers<[1], [0], [0], [1], [0, 0, 1, 1], [], []>} : vector<34x34xf32>, vector<34x8xf32>, vector<34x8xf32> -> vector<34x8xf32>
    %260 = vector.extract_strided_slice %241 {offsets = [0, 0], sizes = [8, 32], strides = [1, 1]} : vector<32x32xf32> to vector<8x32xf32>
    %cst_96 = arith.constant dense<0.000000e+00> : vector<34x32xf32>
    %261 = tpu.matmul %259, %260, %cst_96 {dimension_numbers = #tpu.dot_dimension_numbers<[1], [0], [0], [1], [0, 0, 1, 1], [], []>} : vector<34x8xf32>, vector<8x32xf32>, vector<34x32xf32> -> vector<34x32xf32>
    %262 = vector.extract_strided_slice %239 {offsets = [0, 8], sizes = [34, 8], strides = [1, 1]} : vector<34x32xf32> to vector<34x8xf32>
    %263 = vector.extract_strided_slice %240 {offsets = [0, 8], sizes = [34, 8], strides = [1, 1]} : vector<34x64xf32> to vector<34x8xf32>
    %264 = vector.extract_strided_slice %240 {offsets = [0, 40], sizes = [34, 8], strides = [1, 1]} : vector<34x64xf32> to vector<34x8xf32>
    %cst_97 = arith.constant dense<0.000000e+00> : vector<34x34xf32>
    %265 = tpu.matmul %262, %263, %cst_97 {dimension_numbers = #tpu.dot_dimension_numbers<[1], [1], [0], [0], [0, 0, 1, 0], [], []>} : vector<34x8xf32>, vector<34x8xf32>, vector<34x34xf32> -> vector<34x34xf32>
    %cst_98 = arith.constant 0.353553385 : f32
    %266 = vector.broadcast %cst_98 : f32 to vector<34x34xf32>
    %267 = arith.mulf %265, %266 : vector<34x34xf32>
    %268 = arith.addf %267, %4 : vector<34x34xf32>
    %cst_99 = arith.constant dense<0xFF800000> : vector<34xf32>
    %269 = vector.multi_reduction <maximumf>, %268, %cst_99 [1] : vector<34x34xf32> to vector<34xf32>
    %270 = vector.shape_cast %269 : vector<34xf32> to vector<34x1xf32>
    %271 = vector.broadcast %270 : vector<34x1xf32> to vector<34x34xf32>
    %272 = arith.subf %268, %271 : vector<34x34xf32>
    %273 = math.exp %272 : vector<34x34xf32>
    %cst_100 = arith.constant dense<0.000000e+00> : vector<34xf32>
    %274 = vector.multi_reduction <add>, %273, %cst_100 [1] : vector<34x34xf32> to vector<34xf32>
    %275 = vector.shape_cast %274 : vector<34xf32> to vector<34x1xf32>
    %276 = tpu.reciprocal %275 : vector<34x1xf32> -> vector<34x1xf32>
    %277 = vector.broadcast %276 : vector<34x1xf32> to vector<34x34xf32>
    %278 = arith.mulf %273, %277 : vector<34x34xf32>
    %cst_101 = arith.constant dense<0.000000e+00> : vector<34x8xf32>
    %279 = tpu.matmul %278, %264, %cst_101 {dimension_numbers = #tpu.dot_dimension_numbers<[1], [0], [0], [1], [0, 0, 1, 1], [], []>} : vector<34x34xf32>, vector<34x8xf32>, vector<34x8xf32> -> vector<34x8xf32>
    %280 = vector.extract_strided_slice %241 {offsets = [8, 0], sizes = [8, 32], strides = [1, 1]} : vector<32x32xf32> to vector<8x32xf32>
    %cst_102 = arith.constant dense<0.000000e+00> : vector<34x32xf32>
    %281 = tpu.matmul %279, %280, %cst_102 {dimension_numbers = #tpu.dot_dimension_numbers<[1], [0], [0], [1], [0, 0, 1, 1], [], []>} : vector<34x8xf32>, vector<8x32xf32>, vector<34x32xf32> -> vector<34x32xf32>
    %282 = arith.addf %261, %281 : vector<34x32xf32>
    %283 = vector.extract_strided_slice %239 {offsets = [0, 16], sizes = [34, 8], strides = [1, 1]} : vector<34x32xf32> to vector<34x8xf32>
    %284 = vector.extract_strided_slice %240 {offsets = [0, 16], sizes = [34, 8], strides = [1, 1]} : vector<34x64xf32> to vector<34x8xf32>
    %285 = vector.extract_strided_slice %240 {offsets = [0, 48], sizes = [34, 8], strides = [1, 1]} : vector<34x64xf32> to vector<34x8xf32>
    %cst_103 = arith.constant dense<0.000000e+00> : vector<34x34xf32>
    %286 = tpu.matmul %283, %284, %cst_103 {dimension_numbers = #tpu.dot_dimension_numbers<[1], [1], [0], [0], [0, 0, 1, 0], [], []>} : vector<34x8xf32>, vector<34x8xf32>, vector<34x34xf32> -> vector<34x34xf32>
    %cst_104 = arith.constant 0.353553385 : f32
    %287 = vector.broadcast %cst_104 : f32 to vector<34x34xf32>
    %288 = arith.mulf %286, %287 : vector<34x34xf32>
    %289 = arith.addf %288, %4 : vector<34x34xf32>
    %cst_105 = arith.constant dense<0xFF800000> : vector<34xf32>
    %290 = vector.multi_reduction <maximumf>, %289, %cst_105 [1] : vector<34x34xf32> to vector<34xf32>
    %291 = vector.shape_cast %290 : vector<34xf32> to vector<34x1xf32>
    %292 = vector.broadcast %291 : vector<34x1xf32> to vector<34x34xf32>
    %293 = arith.subf %289, %292 : vector<34x34xf32>
    %294 = math.exp %293 : vector<34x34xf32>
    %cst_106 = arith.constant dense<0.000000e+00> : vector<34xf32>
    %295 = vector.multi_reduction <add>, %294, %cst_106 [1] : vector<34x34xf32> to vector<34xf32>
    %296 = vector.shape_cast %295 : vector<34xf32> to vector<34x1xf32>
    %297 = tpu.reciprocal %296 : vector<34x1xf32> -> vector<34x1xf32>
    %298 = vector.broadcast %297 : vector<34x1xf32> to vector<34x34xf32>
    %299 = arith.mulf %294, %298 : vector<34x34xf32>
    %cst_107 = arith.constant dense<0.000000e+00> : vector<34x8xf32>
    %300 = tpu.matmul %299, %285, %cst_107 {dimension_numbers = #tpu.dot_dimension_numbers<[1], [0], [0], [1], [0, 0, 1, 1], [], []>} : vector<34x34xf32>, vector<34x8xf32>, vector<34x8xf32> -> vector<34x8xf32>
    %301 = vector.extract_strided_slice %241 {offsets = [16, 0], sizes = [8, 32], strides = [1, 1]} : vector<32x32xf32> to vector<8x32xf32>
    %cst_108 = arith.constant dense<0.000000e+00> : vector<34x32xf32>
    %302 = tpu.matmul %300, %301, %cst_108 {dimension_numbers = #tpu.dot_dimension_numbers<[1], [0], [0], [1], [0, 0, 1, 1], [], []>} : vector<34x8xf32>, vector<8x32xf32>, vector<34x32xf32> -> vector<34x32xf32>
    %303 = arith.addf %282, %302 : vector<34x32xf32>
    %304 = vector.extract_strided_slice %239 {offsets = [0, 24], sizes = [34, 8], strides = [1, 1]} : vector<34x32xf32> to vector<34x8xf32>
    %305 = vector.extract_strided_slice %240 {offsets = [0, 24], sizes = [34, 8], strides = [1, 1]} : vector<34x64xf32> to vector<34x8xf32>
    %306 = vector.extract_strided_slice %240 {offsets = [0, 56], sizes = [34, 8], strides = [1, 1]} : vector<34x64xf32> to vector<34x8xf32>
    %cst_109 = arith.constant dense<0.000000e+00> : vector<34x34xf32>
    %307 = tpu.matmul %304, %305, %cst_109 {dimension_numbers = #tpu.dot_dimension_numbers<[1], [1], [0], [0], [0, 0, 1, 0], [], []>} : vector<34x8xf32>, vector<34x8xf32>, vector<34x34xf32> -> vector<34x34xf32>
    %cst_110 = arith.constant 0.353553385 : f32
    %308 = vector.broadcast %cst_110 : f32 to vector<34x34xf32>
    %309 = arith.mulf %307, %308 : vector<34x34xf32>
    %310 = arith.addf %309, %4 : vector<34x34xf32>
    %cst_111 = arith.constant dense<0xFF800000> : vector<34xf32>
    %311 = vector.multi_reduction <maximumf>, %310, %cst_111 [1] : vector<34x34xf32> to vector<34xf32>
    %312 = vector.shape_cast %311 : vector<34xf32> to vector<34x1xf32>
    %313 = vector.broadcast %312 : vector<34x1xf32> to vector<34x34xf32>
    %314 = arith.subf %310, %313 : vector<34x34xf32>
    %315 = math.exp %314 : vector<34x34xf32>
    %cst_112 = arith.constant dense<0.000000e+00> : vector<34xf32>
    %316 = vector.multi_reduction <add>, %315, %cst_112 [1] : vector<34x34xf32> to vector<34xf32>
    %317 = vector.shape_cast %316 : vector<34xf32> to vector<34x1xf32>
    %318 = tpu.reciprocal %317 : vector<34x1xf32> -> vector<34x1xf32>
    %319 = vector.broadcast %318 : vector<34x1xf32> to vector<34x34xf32>
    %320 = arith.mulf %315, %319 : vector<34x34xf32>
    %cst_113 = arith.constant dense<0.000000e+00> : vector<34x8xf32>
    %321 = tpu.matmul %320, %306, %cst_113 {dimension_numbers = #tpu.dot_dimension_numbers<[1], [0], [0], [1], [0, 0, 1, 1], [], []>} : vector<34x34xf32>, vector<34x8xf32>, vector<34x8xf32> -> vector<34x8xf32>
    %322 = vector.extract_strided_slice %241 {offsets = [24, 0], sizes = [8, 32], strides = [1, 1]} : vector<32x32xf32> to vector<8x32xf32>
    %cst_114 = arith.constant dense<0.000000e+00> : vector<34x32xf32>
    %323 = tpu.matmul %321, %322, %cst_114 {dimension_numbers = #tpu.dot_dimension_numbers<[1], [0], [0], [1], [0, 0, 1, 1], [], []>} : vector<34x8xf32>, vector<8x32xf32>, vector<34x32xf32> -> vector<34x32xf32>
    %324 = arith.addf %303, %323 : vector<34x32xf32>
    %c416 = arith.constant 416 : index
    %c0_115 = arith.constant 0 : index
    %325 = vector.load %arg5[%c416, %c0_115] : memref<840x128xf32, #tpu.memory_space<vmem>>, vector<1x32xf32>
    %326 = vector.broadcast %325 : vector<1x32xf32> to vector<34x32xf32>
    %327 = arith.addf %324, %326 : vector<34x32xf32>
    %328 = arith.addf %327, %209 : vector<34x32xf32>
    %cst_116 = arith.constant dense<0.000000e+00> : vector<34xf32>
    %329 = vector.multi_reduction <add>, %328, %cst_116 [1] : vector<34x32xf32> to vector<34xf32>
    %330 = vector.shape_cast %329 : vector<34xf32> to vector<34x1xf32>
    %cst_117 = arith.constant 3.200000e+01 : f32
    %331 = vector.broadcast %cst_117 : f32 to vector<34x1xf32>
    %332 = arith.divf %330, %331 : vector<34x1xf32>
    %333 = arith.mulf %328, %328 : vector<34x32xf32>
    %cst_118 = arith.constant dense<0.000000e+00> : vector<34xf32>
    %334 = vector.multi_reduction <add>, %333, %cst_118 [1] : vector<34x32xf32> to vector<34xf32>
    %335 = vector.shape_cast %334 : vector<34xf32> to vector<34x1xf32>
    %cst_119 = arith.constant 3.200000e+01 : f32
    %336 = vector.broadcast %cst_119 : f32 to vector<34x1xf32>
    %337 = arith.divf %335, %336 : vector<34x1xf32>
    %338 = vector.broadcast %332 : vector<34x1xf32> to vector<34x32xf32>
    %339 = arith.subf %328, %338 : vector<34x32xf32>
    %340 = arith.mulf %332, %332 : vector<34x1xf32>
    %341 = arith.subf %337, %340 : vector<34x1xf32>
    %cst_120 = arith.constant 9.99999997E-7 : f32
    %342 = vector.broadcast %cst_120 : f32 to vector<34x1xf32>
    %343 = arith.addf %341, %342 : vector<34x1xf32>
    %344 = math.rsqrt %343 : vector<34x1xf32>
    %345 = vector.broadcast %344 : vector<34x1xf32> to vector<34x32xf32>
    %346 = arith.mulf %339, %345 : vector<34x32xf32>
    %c440 = arith.constant 440 : index
    %c0_121 = arith.constant 0 : index
    %347 = vector.load %arg5[%c440, %c0_121] : memref<840x128xf32, #tpu.memory_space<vmem>>, vector<1x32xf32>
    %348 = vector.broadcast %347 : vector<1x32xf32> to vector<34x32xf32>
    %349 = arith.mulf %346, %348 : vector<34x32xf32>
    %c448 = arith.constant 448 : index
    %c0_122 = arith.constant 0 : index
    %350 = vector.load %arg5[%c448, %c0_122] : memref<840x128xf32, #tpu.memory_space<vmem>>, vector<1x32xf32>
    %351 = vector.broadcast %350 : vector<1x32xf32> to vector<34x32xf32>
    %352 = arith.addf %349, %351 : vector<34x32xf32>
    %c456 = arith.constant 456 : index
    %c0_123 = arith.constant 0 : index
    %353 = vector.load %arg5[%c456, %c0_123] : memref<840x128xf32, #tpu.memory_space<vmem>>, vector<32x64xf32>
    %cst_124 = arith.constant dense<0.000000e+00> : vector<34x64xf32>
    %354 = tpu.matmul %352, %353, %cst_124 {dimension_numbers = #tpu.dot_dimension_numbers<[1], [0], [0], [1], [0, 0, 1, 1], [], []>} : vector<34x32xf32>, vector<32x64xf32>, vector<34x64xf32> -> vector<34x64xf32>
    %c488 = arith.constant 488 : index
    %c0_125 = arith.constant 0 : index
    %355 = vector.load %arg5[%c488, %c0_125] : memref<840x128xf32, #tpu.memory_space<vmem>>, vector<1x64xf32>
    %356 = vector.broadcast %355 : vector<1x64xf32> to vector<34x64xf32>
    %357 = arith.addf %354, %356 : vector<34x64xf32>
    %cst_126 = arith.constant 5.000000e-01 : f32
    %358 = vector.broadcast %cst_126 : f32 to vector<34x64xf32>
    %359 = arith.mulf %358, %357 : vector<34x64xf32>
    %cst_127 = arith.constant 0.707106769 : f32
    %360 = vector.broadcast %cst_127 : f32 to vector<34x64xf32>
    %361 = arith.mulf %357, %360 : vector<34x64xf32>
    %cst_128 = arith.constant 0.000000e+00 : f32
    %362 = vector.broadcast %cst_128 : f32 to vector<34x64xf32>
    %363 = arith.cmpf olt, %361, %362 : vector<34x64xf32>
    %cst_129 = arith.constant -1.000000e+00 : f32
    %cst_130 = arith.constant 1.000000e+00 : f32
    %364 = vector.broadcast %cst_129 : f32 to vector<34x64xf32>
    %365 = vector.broadcast %cst_130 : f32 to vector<34x64xf32>
    %366 = arith.select %363, %364, %365 : vector<34x64xi1>, vector<34x64xf32>
    %367 = math.absf %361 : vector<34x64xf32>
    %cst_131 = arith.constant 0.327591091 : f32
    %368 = vector.broadcast %cst_131 : f32 to vector<34x64xf32>
    %369 = arith.mulf %368, %367 : vector<34x64xf32>
    %cst_132 = arith.constant 1.000000e+00 : f32
    %370 = vector.broadcast %cst_132 : f32 to vector<34x64xf32>
    %371 = arith.addf %370, %369 : vector<34x64xf32>
    %cst_133 = arith.constant 1.000000e+00 : f32
    %372 = vector.broadcast %cst_133 : f32 to vector<34x64xf32>
    %373 = arith.divf %372, %371 : vector<34x64xf32>
    %cst_134 = arith.constant 1.06140542 : f32
    %374 = vector.broadcast %cst_134 : f32 to vector<34x64xf32>
    %375 = arith.mulf %374, %373 : vector<34x64xf32>
    %cst_135 = arith.constant -1.45315206 : f32
    %376 = vector.broadcast %cst_135 : f32 to vector<34x64xf32>
    %377 = arith.addf %375, %376 : vector<34x64xf32>
    %378 = arith.mulf %377, %373 : vector<34x64xf32>
    %cst_136 = arith.constant 1.42141378 : f32
    %379 = vector.broadcast %cst_136 : f32 to vector<34x64xf32>
    %380 = arith.addf %378, %379 : vector<34x64xf32>
    %381 = arith.mulf %380, %373 : vector<34x64xf32>
    %cst_137 = arith.constant -0.284496725 : f32
    %382 = vector.broadcast %cst_137 : f32 to vector<34x64xf32>
    %383 = arith.addf %381, %382 : vector<34x64xf32>
    %384 = arith.mulf %383, %373 : vector<34x64xf32>
    %cst_138 = arith.constant 0.254829586 : f32
    %385 = vector.broadcast %cst_138 : f32 to vector<34x64xf32>
    %386 = arith.addf %384, %385 : vector<34x64xf32>
    %387 = arith.mulf %386, %373 : vector<34x64xf32>
    %cst_139 = arith.constant 0.000000e+00 : f32
    %388 = vector.broadcast %cst_139 : f32 to vector<34x64xf32>
    %389 = arith.subf %388, %367 : vector<34x64xf32>
    %390 = arith.mulf %389, %367 : vector<34x64xf32>
    %391 = math.exp %390 : vector<34x64xf32>
    %392 = arith.mulf %387, %391 : vector<34x64xf32>
    %cst_140 = arith.constant 1.000000e+00 : f32
    %393 = vector.broadcast %cst_140 : f32 to vector<34x64xf32>
    %394 = arith.subf %393, %392 : vector<34x64xf32>
    %395 = arith.mulf %366, %394 : vector<34x64xf32>
    %cst_141 = arith.constant 1.000000e+00 : f32
    %396 = vector.broadcast %cst_141 : f32 to vector<34x64xf32>
    %397 = arith.addf %396, %395 : vector<34x64xf32>
    %398 = arith.mulf %359, %397 : vector<34x64xf32>
    %c496 = arith.constant 496 : index
    %c0_142 = arith.constant 0 : index
    %399 = vector.load %arg5[%c496, %c0_142] : memref<840x128xf32, #tpu.memory_space<vmem>>, vector<64x32xf32>
    %cst_143 = arith.constant dense<0.000000e+00> : vector<34x32xf32>
    %400 = tpu.matmul %398, %399, %cst_143 {dimension_numbers = #tpu.dot_dimension_numbers<[1], [0], [0], [1], [0, 0, 1, 1], [], []>} : vector<34x64xf32>, vector<64x32xf32>, vector<34x32xf32> -> vector<34x32xf32>
    %c560 = arith.constant 560 : index
    %c0_144 = arith.constant 0 : index
    %401 = vector.load %arg5[%c560, %c0_144] : memref<840x128xf32, #tpu.memory_space<vmem>>, vector<1x32xf32>
    %402 = vector.broadcast %401 : vector<1x32xf32> to vector<34x32xf32>
    %403 = arith.addf %400, %402 : vector<34x32xf32>
    %404 = arith.addf %403, %328 : vector<34x32xf32>
    %c104 = arith.constant 104 : index
    %c0_145 = arith.constant 0 : index
    %405 = vector.load %arg5[%c104, %c0_145] : memref<840x128xf32, #tpu.memory_space<vmem>>, vector<1x32xf32>
    %406 = vector.broadcast %405 : vector<1x32xf32> to vector<2x32xf32>
    %407 = arith.addf %10, %406 : vector<2x32xf32>
    %c112 = arith.constant 112 : index
    %c0_146 = arith.constant 0 : index
    %408 = vector.load %arg5[%c112, %c0_146] : memref<840x128xf32, #tpu.memory_space<vmem>>, vector<1x32xf32>
    %409 = vector.broadcast %408 : vector<1x32xf32> to vector<34x32xf32>
    %410 = arith.addf %404, %409 : vector<34x32xf32>
    %cst_147 = arith.constant dense<0.000000e+00> : vector<34xf32>
    %411 = vector.multi_reduction <add>, %410, %cst_147 [1] : vector<34x32xf32> to vector<34xf32>
    %412 = vector.shape_cast %411 : vector<34xf32> to vector<34x1xf32>
    %cst_148 = arith.constant 3.200000e+01 : f32
    %413 = vector.broadcast %cst_148 : f32 to vector<34x1xf32>
    %414 = arith.divf %412, %413 : vector<34x1xf32>
    %415 = arith.mulf %410, %410 : vector<34x32xf32>
    %cst_149 = arith.constant dense<0.000000e+00> : vector<34xf32>
    %416 = vector.multi_reduction <add>, %415, %cst_149 [1] : vector<34x32xf32> to vector<34xf32>
    %417 = vector.shape_cast %416 : vector<34xf32> to vector<34x1xf32>
    %cst_150 = arith.constant 3.200000e+01 : f32
    %418 = vector.broadcast %cst_150 : f32 to vector<34x1xf32>
    %419 = arith.divf %417, %418 : vector<34x1xf32>
    %420 = vector.broadcast %414 : vector<34x1xf32> to vector<34x32xf32>
    %421 = arith.subf %410, %420 : vector<34x32xf32>
    %422 = arith.mulf %414, %414 : vector<34x1xf32>
    %423 = arith.subf %419, %422 : vector<34x1xf32>
    %cst_151 = arith.constant 9.99999997E-7 : f32
    %424 = vector.broadcast %cst_151 : f32 to vector<34x1xf32>
    %425 = arith.addf %423, %424 : vector<34x1xf32>
    %426 = math.rsqrt %425 : vector<34x1xf32>
    %427 = vector.broadcast %426 : vector<34x1xf32> to vector<34x32xf32>
    %428 = arith.mulf %421, %427 : vector<34x32xf32>
    %c568 = arith.constant 568 : index
    %c0_152 = arith.constant 0 : index
    %429 = vector.load %arg5[%c568, %c0_152] : memref<840x128xf32, #tpu.memory_space<vmem>>, vector<1x32xf32>
    %430 = vector.broadcast %429 : vector<1x32xf32> to vector<34x32xf32>
    %431 = arith.mulf %428, %430 : vector<34x32xf32>
    %c576 = arith.constant 576 : index
    %c0_153 = arith.constant 0 : index
    %432 = vector.load %arg5[%c576, %c0_153] : memref<840x128xf32, #tpu.memory_space<vmem>>, vector<1x32xf32>
    %433 = vector.broadcast %432 : vector<1x32xf32> to vector<34x32xf32>
    %434 = arith.addf %431, %433 : vector<34x32xf32>
    %cst_154 = arith.constant dense<0.000000e+00> : vector<2xf32>
    %435 = vector.multi_reduction <add>, %407, %cst_154 [1] : vector<2x32xf32> to vector<2xf32>
    %436 = vector.shape_cast %435 : vector<2xf32> to vector<2x1xf32>
    %cst_155 = arith.constant 3.200000e+01 : f32
    %437 = vector.broadcast %cst_155 : f32 to vector<2x1xf32>
    %438 = arith.divf %436, %437 : vector<2x1xf32>
    %439 = arith.mulf %407, %407 : vector<2x32xf32>
    %cst_156 = arith.constant dense<0.000000e+00> : vector<2xf32>
    %440 = vector.multi_reduction <add>, %439, %cst_156 [1] : vector<2x32xf32> to vector<2xf32>
    %441 = vector.shape_cast %440 : vector<2xf32> to vector<2x1xf32>
    %cst_157 = arith.constant 3.200000e+01 : f32
    %442 = vector.broadcast %cst_157 : f32 to vector<2x1xf32>
    %443 = arith.divf %441, %442 : vector<2x1xf32>
    %444 = vector.broadcast %438 : vector<2x1xf32> to vector<2x32xf32>
    %445 = arith.subf %407, %444 : vector<2x32xf32>
    %446 = arith.mulf %438, %438 : vector<2x1xf32>
    %447 = arith.subf %443, %446 : vector<2x1xf32>
    %cst_158 = arith.constant 9.99999997E-7 : f32
    %448 = vector.broadcast %cst_158 : f32 to vector<2x1xf32>
    %449 = arith.addf %447, %448 : vector<2x1xf32>
    %450 = math.rsqrt %449 : vector<2x1xf32>
    %451 = vector.broadcast %450 : vector<2x1xf32> to vector<2x32xf32>
    %452 = arith.mulf %445, %451 : vector<2x32xf32>
    %c568_159 = arith.constant 568 : index
    %c0_160 = arith.constant 0 : index
    %453 = vector.load %arg5[%c568_159, %c0_160] : memref<840x128xf32, #tpu.memory_space<vmem>>, vector<1x32xf32>
    %454 = vector.broadcast %453 : vector<1x32xf32> to vector<2x32xf32>
    %455 = arith.mulf %452, %454 : vector<2x32xf32>
    %c576_161 = arith.constant 576 : index
    %c0_162 = arith.constant 0 : index
    %456 = vector.load %arg5[%c576_161, %c0_162] : memref<840x128xf32, #tpu.memory_space<vmem>>, vector<1x32xf32>
    %457 = vector.broadcast %456 : vector<1x32xf32> to vector<2x32xf32>
    %458 = arith.addf %455, %457 : vector<2x32xf32>
    %c584 = arith.constant 584 : index
    %c0_163 = arith.constant 0 : index
    %459 = vector.load %arg5[%c584, %c0_163] : memref<840x128xf32, #tpu.memory_space<vmem>>, vector<32x32xf32>
    %cst_164 = arith.constant dense<0.000000e+00> : vector<2x32xf32>
    %460 = tpu.matmul %458, %459, %cst_164 {dimension_numbers = #tpu.dot_dimension_numbers<[1], [0], [0], [1], [0, 0, 1, 1], [], []>} : vector<2x32xf32>, vector<32x32xf32>, vector<2x32xf32> -> vector<2x32xf32>
    %c616 = arith.constant 616 : index
    %c0_165 = arith.constant 0 : index
    %461 = vector.load %arg5[%c616, %c0_165] : memref<840x128xf32, #tpu.memory_space<vmem>>, vector<1x32xf32>
    %462 = vector.broadcast %461 : vector<1x32xf32> to vector<2x32xf32>
    %463 = arith.addf %460, %462 : vector<2x32xf32>
    %c624 = arith.constant 624 : index
    %c0_166 = arith.constant 0 : index
    %464 = vector.load %arg5[%c624, %c0_166] : memref<840x128xf32, #tpu.memory_space<vmem>>, vector<32x64xf32>
    %cst_167 = arith.constant dense<0.000000e+00> : vector<34x64xf32>
    %465 = tpu.matmul %434, %464, %cst_167 {dimension_numbers = #tpu.dot_dimension_numbers<[1], [0], [0], [1], [0, 0, 1, 1], [], []>} : vector<34x32xf32>, vector<32x64xf32>, vector<34x64xf32> -> vector<34x64xf32>
    %c656 = arith.constant 656 : index
    %c0_168 = arith.constant 0 : index
    %466 = vector.load %arg5[%c656, %c0_168] : memref<840x128xf32, #tpu.memory_space<vmem>>, vector<1x64xf32>
    %467 = vector.broadcast %466 : vector<1x64xf32> to vector<34x64xf32>
    %468 = arith.addf %465, %467 : vector<34x64xf32>
    %c664 = arith.constant 664 : index
    %c0_169 = arith.constant 0 : index
    %469 = vector.load %arg5[%c664, %c0_169] : memref<840x128xf32, #tpu.memory_space<vmem>>, vector<32x32xf32>
    %470 = vector.extract_strided_slice %463 {offsets = [0, 0], sizes = [2, 8], strides = [1, 1]} : vector<2x32xf32> to vector<2x8xf32>
    %471 = vector.extract_strided_slice %468 {offsets = [0, 0], sizes = [34, 8], strides = [1, 1]} : vector<34x64xf32> to vector<34x8xf32>
    %472 = vector.extract_strided_slice %468 {offsets = [0, 32], sizes = [34, 8], strides = [1, 1]} : vector<34x64xf32> to vector<34x8xf32>
    %cst_170 = arith.constant dense<0.000000e+00> : vector<2x34xf32>
    %473 = tpu.matmul %470, %471, %cst_170 {dimension_numbers = #tpu.dot_dimension_numbers<[1], [1], [0], [0], [0, 0, 1, 0], [], []>} : vector<2x8xf32>, vector<34x8xf32>, vector<2x34xf32> -> vector<2x34xf32>
    %cst_171 = arith.constant 0.353553385 : f32
    %474 = vector.broadcast %cst_171 : f32 to vector<2x34xf32>
    %475 = arith.mulf %473, %474 : vector<2x34xf32>
    %476 = arith.addf %475, %5 : vector<2x34xf32>
    %cst_172 = arith.constant dense<0xFF800000> : vector<2xf32>
    %477 = vector.multi_reduction <maximumf>, %476, %cst_172 [1] : vector<2x34xf32> to vector<2xf32>
    %478 = vector.shape_cast %477 : vector<2xf32> to vector<2x1xf32>
    %479 = vector.broadcast %478 : vector<2x1xf32> to vector<2x34xf32>
    %480 = arith.subf %476, %479 : vector<2x34xf32>
    %481 = math.exp %480 : vector<2x34xf32>
    %cst_173 = arith.constant dense<0.000000e+00> : vector<2xf32>
    %482 = vector.multi_reduction <add>, %481, %cst_173 [1] : vector<2x34xf32> to vector<2xf32>
    %483 = vector.shape_cast %482 : vector<2xf32> to vector<2x1xf32>
    %484 = tpu.reciprocal %483 : vector<2x1xf32> -> vector<2x1xf32>
    %485 = vector.broadcast %484 : vector<2x1xf32> to vector<2x34xf32>
    %486 = arith.mulf %481, %485 : vector<2x34xf32>
    %cst_174 = arith.constant dense<0.000000e+00> : vector<2x8xf32>
    %487 = tpu.matmul %486, %472, %cst_174 {dimension_numbers = #tpu.dot_dimension_numbers<[1], [0], [0], [1], [0, 0, 1, 1], [], []>} : vector<2x34xf32>, vector<34x8xf32>, vector<2x8xf32> -> vector<2x8xf32>
    %488 = vector.extract_strided_slice %469 {offsets = [0, 0], sizes = [8, 32], strides = [1, 1]} : vector<32x32xf32> to vector<8x32xf32>
    %cst_175 = arith.constant dense<0.000000e+00> : vector<2x32xf32>
    %489 = tpu.matmul %487, %488, %cst_175 {dimension_numbers = #tpu.dot_dimension_numbers<[1], [0], [0], [1], [0, 0, 1, 1], [], []>} : vector<2x8xf32>, vector<8x32xf32>, vector<2x32xf32> -> vector<2x32xf32>
    %490 = vector.extract_strided_slice %463 {offsets = [0, 8], sizes = [2, 8], strides = [1, 1]} : vector<2x32xf32> to vector<2x8xf32>
    %491 = vector.extract_strided_slice %468 {offsets = [0, 8], sizes = [34, 8], strides = [1, 1]} : vector<34x64xf32> to vector<34x8xf32>
    %492 = vector.extract_strided_slice %468 {offsets = [0, 40], sizes = [34, 8], strides = [1, 1]} : vector<34x64xf32> to vector<34x8xf32>
    %cst_176 = arith.constant dense<0.000000e+00> : vector<2x34xf32>
    %493 = tpu.matmul %490, %491, %cst_176 {dimension_numbers = #tpu.dot_dimension_numbers<[1], [1], [0], [0], [0, 0, 1, 0], [], []>} : vector<2x8xf32>, vector<34x8xf32>, vector<2x34xf32> -> vector<2x34xf32>
    %cst_177 = arith.constant 0.353553385 : f32
    %494 = vector.broadcast %cst_177 : f32 to vector<2x34xf32>
    %495 = arith.mulf %493, %494 : vector<2x34xf32>
    %496 = arith.addf %495, %5 : vector<2x34xf32>
    %cst_178 = arith.constant dense<0xFF800000> : vector<2xf32>
    %497 = vector.multi_reduction <maximumf>, %496, %cst_178 [1] : vector<2x34xf32> to vector<2xf32>
    %498 = vector.shape_cast %497 : vector<2xf32> to vector<2x1xf32>
    %499 = vector.broadcast %498 : vector<2x1xf32> to vector<2x34xf32>
    %500 = arith.subf %496, %499 : vector<2x34xf32>
    %501 = math.exp %500 : vector<2x34xf32>
    %cst_179 = arith.constant dense<0.000000e+00> : vector<2xf32>
    %502 = vector.multi_reduction <add>, %501, %cst_179 [1] : vector<2x34xf32> to vector<2xf32>
    %503 = vector.shape_cast %502 : vector<2xf32> to vector<2x1xf32>
    %504 = tpu.reciprocal %503 : vector<2x1xf32> -> vector<2x1xf32>
    %505 = vector.broadcast %504 : vector<2x1xf32> to vector<2x34xf32>
    %506 = arith.mulf %501, %505 : vector<2x34xf32>
    %cst_180 = arith.constant dense<0.000000e+00> : vector<2x8xf32>
    %507 = tpu.matmul %506, %492, %cst_180 {dimension_numbers = #tpu.dot_dimension_numbers<[1], [0], [0], [1], [0, 0, 1, 1], [], []>} : vector<2x34xf32>, vector<34x8xf32>, vector<2x8xf32> -> vector<2x8xf32>
    %508 = vector.extract_strided_slice %469 {offsets = [8, 0], sizes = [8, 32], strides = [1, 1]} : vector<32x32xf32> to vector<8x32xf32>
    %cst_181 = arith.constant dense<0.000000e+00> : vector<2x32xf32>
    %509 = tpu.matmul %507, %508, %cst_181 {dimension_numbers = #tpu.dot_dimension_numbers<[1], [0], [0], [1], [0, 0, 1, 1], [], []>} : vector<2x8xf32>, vector<8x32xf32>, vector<2x32xf32> -> vector<2x32xf32>
    %510 = arith.addf %489, %509 : vector<2x32xf32>
    %511 = vector.extract_strided_slice %463 {offsets = [0, 16], sizes = [2, 8], strides = [1, 1]} : vector<2x32xf32> to vector<2x8xf32>
    %512 = vector.extract_strided_slice %468 {offsets = [0, 16], sizes = [34, 8], strides = [1, 1]} : vector<34x64xf32> to vector<34x8xf32>
    %513 = vector.extract_strided_slice %468 {offsets = [0, 48], sizes = [34, 8], strides = [1, 1]} : vector<34x64xf32> to vector<34x8xf32>
    %cst_182 = arith.constant dense<0.000000e+00> : vector<2x34xf32>
    %514 = tpu.matmul %511, %512, %cst_182 {dimension_numbers = #tpu.dot_dimension_numbers<[1], [1], [0], [0], [0, 0, 1, 0], [], []>} : vector<2x8xf32>, vector<34x8xf32>, vector<2x34xf32> -> vector<2x34xf32>
    %cst_183 = arith.constant 0.353553385 : f32
    %515 = vector.broadcast %cst_183 : f32 to vector<2x34xf32>
    %516 = arith.mulf %514, %515 : vector<2x34xf32>
    %517 = arith.addf %516, %5 : vector<2x34xf32>
    %cst_184 = arith.constant dense<0xFF800000> : vector<2xf32>
    %518 = vector.multi_reduction <maximumf>, %517, %cst_184 [1] : vector<2x34xf32> to vector<2xf32>
    %519 = vector.shape_cast %518 : vector<2xf32> to vector<2x1xf32>
    %520 = vector.broadcast %519 : vector<2x1xf32> to vector<2x34xf32>
    %521 = arith.subf %517, %520 : vector<2x34xf32>
    %522 = math.exp %521 : vector<2x34xf32>
    %cst_185 = arith.constant dense<0.000000e+00> : vector<2xf32>
    %523 = vector.multi_reduction <add>, %522, %cst_185 [1] : vector<2x34xf32> to vector<2xf32>
    %524 = vector.shape_cast %523 : vector<2xf32> to vector<2x1xf32>
    %525 = tpu.reciprocal %524 : vector<2x1xf32> -> vector<2x1xf32>
    %526 = vector.broadcast %525 : vector<2x1xf32> to vector<2x34xf32>
    %527 = arith.mulf %522, %526 : vector<2x34xf32>
    %cst_186 = arith.constant dense<0.000000e+00> : vector<2x8xf32>
    %528 = tpu.matmul %527, %513, %cst_186 {dimension_numbers = #tpu.dot_dimension_numbers<[1], [0], [0], [1], [0, 0, 1, 1], [], []>} : vector<2x34xf32>, vector<34x8xf32>, vector<2x8xf32> -> vector<2x8xf32>
    %529 = vector.extract_strided_slice %469 {offsets = [16, 0], sizes = [8, 32], strides = [1, 1]} : vector<32x32xf32> to vector<8x32xf32>
    %cst_187 = arith.constant dense<0.000000e+00> : vector<2x32xf32>
    %530 = tpu.matmul %528, %529, %cst_187 {dimension_numbers = #tpu.dot_dimension_numbers<[1], [0], [0], [1], [0, 0, 1, 1], [], []>} : vector<2x8xf32>, vector<8x32xf32>, vector<2x32xf32> -> vector<2x32xf32>
    %531 = arith.addf %510, %530 : vector<2x32xf32>
    %532 = vector.extract_strided_slice %463 {offsets = [0, 24], sizes = [2, 8], strides = [1, 1]} : vector<2x32xf32> to vector<2x8xf32>
    %533 = vector.extract_strided_slice %468 {offsets = [0, 24], sizes = [34, 8], strides = [1, 1]} : vector<34x64xf32> to vector<34x8xf32>
    %534 = vector.extract_strided_slice %468 {offsets = [0, 56], sizes = [34, 8], strides = [1, 1]} : vector<34x64xf32> to vector<34x8xf32>
    %cst_188 = arith.constant dense<0.000000e+00> : vector<2x34xf32>
    %535 = tpu.matmul %532, %533, %cst_188 {dimension_numbers = #tpu.dot_dimension_numbers<[1], [1], [0], [0], [0, 0, 1, 0], [], []>} : vector<2x8xf32>, vector<34x8xf32>, vector<2x34xf32> -> vector<2x34xf32>
    %cst_189 = arith.constant 0.353553385 : f32
    %536 = vector.broadcast %cst_189 : f32 to vector<2x34xf32>
    %537 = arith.mulf %535, %536 : vector<2x34xf32>
    %538 = arith.addf %537, %5 : vector<2x34xf32>
    %cst_190 = arith.constant dense<0xFF800000> : vector<2xf32>
    %539 = vector.multi_reduction <maximumf>, %538, %cst_190 [1] : vector<2x34xf32> to vector<2xf32>
    %540 = vector.shape_cast %539 : vector<2xf32> to vector<2x1xf32>
    %541 = vector.broadcast %540 : vector<2x1xf32> to vector<2x34xf32>
    %542 = arith.subf %538, %541 : vector<2x34xf32>
    %543 = math.exp %542 : vector<2x34xf32>
    %cst_191 = arith.constant dense<0.000000e+00> : vector<2xf32>
    %544 = vector.multi_reduction <add>, %543, %cst_191 [1] : vector<2x34xf32> to vector<2xf32>
    %545 = vector.shape_cast %544 : vector<2xf32> to vector<2x1xf32>
    %546 = tpu.reciprocal %545 : vector<2x1xf32> -> vector<2x1xf32>
    %547 = vector.broadcast %546 : vector<2x1xf32> to vector<2x34xf32>
    %548 = arith.mulf %543, %547 : vector<2x34xf32>
    %cst_192 = arith.constant dense<0.000000e+00> : vector<2x8xf32>
    %549 = tpu.matmul %548, %534, %cst_192 {dimension_numbers = #tpu.dot_dimension_numbers<[1], [0], [0], [1], [0, 0, 1, 1], [], []>} : vector<2x34xf32>, vector<34x8xf32>, vector<2x8xf32> -> vector<2x8xf32>
    %550 = vector.extract_strided_slice %469 {offsets = [24, 0], sizes = [8, 32], strides = [1, 1]} : vector<32x32xf32> to vector<8x32xf32>
    %cst_193 = arith.constant dense<0.000000e+00> : vector<2x32xf32>
    %551 = tpu.matmul %549, %550, %cst_193 {dimension_numbers = #tpu.dot_dimension_numbers<[1], [0], [0], [1], [0, 0, 1, 1], [], []>} : vector<2x8xf32>, vector<8x32xf32>, vector<2x32xf32> -> vector<2x32xf32>
    %552 = arith.addf %531, %551 : vector<2x32xf32>
    %c696 = arith.constant 696 : index
    %c0_194 = arith.constant 0 : index
    %553 = vector.load %arg5[%c696, %c0_194] : memref<840x128xf32, #tpu.memory_space<vmem>>, vector<1x32xf32>
    %554 = vector.broadcast %553 : vector<1x32xf32> to vector<2x32xf32>
    %555 = arith.addf %552, %554 : vector<2x32xf32>
    %c704 = arith.constant 704 : index
    %c0_195 = arith.constant 0 : index
    %556 = vector.load %arg5[%c704, %c0_195] : memref<840x128xf32, #tpu.memory_space<vmem>>, vector<32x32xf32>
    %cst_196 = arith.constant dense<0.000000e+00> : vector<2x32xf32>
    %557 = tpu.matmul %555, %556, %cst_196 {dimension_numbers = #tpu.dot_dimension_numbers<[1], [0], [0], [1], [0, 0, 1, 1], [], []>} : vector<2x32xf32>, vector<32x32xf32>, vector<2x32xf32> -> vector<2x32xf32>
    %c736 = arith.constant 736 : index
    %c0_197 = arith.constant 0 : index
    %558 = vector.load %arg5[%c736, %c0_197] : memref<840x128xf32, #tpu.memory_space<vmem>>, vector<1x32xf32>
    %559 = vector.broadcast %558 : vector<1x32xf32> to vector<2x32xf32>
    %560 = arith.addf %557, %559 : vector<2x32xf32>
    %cst_198 = arith.constant dense<0.000000e+00> : vector<2xf32>
    %561 = vector.multi_reduction <add>, %560, %cst_198 [1] : vector<2x32xf32> to vector<2xf32>
    %562 = vector.shape_cast %561 : vector<2xf32> to vector<2x1xf32>
    %cst_199 = arith.constant 3.200000e+01 : f32
    %563 = vector.broadcast %cst_199 : f32 to vector<2x1xf32>
    %564 = arith.divf %562, %563 : vector<2x1xf32>
    %565 = arith.mulf %560, %560 : vector<2x32xf32>
    %cst_200 = arith.constant dense<0.000000e+00> : vector<2xf32>
    %566 = vector.multi_reduction <add>, %565, %cst_200 [1] : vector<2x32xf32> to vector<2xf32>
    %567 = vector.shape_cast %566 : vector<2xf32> to vector<2x1xf32>
    %cst_201 = arith.constant 3.200000e+01 : f32
    %568 = vector.broadcast %cst_201 : f32 to vector<2x1xf32>
    %569 = arith.divf %567, %568 : vector<2x1xf32>
    %570 = vector.broadcast %564 : vector<2x1xf32> to vector<2x32xf32>
    %571 = arith.subf %560, %570 : vector<2x32xf32>
    %572 = arith.mulf %564, %564 : vector<2x1xf32>
    %573 = arith.subf %569, %572 : vector<2x1xf32>
    %cst_202 = arith.constant 9.99999997E-7 : f32
    %574 = vector.broadcast %cst_202 : f32 to vector<2x1xf32>
    %575 = arith.addf %573, %574 : vector<2x1xf32>
    %576 = math.rsqrt %575 : vector<2x1xf32>
    %577 = vector.broadcast %576 : vector<2x1xf32> to vector<2x32xf32>
    %578 = arith.mulf %571, %577 : vector<2x32xf32>
    %c744 = arith.constant 744 : index
    %c0_203 = arith.constant 0 : index
    %579 = vector.load %arg5[%c744, %c0_203] : memref<840x128xf32, #tpu.memory_space<vmem>>, vector<1x32xf32>
    %580 = vector.broadcast %579 : vector<1x32xf32> to vector<2x32xf32>
    %581 = arith.mulf %578, %580 : vector<2x32xf32>
    %c752 = arith.constant 752 : index
    %c0_204 = arith.constant 0 : index
    %582 = vector.load %arg5[%c752, %c0_204] : memref<840x128xf32, #tpu.memory_space<vmem>>, vector<1x32xf32>
    %583 = vector.broadcast %582 : vector<1x32xf32> to vector<2x32xf32>
    %584 = arith.addf %581, %583 : vector<2x32xf32>
    %c760 = arith.constant 760 : index
    %c0_205 = arith.constant 0 : index
    %585 = vector.load %arg5[%c760, %c0_205] : memref<840x128xf32, #tpu.memory_space<vmem>>, vector<32x16xf32>
    %cst_206 = arith.constant dense<0.000000e+00> : vector<2x16xf32>
    %586 = tpu.matmul %584, %585, %cst_206 {dimension_numbers = #tpu.dot_dimension_numbers<[1], [0], [0], [1], [0, 0, 1, 1], [], []>} : vector<2x32xf32>, vector<32x16xf32>, vector<2x16xf32> -> vector<2x16xf32>
    %c792 = arith.constant 792 : index
    %c0_207 = arith.constant 0 : index
    %587 = vector.load %arg5[%c792, %c0_207] : memref<840x128xf32, #tpu.memory_space<vmem>>, vector<1x16xf32>
    %588 = vector.broadcast %587 : vector<1x16xf32> to vector<2x16xf32>
    %589 = arith.addf %586, %588 : vector<2x16xf32>
    %cst_208 = arith.constant 5.000000e-01 : f32
    %590 = vector.broadcast %cst_208 : f32 to vector<2x16xf32>
    %591 = arith.mulf %590, %589 : vector<2x16xf32>
    %cst_209 = arith.constant 0.707106769 : f32
    %592 = vector.broadcast %cst_209 : f32 to vector<2x16xf32>
    %593 = arith.mulf %589, %592 : vector<2x16xf32>
    %cst_210 = arith.constant 0.000000e+00 : f32
    %594 = vector.broadcast %cst_210 : f32 to vector<2x16xf32>
    %595 = arith.cmpf olt, %593, %594 : vector<2x16xf32>
    %cst_211 = arith.constant -1.000000e+00 : f32
    %cst_212 = arith.constant 1.000000e+00 : f32
    %596 = vector.broadcast %cst_211 : f32 to vector<2x16xf32>
    %597 = vector.broadcast %cst_212 : f32 to vector<2x16xf32>
    %598 = arith.select %595, %596, %597 : vector<2x16xi1>, vector<2x16xf32>
    %599 = math.absf %593 : vector<2x16xf32>
    %cst_213 = arith.constant 0.327591091 : f32
    %600 = vector.broadcast %cst_213 : f32 to vector<2x16xf32>
    %601 = arith.mulf %600, %599 : vector<2x16xf32>
    %cst_214 = arith.constant 1.000000e+00 : f32
    %602 = vector.broadcast %cst_214 : f32 to vector<2x16xf32>
    %603 = arith.addf %602, %601 : vector<2x16xf32>
    %cst_215 = arith.constant 1.000000e+00 : f32
    %604 = vector.broadcast %cst_215 : f32 to vector<2x16xf32>
    %605 = arith.divf %604, %603 : vector<2x16xf32>
    %cst_216 = arith.constant 1.06140542 : f32
    %606 = vector.broadcast %cst_216 : f32 to vector<2x16xf32>
    %607 = arith.mulf %606, %605 : vector<2x16xf32>
    %cst_217 = arith.constant -1.45315206 : f32
    %608 = vector.broadcast %cst_217 : f32 to vector<2x16xf32>
    %609 = arith.addf %607, %608 : vector<2x16xf32>
    %610 = arith.mulf %609, %605 : vector<2x16xf32>
    %cst_218 = arith.constant 1.42141378 : f32
    %611 = vector.broadcast %cst_218 : f32 to vector<2x16xf32>
    %612 = arith.addf %610, %611 : vector<2x16xf32>
    %613 = arith.mulf %612, %605 : vector<2x16xf32>
    %cst_219 = arith.constant -0.284496725 : f32
    %614 = vector.broadcast %cst_219 : f32 to vector<2x16xf32>
    %615 = arith.addf %613, %614 : vector<2x16xf32>
    %616 = arith.mulf %615, %605 : vector<2x16xf32>
    %cst_220 = arith.constant 0.254829586 : f32
    %617 = vector.broadcast %cst_220 : f32 to vector<2x16xf32>
    %618 = arith.addf %616, %617 : vector<2x16xf32>
    %619 = arith.mulf %618, %605 : vector<2x16xf32>
    %cst_221 = arith.constant 0.000000e+00 : f32
    %620 = vector.broadcast %cst_221 : f32 to vector<2x16xf32>
    %621 = arith.subf %620, %599 : vector<2x16xf32>
    %622 = arith.mulf %621, %599 : vector<2x16xf32>
    %623 = math.exp %622 : vector<2x16xf32>
    %624 = arith.mulf %619, %623 : vector<2x16xf32>
    %cst_222 = arith.constant 1.000000e+00 : f32
    %625 = vector.broadcast %cst_222 : f32 to vector<2x16xf32>
    %626 = arith.subf %625, %624 : vector<2x16xf32>
    %627 = arith.mulf %598, %626 : vector<2x16xf32>
    %cst_223 = arith.constant 1.000000e+00 : f32
    %628 = vector.broadcast %cst_223 : f32 to vector<2x16xf32>
    %629 = arith.addf %628, %627 : vector<2x16xf32>
    %630 = arith.mulf %591, %629 : vector<2x16xf32>
    %c800 = arith.constant 800 : index
    %c0_224 = arith.constant 0 : index
    %631 = vector.load %arg5[%c800, %c0_224] : memref<840x128xf32, #tpu.memory_space<vmem>>, vector<16x32xf32>
    %cst_225 = arith.constant dense<0.000000e+00> : vector<2x32xf32>
    %632 = tpu.matmul %630, %631, %cst_225 {dimension_numbers = #tpu.dot_dimension_numbers<[1], [0], [0], [1], [0, 0, 1, 1], [], []>} : vector<2x16xf32>, vector<16x32xf32>, vector<2x32xf32> -> vector<2x32xf32>
    %c816 = arith.constant 816 : index
    %c0_226 = arith.constant 0 : index
    %633 = vector.load %arg5[%c816, %c0_226] : memref<840x128xf32, #tpu.memory_space<vmem>>, vector<1x32xf32>
    %634 = vector.broadcast %633 : vector<1x32xf32> to vector<2x32xf32>
    %635 = arith.addf %632, %634 : vector<2x32xf32>
    %636 = arith.addf %635, %560 : vector<2x32xf32>
    %cst_227 = arith.constant dense<0.000000e+00> : vector<2xf32>
    %637 = vector.multi_reduction <add>, %636, %cst_227 [1] : vector<2x32xf32> to vector<2xf32>
    %638 = vector.shape_cast %637 : vector<2xf32> to vector<2x1xf32>
    %cst_228 = arith.constant 3.200000e+01 : f32
    %639 = vector.broadcast %cst_228 : f32 to vector<2x1xf32>
    %640 = arith.divf %638, %639 : vector<2x1xf32>
    %641 = arith.mulf %636, %636 : vector<2x32xf32>
    %cst_229 = arith.constant dense<0.000000e+00> : vector<2xf32>
    %642 = vector.multi_reduction <add>, %641, %cst_229 [1] : vector<2x32xf32> to vector<2xf32>
    %643 = vector.shape_cast %642 : vector<2xf32> to vector<2x1xf32>
    %cst_230 = arith.constant 3.200000e+01 : f32
    %644 = vector.broadcast %cst_230 : f32 to vector<2x1xf32>
    %645 = arith.divf %643, %644 : vector<2x1xf32>
    %646 = vector.broadcast %640 : vector<2x1xf32> to vector<2x32xf32>
    %647 = arith.subf %636, %646 : vector<2x32xf32>
    %648 = arith.mulf %640, %640 : vector<2x1xf32>
    %649 = arith.subf %645, %648 : vector<2x1xf32>
    %cst_231 = arith.constant 9.99999997E-7 : f32
    %650 = vector.broadcast %cst_231 : f32 to vector<2x1xf32>
    %651 = arith.addf %649, %650 : vector<2x1xf32>
    %652 = math.rsqrt %651 : vector<2x1xf32>
    %653 = vector.broadcast %652 : vector<2x1xf32> to vector<2x32xf32>
    %654 = arith.mulf %647, %653 : vector<2x32xf32>
    %c824 = arith.constant 824 : index
    %c0_232 = arith.constant 0 : index
    %655 = vector.load %arg5[%c824, %c0_232] : memref<840x128xf32, #tpu.memory_space<vmem>>, vector<1x32xf32>
    %656 = vector.broadcast %655 : vector<1x32xf32> to vector<2x32xf32>
    %657 = arith.mulf %654, %656 : vector<2x32xf32>
    %c832 = arith.constant 832 : index
    %c0_233 = arith.constant 0 : index
    %658 = vector.load %arg5[%c832, %c0_233] : memref<840x128xf32, #tpu.memory_space<vmem>>, vector<1x32xf32>
    %659 = vector.broadcast %658 : vector<1x32xf32> to vector<2x32xf32>
    %660 = arith.addf %657, %659 : vector<2x32xf32>
    %c0_234 = arith.constant 0 : index
    %c0_235 = arith.constant 0 : index
    %c0_236 = arith.constant 0 : index
    %661 = vector.load %arg6[%c0_234, %c0_235, %c0_236] : memref<1x2x32xf32, #tpu.memory_space<vmem>>, vector<1x2x32xf32>
    %662 = vector.shape_cast %661 : vector<1x2x32xf32> to vector<2x32xf32>
    %663 = vector.shape_cast %660 : vector<2x32xf32> to vector<1x2x32xf32>
    tpu.vector_store %arg6[%c0_234, %c0_235, %c0_236], %663 {strides = array<i32>} : memref<1x2x32xf32, #tpu.memory_space<vmem>>, vector<1x2x32xf32>,
    return
  }
  func.func @transform_0(%arg0: i32) -> (i32, i32, i32) {
    %c0_i32 = arith.constant 0 : i32
    %c0_i32_0 = arith.constant 0 : i32
    %c0_i32_1 = arith.constant 0 : i32
    return %arg0, %c0_i32, %c0_i32_0 : i32, i32, i32
  }
  func.func @transform_1(%arg0: i32) -> (i32, i32, i32) {
    %c0_i32 = arith.constant 0 : i32
    %c0_i32_0 = arith.constant 0 : i32
    %c0_i32_1 = arith.constant 0 : i32
    return %arg0, %c0_i32, %c0_i32_0 : i32, i32, i32
  }
  func.func @transform_2(%arg0: i32) -> (i32, i32) {
    %c0_i32 = arith.constant 0 : i32
    %c0_i32_0 = arith.constant 0 : i32
    %c0_i32_1 = arith.constant 0 : i32
    return %c0_i32, %c0_i32_0 : i32, i32
  }
  func.func @transform_3(%arg0: i32) -> (i32, i32) {
    %c0_i32 = arith.constant 0 : i32
    %c0_i32_0 = arith.constant 0 : i32
    %c0_i32_1 = arith.constant 0 : i32
    return %c0_i32, %c0_i32_0 : i32, i32
  }
  func.func @transform_4(%arg0: i32) -> (i32, i32) {
    %c0_i32 = arith.constant 0 : i32
    %c0_i32_0 = arith.constant 0 : i32
    %c0_i32_1 = arith.constant 0 : i32
    return %c0_i32, %c0_i32_0 : i32, i32
  }
  func.func @transform_5(%arg0: i32) -> (i32, i32, i32) {
    %c0_i32 = arith.constant 0 : i32
    %c0_i32_0 = arith.constant 0 : i32
    %c0_i32_1 = arith.constant 0 : i32
    return %arg0, %c0_i32, %c0_i32_0 : i32, i32, i32
  }
}

</mosaic_0001>

<llo_original>
// kernel: fwd.1
$region0: #{fwd.1}
  #allocation0 [shape = 'u32[]', space=smem, size = 0x4, offset = 0x4, fixed_abs, tag = 'smem constant byte address 0x4 - core index']
  #allocation1 [shape = 'u32[144,128]{1,0:T(1,128)}', space=vmem, size = 0x12000, scoped, tag = 'internal scratch']
  %s0 = inlined_call_operand.vmem [shape: f32[1,34,48], index: 0, kind: input, shape index: {}]
  %s1 = inlined_call_operand.vmem [shape: f32[1,2,8], index: 1, kind: input, shape index: {}]
  %s2 = inlined_call_operand.vmem [shape: f32[34,34], index: 2, kind: input, shape index: {}]
  %s3 = inlined_call_operand.vmem [shape: f32[2,34], index: 3, kind: input, shape index: {}]
  %s4 = inlined_call_operand.vmem [shape: f32[840,128], index: 4, kind: input, shape index: {}]
  %s5 = inlined_call_operand.hbm [shape: f32[1,2,32], index: 5, kind: output, shape index: {}]
  %s6 = sld [smem:[#allocation0]]
  $region30: #{fwd.1} parent=0
    _
  %s8 = ssub.s32 1, %s6
  %s9 = scalar_select 0, %s8, %s6
  $region1: #{fwd.1} parent=0
    #allocation2 [shape = 'u8[1024]{0}', space=vmem, size = 0x400, scoped, tag = 'output window, operand 0, single buffered']
    #allocation3 [shape = 's32[1]{0}', space=sflag, size = 0x4, scoped, tag = 'scoped memory for fwd.1']
    %10 = vsyncpa [#allocation3], 0
    // Predicated region
    $region2: #{fwd.1} parent=1 // pred_check
      _
    $region3: #{fwd.1} parent=1 // pred_check_branch
      %12 = sbr.rel (0) target = $region5
    $region4: #{fwd.1} parent=1 // pred_region
      _
    $region5: #{fwd.1} parent=1 // pred_fallthru
      _
    // Predicated region
    $region6: #{fwd.1} parent=1 // pred_check
      _
    $region7: #{fwd.1} parent=1 // pred_check_branch
      %14 = sbr.rel (0) target = $region9
    $region8: #{fwd.1} parent=1 // pred_region
      _
    $region9: #{fwd.1} parent=1 // pred_fallthru
      _
    // Predicated region
    $region10: #{fwd.1} parent=1 // pred_check
      _
    $region11: #{fwd.1} parent=1 // pred_check_branch
      %16 = sbr.rel (0) target = $region13
    $region12: #{fwd.1} parent=1 // pred_region
      _
    $region13: #{fwd.1} parent=1 // pred_fallthru
      _
    // Predicated region
    $region14: #{fwd.1} parent=1 // pred_check
      _
    $region15: #{fwd.1} parent=1 // pred_check_branch
      %18 = sbr.rel (0) target = $region17
    $region16: #{fwd.1} parent=1 // pred_region
      _
    $region17: #{fwd.1} parent=1 // pred_fallthru
      _
    // Predicated region
    $region18: #{fwd.1} parent=1 // pred_check
      _
    $region19: #{fwd.1} parent=1 // pred_check_branch
      %20 = sbr.rel (0) target = $region21
    $region20: #{fwd.1} parent=1 // pred_region
      _
    $region21: #{fwd.1} parent=1 // pred_fallthru
      _
    %v21 = vld [vmem:[%s0] sm:$0xff]
    %v22 = vld [vmem:[%s0 + $0x8] sm:$0xff]
    %v23 = vld [vmem:[%s0 + $0x10] sm:$0xff]
    %v24 = vld [vmem:[%s0 + $0x18] sm:$0xff]
    %v25 = vld [vmem:[%s0 + $0x20] sm:$0x3]
    %v26 = vld [vmem:[%s1] sm:$0x3]
    %v27 = vld [vmem:[%s2] sm:$0xff]
    %v28 = vld [vmem:[%s2 + $0x8] sm:$0xff]
    %v29 = vld [vmem:[%s2 + $0x10] sm:$0xff]
    %v30 = vld [vmem:[%s2 + $0x18] sm:$0xff]
    %v31 = vld [vmem:[%s2 + $0x20] sm:$0x3]
    %v32 = vld [vmem:[%s3] sm:$0x3]
    %v33 = vld [vmem:[%s4 + $0x30] sm:$0xff]
    %v34 = vld [vmem:[%s4 + $0x60] sm:$0x1]
    %v35 = vlaneseq
    %v36 = vshrl.u32 %v35, 7
    %v37 = vsub.s32 0, %v36
    %v38 = vrot.slane %v34, %v37
    %vm39 = vcmask 64512
    %v41 = vsel %vm39, %v26, 0
    %43 = vmatprep.subr.mxu0 0.0
    %44 = vmatpush1.msra.mxu0 %v33
    %45 = vmatprep.subr.mxu0 0.0
    %46 = vmatpush1.msra.mxu0 0.0
    %47 = vmatprep.subr.mxu0 0.0
    %48 = vmatpush1.msra.mxu0 0.0
    %49 = vmatprep.subr.mxu0 0.0
    %50 = vmatpush1.msra.mxu0 0.0
    %51 = vmatprep.subr.mxu0 0.0
    %52 = vmatpush1.msra.mxu0 0.0
    %53 = vmatprep.subr.mxu0 0.0
    %54 = vmatpush1.msra.mxu0 0.0
    %55 = vmatprep.subr.mxu0 0.0
    %56 = vmatpush1.msra.mxu0 0.0
    %57 = vmatprep.subr.mxu0 0.0
    %58 = vmatpush1.msra.mxu0 0.0
    %59 = vmatprep.subr.mxu0 0.0
    %60 = vmatpush1.msra.mxu0 0.0
    %61 = vmatprep.subr.mxu0 0.0
    %62 = vmatpush1.msra.mxu0 0.0
    %63 = vmatprep.subr.mxu0 0.0
    %64 = vmatpush1.msra.mxu0 0.0
    %65 = vmatprep.subr.mxu0 0.0
    %66 = vmatpush1.msra.mxu0 0.0
    %67 = vmatprep.subr.mxu0 0.0
    %68 = vmatpush1.msra.mxu0 0.0
    %69 = vmatprep.subr.mxu0 0.0
    %70 = vmatpush1.msra.mxu0 0.0
    %71 = vmatprep.subr.mxu0 0.0
    %72 = vmatpush1.msra.mxu0 0.0
    %73 = vmatprep.subr.mxu0 0.0
    %74 = vmatpush1.msra.mxu0 0.0
    %75 = vmatprep.subr.mxu0 0.0
    %76 = vmatpush1.msra.mxu0 0.0
    %77 = vmatprep.subr.mxu0 0.0
    %78 = vmatpush1.msra.mxu0 0.0
    %79 = vmatprep.subr.mxu0 0.0
    %80 = vmatpush1.msra.mxu0 0.0
    %81 = vmatprep.subr.mxu0 0.0
    %82 = vmatpush1.msra.mxu0 0.0
    %83 = vmatprep.subr.mxu0 0.0
    %84 = vmatpush1.msra.mxu0 0.0
    %85 = vmatprep.subr.mxu0 0.0
    %86 = vmatpush1.msra.mxu0 0.0
    %87 = vmatprep.subr.mxu0 0.0
    %88 = vmatpush1.msra.mxu0 0.0
    %89 = vmatprep.subr.mxu0 0.0
    %90 = vmatpush1.msra.mxu0 0.0
    %91 = vmatprep.subr.mxu0 0.0
    %92 = vmatpush1.msra.mxu0 0.0
    %93 = vmatprep.subr.mxu0 0.0
    %94 = vmatpush1.msra.mxu0 0.0
    %95 = vmatprep.subr.mxu0 0.0
    %96 = vmatpush1.msra.mxu0 0.0
    %97 = vmatprep.subr.mxu0 0.0
    %98 = vmatpush1.msra.mxu0 0.0
    %99 = vmatprep.subr.mxu0 0.0
    %100 = vmatpush1.msra.mxu0 0.0
    %101 = vmatprep.subr.mxu0 0.0
    %102 = vmatpush1.msra.mxu0 0.0
    %103 = vmatprep.subr.mxu0 0.0
    %104 = vmatpush1.msra.mxu0 0.0
    %105 = vmatprep.subr.mxu0 0.0
    %106 = vmatpush1.msra.mxu0 0.0
    %107 = vmatprep.mubr.f32.mxu0 0.0
    %108 = vmatmul.mubr.f32.gmra.mrb[0].mxu0 %v41
    %v109 = vpop.f32.mrb[0].mxu0
    %v110 = vadd.f32 %v38, %v109
    %v111 = vpop.f32.mrb[0].mxu0
    %112 = vdwg.mxu0
    %v113 = vld [vmem:[%s4] sm:$0xff]
    %v114 = vld [vmem:[%s4 + $0x8] sm:$0xff]
    %v115 = vld [vmem:[%s4 + $0x10] sm:$0xff]
    %v116 = vld [vmem:[%s4 + $0x18] sm:$0xff]
    %v117 = vld [vmem:[%s4 + $0x20] sm:$0xff]
    %v118 = vld [vmem:[%s4 + $0x28] sm:$0xff]
    %v119 = vld [vmem:[%s4 + $0x38] sm:$0xff]
    %v120 = vld [vmem:[%s4 + $0x40] sm:$0xff]
    %v121 = vld [vmem:[%s4 + $0x48] sm:$0xff]
    %v122 = vld [vmem:[%s4 + $0x50] sm:$0xff]
    %v123 = vld [vmem:[%s4 + $0x58] sm:$0x3]
    %vm124 = vcmask 392192
    %v126 = vsel %vm124, %v21, 0
    %v129 = vsel %vm124, %v22, 0
    %v132 = vsel %vm124, %v23, 0
    %v135 = vsel %vm124, %v24, 0
    %v138 = vsel %vm124, %v25, 0
    %140 = vmatprep.subr.mxu0 0.0
    %141 = vmatpush1.msra.mxu0 %v113
    %142 = vmatprep.subr.mxu0 0.0
    %143 = vmatpush1.msra.mxu0 %v114
    %144 = vmatprep.subr.mxu0 0.0
    %145 = vmatpush1.msra.mxu0 %v115
    %146 = vmatprep.subr.mxu0 0.0
    %147 = vmatpush1.msra.mxu0 %v116
    %148 = vmatprep.subr.mxu0 0.0
    %149 = vmatpush1.msra.mxu0 %v117
    %150 = vmatprep.subr.mxu0 0.0
    %151 = vmatpush1.msra.mxu0 %v118
    %152 = vmatprep.subr.mxu0 0.0
    %153 = vmatpush1.msra.mxu0 0.0
    %154 = vmatprep.subr.mxu0 0.0
    %155 = vmatpush1.msra.mxu0 0.0
    %156 = vmatprep.subr.mxu0 0.0
    %157 = vmatpush1.msra.mxu0 0.0
    %158 = vmatprep.subr.mxu0 0.0
    %159 = vmatpush1.msra.mxu0 0.0
    %160 = vmatprep.subr.mxu0 0.0
    %161 = vmatpush1.msra.mxu0 0.0
    %162 = vmatprep.subr.mxu0 0.0
    %163 = vmatpush1.msra.mxu0 0.0
    %164 = vmatprep.subr.mxu0 0.0
    %165 = vmatpush1.msra.mxu0 0.0
    %166 = vmatprep.subr.mxu0 0.0
    %167 = vmatpush1.msra.mxu0 0.0
    %168 = vmatprep.subr.mxu0 0.0
    %169 = vmatpush1.msra.mxu0 0.0
    %170 = vmatprep.subr.mxu0 0.0
    %171 = vmatpush1.msra.mxu0 0.0
    %172 = vmatprep.subr.mxu0 0.0
    %173 = vmatpush1.msra.mxu0 0.0
    %174 = vmatprep.subr.mxu0 0.0
    %175 = vmatpush1.msra.mxu0 0.0
    %176 = vmatprep.subr.mxu0 0.0
    %177 = vmatpush1.msra.mxu0 0.0
    %178 = vmatprep.subr.mxu0 0.0
    %179 = vmatpush1.msra.mxu0 0.0
    %180 = vmatprep.subr.mxu0 0.0
    %181 = vmatpush1.msra.mxu0 0.0
    %182 = vmatprep.subr.mxu0 0.0
    %183 = vmatpush1.msra.mxu0 0.0
    %184 = vmatprep.subr.mxu0 0.0
    %185 = vmatpush1.msra.mxu0 0.0
    %186 = vmatprep.subr.mxu0 0.0
    %187 = vmatpush1.msra.mxu0 0.0
    %188 = vmatprep.subr.mxu0 0.0
    %189 = vmatpush1.msra.mxu0 0.0
    %190 = vmatprep.subr.mxu0 0.0
    %191 = vmatpush1.msra.mxu0 0.0
    %192 = vmatprep.subr.mxu0 0.0
    %193 = vmatpush1.msra.mxu0 0.0
    %194 = vmatprep.subr.mxu0 0.0
    %195 = vmatpush1.msra.mxu0 0.0
    %196 = vmatprep.subr.mxu0 0.0
    %197 = vmatpush1.msra.mxu0 0.0
    %198 = vmatprep.subr.mxu0 0.0
    %199 = vmatpush1.msra.mxu0 0.0
    %200 = vmatprep.subr.mxu0 0.0
    %201 = vmatpush1.msra.mxu0 0.0
    %202 = vmatprep.subr.mxu0 0.0
    %203 = vmatpush1.msra.mxu0 0.0
    %204 = vmatprep.mubr.f32.mxu0 0.0
    %205 = vmatmul.mubr.f32.gmra.mrb[0].mxu0 %v126
    %v206 = vpop.f32.mrb[0].mxu0
    %v207 = vadd.f32 %v119, %v206
    %v208 = vpop.f32.mrb[0].mxu0
    %209 = vmatprep.mubr.f32.mxu0 0.0
    %210 = vmatmul.mubr.f32.gmra.mrb[0].mxu0 %v129
    %v211 = vpop.f32.mrb[0].mxu0
    %v212 = vadd.f32 %v120, %v211
    %v213 = vpop.f32.mrb[0].mxu0
    %214 = vmatprep.mubr.f32.mxu0 0.0
    %215 = vmatmul.mubr.f32.gmra.mrb[0].mxu0 %v132
    %v216 = vpop.f32.mrb[0].mxu0
    %v217 = vadd.f32 %v121, %v216
    %v218 = vpop.f32.mrb[0].mxu0
    %219 = vmatprep.mubr.f32.mxu0 0.0
    %220 = vmatmul.mubr.f32.gmra.mrb[0].mxu0 %v135
    %v221 = vpop.f32.mrb[0].mxu0
    %v222 = vadd.f32 %v122, %v221
    %v223 = vpop.f32.mrb[0].mxu0
    %224 = vmatprep.mubr.f32.mxu0 0.0
    %225 = vmatmul.mubr.f32.gmra.mrb[0].mxu0 %v138
    %v226 = vpop.f32.mrb[0].mxu0
    %v227 = vadd.f32 %v123, %v226
    %v228 = vpop.f32.mrb[0].mxu0
    %229 = vdwg.mxu0
    %vm230 = vcmask 261120
    %v231 = vsel %vm230, %v207, 0.0
    %232 = vadd.xlane.f32.xlu0 %v231
    %v233 = vpop.xlane.xlu0 %232
    %v234 = vsel %vm230, %v212, 0.0
    %235 = vadd.xlane.f32.xlu0 %v234
    %v236 = vpop.xlane.xlu0 %235
    %v237 = vsel %vm230, %v217, 0.0
    %238 = vadd.xlane.f32.xlu0 %v237
    %v239 = vpop.xlane.xlu0 %238
    %v240 = vsel %vm230, %v222, 0.0
    %241 = vadd.xlane.f32.xlu0 %v240
    %v242 = vpop.xlane.xlu0 %241
    %vm243 = vcmask 254976
    %v244 = vsel %vm243, %v227, 0.0
    %245 = vadd.xlane.f32.xlu0 %v244
    %v246 = vpop.xlane.xlu0 %245
    %v247 = vrcp.pop 32.0
    %v248 = vmul.f32 %v233, %v247
    %v249 = vmul.f32 %v236, %v247
    %v250 = vmul.f32 %v239, %v247
    %v251 = vmul.f32 %v242, %v247
    %v252 = vmul.f32 %v246, %v247
    %v253 = vmul.f32 %v207, %v207
    %v254 = vmul.f32 %v212, %v212
    %v255 = vmul.f32 %v217, %v217
    %v256 = vmul.f32 %v222, %v222
    %v257 = vmul.f32 %v227, %v227
    %v258 = vsel %vm230, %v253, 0.0
    %259 = vadd.xlane.f32.xlu0 %v258
    %v260 = vpop.xlane.xlu0 %259
    %v261 = vsel %vm230, %v254, 0.0
    %262 = vadd.xlane.f32.xlu0 %v261
    %v263 = vpop.xlane.xlu0 %262
    %v264 = vsel %vm230, %v255, 0.0
    %265 = vadd.xlane.f32.xlu0 %v264
    %v266 = vpop.xlane.xlu0 %265
    %v267 = vsel %vm230, %v256, 0.0
    %268 = vadd.xlane.f32.xlu0 %v267
    %v269 = vpop.xlane.xlu0 %268
    %v270 = vsel %vm243, %v257, 0.0
    %271 = vadd.xlane.f32.xlu0 %v270
    %v272 = vpop.xlane.xlu0 %271
    %v273 = vmul.f32 %v260, %v247
    %v274 = vmul.f32 %v263, %v247
    %v275 = vmul.f32 %v266, %v247
    %v276 = vmul.f32 %v269, %v247
    %v277 = vmul.f32 %v272, %v247
    %v278 = vsub.f32 %v207, %v248
    %v279 = vsub.f32 %v212, %v249
    %v280 = vsub.f32 %v217, %v250
    %v281 = vsub.f32 %v222, %v251
    %v282 = vsub.f32 %v227, %v252
    %v283 = vmul.f32 %v248, %v248
    %v284 = vmul.f32 %v249, %v249
    %v285 = vmul.f32 %v250, %v250
    %v286 = vmul.f32 %v251, %v251
    %v287 = vmul.f32 %v252, %v252
    %v288 = vsub.f32 %v273, %v283
    %v289 = vsub.f32 %v274, %v284
    %v290 = vsub.f32 %v275, %v285
    %v291 = vsub.f32 %v276, %v286
    %v292 = vsub.f32 %v277, %v287
    %v293 = vadd.f32 %v288, 1e-06
    %v294 = vadd.f32 %v289, 1e-06
    %v295 = vadd.f32 %v290, 1e-06
    %v296 = vadd.f32 %v291, 1e-06
    %v297 = vadd.f32 %v292, 1e-06
    %v298 = vrsqrt.pop %v293
    %v299 = vrsqrt.pop %v294
    %v300 = vrsqrt.pop %v295
    %v301 = vrsqrt.pop %v296
    %v302 = vrsqrt.pop %v297
    %v303 = vmul.f32 %v278, %v298
    %v304 = vmul.f32 %v279, %v299
    %v305 = vmul.f32 %v280, %v300
    %v306 = vmul.f32 %v281, %v301
    %v307 = vmul.f32 %v282, %v302
    %v308 = vld [vmem:[%s4 + $0xc8] sm:$0x1]
    %v309 = vlaneseq
    %v310 = vshrl.u32 %v309, 7
    %v311 = vsub.s32 0, %v310
    %v312 = vrot.slane %v308, %v311
    %v313 = vmul.f32 %v303, %v312
    %v314 = vmul.f32 %v304, %v312
    %v315 = vmul.f32 %v305, %v312
    %v316 = vmul.f32 %v306, %v312
    %v317 = vmul.f32 %v307, %v312
    %v318 = vld [vmem:[%s4 + $0xd0] sm:$0x1]
    %v319 = vlaneseq
    %v320 = vshrl.u32 %v319, 7
    %v321 = vsub.s32 0, %v320
    %v322 = vrot.slane %v318, %v321
    %v323 = vadd.f32 %v313, %v322
    %v324 = vadd.f32 %v314, %v322
    %v325 = vadd.f32 %v315, %v322
    %v326 = vadd.f32 %v316, %v322
    %v327 = vadd.f32 %v317, %v322
    %v328 = vld [vmem:[%s4 + $0x78] sm:$0xff]
    %v329 = vld [vmem:[%s4 + $0x80] sm:$0xff]
    %v330 = vld [vmem:[%s4 + $0x88] sm:$0xff]
    %v331 = vld [vmem:[%s4 + $0x90] sm:$0xff]
    %v332 = vld [vmem:[%s4 + $0x98] sm:$0x1]
    %v333 = vlaneseq
    %v334 = vshrl.u32 %v333, 7
    %v335 = vsub.s32 0, %v334
    %v336 = vrot.slane %v332, %v335
    %v338 = vsel %vm230, %v323, 0
    %v341 = vsel %vm230, %v324, 0
    %v344 = vsel %vm230, %v325, 0
    %v347 = vsel %vm230, %v326, 0
    %v350 = vsel %vm230, %v327, 0
    %352 = vmatprep.subr.mxu0 0.0
    %353 = vmatpush1.msra.mxu0 %v328
    %354 = vmatprep.subr.mxu0 0.0
    %355 = vmatpush1.msra.mxu0 %v329
    %356 = vmatprep.subr.mxu0 0.0
    %357 = vmatpush1.msra.mxu0 %v330
    %358 = vmatprep.subr.mxu0 0.0
    %359 = vmatpush1.msra.mxu0 %v331
    %360 = vmatprep.subr.mxu0 0.0
    %361 = vmatpush1.msra.mxu0 0.0
    %362 = vmatprep.subr.mxu0 0.0
    %363 = vmatpush1.msra.mxu0 0.0
    %364 = vmatprep.subr.mxu0 0.0
    %365 = vmatpush1.msra.mxu0 0.0
    %366 = vmatprep.subr.mxu0 0.0
    %367 = vmatpush1.msra.mxu0 0.0
    %368 = vmatprep.subr.mxu0 0.0
    %369 = vmatpush1.msra.mxu0 0.0
    %370 = vmatprep.subr.mxu0 0.0
    %371 = vmatpush1.msra.mxu0 0.0
    %372 = vmatprep.subr.mxu0 0.0
    %373 = vmatpush1.msra.mxu0 0.0
    %374 = vmatprep.subr.mxu0 0.0
    %375 = vmatpush1.msra.mxu0 0.0
    %376 = vmatprep.subr.mxu0 0.0
    %377 = vmatpush1.msra.mxu0 0.0
    %378 = vmatprep.subr.mxu0 0.0
    %379 = vmatpush1.msra.mxu0 0.0
    %380 = vmatprep.subr.mxu0 0.0
    %381 = vmatpush1.msra.mxu0 0.0
    %382 = vmatprep.subr.mxu0 0.0
    %383 = vmatpush1.msra.mxu0 0.0
    %384 = vmatprep.subr.mxu0 0.0
    %385 = vmatpush1.msra.mxu0 0.0
    %386 = vmatprep.subr.mxu0 0.0
    %387 = vmatpush1.msra.mxu0 0.0
    %388 = vmatprep.subr.mxu0 0.0
    %389 = vmatpush1.msra.mxu0 0.0
    %390 = vmatprep.subr.mxu0 0.0
    %391 = vmatpush1.msra.mxu0 0.0
    %392 = vmatprep.subr.mxu0 0.0
    %393 = vmatpush1.msra.mxu0 0.0
    %394 = vmatprep.subr.mxu0 0.0
    %395 = vmatpush1.msra.mxu0 0.0
    %396 = vmatprep.subr.mxu0 0.0
    %397 = vmatpush1.msra.mxu0 0.0
    %398 = vmatprep.subr.mxu0 0.0
    %399 = vmatpush1.msra.mxu0 0.0
    %400 = vmatprep.subr.mxu0 0.0
    %401 = vmatpush1.msra.mxu0 0.0
    %402 = vmatprep.subr.mxu0 0.0
    %403 = vmatpush1.msra.mxu0 0.0
    %404 = vmatprep.subr.mxu0 0.0
    %405 = vmatpush1.msra.mxu0 0.0
    %406 = vmatprep.subr.mxu0 0.0
    %407 = vmatpush1.msra.mxu0 0.0
    %408 = vmatprep.subr.mxu0 0.0
    %409 = vmatpush1.msra.mxu0 0.0
    %410 = vmatprep.subr.mxu0 0.0
    %411 = vmatpush1.msra.mxu0 0.0
    %412 = vmatprep.subr.mxu0 0.0
    %413 = vmatpush1.msra.mxu0 0.0
    %414 = vmatprep.subr.mxu0 0.0
    %415 = vmatpush1.msra.mxu0 0.0
    %416 = vmatprep.mubr.f32.mxu0 0.0
    %417 = vmatmul.mubr.f32.gmra.mrb[0].mxu0 %v338
    %v418 = vpop.f32.mrb[0].mxu0
    %v419 = vadd.f32 %v336, %v418
    %v420 = vpop.f32.mrb[0].mxu0
    %421 = vmatprep.mubr.f32.mxu0 0.0
    %422 = vmatmul.mubr.f32.gmra.mrb[0].mxu0 %v341
    %v423 = vpop.f32.mrb[0].mxu0
    %v424 = vadd.f32 %v336, %v423
    %v425 = vpop.f32.mrb[0].mxu0
    %426 = vmatprep.mubr.f32.mxu0 0.0
    %427 = vmatmul.mubr.f32.gmra.mrb[0].mxu0 %v344
    %v428 = vpop.f32.mrb[0].mxu0
    %v429 = vadd.f32 %v336, %v428
    %v430 = vpop.f32.mrb[0].mxu0
    %431 = vmatprep.mubr.f32.mxu0 0.0
    %432 = vmatmul.mubr.f32.gmra.mrb[0].mxu0 %v347
    %v433 = vpop.f32.mrb[0].mxu0
    %v434 = vadd.f32 %v336, %v433
    %v435 = vpop.f32.mrb[0].mxu0
    %436 = vmatprep.mubr.f32.mxu0 0.0
    %437 = vmatmul.mubr.f32.gmra.mrb[0].mxu0 %v350
    %v438 = vpop.f32.mrb[0].mxu0
    %v439 = vadd.f32 %v336, %v438
    %v440 = vpop.f32.mrb[0].mxu0
    %441 = vdwg.mxu0
    %v442 = vld [vmem:[%s4 + $0xa0] sm:$0xff]
    %v443 = vld [vmem:[%s4 + $0xa8] sm:$0xff]
    %v444 = vld [vmem:[%s4 + $0xb0] sm:$0xff]
    %v445 = vld [vmem:[%s4 + $0xb8] sm:$0xff]
    %451 = vrot.lane.b32.xlu0 %v419, 96
    %v452 = vpop.permute.xlu0 %451
    %453 = vrot.lane.b32.xlu0 %v424, 96
    %v454 = vpop.permute.xlu0 %453
    %455 = vrot.lane.b32.xlu0 %v429, 96
    %v456 = vpop.permute.xlu0 %455
    %457 = vrot.lane.b32.xlu0 %v434, 96
    %v458 = vpop.permute.xlu0 %457
    %459 = vrot.lane.b32.xlu0 %v439, 96
    %v460 = vpop.permute.xlu0 %459
    %v461 = vsel %vm39, %v419, 0
    %v463 = vsel %vm39, %v424, 0
    %v465 = vsel %vm39, %v429, 0
    %v467 = vsel %vm39, %v434, 0
    %v469 = vsel %vm39, %v439, 0
    %v471 = vsel %vm39, %v452, 0
    %v473 = vsel %vm39, %v454, 0
    %v475 = vsel %vm39, %v456, 0
    %v477 = vsel %vm39, %v458, 0
    %v479 = vsel %vm39, %v460, 0
    %481 = vmatprep.subr.mxu0 0.0
    %482 = vmatpush1.xpose.msra.mxu0 %v471
    %483 = vmatprep.subr.mxu0 0.0
    %484 = vmatpush1.xpose.msra.mxu0 %v473
    %485 = vmatprep.subr.mxu0 0.0
    %486 = vmatpush1.xpose.msra.mxu0 %v475
    %487 = vmatprep.subr.mxu0 0.0
    %488 = vmatpush1.xpose.msra.mxu0 %v477
    %489 = vmatprep.subr.mxu0 0.0
    %490 = vmatpush1.xpose.msra.mxu0 %v479
    %491 = vmatprep.subr.mxu0 0.0
    %492 = vmatpush1.xpose.msra.mxu0 0.0
    %493 = vmatprep.subr.mxu0 0.0
    %494 = vmatpush1.xpose.msra.mxu0 0.0
    %495 = vmatprep.subr.mxu0 0.0
    %496 = vmatpush1.xpose.msra.mxu0 0.0
    %497 = vmatprep.subr.mxu0 0.0
    %498 = vmatpush1.xpose.msra.mxu0 0.0
    %499 = vmatprep.subr.mxu0 0.0
    %500 = vmatpush1.xpose.msra.mxu0 0.0
    %501 = vmatprep.subr.mxu0 0.0
    %502 = vmatpush1.xpose.msra.mxu0 0.0
    %503 = vmatprep.subr.mxu0 0.0
    %504 = vmatpush1.xpose.msra.mxu0 0.0
    %505 = vmatprep.subr.mxu0 0.0
    %506 = vmatpush1.xpose.msra.mxu0 0.0
    %507 = vmatprep.subr.mxu0 0.0
    %508 = vmatpush1.xpose.msra.mxu0 0.0
    %509 = vmatprep.subr.mxu0 0.0
    %510 = vmatpush1.xpose.msra.mxu0 0.0
    %511 = vmatprep.subr.mxu0 0.0
    %512 = vmatpush1.xpose.msra.mxu0 0.0
    %513 = vmatprep.subr.mxu0 0.0
    %514 = vmatpush1.xpose.msra.mxu0 0.0
    %515 = vmatprep.subr.mxu0 0.0
    %516 = vmatpush1.xpose.msra.mxu0 0.0
    %517 = vmatprep.subr.mxu0 0.0
    %518 = vmatpush1.xpose.msra.mxu0 0.0
    %519 = vmatprep.subr.mxu0 0.0
    %520 = vmatpush1.xpose.msra.mxu0 0.0
    %521 = vmatprep.subr.mxu0 0.0
    %522 = vmatpush1.xpose.msra.mxu0 0.0
    %523 = vmatprep.subr.mxu0 0.0
    %524 = vmatpush1.xpose.msra.mxu0 0.0
    %525 = vmatprep.subr.mxu0 0.0
    %526 = vmatpush1.xpose.msra.mxu0 0.0
    %527 = vmatprep.subr.mxu0 0.0
    %528 = vmatpush1.xpose.msra.mxu0 0.0
    %529 = vmatprep.subr.mxu0 0.0
    %530 = vmatpush1.xpose.msra.mxu0 0.0
    %531 = vmatprep.subr.mxu0 0.0
    %532 = vmatpush1.xpose.msra.mxu0 0.0
    %533 = vmatprep.subr.mxu0 0.0
    %534 = vmatpush1.xpose.msra.mxu0 0.0
    %535 = vmatprep.subr.mxu0 0.0
    %536 = vmatpush1.xpose.msra.mxu0 0.0
    %537 = vmatprep.subr.mxu0 0.0
    %538 = vmatpush1.xpose.msra.mxu0 0.0
    %539 = vmatprep.subr.mxu0 0.0
    %540 = vmatpush1.xpose.msra.mxu0 0.0
    %541 = vmatprep.subr.mxu0 0.0
    %542 = vmatpush1.xpose.msra.mxu0 0.0
    %543 = vmatprep.subr.mxu0 0.0
    %544 = vmatpush1.xpose.msra.mxu0 0.0
    %545 = vmatprep.mubr.f32.mxu0 0.0
    %546 = vmatmul.mubr.f32.gmra.mrb[0].mxu0 %v461
    %v547 = vpop.f32.mrb[0].mxu0
    %v548 = vadd.f32 0.0, %v547
    %v549 = vpop.f32.mrb[0].mxu0
    %550 = vmatprep.mubr.f32.mxu0 0.0
    %551 = vmatmul.mubr.f32.gmra.mrb[0].mxu0 %v463
    %v552 = vpop.f32.mrb[0].mxu0
    %v553 = vadd.f32 0.0, %v552
    %v554 = vpop.f32.mrb[0].mxu0
    %555 = vmatprep.mubr.f32.mxu0 0.0
    %556 = vmatmul.mubr.f32.gmra.mrb[0].mxu0 %v465
    %v557 = vpop.f32.mrb[0].mxu0
    %v558 = vadd.f32 0.0, %v557
    %v559 = vpop.f32.mrb[0].mxu0
    %560 = vmatprep.mubr.f32.mxu0 0.0
    %561 = vmatmul.mubr.f32.gmra.mrb[0].mxu0 %v467
    %v562 = vpop.f32.mrb[0].mxu0
    %v563 = vadd.f32 0.0, %v562
    %v564 = vpop.f32.mrb[0].mxu0
    %565 = vmatprep.mubr.f32.mxu0 0.0
    %566 = vmatmul.mubr.f32.gmra.mrb[0].mxu0 %v469
    %v567 = vpop.f32.mrb[0].mxu0
    %v568 = vadd.f32 0.0, %v567
    %v569 = vpop.f32.mrb[0].mxu0
    %570 = vdwg.mxu0
    %v571 = vmul.f32 %v548, 0.35355338
    %v572 = vmul.f32 %v553, 0.35355338
    %v573 = vmul.f32 %v558, 0.35355338
    %v574 = vmul.f32 %v563, 0.35355338
    %v575 = vmul.f32 %v568, 0.35355338
    %v576 = vadd.f32 %v571, %v27
    %v577 = vadd.f32 %v572, %v28
    %v578 = vadd.f32 %v573, %v29
    %v579 = vadd.f32 %v574, %v30
    %v580 = vadd.f32 %v575, %v31
    %vm581 = vcmask 277504
    %v582 = vsel %vm581, %v576, -inf
    %583 = vmax.xlane.f32.xlu0 %v582
    %v584 = vpop.xlane.xlu0 %583
    %v585 = vsel %vm581, %v577, -inf
    %586 = vmax.xlane.f32.xlu0 %v585
    %v587 = vpop.xlane.xlu0 %586
    %v588 = vsel %vm581, %v578, -inf
    %589 = vmax.xlane.f32.xlu0 %v588
    %v590 = vpop.xlane.xlu0 %589
    %v591 = vsel %vm581, %v579, -inf
    %592 = vmax.xlane.f32.xlu0 %v591
    %v593 = vpop.xlane.xlu0 %592
    %vm594 = vcmask 271360
    %v595 = vsel %vm594, %v580, -inf
    %596 = vmax.xlane.f32.xlu0 %v595
    %v597 = vpop.xlane.xlu0 %596
    %v598 = vsub.f32 %v576, %v584
    %v599 = vsub.f32 %v577, %v587
    %v600 = vsub.f32 %v578, %v590
    %v601 = vsub.f32 %v579, %v593
    %v602 = vsub.f32 %v580, %v597
    %v603 = vmul.f32 %v598, 1.442695
    %v604 = vpow.pop %v603
    %v605 = vmul.f32 %v599, 1.442695
    %v606 = vpow.pop %v605
    %v607 = vmul.f32 %v600, 1.442695
    %v608 = vpow.pop %v607
    %v609 = vmul.f32 %v601, 1.442695
    %v610 = vpow.pop %v609
    %v611 = vmul.f32 %v602, 1.442695
    %v612 = vpow.pop %v611
    %v613 = vsel %vm581, %v604, 0.0
    %614 = vadd.xlane.f32.xlu0 %v613
    %v615 = vpop.xlane.xlu0 %614
    %v616 = vsel %vm581, %v606, 0.0
    %617 = vadd.xlane.f32.xlu0 %v616
    %v618 = vpop.xlane.xlu0 %617
    %v619 = vsel %vm581, %v608, 0.0
    %620 = vadd.xlane.f32.xlu0 %v619
    %v621 = vpop.xlane.xlu0 %620
    %v622 = vsel %vm581, %v610, 0.0
    %623 = vadd.xlane.f32.xlu0 %v622
    %v624 = vpop.xlane.xlu0 %623
    %v625 = vsel %vm594, %v612, 0.0
    %626 = vadd.xlane.f32.xlu0 %v625
    %v627 = vpop.xlane.xlu0 %626
    %v628 = vrcp.pop %v615
    %v629 = vrcp.pop %v618
    %v630 = vrcp.pop %v621
    %v631 = vrcp.pop %v624
    %v632 = vrcp.pop %v627
    %v633 = vmul.f32 %v604, %v628
    %v634 = vmul.f32 %v606, %v629
    %v635 = vmul.f32 %v608, %v630
    %v636 = vmul.f32 %v610, %v631
    %v637 = vmul.f32 %v612, %v632
    %638 = vrot.lane.b32.xlu0 %v419, 64
    %v639 = vpop.permute.xlu0 %638
    %640 = vrot.lane.b32.xlu0 %v424, 64
    %v641 = vpop.permute.xlu0 %640
    %642 = vrot.lane.b32.xlu0 %v429, 64
    %v643 = vpop.permute.xlu0 %642
    %644 = vrot.lane.b32.xlu0 %v434, 64
    %v645 = vpop.permute.xlu0 %644
    %646 = vrot.lane.b32.xlu0 %v439, 64
    %v647 = vpop.permute.xlu0 %646
    %v653 = vsel %vm581, %v633, 0
    %v656 = vsel %vm581, %v634, 0
    %v659 = vsel %vm581, %v635, 0
    %v662 = vsel %vm581, %v636, 0
    %v665 = vsel %vm581, %v637, 0
    %vm667 = vcmask 1041408
    %v668 = vsel %vm667, %v647, 0
    %670 = vmatprep.subr.mxu0 0.0
    %671 = vmatpush1.msra.mxu0 %v639
    %672 = vmatprep.subr.mxu0 0.0
    %673 = vmatpush1.msra.mxu0 %v641
    %674 = vmatprep.subr.mxu0 0.0
    %675 = vmatpush1.msra.mxu0 %v643
    %676 = vmatprep.subr.mxu0 0.0
    %677 = vmatpush1.msra.mxu0 %v645
    %678 = vmatprep.subr.mxu0 0.0
    %679 = vmatpush1.msra.mxu0 %v668
    %680 = vmatprep.subr.mxu0 0.0
    %681 = vmatpush1.msra.mxu0 0.0
    %682 = vmatprep.subr.mxu0 0.0
    %683 = vmatpush1.msra.mxu0 0.0
    %684 = vmatprep.subr.mxu0 0.0
    %685 = vmatpush1.msra.mxu0 0.0
    %686 = vmatprep.subr.mxu0 0.0
    %687 = vmatpush1.msra.mxu0 0.0
    %688 = vmatprep.subr.mxu0 0.0
    %689 = vmatpush1.msra.mxu0 0.0
    %690 = vmatprep.subr.mxu0 0.0
    %691 = vmatpush1.msra.mxu0 0.0
    %692 = vmatprep.subr.mxu0 0.0
    %693 = vmatpush1.msra.mxu0 0.0
    %694 = vmatprep.subr.mxu0 0.0
    %695 = vmatpush1.msra.mxu0 0.0
    %696 = vmatprep.subr.mxu0 0.0
    %697 = vmatpush1.msra.mxu0 0.0
    %698 = vmatprep.subr.mxu0 0.0
    %699 = vmatpush1.msra.mxu0 0.0
    %700 = vmatprep.subr.mxu0 0.0
    %701 = vmatpush1.msra.mxu0 0.0
    %702 = vmatprep.subr.mxu0 0.0
    %703 = vmatpush1.msra.mxu0 0.0
    %704 = vmatprep.subr.mxu0 0.0
    %705 = vmatpush1.msra.mxu0 0.0
    %706 = vmatprep.subr.mxu0 0.0
    %707 = vmatpush1.msra.mxu0 0.0
    %708 = vmatprep.subr.mxu0 0.0
    %709 = vmatpush1.msra.mxu0 0.0
    %710 = vmatprep.subr.mxu0 0.0
    %711 = vmatpush1.msra.mxu0 0.0
    %712 = vmatprep.subr.mxu0 0.0
    %713 = vmatpush1.msra.mxu0 0.0
    %714 = vmatprep.subr.mxu0 0.0
    %715 = vmatpush1.msra.mxu0 0.0
    %716 = vmatprep.subr.mxu0 0.0
    %717 = vmatpush1.msra.mxu0 0.0
    %718 = vmatprep.subr.mxu0 0.0
    %719 = vmatpush1.msra.mxu0 0.0
    %720 = vmatprep.subr.mxu0 0.0
    %721 = vmatpush1.msra.mxu0 0.0
    %722 = vmatprep.subr.mxu0 0.0
    %723 = vmatpush1.msra.mxu0 0.0
    %724 = vmatprep.subr.mxu0 0.0
    %725 = vmatpush1.msra.mxu0 0.0
    %726 = vmatprep.subr.mxu0 0.0
    %727 = vmatpush1.msra.mxu0 0.0
    %728 = vmatprep.subr.mxu0 0.0
    %729 = vmatpush1.msra.mxu0 0.0
    %730 = vmatprep.subr.mxu0 0.0
    %731 = vmatpush1.msra.mxu0 0.0
    %732 = vmatprep.subr.mxu0 0.0
    %733 = vmatpush1.msra.mxu0 0.0
    %734 = vmatprep.mubr.f32.mxu0 0.0
    %735 = vmatmul.mubr.f32.gmra.mrb[0].mxu0 %v653
    %v736 = vpop.f32.mrb[0].mxu0
    %v737 = vadd.f32 0.0, %v736
    %v738 = vpop.f32.mrb[0].mxu0
    %739 = vmatprep.mubr.f32.mxu0 0.0
    %740 = vmatmul.mubr.f32.gmra.mrb[0].mxu0 %v656
    %v741 = vpop.f32.mrb[0].mxu0
    %v742 = vadd.f32 0.0, %v741
    %v743 = vpop.f32.mrb[0].mxu0
    %744 = vmatprep.mubr.f32.mxu0 0.0
    %745 = vmatmul.mubr.f32.gmra.mrb[0].mxu0 %v659
    %v746 = vpop.f32.mrb[0].mxu0
    %v747 = vadd.f32 0.0, %v746
    %v748 = vpop.f32.mrb[0].mxu0
    %749 = vmatprep.mubr.f32.mxu0 0.0
    %750 = vmatmul.mubr.f32.gmra.mrb[0].mxu0 %v662
    %v751 = vpop.f32.mrb[0].mxu0
    %v752 = vadd.f32 0.0, %v751
    %v753 = vpop.f32.mrb[0].mxu0
    %754 = vmatprep.mubr.f32.mxu0 0.0
    %755 = vmatmul.mubr.f32.gmra.mrb[0].mxu0 %v665
    %v756 = vpop.f32.mrb[0].mxu0
    %v757 = vadd.f32 0.0, %v756
    %v758 = vpop.f32.mrb[0].mxu0
    %759 = vdwg.mxu0
    %760 = vrot.lane.b32.xlu0 %v419, 120
    %v761 = vpop.permute.xlu0 %760
    %762 = vrot.lane.b32.xlu0 %v424, 120
    %v763 = vpop.permute.xlu0 %762
    %764 = vrot.lane.b32.xlu0 %v429, 120
    %v765 = vpop.permute.xlu0 %764
    %766 = vrot.lane.b32.xlu0 %v434, 120
    %v767 = vpop.permute.xlu0 %766
    %768 = vrot.lane.b32.xlu0 %v439, 120
    %v769 = vpop.permute.xlu0 %768
    %770 = vrot.lane.b32.xlu0 %v419, 88
    %v771 = vpop.permute.xlu0 %770
    %772 = vrot.lane.b32.xlu0 %v424, 88
    %v773 = vpop.permute.xlu0 %772
    %774 = vrot.lane.b32.xlu0 %v429, 88
    %v775 = vpop.permute.xlu0 %774
    %776 = vrot.lane.b32.xlu0 %v434, 88
    %v777 = vpop.permute.xlu0 %776
    %778 = vrot.lane.b32.xlu0 %v439, 88
    %v779 = vpop.permute.xlu0 %778
    %v780 = vsel %vm39, %v761, 0
    %v782 = vsel %vm39, %v763, 0
    %v784 = vsel %vm39, %v765, 0
    %v786 = vsel %vm39, %v767, 0
    %v788 = vsel %vm39, %v769, 0
    %v790 = vsel %vm39, %v771, 0
    %v792 = vsel %vm39, %v773, 0
    %v794 = vsel %vm39, %v775, 0
    %v796 = vsel %vm39, %v777, 0
    %v798 = vsel %vm39, %v779, 0
    %800 = vmatprep.subr.mxu0 0.0
    %801 = vmatpush1.xpose.msra.mxu0 %v790
    %802 = vmatprep.subr.mxu0 0.0
    %803 = vmatpush1.xpose.msra.mxu0 %v792
    %804 = vmatprep.subr.mxu0 0.0
    %805 = vmatpush1.xpose.msra.mxu0 %v794
    %806 = vmatprep.subr.mxu0 0.0
    %807 = vmatpush1.xpose.msra.mxu0 %v796
    %808 = vmatprep.subr.mxu0 0.0
    %809 = vmatpush1.xpose.msra.mxu0 %v798
    %810 = vmatprep.subr.mxu0 0.0
    %811 = vmatpush1.xpose.msra.mxu0 0.0
    %812 = vmatprep.subr.mxu0 0.0
    %813 = vmatpush1.xpose.msra.mxu0 0.0
    %814 = vmatprep.subr.mxu0 0.0
    %815 = vmatpush1.xpose.msra.mxu0 0.0
    %816 = vmatprep.subr.mxu0 0.0
    %817 = vmatpush1.xpose.msra.mxu0 0.0
    %818 = vmatprep.subr.mxu0 0.0
    %819 = vmatpush1.xpose.msra.mxu0 0.0
    %820 = vmatprep.subr.mxu0 0.0
    %821 = vmatpush1.xpose.msra.mxu0 0.0
    %822 = vmatprep.subr.mxu0 0.0
    %823 = vmatpush1.xpose.msra.mxu0 0.0
    %824 = vmatprep.subr.mxu0 0.0
    %825 = vmatpush1.xpose.msra.mxu0 0.0
    %826 = vmatprep.subr.mxu0 0.0
    %827 = vmatpush1.xpose.msra.mxu0 0.0
    %828 = vmatprep.subr.mxu0 0.0
    %829 = vmatpush1.xpose.msra.mxu0 0.0
    %830 = vmatprep.subr.mxu0 0.0
    %831 = vmatpush1.xpose.msra.mxu0 0.0
    %832 = vmatprep.subr.mxu0 0.0
    %833 = vmatpush1.xpose.msra.mxu0 0.0
    %834 = vmatprep.subr.mxu0 0.0
    %835 = vmatpush1.xpose.msra.mxu0 0.0
    %836 = vmatprep.subr.mxu0 0.0
    %837 = vmatpush1.xpose.msra.mxu0 0.0
    %838 = vmatprep.subr.mxu0 0.0
    %839 = vmatpush1.xpose.msra.mxu0 0.0
    %840 = vmatprep.subr.mxu0 0.0
    %841 = vmatpush1.xpose.msra.mxu0 0.0
    %842 = vmatprep.subr.mxu0 0.0
    %843 = vmatpush1.xpose.msra.mxu0 0.0
    %844 = vmatprep.subr.mxu0 0.0
    %845 = vmatpush1.xpose.msra.mxu0 0.0
    %846 = vmatprep.subr.mxu0 0.0
    %847 = vmatpush1.xpose.msra.mxu0 0.0
    %848 = vmatprep.subr.mxu0 0.0
    %849 = vmatpush1.xpose.msra.mxu0 0.0
    %850 = vmatprep.subr.mxu0 0.0
    %851 = vmatpush1.xpose.msra.mxu0 0.0
    %852 = vmatprep.subr.mxu0 0.0
    %853 = vmatpush1.xpose.msra.mxu0 0.0
    %854 = vmatprep.subr.mxu0 0.0
    %855 = vmatpush1.xpose.msra.mxu0 0.0
    %856 = vmatprep.subr.mxu0 0.0
    %857 = vmatpush1.xpose.msra.mxu0 0.0
    %858 = vmatprep.subr.mxu0 0.0
    %859 = vmatpush1.xpose.msra.mxu0 0.0
    %860 = vmatprep.subr.mxu0 0.0
    %861 = vmatpush1.xpose.msra.mxu0 0.0
    %862 = vmatprep.subr.mxu0 0.0
    %863 = vmatpush1.xpose.msra.mxu0 0.0
    %864 = vmatprep.mubr.f32.mxu0 0.0
    %865 = vmatmul.mubr.f32.gmra.mrb[0].mxu0 %v780
    %v866 = vpop.f32.mrb[0].mxu0
    %v867 = vadd.f32 0.0, %v866
    %v868 = vpop.f32.mrb[0].mxu0
    %869 = vmatprep.mubr.f32.mxu0 0.0
    %870 = vmatmul.mubr.f32.gmra.mrb[0].mxu0 %v782
    %v871 = vpop.f32.mrb[0].mxu0
    %v872 = vadd.f32 0.0, %v871
    %v873 = vpop.f32.mrb[0].mxu0
    %874 = vmatprep.mubr.f32.mxu0 0.0
    %875 = vmatmul.mubr.f32.gmra.mrb[0].mxu0 %v784
    %v876 = vpop.f32.mrb[0].mxu0
    %v877 = vadd.f32 0.0, %v876
    %v878 = vpop.f32.mrb[0].mxu0
    %879 = vmatprep.mubr.f32.mxu0 0.0
    %880 = vmatmul.mubr.f32.gmra.mrb[0].mxu0 %v786
    %v881 = vpop.f32.mrb[0].mxu0
    %v882 = vadd.f32 0.0, %v881
    %v883 = vpop.f32.mrb[0].mxu0
    %884 = vmatprep.mubr.f32.mxu0 0.0
    %885 = vmatmul.mubr.f32.gmra.mrb[0].mxu0 %v788
    %v886 = vpop.f32.mrb[0].mxu0
    %v887 = vadd.f32 0.0, %v886
    %v888 = vpop.f32.mrb[0].mxu0
    %889 = vdwg.mxu0
    %v890 = vmul.f32 %v867, 0.35355338
    %v891 = vmul.f32 %v872, 0.35355338
    %v892 = vmul.f32 %v877, 0.35355338
    %v893 = vmul.f32 %v882, 0.35355338
    %v894 = vmul.f32 %v887, 0.35355338
    %v895 = vadd.f32 %v890, %v27
    %v896 = vadd.f32 %v891, %v28
    %v897 = vadd.f32 %v892, %v29
    %v898 = vadd.f32 %v893, %v30
    %v899 = vadd.f32 %v894, %v31
    %v900 = vsel %vm581, %v895, -inf
    %901 = vmax.xlane.f32.xlu0 %v900
    %v902 = vpop.xlane.xlu0 %901
    %v903 = vsel %vm581, %v896, -inf
    %904 = vmax.xlane.f32.xlu0 %v903
    %v905 = vpop.xlane.xlu0 %904
    %v906 = vsel %vm581, %v897, -inf
    %907 = vmax.xlane.f32.xlu0 %v906
    %v908 = vpop.xlane.xlu0 %907
    %v909 = vsel %vm581, %v898, -inf
    %910 = vmax.xlane.f32.xlu0 %v909
    %v911 = vpop.xlane.xlu0 %910
    %v912 = vsel %vm594, %v899, -inf
    %913 = vmax.xlane.f32.xlu0 %v912
    %v914 = vpop.xlane.xlu0 %913
    %v915 = vsub.f32 %v895, %v902
    %v916 = vsub.f32 %v896, %v905
    %v917 = vsub.f32 %v897, %v908
    %v918 = vsub.f32 %v898, %v911
    %v919 = vsub.f32 %v899, %v914
    %v920 = vmul.f32 %v915, 1.442695
    %v921 = vpow.pop %v920
    %v922 = vmul.f32 %v916, 1.442695
    %v923 = vpow.pop %v922
    %v924 = vmul.f32 %v917, 1.442695
    %v925 = vpow.pop %v924
    %v926 = vmul.f32 %v918, 1.442695
    %v927 = vpow.pop %v926
    %v928 = vmul.f32 %v919, 1.442695
    %v929 = vpow.pop %v928
    %v930 = vsel %vm581, %v921, 0.0
    %931 = vadd.xlane.f32.xlu0 %v930
    %v932 = vpop.xlane.xlu0 %931
    %v933 = vsel %vm581, %v923, 0.0
    %934 = vadd.xlane.f32.xlu0 %v933
    %v935 = vpop.xlane.xlu0 %934
    %v936 = vsel %vm581, %v925, 0.0
    %937 = vadd.xlane.f32.xlu0 %v936
    %v938 = vpop.xlane.xlu0 %937
    %v939 = vsel %vm581, %v927, 0.0
    %940 = vadd.xlane.f32.xlu0 %v939
    %v941 = vpop.xlane.xlu0 %940
    %v942 = vsel %vm594, %v929, 0.0
    %943 = vadd.xlane.f32.xlu0 %v942
    %v944 = vpop.xlane.xlu0 %943
    %v945 = vrcp.pop %v932
    %v946 = vrcp.pop %v935
    %v947 = vrcp.pop %v938
    %v948 = vrcp.pop %v941
    %v949 = vrcp.pop %v944
    %v950 = vmul.f32 %v921, %v945
    %v951 = vmul.f32 %v923, %v946
    %v952 = vmul.f32 %v925, %v947
    %v953 = vmul.f32 %v927, %v948
    %v954 = vmul.f32 %v929, %v949
    %955 = vrot.lane.b32.xlu0 %v419, 56
    %v956 = vpop.permute.xlu0 %955
    %957 = vrot.lane.b32.xlu0 %v424, 56
    %v958 = vpop.permute.xlu0 %957
    %959 = vrot.lane.b32.xlu0 %v429, 56
    %v960 = vpop.permute.xlu0 %959
    %961 = vrot.lane.b32.xlu0 %v434, 56
    %v962 = vpop.permute.xlu0 %961
    %963 = vrot.lane.b32.xlu0 %v439, 56
    %v964 = vpop.permute.xlu0 %963
    %v970 = vsel %vm581, %v950, 0
    %v973 = vsel %vm581, %v951, 0
    %v976 = vsel %vm581, %v952, 0
    %v979 = vsel %vm581, %v953, 0
    %v982 = vsel %vm581, %v954, 0
    %v984 = vsel %vm667, %v964, 0
    %986 = vmatprep.subr.mxu0 0.0
    %987 = vmatpush1.msra.mxu0 %v956
    %988 = vmatprep.subr.mxu0 0.0
    %989 = vmatpush1.msra.mxu0 %v958
    %990 = vmatprep.subr.mxu0 0.0
    %991 = vmatpush1.msra.mxu0 %v960
    %992 = vmatprep.subr.mxu0 0.0
    %993 = vmatpush1.msra.mxu0 %v962
    %994 = vmatprep.subr.mxu0 0.0
    %995 = vmatpush1.msra.mxu0 %v984
    %996 = vmatprep.subr.mxu0 0.0
    %997 = vmatpush1.msra.mxu0 0.0
    %998 = vmatprep.subr.mxu0 0.0
    %999 = vmatpush1.msra.mxu0 0.0
    %1000 = vmatprep.subr.mxu0 0.0
    %1001 = vmatpush1.msra.mxu0 0.0
    %1002 = vmatprep.subr.mxu0 0.0
    %1003 = vmatpush1.msra.mxu0 0.0
    %1004 = vmatprep.subr.mxu0 0.0
    %1005 = vmatpush1.msra.mxu0 0.0
    %1006 = vmatprep.subr.mxu0 0.0
    %1007 = vmatpush1.msra.mxu0 0.0
    %1008 = vmatprep.subr.mxu0 0.0
    %1009 = vmatpush1.msra.mxu0 0.0
    %1010 = vmatprep.subr.mxu0 0.0
    %1011 = vmatpush1.msra.mxu0 0.0
    %1012 = vmatprep.subr.mxu0 0.0
    %1013 = vmatpush1.msra.mxu0 0.0
    %1014 = vmatprep.subr.mxu0 0.0
    %1015 = vmatpush1.msra.mxu0 0.0
    %1016 = vmatprep.subr.mxu0 0.0
    %1017 = vmatpush1.msra.mxu0 0.0
    %1018 = vmatprep.subr.mxu0 0.0
    %1019 = vmatpush1.msra.mxu0 0.0
    %1020 = vmatprep.subr.mxu0 0.0
    %1021 = vmatpush1.msra.mxu0 0.0
    %1022 = vmatprep.subr.mxu0 0.0
    %1023 = vmatpush1.msra.mxu0 0.0
    %1024 = vmatprep.subr.mxu0 0.0
    %1025 = vmatpush1.msra.mxu0 0.0
    %1026 = vmatprep.subr.mxu0 0.0
    %1027 = vmatpush1.msra.mxu0 0.0
    %1028 = vmatprep.subr.mxu0 0.0
    %1029 = vmatpush1.msra.mxu0 0.0
    %1030 = vmatprep.subr.mxu0 0.0
    %1031 = vmatpush1.msra.mxu0 0.0
    %1032 = vmatprep.subr.mxu0 0.0
    %1033 = vmatpush1.msra.mxu0 0.0
    %1034 = vmatprep.subr.mxu0 0.0
    %1035 = vmatpush1.msra.mxu0 0.0
    %1036 = vmatprep.subr.mxu0 0.0
    %1037 = vmatpush1.msra.mxu0 0.0
    %1038 = vmatprep.subr.mxu0 0.0
    %1039 = vmatpush1.msra.mxu0 0.0
    %1040 = vmatprep.subr.mxu0 0.0
    %1041 = vmatpush1.msra.mxu0 0.0
    %1042 = vmatprep.subr.mxu0 0.0
    %1043 = vmatpush1.msra.mxu0 0.0
    %1044 = vmatprep.subr.mxu0 0.0
    %1045 = vmatpush1.msra.mxu0 0.0
    %1046 = vmatprep.subr.mxu0 0.0
    %1047 = vmatpush1.msra.mxu0 0.0
    %1048 = vmatprep.subr.mxu0 0.0
    %1049 = vmatpush1.msra.mxu0 0.0
    %1050 = vmatprep.mubr.f32.mxu0 0.0
    %1051 = vmatmul.mubr.f32.gmra.mrb[0].mxu0 %v970
    %v1052 = vpop.f32.mrb[0].mxu0
    %v1053 = vadd.f32 0.0, %v1052
    %v1054 = vpop.f32.mrb[0].mxu0
    %1055 = vmatprep.mubr.f32.mxu0 0.0
    %1056 = vmatmul.mubr.f32.gmra.mrb[0].mxu0 %v973
    %v1057 = vpop.f32.mrb[0].mxu0
    %v1058 = vadd.f32 0.0, %v1057
    %v1059 = vpop.f32.mrb[0].mxu0
    %1060 = vmatprep.mubr.f32.mxu0 0.0
    %1061 = vmatmul.mubr.f32.gmra.mrb[0].mxu0 %v976
    %v1062 = vpop.f32.mrb[0].mxu0
    %v1063 = vadd.f32 0.0, %v1062
    %v1064 = vpop.f32.mrb[0].mxu0
    %1065 = vmatprep.mubr.f32.mxu0 0.0
    %1066 = vmatmul.mubr.f32.gmra.mrb[0].mxu0 %v979
    %v1067 = vpop.f32.mrb[0].mxu0
    %v1068 = vadd.f32 0.0, %v1067
    %v1069 = vpop.f32.mrb[0].mxu0
    %1070 = vmatprep.mubr.f32.mxu0 0.0
    %1071 = vmatmul.mubr.f32.gmra.mrb[0].mxu0 %v982
    %v1072 = vpop.f32.mrb[0].mxu0
    %v1073 = vadd.f32 0.0, %v1072
    %v1074 = vpop.f32.mrb[0].mxu0
    %1075 = vdwg.mxu0
    %v1077 = vsel %vm39, %v1053, 0
    %v1080 = vsel %vm39, %v1058, 0
    %v1083 = vsel %vm39, %v1063, 0
    %v1086 = vsel %vm39, %v1068, 0
    %v1089 = vsel %vm39, %v1073, 0
    %1091 = vmatprep.subr.mxu0 0.0
    %1092 = vmatpush1.msra.mxu0 %v443
    %1093 = vmatprep.subr.mxu0 0.0
    %1094 = vmatpush1.msra.mxu0 0.0
    %1095 = vmatprep.subr.mxu0 0.0
    %1096 = vmatpush1.msra.mxu0 0.0
    %1097 = vmatprep.subr.mxu0 0.0
    %1098 = vmatpush1.msra.mxu0 0.0
    %1099 = vmatprep.subr.mxu0 0.0
    %1100 = vmatpush1.msra.mxu0 0.0
    %1101 = vmatprep.subr.mxu0 0.0
    %1102 = vmatpush1.msra.mxu0 0.0
    %1103 = vmatprep.subr.mxu0 0.0
    %1104 = vmatpush1.msra.mxu0 0.0
    %1105 = vmatprep.subr.mxu0 0.0
    %1106 = vmatpush1.msra.mxu0 0.0
    %1107 = vmatprep.subr.mxu0 0.0
    %1108 = vmatpush1.msra.mxu0 0.0
    %1109 = vmatprep.subr.mxu0 0.0
    %1110 = vmatpush1.msra.mxu0 0.0
    %1111 = vmatprep.subr.mxu0 0.0
    %1112 = vmatpush1.msra.mxu0 0.0
    %1113 = vmatprep.subr.mxu0 0.0
    %1114 = vmatpush1.msra.mxu0 0.0
    %1115 = vmatprep.subr.mxu0 0.0
    %1116 = vmatpush1.msra.mxu0 0.0
    %1117 = vmatprep.subr.mxu0 0.0
    %1118 = vmatpush1.msra.mxu0 0.0
    %1119 = vmatprep.subr.mxu0 0.0
    %1120 = vmatpush1.msra.mxu0 0.0
    %1121 = vmatprep.subr.mxu0 0.0
    %1122 = vmatpush1.msra.mxu0 0.0
    %1123 = vmatprep.subr.mxu0 0.0
    %1124 = vmatpush1.msra.mxu0 0.0
    %1125 = vmatprep.subr.mxu0 0.0
    %1126 = vmatpush1.msra.mxu0 0.0
    %1127 = vmatprep.subr.mxu0 0.0
    %1128 = vmatpush1.msra.mxu0 0.0
    %1129 = vmatprep.subr.mxu0 0.0
    %1130 = vmatpush1.msra.mxu0 0.0
    %1131 = vmatprep.subr.mxu0 0.0
    %1132 = vmatpush1.msra.mxu0 0.0
    %1133 = vmatprep.subr.mxu0 0.0
    %1134 = vmatpush1.msra.mxu0 0.0
    %1135 = vmatprep.subr.mxu0 0.0
    %1136 = vmatpush1.msra.mxu0 0.0
    %1137 = vmatprep.subr.mxu0 0.0
    %1138 = vmatpush1.msra.mxu0 0.0
    %1139 = vmatprep.subr.mxu0 0.0
    %1140 = vmatpush1.msra.mxu0 0.0
    %1141 = vmatprep.subr.mxu0 0.0
    %1142 = vmatpush1.msra.mxu0 0.0
    %1143 = vmatprep.subr.mxu0 0.0
    %1144 = vmatpush1.msra.mxu0 0.0
    %1145 = vmatprep.subr.mxu0 0.0
    %1146 = vmatpush1.msra.mxu0 0.0
    %1147 = vmatprep.subr.mxu0 0.0
    %1148 = vmatpush1.msra.mxu0 0.0
    %1149 = vmatprep.subr.mxu0 0.0
    %1150 = vmatpush1.msra.mxu0 0.0
    %1151 = vmatprep.subr.mxu0 0.0
    %1152 = vmatpush1.msra.mxu0 0.0
    %1153 = vmatprep.subr.mxu0 0.0
    %1154 = vmatpush1.msra.mxu0 0.0
    %1155 = vmatprep.mubr.f32.mxu0 0.0
    %1156 = vmatmul.mubr.f32.gmra.mrb[0].mxu0 %v1077
    %v1157 = vpop.f32.mrb[0].mxu0
    %v1158 = vadd.f32 0.0, %v1157
    %v1159 = vpop.f32.mrb[0].mxu0
    %1160 = vmatprep.mubr.f32.mxu0 0.0
    %1161 = vmatmul.mubr.f32.gmra.mrb[0].mxu0 %v1080
    %v1162 = vpop.f32.mrb[0].mxu0
    %v1163 = vadd.f32 0.0, %v1162
    %v1164 = vpop.f32.mrb[0].mxu0
    %1165 = vmatprep.mubr.f32.mxu0 0.0
    %1166 = vmatmul.mubr.f32.gmra.mrb[0].mxu0 %v1083
    %v1167 = vpop.f32.mrb[0].mxu0
    %v1168 = vadd.f32 0.0, %v1167
    %v1169 = vpop.f32.mrb[0].mxu0
    %1170 = vmatprep.mubr.f32.mxu0 0.0
    %1171 = vmatmul.mubr.f32.gmra.mrb[0].mxu0 %v1086
    %v1172 = vpop.f32.mrb[0].mxu0
    %v1173 = vadd.f32 0.0, %v1172
    %v1174 = vpop.f32.mrb[0].mxu0
    %1175 = vmatprep.mubr.f32.mxu0 0.0
    %1176 = vmatmul.mubr.f32.gmra.mrb[0].mxu0 %v1089
    %v1177 = vpop.f32.mrb[0].mxu0
    %v1178 = vadd.f32 0.0, %v1177
    %v1179 = vpop.f32.mrb[0].mxu0
    %1180 = vdwg.mxu0
    %v1182 = vsel %vm39, %v737, 0
    %v1185 = vsel %vm39, %v742, 0
    %v1188 = vsel %vm39, %v747, 0
    %v1191 = vsel %vm39, %v752, 0
    %v1194 = vsel %vm39, %v757, 0
    %1196 = vmatprep.subr.mxu0 0.0
    %1197 = vmatpush1.msra.mxu0 %v442
    %1198 = vmatprep.subr.mxu0 0.0
    %1199 = vmatpush1.msra.mxu0 0.0
    %1200 = vmatprep.subr.mxu0 0.0
    %1201 = vmatpush1.msra.mxu0 0.0
    %1202 = vmatprep.subr.mxu0 0.0
    %1203 = vmatpush1.msra.mxu0 0.0
    %1204 = vmatprep.subr.mxu0 0.0
    %1205 = vmatpush1.msra.mxu0 0.0
    %1206 = vmatprep.subr.mxu0 0.0
    %1207 = vmatpush1.msra.mxu0 0.0
    %1208 = vmatprep.subr.mxu0 0.0
    %1209 = vmatpush1.msra.mxu0 0.0
    %1210 = vmatprep.subr.mxu0 0.0
    %1211 = vmatpush1.msra.mxu0 0.0
    %1212 = vmatprep.subr.mxu0 0.0
    %1213 = vmatpush1.msra.mxu0 0.0
    %1214 = vmatprep.subr.mxu0 0.0
    %1215 = vmatpush1.msra.mxu0 0.0
    %1216 = vmatprep.subr.mxu0 0.0
    %1217 = vmatpush1.msra.mxu0 0.0
    %1218 = vmatprep.subr.mxu0 0.0
    %1219 = vmatpush1.msra.mxu0 0.0
    %1220 = vmatprep.subr.mxu0 0.0
    %1221 = vmatpush1.msra.mxu0 0.0
    %1222 = vmatprep.subr.mxu0 0.0
    %1223 = vmatpush1.msra.mxu0 0.0
    %1224 = vmatprep.subr.mxu0 0.0
    %1225 = vmatpush1.msra.mxu0 0.0
    %1226 = vmatprep.subr.mxu0 0.0
    %1227 = vmatpush1.msra.mxu0 0.0
    %1228 = vmatprep.subr.mxu0 0.0
    %1229 = vmatpush1.msra.mxu0 0.0
    %1230 = vmatprep.subr.mxu0 0.0
    %1231 = vmatpush1.msra.mxu0 0.0
    %1232 = vmatprep.subr.mxu0 0.0
    %1233 = vmatpush1.msra.mxu0 0.0
    %1234 = vmatprep.subr.mxu0 0.0
    %1235 = vmatpush1.msra.mxu0 0.0
    %1236 = vmatprep.subr.mxu0 0.0
    %1237 = vmatpush1.msra.mxu0 0.0
    %1238 = vmatprep.subr.mxu0 0.0
    %1239 = vmatpush1.msra.mxu0 0.0
    %1240 = vmatprep.subr.mxu0 0.0
    %1241 = vmatpush1.msra.mxu0 0.0
    %1242 = vmatprep.subr.mxu0 0.0
    %1243 = vmatpush1.msra.mxu0 0.0
    %1244 = vmatprep.subr.mxu0 0.0
    %1245 = vmatpush1.msra.mxu0 0.0
    %1246 = vmatprep.subr.mxu0 0.0
    %1247 = vmatpush1.msra.mxu0 0.0
    %1248 = vmatprep.subr.mxu0 0.0
    %1249 = vmatpush1.msra.mxu0 0.0
    %1250 = vmatprep.subr.mxu0 0.0
    %1251 = vmatpush1.msra.mxu0 0.0
    %1252 = vmatprep.subr.mxu0 0.0
    %1253 = vmatpush1.msra.mxu0 0.0
    %1254 = vmatprep.subr.mxu0 0.0
    %1255 = vmatpush1.msra.mxu0 0.0
    %1256 = vmatprep.subr.mxu0 0.0
    %1257 = vmatpush1.msra.mxu0 0.0
    %1258 = vmatprep.subr.mxu0 0.0
    %1259 = vmatpush1.msra.mxu0 0.0
    %1260 = vmatprep.mubr.f32.mxu0 0.0
    %1261 = vmatmul.mubr.f32.gmra.mrb[0].mxu0 %v1182
    %v1262 = vpop.f32.mrb[0].mxu0
    %v1263 = vadd.f32 %v1158, %v1262
    %v1264 = vpop.f32.mrb[0].mxu0
    %1265 = vmatprep.mubr.f32.mxu0 0.0
    %1266 = vmatmul.mubr.f32.gmra.mrb[0].mxu0 %v1185
    %v1267 = vpop.f32.mrb[0].mxu0
    %v1268 = vadd.f32 %v1163, %v1267
    %v1269 = vpop.f32.mrb[0].mxu0
    %1270 = vmatprep.mubr.f32.mxu0 0.0
    %1271 = vmatmul.mubr.f32.gmra.mrb[0].mxu0 %v1188
    %v1272 = vpop.f32.mrb[0].mxu0
    %v1273 = vadd.f32 %v1168, %v1272
    %v1274 = vpop.f32.mrb[0].mxu0
    %1275 = vmatprep.mubr.f32.mxu0 0.0
    %1276 = vmatmul.mubr.f32.gmra.mrb[0].mxu0 %v1191
    %v1277 = vpop.f32.mrb[0].mxu0
    %v1278 = vadd.f32 %v1173, %v1277
    %v1279 = vpop.f32.mrb[0].mxu0
    %1280 = vmatprep.mubr.f32.mxu0 0.0
    %1281 = vmatmul.mubr.f32.gmra.mrb[0].mxu0 %v1194
    %v1282 = vpop.f32.mrb[0].mxu0
    %v1283 = vadd.f32 %v1178, %v1282
    %v1284 = vpop.f32.mrb[0].mxu0
    %1285 = vdwg.mxu0
    %1286 = vrot.lane.b32.xlu0 %v419, 112
    %v1287 = vpop.permute.xlu0 %1286
    %1288 = vrot.lane.b32.xlu0 %v424, 112
    %v1289 = vpop.permute.xlu0 %1288
    %1290 = vrot.lane.b32.xlu0 %v429, 112
    %v1291 = vpop.permute.xlu0 %1290
    %1292 = vrot.lane.b32.xlu0 %v434, 112
    %v1293 = vpop.permute.xlu0 %1292
    %1294 = vrot.lane.b32.xlu0 %v439, 112
    %v1295 = vpop.permute.xlu0 %1294
    %1296 = vrot.lane.b32.xlu0 %v419, 80
    %v1297 = vpop.permute.xlu0 %1296
    %1298 = vrot.lane.b32.xlu0 %v424, 80
    %v1299 = vpop.permute.xlu0 %1298
    %1300 = vrot.lane.b32.xlu0 %v429, 80
    %v1301 = vpop.permute.xlu0 %1300
    %1302 = vrot.lane.b32.xlu0 %v434, 80
    %v1303 = vpop.permute.xlu0 %1302
    %1304 = vrot.lane.b32.xlu0 %v439, 80
    %v1305 = vpop.permute.xlu0 %1304
    %v1306 = vsel %vm39, %v1287, 0
    %v1308 = vsel %vm39, %v1289, 0
    %v1310 = vsel %vm39, %v1291, 0
    %v1312 = vsel %vm39, %v1293, 0
    %v1314 = vsel %vm39, %v1295, 0
    %v1316 = vsel %vm39, %v1297, 0
    %v1318 = vsel %vm39, %v1299, 0
    %v1320 = vsel %vm39, %v1301, 0
    %v1322 = vsel %vm39, %v1303, 0
    %v1324 = vsel %vm39, %v1305, 0
    %1326 = vmatprep.subr.mxu0 0.0
    %1327 = vmatpush1.xpose.msra.mxu0 %v1316
    %1328 = vmatprep.subr.mxu0 0.0
    %1329 = vmatpush1.xpose.msra.mxu0 %v1318
    %1330 = vmatprep.subr.mxu0 0.0
    %1331 = vmatpush1.xpose.msra.mxu0 %v1320
    %1332 = vmatprep.subr.mxu0 0.0
    %1333 = vmatpush1.xpose.msra.mxu0 %v1322
    %1334 = vmatprep.subr.mxu0 0.0
    %1335 = vmatpush1.xpose.msra.mxu0 %v1324
    %1336 = vmatprep.subr.mxu0 0.0
    %1337 = vmatpush1.xpose.msra.mxu0 0.0
    %1338 = vmatprep.subr.mxu0 0.0
    %1339 = vmatpush1.xpose.msra.mxu0 0.0
    %1340 = vmatprep.subr.mxu0 0.0
    %1341 = vmatpush1.xpose.msra.mxu0 0.0
    %1342 = vmatprep.subr.mxu0 0.0
    %1343 = vmatpush1.xpose.msra.mxu0 0.0
    %1344 = vmatprep.subr.mxu0 0.0
    %1345 = vmatpush1.xpose.msra.mxu0 0.0
    %1346 = vmatprep.subr.mxu0 0.0
    %1347 = vmatpush1.xpose.msra.mxu0 0.0
    %1348 = vmatprep.subr.mxu0 0.0
    %1349 = vmatpush1.xpose.msra.mxu0 0.0
    %1350 = vmatprep.subr.mxu0 0.0
    %1351 = vmatpush1.xpose.msra.mxu0 0.0
    %1352 = vmatprep.subr.mxu0 0.0
    %1353 = vmatpush1.xpose.msra.mxu0 0.0
    %1354 = vmatprep.subr.mxu0 0.0
    %1355 = vmatpush1.xpose.msra.mxu0 0.0
    %1356 = vmatprep.subr.mxu0 0.0
    %1357 = vmatpush1.xpose.msra.mxu0 0.0
    %1358 = vmatprep.subr.mxu0 0.0
    %1359 = vmatpush1.xpose.msra.mxu0 0.0
    %1360 = vmatprep.subr.mxu0 0.0
    %1361 = vmatpush1.xpose.msra.mxu0 0.0
    %1362 = vmatprep.subr.mxu0 0.0
    %1363 = vmatpush1.xpose.msra.mxu0 0.0
    %1364 = vmatprep.subr.mxu0 0.0
    %1365 = vmatpush1.xpose.msra.mxu0 0.0
    %1366 = vmatprep.subr.mxu0 0.0
    %1367 = vmatpush1.xpose.msra.mxu0 0.0
    %1368 = vmatprep.subr.mxu0 0.0
    %1369 = vmatpush1.xpose.msra.mxu0 0.0
    %1370 = vmatprep.subr.mxu0 0.0
    %1371 = vmatpush1.xpose.msra.mxu0 0.0
    %1372 = vmatprep.subr.mxu0 0.0
    %1373 = vmatpush1.xpose.msra.mxu0 0.0
    %1374 = vmatprep.subr.mxu0 0.0
    %1375 = vmatpush1.xpose.msra.mxu0 0.0
    %1376 = vmatprep.subr.mxu0 0.0
    %1377 = vmatpush1.xpose.msra.mxu0 0.0
    %1378 = vmatprep.subr.mxu0 0.0
    %1379 = vmatpush1.xpose.msra.mxu0 0.0
    %1380 = vmatprep.subr.mxu0 0.0
    %1381 = vmatpush1.xpose.msra.mxu0 0.0
    %1382 = vmatprep.subr.mxu0 0.0
    %1383 = vmatpush1.xpose.msra.mxu0 0.0
    %1384 = vmatprep.subr.mxu0 0.0
    %1385 = vmatpush1.xpose.msra.mxu0 0.0
    %1386 = vmatprep.subr.mxu0 0.0
    %1387 = vmatpush1.xpose.msra.mxu0 0.0
    %1388 = vmatprep.subr.mxu0 0.0
    %1389 = vmatpush1.xpose.msra.mxu0 0.0
    %1390 = vmatprep.mubr.f32.mxu0 0.0
    %1391 = vmatmul.mubr.f32.gmra.mrb[0].mxu0 %v1306
    %v1392 = vpop.f32.mrb[0].mxu0
    %v1393 = vadd.f32 0.0, %v1392
    %v1394 = vpop.f32.mrb[0].mxu0
    %1395 = vmatprep.mubr.f32.mxu0 0.0
    %1396 = vmatmul.mubr.f32.gmra.mrb[0].mxu0 %v1308
    %v1397 = vpop.f32.mrb[0].mxu0
    %v1398 = vadd.f32 0.0, %v1397
    %v1399 = vpop.f32.mrb[0].mxu0
    %1400 = vmatprep.mubr.f32.mxu0 0.0
    %1401 = vmatmul.mubr.f32.gmra.mrb[0].mxu0 %v1310
    %v1402 = vpop.f32.mrb[0].mxu0
    %v1403 = vadd.f32 0.0, %v1402
    %v1404 = vpop.f32.mrb[0].mxu0
    %1405 = vmatprep.mubr.f32.mxu0 0.0
    %1406 = vmatmul.mubr.f32.gmra.mrb[0].mxu0 %v1312
    %v1407 = vpop.f32.mrb[0].mxu0
    %v1408 = vadd.f32 0.0, %v1407
    %v1409 = vpop.f32.mrb[0].mxu0
    %1410 = vmatprep.mubr.f32.mxu0 0.0
    %1411 = vmatmul.mubr.f32.gmra.mrb[0].mxu0 %v1314
    %v1412 = vpop.f32.mrb[0].mxu0
    %v1413 = vadd.f32 0.0, %v1412
    %v1414 = vpop.f32.mrb[0].mxu0
    %1415 = vdwg.mxu0
    %v1416 = vmul.f32 %v1393, 0.35355338
    %v1417 = vmul.f32 %v1398, 0.35355338
    %v1418 = vmul.f32 %v1403, 0.35355338
    %v1419 = vmul.f32 %v1408, 0.35355338
    %v1420 = vmul.f32 %v1413, 0.35355338
    %v1421 = vadd.f32 %v1416, %v27
    %v1422 = vadd.f32 %v1417, %v28
    %v1423 = vadd.f32 %v1418, %v29
    %v1424 = vadd.f32 %v1419, %v30
    %v1425 = vadd.f32 %v1420, %v31
    %v1426 = vsel %vm581, %v1421, -inf
    %1427 = vmax.xlane.f32.xlu0 %v1426
    %v1428 = vpop.xlane.xlu0 %1427
    %v1429 = vsel %vm581, %v1422, -inf
    %1430 = vmax.xlane.f32.xlu0 %v1429
    %v1431 = vpop.xlane.xlu0 %1430
    %v1432 = vsel %vm581, %v1423, -inf
    %1433 = vmax.xlane.f32.xlu0 %v1432
    %v1434 = vpop.xlane.xlu0 %1433
    %v1435 = vsel %vm581, %v1424, -inf
    %1436 = vmax.xlane.f32.xlu0 %v1435
    %v1437 = vpop.xlane.xlu0 %1436
    %v1438 = vsel %vm594, %v1425, -inf
    %1439 = vmax.xlane.f32.xlu0 %v1438
    %v1440 = vpop.xlane.xlu0 %1439
    %v1441 = vsub.f32 %v1421, %v1428
    %v1442 = vsub.f32 %v1422, %v1431
    %v1443 = vsub.f32 %v1423, %v1434
    %v1444 = vsub.f32 %v1424, %v1437
    %v1445 = vsub.f32 %v1425, %v1440
    %v1446 = vmul.f32 %v1441, 1.442695
    %v1447 = vpow.pop %v1446
    %v1448 = vmul.f32 %v1442, 1.442695
    %v1449 = vpow.pop %v1448
    %v1450 = vmul.f32 %v1443, 1.442695
    %v1451 = vpow.pop %v1450
    %v1452 = vmul.f32 %v1444, 1.442695
    %v1453 = vpow.pop %v1452
    %v1454 = vmul.f32 %v1445, 1.442695
    %v1455 = vpow.pop %v1454
    %v1456 = vsel %vm581, %v1447, 0.0
    %1457 = vadd.xlane.f32.xlu0 %v1456
    %v1458 = vpop.xlane.xlu0 %1457
    %v1459 = vsel %vm581, %v1449, 0.0
    %1460 = vadd.xlane.f32.xlu0 %v1459
    %v1461 = vpop.xlane.xlu0 %1460
    %v1462 = vsel %vm581, %v1451, 0.0
    %1463 = vadd.xlane.f32.xlu0 %v1462
    %v1464 = vpop.xlane.xlu0 %1463
    %v1465 = vsel %vm581, %v1453, 0.0
    %1466 = vadd.xlane.f32.xlu0 %v1465
    %v1467 = vpop.xlane.xlu0 %1466
    %v1468 = vsel %vm594, %v1455, 0.0
    %1469 = vadd.xlane.f32.xlu0 %v1468
    %v1470 = vpop.xlane.xlu0 %1469
    %v1471 = vrcp.pop %v1458
    %v1472 = vrcp.pop %v1461
    %v1473 = vrcp.pop %v1464
    %v1474 = vrcp.pop %v1467
    %v1475 = vrcp.pop %v1470
    %v1476 = vmul.f32 %v1447, %v1471
    %v1477 = vmul.f32 %v1449, %v1472
    %v1478 = vmul.f32 %v1451, %v1473
    %v1479 = vmul.f32 %v1453, %v1474
    %v1480 = vmul.f32 %v1455, %v1475
    %1481 = vrot.lane.b32.xlu0 %v419, 48
    %v1482 = vpop.permute.xlu0 %1481
    %1483 = vrot.lane.b32.xlu0 %v424, 48
    %v1484 = vpop.permute.xlu0 %1483
    %1485 = vrot.lane.b32.xlu0 %v429, 48
    %v1486 = vpop.permute.xlu0 %1485
    %1487 = vrot.lane.b32.xlu0 %v434, 48
    %v1488 = vpop.permute.xlu0 %1487
    %1489 = vrot.lane.b32.xlu0 %v439, 48
    %v1490 = vpop.permute.xlu0 %1489
    %v1496 = vsel %vm581, %v1476, 0
    %v1499 = vsel %vm581, %v1477, 0
    %v1502 = vsel %vm581, %v1478, 0
    %v1505 = vsel %vm581, %v1479, 0
    %v1508 = vsel %vm581, %v1480, 0
    %v1510 = vsel %vm667, %v1490, 0
    %1512 = vmatprep.subr.mxu0 0.0
    %1513 = vmatpush1.msra.mxu0 %v1482
    %1514 = vmatprep.subr.mxu0 0.0
    %1515 = vmatpush1.msra.mxu0 %v1484
    %1516 = vmatprep.subr.mxu0 0.0
    %1517 = vmatpush1.msra.mxu0 %v1486
    %1518 = vmatprep.subr.mxu0 0.0
    %1519 = vmatpush1.msra.mxu0 %v1488
    %1520 = vmatprep.subr.mxu0 0.0
    %1521 = vmatpush1.msra.mxu0 %v1510
    %1522 = vmatprep.subr.mxu0 0.0
    %1523 = vmatpush1.msra.mxu0 0.0
    %1524 = vmatprep.subr.mxu0 0.0
    %1525 = vmatpush1.msra.mxu0 0.0
    %1526 = vmatprep.subr.mxu0 0.0
    %1527 = vmatpush1.msra.mxu0 0.0
    %1528 = vmatprep.subr.mxu0 0.0
    %1529 = vmatpush1.msra.mxu0 0.0
    %1530 = vmatprep.subr.mxu0 0.0
    %1531 = vmatpush1.msra.mxu0 0.0
    %1532 = vmatprep.subr.mxu0 0.0
    %1533 = vmatpush1.msra.mxu0 0.0
    %1534 = vmatprep.subr.mxu0 0.0
    %1535 = vmatpush1.msra.mxu0 0.0
    %1536 = vmatprep.subr.mxu0 0.0
    %1537 = vmatpush1.msra.mxu0 0.0
    %1538 = vmatprep.subr.mxu0 0.0
    %1539 = vmatpush1.msra.mxu0 0.0
    %1540 = vmatprep.subr.mxu0 0.0
    %1541 = vmatpush1.msra.mxu0 0.0
    %1542 = vmatprep.subr.mxu0 0.0
    %1543 = vmatpush1.msra.mxu0 0.0
    %1544 = vmatprep.subr.mxu0 0.0
    %1545 = vmatpush1.msra.mxu0 0.0
    %1546 = vmatprep.subr.mxu0 0.0
    %1547 = vmatpush1.msra.mxu0 0.0
    %1548 = vmatprep.subr.mxu0 0.0
    %1549 = vmatpush1.msra.mxu0 0.0
    %1550 = vmatprep.subr.mxu0 0.0
    %1551 = vmatpush1.msra.mxu0 0.0
    %1552 = vmatprep.subr.mxu0 0.0
    %1553 = vmatpush1.msra.mxu0 0.0
    %1554 = vmatprep.subr.mxu0 0.0
    %1555 = vmatpush1.msra.mxu0 0.0
    %1556 = vmatprep.subr.mxu0 0.0
    %1557 = vmatpush1.msra.mxu0 0.0
    %1558 = vmatprep.subr.mxu0 0.0
    %1559 = vmatpush1.msra.mxu0 0.0
    %1560 = vmatprep.subr.mxu0 0.0
    %1561 = vmatpush1.msra.mxu0 0.0
    %1562 = vmatprep.subr.mxu0 0.0
    %1563 = vmatpush1.msra.mxu0 0.0
    %1564 = vmatprep.subr.mxu0 0.0
    %1565 = vmatpush1.msra.mxu0 0.0
    %1566 = vmatprep.subr.mxu0 0.0
    %1567 = vmatpush1.msra.mxu0 0.0
    %1568 = vmatprep.subr.mxu0 0.0
    %1569 = vmatpush1.msra.mxu0 0.0
    %1570 = vmatprep.subr.mxu0 0.0
    %1571 = vmatpush1.msra.mxu0 0.0
    %1572 = vmatprep.subr.mxu0 0.0
    %1573 = vmatpush1.msra.mxu0 0.0
    %1574 = vmatprep.subr.mxu0 0.0
    %1575 = vmatpush1.msra.mxu0 0.0
    %1576 = vmatprep.mubr.f32.mxu0 0.0
    %1577 = vmatmul.mubr.f32.gmra.mrb[0].mxu0 %v1496
    %v1578 = vpop.f32.mrb[0].mxu0
    %v1579 = vadd.f32 0.0, %v1578
    %v1580 = vpop.f32.mrb[0].mxu0
    %1581 = vmatprep.mubr.f32.mxu0 0.0
    %1582 = vmatmul.mubr.f32.gmra.mrb[0].mxu0 %v1499
    %v1583 = vpop.f32.mrb[0].mxu0
    %v1584 = vadd.f32 0.0, %v1583
    %v1585 = vpop.f32.mrb[0].mxu0
    %1586 = vmatprep.mubr.f32.mxu0 0.0
    %1587 = vmatmul.mubr.f32.gmra.mrb[0].mxu0 %v1502
    %v1588 = vpop.f32.mrb[0].mxu0
    %v1589 = vadd.f32 0.0, %v1588
    %v1590 = vpop.f32.mrb[0].mxu0
    %1591 = vmatprep.mubr.f32.mxu0 0.0
    %1592 = vmatmul.mubr.f32.gmra.mrb[0].mxu0 %v1505
    %v1593 = vpop.f32.mrb[0].mxu0
    %v1594 = vadd.f32 0.0, %v1593
    %v1595 = vpop.f32.mrb[0].mxu0
    %1596 = vmatprep.mubr.f32.mxu0 0.0
    %1597 = vmatmul.mubr.f32.gmra.mrb[0].mxu0 %v1508
    %v1598 = vpop.f32.mrb[0].mxu0
    %v1599 = vadd.f32 0.0, %v1598
    %v1600 = vpop.f32.mrb[0].mxu0
    %1601 = vdwg.mxu0
    %v1603 = vsel %vm39, %v1579, 0
    %v1606 = vsel %vm39, %v1584, 0
    %v1609 = vsel %vm39, %v1589, 0
    %v1612 = vsel %vm39, %v1594, 0
    %v1615 = vsel %vm39, %v1599, 0
    %1617 = vmatprep.subr.mxu0 0.0
    %1618 = vmatpush1.msra.mxu0 %v444
    %1619 = vmatprep.subr.mxu0 0.0
    %1620 = vmatpush1.msra.mxu0 0.0
    %1621 = vmatprep.subr.mxu0 0.0
    %1622 = vmatpush1.msra.mxu0 0.0
    %1623 = vmatprep.subr.mxu0 0.0
    %1624 = vmatpush1.msra.mxu0 0.0
    %1625 = vmatprep.subr.mxu0 0.0
    %1626 = vmatpush1.msra.mxu0 0.0
    %1627 = vmatprep.subr.mxu0 0.0
    %1628 = vmatpush1.msra.mxu0 0.0
    %1629 = vmatprep.subr.mxu0 0.0
    %1630 = vmatpush1.msra.mxu0 0.0
    %1631 = vmatprep.subr.mxu0 0.0
    %1632 = vmatpush1.msra.mxu0 0.0
    %1633 = vmatprep.subr.mxu0 0.0
    %1634 = vmatpush1.msra.mxu0 0.0
    %1635 = vmatprep.subr.mxu0 0.0
    %1636 = vmatpush1.msra.mxu0 0.0
    %1637 = vmatprep.subr.mxu0 0.0
    %1638 = vmatpush1.msra.mxu0 0.0
    %1639 = vmatprep.subr.mxu0 0.0
    %1640 = vmatpush1.msra.mxu0 0.0
    %1641 = vmatprep.subr.mxu0 0.0
    %1642 = vmatpush1.msra.mxu0 0.0
    %1643 = vmatprep.subr.mxu0 0.0
    %1644 = vmatpush1.msra.mxu0 0.0
    %1645 = vmatprep.subr.mxu0 0.0
    %1646 = vmatpush1.msra.mxu0 0.0
    %1647 = vmatprep.subr.mxu0 0.0
    %1648 = vmatpush1.msra.mxu0 0.0
    %1649 = vmatprep.subr.mxu0 0.0
    %1650 = vmatpush1.msra.mxu0 0.0
    %1651 = vmatprep.subr.mxu0 0.0
    %1652 = vmatpush1.msra.mxu0 0.0
    %1653 = vmatprep.subr.mxu0 0.0
    %1654 = vmatpush1.msra.mxu0 0.0
    %1655 = vmatprep.subr.mxu0 0.0
    %1656 = vmatpush1.msra.mxu0 0.0
    %1657 = vmatprep.subr.mxu0 0.0
    %1658 = vmatpush1.msra.mxu0 0.0
    %1659 = vmatprep.subr.mxu0 0.0
    %1660 = vmatpush1.msra.mxu0 0.0
    %1661 = vmatprep.subr.mxu0 0.0
    %1662 = vmatpush1.msra.mxu0 0.0
    %1663 = vmatprep.subr.mxu0 0.0
    %1664 = vmatpush1.msra.mxu0 0.0
    %1665 = vmatprep.subr.mxu0 0.0
    %1666 = vmatpush1.msra.mxu0 0.0
    %1667 = vmatprep.subr.mxu0 0.0
    %1668 = vmatpush1.msra.mxu0 0.0
    %1669 = vmatprep.subr.mxu0 0.0
    %1670 = vmatpush1.msra.mxu0 0.0
    %1671 = vmatprep.subr.mxu0 0.0
    %1672 = vmatpush1.msra.mxu0 0.0
    %1673 = vmatprep.subr.mxu0 0.0
    %1674 = vmatpush1.msra.mxu0 0.0
    %1675 = vmatprep.subr.mxu0 0.0
    %1676 = vmatpush1.msra.mxu0 0.0
    %1677 = vmatprep.subr.mxu0 0.0
    %1678 = vmatpush1.msra.mxu0 0.0
    %1679 = vmatprep.subr.mxu0 0.0
    %1680 = vmatpush1.msra.mxu0 0.0
    %1681 = vmatprep.mubr.f32.mxu0 0.0
    %1682 = vmatmul.mubr.f32.gmra.mrb[0].mxu0 %v1603
    %v1683 = vpop.f32.mrb[0].mxu0
    %v1684 = vadd.f32 0.0, %v1683
    %v1685 = vpop.f32.mrb[0].mxu0
    %1686 = vmatprep.mubr.f32.mxu0 0.0
    %1687 = vmatmul.mubr.f32.gmra.mrb[0].mxu0 %v1606
    %v1688 = vpop.f32.mrb[0].mxu0
    %v1689 = vadd.f32 0.0, %v1688
    %v1690 = vpop.f32.mrb[0].mxu0
    %1691 = vmatprep.mubr.f32.mxu0 0.0
    %1692 = vmatmul.mubr.f32.gmra.mrb[0].mxu0 %v1609
    %v1693 = vpop.f32.mrb[0].mxu0
    %v1694 = vadd.f32 0.0, %v1693
    %v1695 = vpop.f32.mrb[0].mxu0
    %1696 = vmatprep.mubr.f32.mxu0 0.0
    %1697 = vmatmul.mubr.f32.gmra.mrb[0].mxu0 %v1612
    %v1698 = vpop.f32.mrb[0].mxu0
    %v1699 = vadd.f32 0.0, %v1698
    %v1700 = vpop.f32.mrb[0].mxu0
    %1701 = vmatprep.mubr.f32.mxu0 0.0
    %1702 = vmatmul.mubr.f32.gmra.mrb[0].mxu0 %v1615
    %v1703 = vpop.f32.mrb[0].mxu0
    %v1704 = vadd.f32 0.0, %v1703
    %v1705 = vpop.f32.mrb[0].mxu0
    %1706 = vdwg.mxu0
    %v1707 = vadd.f32 %v1263, %v1684
    %v1708 = vadd.f32 %v1268, %v1689
    %v1709 = vadd.f32 %v1273, %v1694
    %v1710 = vadd.f32 %v1278, %v1699
    %v1711 = vadd.f32 %v1283, %v1704
    %1712 = vrot.lane.b32.xlu0 %v419, 104
    %v1713 = vpop.permute.xlu0 %1712
    %1714 = vrot.lane.b32.xlu0 %v424, 104
    %v1715 = vpop.permute.xlu0 %1714
    %1716 = vrot.lane.b32.xlu0 %v429, 104
    %v1717 = vpop.permute.xlu0 %1716
    %1718 = vrot.lane.b32.xlu0 %v434, 104
    %v1719 = vpop.permute.xlu0 %1718
    %1720 = vrot.lane.b32.xlu0 %v439, 104
    %v1721 = vpop.permute.xlu0 %1720
    %1722 = vrot.lane.b32.xlu0 %v419, 72
    %v1723 = vpop.permute.xlu0 %1722
    %1724 = vrot.lane.b32.xlu0 %v424, 72
    %v1725 = vpop.permute.xlu0 %1724
    %1726 = vrot.lane.b32.xlu0 %v429, 72
    %v1727 = vpop.permute.xlu0 %1726
    %1728 = vrot.lane.b32.xlu0 %v434, 72
    %v1729 = vpop.permute.xlu0 %1728
    %1730 = vrot.lane.b32.xlu0 %v439, 72
    %v1731 = vpop.permute.xlu0 %1730
    %v1732 = vsel %vm39, %v1713, 0
    %v1734 = vsel %vm39, %v1715, 0
    %v1736 = vsel %vm39, %v1717, 0
    %v1738 = vsel %vm39, %v1719, 0
    %v1740 = vsel %vm39, %v1721, 0
    %v1742 = vsel %vm39, %v1723, 0
    %v1744 = vsel %vm39, %v1725, 0
    %v1746 = vsel %vm39, %v1727, 0
    %v1748 = vsel %vm39, %v1729, 0
    %v1750 = vsel %vm39, %v1731, 0
    %1752 = vmatprep.subr.mxu0 0.0
    %1753 = vmatpush1.xpose.msra.mxu0 %v1742
    %1754 = vmatprep.subr.mxu0 0.0
    %1755 = vmatpush1.xpose.msra.mxu0 %v1744
    %1756 = vmatprep.subr.mxu0 0.0
    %1757 = vmatpush1.xpose.msra.mxu0 %v1746
    %1758 = vmatprep.subr.mxu0 0.0
    %1759 = vmatpush1.xpose.msra.mxu0 %v1748
    %1760 = vmatprep.subr.mxu0 0.0
    %1761 = vmatpush1.xpose.msra.mxu0 %v1750
    %1762 = vmatprep.subr.mxu0 0.0
    %1763 = vmatpush1.xpose.msra.mxu0 0.0
    %1764 = vmatprep.subr.mxu0 0.0
    %1765 = vmatpush1.xpose.msra.mxu0 0.0
    %1766 = vmatprep.subr.mxu0 0.0
    %1767 = vmatpush1.xpose.msra.mxu0 0.0
    %1768 = vmatprep.subr.mxu0 0.0
    %1769 = vmatpush1.xpose.msra.mxu0 0.0
    %1770 = vmatprep.subr.mxu0 0.0
    %1771 = vmatpush1.xpose.msra.mxu0 0.0
    %1772 = vmatprep.subr.mxu0 0.0
    %1773 = vmatpush1.xpose.msra.mxu0 0.0
    %1774 = vmatprep.subr.mxu0 0.0
    %1775 = vmatpush1.xpose.msra.mxu0 0.0
    %1776 = vmatprep.subr.mxu0 0.0
    %1777 = vmatpush1.xpose.msra.mxu0 0.0
    %1778 = vmatprep.subr.mxu0 0.0
    %1779 = vmatpush1.xpose.msra.mxu0 0.0
    %1780 = vmatprep.subr.mxu0 0.0
    %1781 = vmatpush1.xpose.msra.mxu0 0.0
    %1782 = vmatprep.subr.mxu0 0.0
    %1783 = vmatpush1.xpose.msra.mxu0 0.0
    %1784 = vmatprep.subr.mxu0 0.0
    %1785 = vmatpush1.xpose.msra.mxu0 0.0
    %1786 = vmatprep.subr.mxu0 0.0
    %1787 = vmatpush1.xpose.msra.mxu0 0.0
    %1788 = vmatprep.subr.mxu0 0.0
    %1789 = vmatpush1.xpose.msra.mxu0 0.0
    %1790 = vmatprep.subr.mxu0 0.0
    %1791 = vmatpush1.xpose.msra.mxu0 0.0
    %1792 = vmatprep.subr.mxu0 0.0
    %1793 = vmatpush1.xpose.msra.mxu0 0.0
    %1794 = vmatprep.subr.mxu0 0.0
    %1795 = vmatpush1.xpose.msra.mxu0 0.0
    %1796 = vmatprep.subr.mxu0 0.0
    %1797 = vmatpush1.xpose.msra.mxu0 0.0
    %1798 = vmatprep.subr.mxu0 0.0
    %1799 = vmatpush1.xpose.msra.mxu0 0.0
    %1800 = vmatprep.subr.mxu0 0.0
    %1801 = vmatpush1.xpose.msra.mxu0 0.0
    %1802 = vmatprep.subr.mxu0 0.0
    %1803 = vmatpush1.xpose.msra.mxu0 0.0
    %1804 = vmatprep.subr.mxu0 0.0
    %1805 = vmatpush1.xpose.msra.mxu0 0.0
    %1806 = vmatprep.subr.mxu0 0.0
    %1807 = vmatpush1.xpose.msra.mxu0 0.0
    %1808 = vmatprep.subr.mxu0 0.0
    %1809 = vmatpush1.xpose.msra.mxu0 0.0
    %1810 = vmatprep.subr.mxu0 0.0
    %1811 = vmatpush1.xpose.msra.mxu0 0.0
    %1812 = vmatprep.subr.mxu0 0.0
    %1813 = vmatpush1.xpose.msra.mxu0 0.0
    %1814 = vmatprep.subr.mxu0 0.0
    %1815 = vmatpush1.xpose.msra.mxu0 0.0
    %1816 = vmatprep.mubr.f32.mxu0 0.0
    %1817 = vmatmul.mubr.f32.gmra.mrb[0].mxu0 %v1732
    %v1818 = vpop.f32.mrb[0].mxu0
    %v1819 = vadd.f32 0.0, %v1818
    %v1820 = vpop.f32.mrb[0].mxu0
    %1821 = vmatprep.mubr.f32.mxu0 0.0
    %1822 = vmatmul.mubr.f32.gmra.mrb[0].mxu0 %v1734
    %v1823 = vpop.f32.mrb[0].mxu0
    %v1824 = vadd.f32 0.0, %v1823
    %v1825 = vpop.f32.mrb[0].mxu0
    %1826 = vmatprep.mubr.f32.mxu0 0.0
    %1827 = vmatmul.mubr.f32.gmra.mrb[0].mxu0 %v1736
    %v1828 = vpop.f32.mrb[0].mxu0
    %v1829 = vadd.f32 0.0, %v1828
    %v1830 = vpop.f32.mrb[0].mxu0
    %1831 = vmatprep.mubr.f32.mxu0 0.0
    %1832 = vmatmul.mubr.f32.gmra.mrb[0].mxu0 %v1738
    %v1833 = vpop.f32.mrb[0].mxu0
    %v1834 = vadd.f32 0.0, %v1833
    %v1835 = vpop.f32.mrb[0].mxu0
    %1836 = vmatprep.mubr.f32.mxu0 0.0
    %1837 = vmatmul.mubr.f32.gmra.mrb[0].mxu0 %v1740
    %v1838 = vpop.f32.mrb[0].mxu0
    %v1839 = vadd.f32 0.0, %v1838
    %v1840 = vpop.f32.mrb[0].mxu0
    %1841 = vdwg.mxu0
    %v1842 = vmul.f32 %v1819, 0.35355338
    %v1843 = vmul.f32 %v1824, 0.35355338
    %v1844 = vmul.f32 %v1829, 0.35355338
    %v1845 = vmul.f32 %v1834, 0.35355338
    %v1846 = vmul.f32 %v1839, 0.35355338
    %v1847 = vadd.f32 %v1842, %v27
    %v1848 = vadd.f32 %v1843, %v28
    %v1849 = vadd.f32 %v1844, %v29
    %v1850 = vadd.f32 %v1845, %v30
    %v1851 = vadd.f32 %v1846, %v31
    %v1852 = vsel %vm581, %v1847, -inf
    %1853 = vmax.xlane.f32.xlu0 %v1852
    %v1854 = vpop.xlane.xlu0 %1853
    %v1855 = vsel %vm581, %v1848, -inf
    %1856 = vmax.xlane.f32.xlu0 %v1855
    %v1857 = vpop.xlane.xlu0 %1856
    %v1858 = vsel %vm581, %v1849, -inf
    %1859 = vmax.xlane.f32.xlu0 %v1858
    %v1860 = vpop.xlane.xlu0 %1859
    %v1861 = vsel %vm581, %v1850, -inf
    %1862 = vmax.xlane.f32.xlu0 %v1861
    %v1863 = vpop.xlane.xlu0 %1862
    %v1864 = vsel %vm594, %v1851, -inf
    %1865 = vmax.xlane.f32.xlu0 %v1864
    %v1866 = vpop.xlane.xlu0 %1865
    %v1867 = vsub.f32 %v1847, %v1854
    %v1868 = vsub.f32 %v1848, %v1857
    %v1869 = vsub.f32 %v1849, %v1860
    %v1870 = vsub.f32 %v1850, %v1863
    %v1871 = vsub.f32 %v1851, %v1866
    %v1872 = vmul.f32 %v1867, 1.442695
    %v1873 = vpow.pop %v1872
    %v1874 = vmul.f32 %v1868, 1.442695
    %v1875 = vpow.pop %v1874
    %v1876 = vmul.f32 %v1869, 1.442695
    %v1877 = vpow.pop %v1876
    %v1878 = vmul.f32 %v1870, 1.442695
    %v1879 = vpow.pop %v1878
    %v1880 = vmul.f32 %v1871, 1.442695
    %v1881 = vpow.pop %v1880
    %v1882 = vsel %vm581, %v1873, 0.0
    %1883 = vadd.xlane.f32.xlu0 %v1882
    %v1884 = vpop.xlane.xlu0 %1883
    %v1885 = vsel %vm581, %v1875, 0.0
    %1886 = vadd.xlane.f32.xlu0 %v1885
    %v1887 = vpop.xlane.xlu0 %1886
    %v1888 = vsel %vm581, %v1877, 0.0
    %1889 = vadd.xlane.f32.xlu0 %v1888
    %v1890 = vpop.xlane.xlu0 %1889
    %v1891 = vsel %vm581, %v1879, 0.0
    %1892 = vadd.xlane.f32.xlu0 %v1891
    %v1893 = vpop.xlane.xlu0 %1892
    %v1894 = vsel %vm594, %v1881, 0.0
    %1895 = vadd.xlane.f32.xlu0 %v1894
    %v1896 = vpop.xlane.xlu0 %1895
    %v1897 = vrcp.pop %v1884
    %v1898 = vrcp.pop %v1887
    %v1899 = vrcp.pop %v1890
    %v1900 = vrcp.pop %v1893
    %v1901 = vrcp.pop %v1896
    %v1902 = vmul.f32 %v1873, %v1897
    %v1903 = vmul.f32 %v1875, %v1898
    %v1904 = vmul.f32 %v1877, %v1899
    %v1905 = vmul.f32 %v1879, %v1900
    %v1906 = vmul.f32 %v1881, %v1901
    %1907 = vrot.lane.b32.xlu0 %v419, 40
    %v1908 = vpop.permute.xlu0 %1907
    %1909 = vrot.lane.b32.xlu0 %v424, 40
    %v1910 = vpop.permute.xlu0 %1909
    %1911 = vrot.lane.b32.xlu0 %v429, 40
    %v1912 = vpop.permute.xlu0 %1911
    %1913 = vrot.lane.b32.xlu0 %v434, 40
    %v1914 = vpop.permute.xlu0 %1913
    %1915 = vrot.lane.b32.xlu0 %v439, 40
    %v1916 = vpop.permute.xlu0 %1915
    %v1922 = vsel %vm581, %v1902, 0
    %v1925 = vsel %vm581, %v1903, 0
    %v1928 = vsel %vm581, %v1904, 0
    %v1931 = vsel %vm581, %v1905, 0
    %v1934 = vsel %vm581, %v1906, 0
    %v1936 = vsel %vm667, %v1916, 0
    %1938 = vmatprep.subr.mxu0 0.0
    %1939 = vmatpush1.msra.mxu0 %v1908
    %1940 = vmatprep.subr.mxu0 0.0
    %1941 = vmatpush1.msra.mxu0 %v1910
    %1942 = vmatprep.subr.mxu0 0.0
    %1943 = vmatpush1.msra.mxu0 %v1912
    %1944 = vmatprep.subr.mxu0 0.0
    %1945 = vmatpush1.msra.mxu0 %v1914
    %1946 = vmatprep.subr.mxu0 0.0
    %1947 = vmatpush1.msra.mxu0 %v1936
    %1948 = vmatprep.subr.mxu0 0.0
    %1949 = vmatpush1.msra.mxu0 0.0
    %1950 = vmatprep.subr.mxu0 0.0
    %1951 = vmatpush1.msra.mxu0 0.0
    %1952 = vmatprep.subr.mxu0 0.0
    %1953 = vmatpush1.msra.mxu0 0.0
    %1954 = vmatprep.subr.mxu0 0.0
    %1955 = vmatpush1.msra.mxu0 0.0
    %1956 = vmatprep.subr.mxu0 0.0
    %1957 = vmatpush1.msra.mxu0 0.0
    %1958 = vmatprep.subr.mxu0 0.0
    %1959 = vmatpush1.msra.mxu0 0.0
    %1960 = vmatprep.subr.mxu0 0.0
    %1961 = vmatpush1.msra.mxu0 0.0
    %1962 = vmatprep.subr.mxu0 0.0
    %1963 = vmatpush1.msra.mxu0 0.0
    %1964 = vmatprep.subr.mxu0 0.0
    %1965 = vmatpush1.msra.mxu0 0.0
    %1966 = vmatprep.subr.mxu0 0.0
    %1967 = vmatpush1.msra.mxu0 0.0
    %1968 = vmatprep.subr.mxu0 0.0
    %1969 = vmatpush1.msra.mxu0 0.0
    %1970 = vmatprep.subr.mxu0 0.0
    %1971 = vmatpush1.msra.mxu0 0.0
    %1972 = vmatprep.subr.mxu0 0.0
    %1973 = vmatpush1.msra.mxu0 0.0
    %1974 = vmatprep.subr.mxu0 0.0
    %1975 = vmatpush1.msra.mxu0 0.0
    %1976 = vmatprep.subr.mxu0 0.0
    %1977 = vmatpush1.msra.mxu0 0.0
    %1978 = vmatprep.subr.mxu0 0.0
    %1979 = vmatpush1.msra.mxu0 0.0
    %1980 = vmatprep.subr.mxu0 0.0
    %1981 = vmatpush1.msra.mxu0 0.0
    %1982 = vmatprep.subr.mxu0 0.0
    %1983 = vmatpush1.msra.mxu0 0.0
    %1984 = vmatprep.subr.mxu0 0.0
    %1985 = vmatpush1.msra.mxu0 0.0
    %1986 = vmatprep.subr.mxu0 0.0
    %1987 = vmatpush1.msra.mxu0 0.0
    %1988 = vmatprep.subr.mxu0 0.0
    %1989 = vmatpush1.msra.mxu0 0.0
    %1990 = vmatprep.subr.mxu0 0.0
    %1991 = vmatpush1.msra.mxu0 0.0
    %1992 = vmatprep.subr.mxu0 0.0
    %1993 = vmatpush1.msra.mxu0 0.0
    %1994 = vmatprep.subr.mxu0 0.0
    %1995 = vmatpush1.msra.mxu0 0.0
    %1996 = vmatprep.subr.mxu0 0.0
    %1997 = vmatpush1.msra.mxu0 0.0
    %1998 = vmatprep.subr.mxu0 0.0
    %1999 = vmatpush1.msra.mxu0 0.0
    %2000 = vmatprep.subr.mxu0 0.0
    %2001 = vmatpush1.msra.mxu0 0.0
    %2002 = vmatprep.mubr.f32.mxu0 0.0
    %2003 = vmatmul.mubr.f32.gmra.mrb[0].mxu0 %v1922
    %v2004 = vpop.f32.mrb[0].mxu0
    %v2005 = vadd.f32 0.0, %v2004
    %v2006 = vpop.f32.mrb[0].mxu0
    %2007 = vmatprep.mubr.f32.mxu0 0.0
    %2008 = vmatmul.mubr.f32.gmra.mrb[0].mxu0 %v1925
    %v2009 = vpop.f32.mrb[0].mxu0
    %v2010 = vadd.f32 0.0, %v2009
    %v2011 = vpop.f32.mrb[0].mxu0
    %2012 = vmatprep.mubr.f32.mxu0 0.0
    %2013 = vmatmul.mubr.f32.gmra.mrb[0].mxu0 %v1928
    %v2014 = vpop.f32.mrb[0].mxu0
    %v2015 = vadd.f32 0.0, %v2014
    %v2016 = vpop.f32.mrb[0].mxu0
    %2017 = vmatprep.mubr.f32.mxu0 0.0
    %2018 = vmatmul.mubr.f32.gmra.mrb[0].mxu0 %v1931
    %v2019 = vpop.f32.mrb[0].mxu0
    %v2020 = vadd.f32 0.0, %v2019
    %v2021 = vpop.f32.mrb[0].mxu0
    %2022 = vmatprep.mubr.f32.mxu0 0.0
    %2023 = vmatmul.mubr.f32.gmra.mrb[0].mxu0 %v1934
    %v2024 = vpop.f32.mrb[0].mxu0
    %v2025 = vadd.f32 0.0, %v2024
    %v2026 = vpop.f32.mrb[0].mxu0
    %2027 = vdwg.mxu0
    %v2029 = vsel %vm39, %v2005, 0
    %v2032 = vsel %vm39, %v2010, 0
    %v2035 = vsel %vm39, %v2015, 0
    %v2038 = vsel %vm39, %v2020, 0
    %v2041 = vsel %vm39, %v2025, 0
    %2043 = vmatprep.subr.mxu0 0.0
    %2044 = vmatpush1.msra.mxu0 %v445
    %2045 = vmatprep.subr.mxu0 0.0
    %2046 = vmatpush1.msra.mxu0 0.0
    %2047 = vmatprep.subr.mxu0 0.0
    %2048 = vmatpush1.msra.mxu0 0.0
    %2049 = vmatprep.subr.mxu0 0.0
    %2050 = vmatpush1.msra.mxu0 0.0
    %2051 = vmatprep.subr.mxu0 0.0
    %2052 = vmatpush1.msra.mxu0 0.0
    %2053 = vmatprep.subr.mxu0 0.0
    %2054 = vmatpush1.msra.mxu0 0.0
    %2055 = vmatprep.subr.mxu0 0.0
    %2056 = vmatpush1.msra.mxu0 0.0
    %2057 = vmatprep.subr.mxu0 0.0
    %2058 = vmatpush1.msra.mxu0 0.0
    %2059 = vmatprep.subr.mxu0 0.0
    %2060 = vmatpush1.msra.mxu0 0.0
    %2061 = vmatprep.subr.mxu0 0.0
    %2062 = vmatpush1.msra.mxu0 0.0
    %2063 = vmatprep.subr.mxu0 0.0
    %2064 = vmatpush1.msra.mxu0 0.0
    %2065 = vmatprep.subr.mxu0 0.0
    %2066 = vmatpush1.msra.mxu0 0.0
    %2067 = vmatprep.subr.mxu0 0.0
    %2068 = vmatpush1.msra.mxu0 0.0
    %2069 = vmatprep.subr.mxu0 0.0
    %2070 = vmatpush1.msra.mxu0 0.0
    %2071 = vmatprep.subr.mxu0 0.0
    %2072 = vmatpush1.msra.mxu0 0.0
    %2073 = vmatprep.subr.mxu0 0.0
    %2074 = vmatpush1.msra.mxu0 0.0
    %2075 = vmatprep.subr.mxu0 0.0
    %2076 = vmatpush1.msra.mxu0 0.0
    %2077 = vmatprep.subr.mxu0 0.0
    %2078 = vmatpush1.msra.mxu0 0.0
    %2079 = vmatprep.subr.mxu0 0.0
    %2080 = vmatpush1.msra.mxu0 0.0
    %2081 = vmatprep.subr.mxu0 0.0
    %2082 = vmatpush1.msra.mxu0 0.0
    %2083 = vmatprep.subr.mxu0 0.0
    %2084 = vmatpush1.msra.mxu0 0.0
    %2085 = vmatprep.subr.mxu0 0.0
    %2086 = vmatpush1.msra.mxu0 0.0
    %2087 = vmatprep.subr.mxu0 0.0
    %2088 = vmatpush1.msra.mxu0 0.0
    %2089 = vmatprep.subr.mxu0 0.0
    %2090 = vmatpush1.msra.mxu0 0.0
    %2091 = vmatprep.subr.mxu0 0.0
    %2092 = vmatpush1.msra.mxu0 0.0
    %2093 = vmatprep.subr.mxu0 0.0
    %2094 = vmatpush1.msra.mxu0 0.0
    %2095 = vmatprep.subr.mxu0 0.0
    %2096 = vmatpush1.msra.mxu0 0.0
    %2097 = vmatprep.subr.mxu0 0.0
    %2098 = vmatpush1.msra.mxu0 0.0
    %2099 = vmatprep.subr.mxu0 0.0
    %2100 = vmatpush1.msra.mxu0 0.0
    %2101 = vmatprep.subr.mxu0 0.0
    %2102 = vmatpush1.msra.mxu0 0.0
    %2103 = vmatprep.subr.mxu0 0.0
    %2104 = vmatpush1.msra.mxu0 0.0
    %2105 = vmatprep.subr.mxu0 0.0
    %2106 = vmatpush1.msra.mxu0 0.0
    %2107 = vmatprep.mubr.f32.mxu0 0.0
    %2108 = vmatmul.mubr.f32.gmra.mrb[0].mxu0 %v2029
    %v2109 = vpop.f32.mrb[0].mxu0
    %v2110 = vadd.f32 0.0, %v2109
    %v2111 = vpop.f32.mrb[0].mxu0
    %2112 = vmatprep.mubr.f32.mxu0 0.0
    %2113 = vmatmul.mubr.f32.gmra.mrb[0].mxu0 %v2032
    %v2114 = vpop.f32.mrb[0].mxu0
    %v2115 = vadd.f32 0.0, %v2114
    %v2116 = vpop.f32.mrb[0].mxu0
    %2117 = vmatprep.mubr.f32.mxu0 0.0
    %2118 = vmatmul.mubr.f32.gmra.mrb[0].mxu0 %v2035
    %v2119 = vpop.f32.mrb[0].mxu0
    %v2120 = vadd.f32 0.0, %v2119
    %v2121 = vpop.f32.mrb[0].mxu0
    %2122 = vmatprep.mubr.f32.mxu0 0.0
    %2123 = vmatmul.mubr.f32.gmra.mrb[0].mxu0 %v2038
    %v2124 = vpop.f32.mrb[0].mxu0
    %v2125 = vadd.f32 0.0, %v2124
    %v2126 = vpop.f32.mrb[0].mxu0
    %2127 = vmatprep.mubr.f32.mxu0 0.0
    %2128 = vmatmul.mubr.f32.gmra.mrb[0].mxu0 %v2041
    %v2129 = vpop.f32.mrb[0].mxu0
    %v2130 = vadd.f32 0.0, %v2129
    %v2131 = vpop.f32.mrb[0].mxu0
    %2132 = vdwg.mxu0
    %v2133 = vadd.f32 %v1707, %v2110
    %v2134 = vadd.f32 %v1708, %v2115
    %v2135 = vadd.f32 %v1709, %v2120
    %v2136 = vadd.f32 %v1710, %v2125
    %v2137 = vadd.f32 %v1711, %v2130
    %v2138 = vld [vmem:[%s4 + $0xc0] sm:$0x1]
    %v2139 = vlaneseq
    %v2140 = vshrl.u32 %v2139, 7
    %v2141 = vsub.s32 0, %v2140
    %v2142 = vrot.slane %v2138, %v2141
    %v2143 = vadd.f32 %v2133, %v2142
    %v2144 = vadd.f32 %v2134, %v2142
    %v2145 = vadd.f32 %v2135, %v2142
    %v2146 = vadd.f32 %v2136, %v2142
    %v2147 = vadd.f32 %v2137, %v2142
    %v2148 = vadd.f32 %v2143, %v207
    %v2149 = vadd.f32 %v2144, %v212
    %v2150 = vadd.f32 %v2145, %v217
    %v2151 = vadd.f32 %v2146, %v222
    %v2152 = vadd.f32 %v2147, %v227
    %v2153 = vsel %vm230, %v2148, 0.0
    %2154 = vadd.xlane.f32.xlu0 %v2153
    %v2155 = vpop.xlane.xlu0 %2154
    %v2156 = vsel %vm230, %v2149, 0.0
    %2157 = vadd.xlane.f32.xlu0 %v2156
    %v2158 = vpop.xlane.xlu0 %2157
    %v2159 = vsel %vm230, %v2150, 0.0
    %2160 = vadd.xlane.f32.xlu0 %v2159
    %v2161 = vpop.xlane.xlu0 %2160
    %v2162 = vsel %vm230, %v2151, 0.0
    %2163 = vadd.xlane.f32.xlu0 %v2162
    %v2164 = vpop.xlane.xlu0 %2163
    %v2165 = vsel %vm243, %v2152, 0.0
    %2166 = vadd.xlane.f32.xlu0 %v2165
    %v2167 = vpop.xlane.xlu0 %2166
    %v2168 = vmul.f32 %v2155, %v247
    %v2169 = vmul.f32 %v2158, %v247
    %v2170 = vmul.f32 %v2161, %v247
    %v2171 = vmul.f32 %v2164, %v247
    %v2172 = vmul.f32 %v2167, %v247
    %v2173 = vmul.f32 %v2148, %v2148
    %v2174 = vmul.f32 %v2149, %v2149
    %v2175 = vmul.f32 %v2150, %v2150
    %v2176 = vmul.f32 %v2151, %v2151
    %v2177 = vmul.f32 %v2152, %v2152
    %v2178 = vsel %vm230, %v2173, 0.0
    %2179 = vadd.xlane.f32.xlu0 %v2178
    %v2180 = vpop.xlane.xlu0 %2179
    %v2181 = vsel %vm230, %v2174, 0.0
    %2182 = vadd.xlane.f32.xlu0 %v2181
    %v2183 = vpop.xlane.xlu0 %2182
    %v2184 = vsel %vm230, %v2175, 0.0
    %2185 = vadd.xlane.f32.xlu0 %v2184
    %v2186 = vpop.xlane.xlu0 %2185
    %v2187 = vsel %vm230, %v2176, 0.0
    %2188 = vadd.xlane.f32.xlu0 %v2187
    %v2189 = vpop.xlane.xlu0 %2188
    %v2190 = vsel %vm243, %v2177, 0.0
    %2191 = vadd.xlane.f32.xlu0 %v2190
    %v2192 = vpop.xlane.xlu0 %2191
    %v2193 = vmul.f32 %v2180, %v247
    %v2194 = vmul.f32 %v2183, %v247
    %v2195 = vmul.f32 %v2186, %v247
    %v2196 = vmul.f32 %v2189, %v247
    %v2197 = vmul.f32 %v2192, %v247
    %v2198 = vsub.f32 %v2148, %v2168
    %v2199 = vsub.f32 %v2149, %v2169
    %v2200 = vsub.f32 %v2150, %v2170
    %v2201 = vsub.f32 %v2151, %v2171
    %v2202 = vsub.f32 %v2152, %v2172
    %v2203 = vmul.f32 %v2168, %v2168
    %v2204 = vmul.f32 %v2169, %v2169
    %v2205 = vmul.f32 %v2170, %v2170
    %v2206 = vmul.f32 %v2171, %v2171
    %v2207 = vmul.f32 %v2172, %v2172
    %v2208 = vsub.f32 %v2193, %v2203
    %v2209 = vsub.f32 %v2194, %v2204
    %v2210 = vsub.f32 %v2195, %v2205
    %v2211 = vsub.f32 %v2196, %v2206
    %v2212 = vsub.f32 %v2197, %v2207
    %v2213 = vadd.f32 %v2208, 1e-06
    %v2214 = vadd.f32 %v2209, 1e-06
    %v2215 = vadd.f32 %v2210, 1e-06
    %v2216 = vadd.f32 %v2211, 1e-06
    %v2217 = vadd.f32 %v2212, 1e-06
    %v2218 = vrsqrt.pop %v2213
    %v2219 = vrsqrt.pop %v2214
    %v2220 = vrsqrt.pop %v2215
    %v2221 = vrsqrt.pop %v2216
    %v2222 = vrsqrt.pop %v2217
    %v2223 = vmul.f32 %v2198, %v2218
    %v2224 = vmul.f32 %v2199, %v2219
    %v2225 = vmul.f32 %v2200, %v2220
    %v2226 = vmul.f32 %v2201, %v2221
    %v2227 = vmul.f32 %v2202, %v2222
    %v2228 = vld [vmem:[%s4 + $0xd8] sm:$0x1]
    %v2229 = vlaneseq
    %v2230 = vshrl.u32 %v2229, 7
    %v2231 = vsub.s32 0, %v2230
    %v2232 = vrot.slane %v2228, %v2231
    %v2233 = vmul.f32 %v2223, %v2232
    %v2234 = vmul.f32 %v2224, %v2232
    %v2235 = vmul.f32 %v2225, %v2232
    %v2236 = vmul.f32 %v2226, %v2232
    %v2237 = vmul.f32 %v2227, %v2232
    %v2238 = vld [vmem:[%s4 + $0xe0] sm:$0x1]
    %v2239 = vlaneseq
    %v2240 = vshrl.u32 %v2239, 7
    %v2241 = vsub.s32 0, %v2240
    %v2242 = vrot.slane %v2238, %v2241
    %v2243 = vadd.f32 %v2233, %v2242
    %v2244 = vadd.f32 %v2234, %v2242
    %v2245 = vadd.f32 %v2235, %v2242
    %v2246 = vadd.f32 %v2236, %v2242
    %v2247 = vadd.f32 %v2237, %v2242
    %v2248 = vld [vmem:[%s4 + $0xe8] sm:$0xff]
    %v2249 = vld [vmem:[%s4 + $0xf0] sm:$0xff]
    %v2250 = vld [vmem:[%s4 + $0xf8] sm:$0xff]
    %v2251 = vld [vmem:[%s4 + $0x100] sm:$0xff]
    %v2252 = vld [vmem:[%s4 + $0x108] sm:$0x1]
    %v2253 = vlaneseq
    %v2254 = vshrl.u32 %v2253, 7
    %v2255 = vsub.s32 0, %v2254
    %v2256 = vrot.slane %v2252, %v2255
    %v2258 = vsel %vm230, %v2243, 0
    %v2261 = vsel %vm230, %v2244, 0
    %v2264 = vsel %vm230, %v2245, 0
    %v2267 = vsel %vm230, %v2246, 0
    %v2270 = vsel %vm230, %v2247, 0
    %2272 = vmatprep.subr.mxu0 0.0
    %2273 = vmatpush1.msra.mxu0 %v2248
    %2274 = vmatprep.subr.mxu0 0.0
    %2275 = vmatpush1.msra.mxu0 %v2249
    %2276 = vmatprep.subr.mxu0 0.0
    %2277 = vmatpush1.msra.mxu0 %v2250
    %2278 = vmatprep.subr.mxu0 0.0
    %2279 = vmatpush1.msra.mxu0 %v2251
    %2280 = vmatprep.subr.mxu0 0.0
    %2281 = vmatpush1.msra.mxu0 0.0
    %2282 = vmatprep.subr.mxu0 0.0
    %2283 = vmatpush1.msra.mxu0 0.0
    %2284 = vmatprep.subr.mxu0 0.0
    %2285 = vmatpush1.msra.mxu0 0.0
    %2286 = vmatprep.subr.mxu0 0.0
    %2287 = vmatpush1.msra.mxu0 0.0
    %2288 = vmatprep.subr.mxu0 0.0
    %2289 = vmatpush1.msra.mxu0 0.0
    %2290 = vmatprep.subr.mxu0 0.0
    %2291 = vmatpush1.msra.mxu0 0.0
    %2292 = vmatprep.subr.mxu0 0.0
    %2293 = vmatpush1.msra.mxu0 0.0
    %2294 = vmatprep.subr.mxu0 0.0
    %2295 = vmatpush1.msra.mxu0 0.0
    %2296 = vmatprep.subr.mxu0 0.0
    %2297 = vmatpush1.msra.mxu0 0.0
    %2298 = vmatprep.subr.mxu0 0.0
    %2299 = vmatpush1.msra.mxu0 0.0
    %2300 = vmatprep.subr.mxu0 0.0
    %2301 = vmatpush1.msra.mxu0 0.0
    %2302 = vmatprep.subr.mxu0 0.0
    %2303 = vmatpush1.msra.mxu0 0.0
    %2304 = vmatprep.subr.mxu0 0.0
    %2305 = vmatpush1.msra.mxu0 0.0
    %2306 = vmatprep.subr.mxu0 0.0
    %2307 = vmatpush1.msra.mxu0 0.0
    %2308 = vmatprep.subr.mxu0 0.0
    %2309 = vmatpush1.msra.mxu0 0.0
    %2310 = vmatprep.subr.mxu0 0.0
    %2311 = vmatpush1.msra.mxu0 0.0
    %2312 = vmatprep.subr.mxu0 0.0
    %2313 = vmatpush1.msra.mxu0 0.0
    %2314 = vmatprep.subr.mxu0 0.0
    %2315 = vmatpush1.msra.mxu0 0.0
    %2316 = vmatprep.subr.mxu0 0.0
    %2317 = vmatpush1.msra.mxu0 0.0
    %2318 = vmatprep.subr.mxu0 0.0
    %2319 = vmatpush1.msra.mxu0 0.0
    %2320 = vmatprep.subr.mxu0 0.0
    %2321 = vmatpush1.msra.mxu0 0.0
    %2322 = vmatprep.subr.mxu0 0.0
    %2323 = vmatpush1.msra.mxu0 0.0
    %2324 = vmatprep.subr.mxu0 0.0
    %2325 = vmatpush1.msra.mxu0 0.0
    %2326 = vmatprep.subr.mxu0 0.0
    %2327 = vmatpush1.msra.mxu0 0.0
    %2328 = vmatprep.subr.mxu0 0.0
    %2329 = vmatpush1.msra.mxu0 0.0
    %2330 = vmatprep.subr.mxu0 0.0
    %2331 = vmatpush1.msra.mxu0 0.0
    %2332 = vmatprep.subr.mxu0 0.0
    %2333 = vmatpush1.msra.mxu0 0.0
    %2334 = vmatprep.subr.mxu0 0.0
    %2335 = vmatpush1.msra.mxu0 0.0
    %2336 = vmatprep.mubr.f32.mxu0 0.0
    %2337 = vmatmul.mubr.f32.gmra.mrb[0].mxu0 %v2258
    %v2338 = vpop.f32.mrb[0].mxu0
    %v2339 = vadd.f32 %v2256, %v2338
    %v2340 = vpop.f32.mrb[0].mxu0
    %2341 = vmatprep.mubr.f32.mxu0 0.0
    %2342 = vmatmul.mubr.f32.gmra.mrb[0].mxu0 %v2261
    %v2343 = vpop.f32.mrb[0].mxu0
    %v2344 = vadd.f32 %v2256, %v2343
    %v2345 = vpop.f32.mrb[0].mxu0
    %2346 = vmatprep.mubr.f32.mxu0 0.0
    %2347 = vmatmul.mubr.f32.gmra.mrb[0].mxu0 %v2264
    %v2348 = vpop.f32.mrb[0].mxu0
    %v2349 = vadd.f32 %v2256, %v2348
    %v2350 = vpop.f32.mrb[0].mxu0
    %2351 = vmatprep.mubr.f32.mxu0 0.0
    %2352 = vmatmul.mubr.f32.gmra.mrb[0].mxu0 %v2267
    %v2353 = vpop.f32.mrb[0].mxu0
    %v2354 = vadd.f32 %v2256, %v2353
    %v2355 = vpop.f32.mrb[0].mxu0
    %2356 = vmatprep.mubr.f32.mxu0 0.0
    %2357 = vmatmul.mubr.f32.gmra.mrb[0].mxu0 %v2270
    %v2358 = vpop.f32.mrb[0].mxu0
    %v2359 = vadd.f32 %v2256, %v2358
    %v2360 = vpop.f32.mrb[0].mxu0
    %2361 = vdwg.mxu0
    %v2362 = vmul.f32 %v2339, 0.5
    %v2363 = vmul.f32 %v2344, 0.5
    %v2364 = vmul.f32 %v2349, 0.5
    %v2365 = vmul.f32 %v2354, 0.5
    %v2366 = vmul.f32 %v2359, 0.5
    %v2367 = vmul.f32 %v2339, 0.70710677
    %v2368 = vmul.f32 %v2344, 0.70710677
    %v2369 = vmul.f32 %v2349, 0.70710677
    %v2370 = vmul.f32 %v2354, 0.70710677
    %v2371 = vmul.f32 %v2359, 0.70710677
    %vm2372 = vcmp.lt.f32.partialorder %v2367, 0.0
    %vm2373 = vcmp.lt.f32.partialorder %v2368, 0.0
    %vm2374 = vcmp.lt.f32.partialorder %v2369, 0.0
    %vm2375 = vcmp.lt.f32.partialorder %v2370, 0.0
    %vm2376 = vcmp.lt.f32.partialorder %v2371, 0.0
    %v2377 = vsel %vm2372, -1.0, 1.0
    %v2378 = vsel %vm2373, -1.0, 1.0
    %v2379 = vsel %vm2374, -1.0, 1.0
    %v2380 = vsel %vm2375, -1.0, 1.0
    %v2381 = vsel %vm2376, -1.0, 1.0
    %v2382 = vand.u32 2147483647, %v2367
    %v2383 = vand.u32 2147483647, %v2368
    %v2384 = vand.u32 2147483647, %v2369
    %v2385 = vand.u32 2147483647, %v2370
    %v2386 = vand.u32 2147483647, %v2371
    %v2387 = vmul.f32 %v2382, 0.3275911
    %v2388 = vmul.f32 %v2383, 0.3275911
    %v2389 = vmul.f32 %v2384, 0.3275911
    %v2390 = vmul.f32 %v2385, 0.3275911
    %v2391 = vmul.f32 %v2386, 0.3275911
    %v2392 = vadd.f32 %v2387, 1.0
    %v2393 = vadd.f32 %v2388, 1.0
    %v2394 = vadd.f32 %v2389, 1.0
    %v2395 = vadd.f32 %v2390, 1.0
    %v2396 = vadd.f32 %v2391, 1.0
    %v2397 = vrcp.pop %v2392
    %v2398 = vmul.f32 1.0, %v2397
    %v2399 = vrcp.pop %v2393
    %v2400 = vmul.f32 1.0, %v2399
    %v2401 = vrcp.pop %v2394
    %v2402 = vmul.f32 1.0, %v2401
    %v2403 = vrcp.pop %v2395
    %v2404 = vmul.f32 1.0, %v2403
    %v2405 = vrcp.pop %v2396
    %v2406 = vmul.f32 1.0, %v2405
    %v2407 = vmul.f32 %v2398, 1.0614054
    %v2408 = vmul.f32 %v2400, 1.0614054
    %v2409 = vmul.f32 %v2402, 1.0614054
    %v2410 = vmul.f32 %v2404, 1.0614054
    %v2411 = vmul.f32 %v2406, 1.0614054
    %v2412 = vadd.f32 %v2407, -1.4531521
    %v2413 = vadd.f32 %v2408, -1.4531521
    %v2414 = vadd.f32 %v2409, -1.4531521
    %v2415 = vadd.f32 %v2410, -1.4531521
    %v2416 = vadd.f32 %v2411, -1.4531521
    %v2417 = vmul.f32 %v2412, %v2398
    %v2418 = vmul.f32 %v2413, %v2400
    %v2419 = vmul.f32 %v2414, %v2402
    %v2420 = vmul.f32 %v2415, %v2404
    %v2421 = vmul.f32 %v2416, %v2406
    %v2422 = vadd.f32 %v2417, 1.4214138
    %v2423 = vadd.f32 %v2418, 1.4214138
    %v2424 = vadd.f32 %v2419, 1.4214138
    %v2425 = vadd.f32 %v2420, 1.4214138
    %v2426 = vadd.f32 %v2421, 1.4214138
    %v2427 = vmul.f32 %v2422, %v2398
    %v2428 = vmul.f32 %v2423, %v2400
    %v2429 = vmul.f32 %v2424, %v2402
    %v2430 = vmul.f32 %v2425, %v2404
    %v2431 = vmul.f32 %v2426, %v2406
    %v2432 = vadd.f32 %v2427, -0.28449672
    %v2433 = vadd.f32 %v2428, -0.28449672
    %v2434 = vadd.f32 %v2429, -0.28449672
    %v2435 = vadd.f32 %v2430, -0.28449672
    %v2436 = vadd.f32 %v2431, -0.28449672
    %v2437 = vmul.f32 %v2432, %v2398
    %v2438 = vmul.f32 %v2433, %v2400
    %v2439 = vmul.f32 %v2434, %v2402
    %v2440 = vmul.f32 %v2435, %v2404
    %v2441 = vmul.f32 %v2436, %v2406
    %v2442 = vadd.f32 %v2437, 0.2548296
    %v2443 = vadd.f32 %v2438, 0.2548296
    %v2444 = vadd.f32 %v2439, 0.2548296
    %v2445 = vadd.f32 %v2440, 0.2548296
    %v2446 = vadd.f32 %v2441, 0.2548296
    %v2447 = vmul.f32 %v2442, %v2398
    %v2448 = vmul.f32 %v2443, %v2400
    %v2449 = vmul.f32 %v2444, %v2402
    %v2450 = vmul.f32 %v2445, %v2404
    %v2451 = vmul.f32 %v2446, %v2406
    %v2452 = vsub.f32 0.0, %v2382
    %v2453 = vsub.f32 0.0, %v2383
    %v2454 = vsub.f32 0.0, %v2384
    %v2455 = vsub.f32 0.0, %v2385
    %v2456 = vsub.f32 0.0, %v2386
    %v2457 = vmul.f32 %v2452, %v2382
    %v2458 = vmul.f32 %v2453, %v2383
    %v2459 = vmul.f32 %v2454, %v2384
    %v2460 = vmul.f32 %v2455, %v2385
    %v2461 = vmul.f32 %v2456, %v2386
    %v2462 = vmul.f32 %v2457, 1.442695
    %v2463 = vpow.pop %v2462
    %v2464 = vmul.f32 %v2458, 1.442695
    %v2465 = vpow.pop %v2464
    %v2466 = vmul.f32 %v2459, 1.442695
    %v2467 = vpow.pop %v2466
    %v2468 = vmul.f32 %v2460, 1.442695
    %v2469 = vpow.pop %v2468
    %v2470 = vmul.f32 %v2461, 1.442695
    %v2471 = vpow.pop %v2470
    %v2472 = vmul.f32 %v2447, %v2463
    %v2473 = vmul.f32 %v2448, %v2465
    %v2474 = vmul.f32 %v2449, %v2467
    %v2475 = vmul.f32 %v2450, %v2469
    %v2476 = vmul.f32 %v2451, %v2471
    %v2477 = vsub.f32 1.0, %v2472
    %v2478 = vsub.f32 1.0, %v2473
    %v2479 = vsub.f32 1.0, %v2474
    %v2480 = vsub.f32 1.0, %v2475
    %v2481 = vsub.f32 1.0, %v2476
    %v2482 = vmul.f32 %v2377, %v2477
    %v2483 = vmul.f32 %v2378, %v2478
    %v2484 = vmul.f32 %v2379, %v2479
    %v2485 = vmul.f32 %v2380, %v2480
    %v2486 = vmul.f32 %v2381, %v2481
    %v2487 = vadd.f32 %v2482, 1.0
    %v2488 = vadd.f32 %v2483, 1.0
    %v2489 = vadd.f32 %v2484, 1.0
    %v2490 = vadd.f32 %v2485, 1.0
    %v2491 = vadd.f32 %v2486, 1.0
    %v2492 = vmul.f32 %v2362, %v2487
    %v2493 = vmul.f32 %v2363, %v2488
    %v2494 = vmul.f32 %v2364, %v2489
    %v2495 = vmul.f32 %v2365, %v2490
    %v2496 = vmul.f32 %v2366, %v2491
    %v2497 = vld [vmem:[%s4 + $0x110] sm:$0xff]
    %v2498 = vld [vmem:[%s4 + $0x118] sm:$0xff]
    %v2499 = vld [vmem:[%s4 + $0x120] sm:$0xff]
    %v2500 = vld [vmem:[%s4 + $0x128] sm:$0xff]
    %v2501 = vld [vmem:[%s4 + $0x130] sm:$0xff]
    %v2502 = vld [vmem:[%s4 + $0x138] sm:$0xff]
    %v2503 = vld [vmem:[%s4 + $0x140] sm:$0xff]
    %v2504 = vld [vmem:[%s4 + $0x148] sm:$0xff]
    %v2505 = vld [vmem:[%s4 + $0x150] sm:$0x1]
    %v2506 = vlaneseq
    %v2507 = vshrl.u32 %v2506, 7
    %v2508 = vsub.s32 0, %v2507
    %v2509 = vrot.slane %v2505, %v2508
    %vm2510 = vcmask 523264
    %v2512 = vsel %vm2510, %v2492, 0
    %v2515 = vsel %vm2510, %v2493, 0
    %v2518 = vsel %vm2510, %v2494, 0
    %v2521 = vsel %vm2510, %v2495, 0
    %v2524 = vsel %vm2510, %v2496, 0
    %2526 = vmatprep.subr.mxu0 0.0
    %2527 = vmatpush1.msra.mxu0 %v2497
    %2528 = vmatprep.subr.mxu0 0.0
    %2529 = vmatpush1.msra.mxu0 %v2498
    %2530 = vmatprep.subr.mxu0 0.0
    %2531 = vmatpush1.msra.mxu0 %v2499
    %2532 = vmatprep.subr.mxu0 0.0
    %2533 = vmatpush1.msra.mxu0 %v2500
    %2534 = vmatprep.subr.mxu0 0.0
    %2535 = vmatpush1.msra.mxu0 %v2501
    %2536 = vmatprep.subr.mxu0 0.0
    %2537 = vmatpush1.msra.mxu0 %v2502
    %2538 = vmatprep.subr.mxu0 0.0
    %2539 = vmatpush1.msra.mxu0 %v2503
    %2540 = vmatprep.subr.mxu0 0.0
    %2541 = vmatpush1.msra.mxu0 %v2504
    %2542 = vmatprep.subr.mxu0 0.0
    %2543 = vmatpush1.msra.mxu0 0.0
    %2544 = vmatprep.subr.mxu0 0.0
    %2545 = vmatpush1.msra.mxu0 0.0
    %2546 = vmatprep.subr.mxu0 0.0
    %2547 = vmatpush1.msra.mxu0 0.0
    %2548 = vmatprep.subr.mxu0 0.0
    %2549 = vmatpush1.msra.mxu0 0.0
    %2550 = vmatprep.subr.mxu0 0.0
    %2551 = vmatpush1.msra.mxu0 0.0
    %2552 = vmatprep.subr.mxu0 0.0
    %2553 = vmatpush1.msra.mxu0 0.0
    %2554 = vmatprep.subr.mxu0 0.0
    %2555 = vmatpush1.msra.mxu0 0.0
    %2556 = vmatprep.subr.mxu0 0.0
    %2557 = vmatpush1.msra.mxu0 0.0
    %2558 = vmatprep.subr.mxu0 0.0
    %2559 = vmatpush1.msra.mxu0 0.0
    %2560 = vmatprep.subr.mxu0 0.0
    %2561 = vmatpush1.msra.mxu0 0.0
    %2562 = vmatprep.subr.mxu0 0.0
    %2563 = vmatpush1.msra.mxu0 0.0
    %2564 = vmatprep.subr.mxu0 0.0
    %2565 = vmatpush1.msra.mxu0 0.0
    %2566 = vmatprep.subr.mxu0 0.0
    %2567 = vmatpush1.msra.mxu0 0.0
    %2568 = vmatprep.subr.mxu0 0.0
    %2569 = vmatpush1.msra.mxu0 0.0
    %2570 = vmatprep.subr.mxu0 0.0
    %2571 = vmatpush1.msra.mxu0 0.0
    %2572 = vmatprep.subr.mxu0 0.0
    %2573 = vmatpush1.msra.mxu0 0.0
    %2574 = vmatprep.subr.mxu0 0.0
    %2575 = vmatpush1.msra.mxu0 0.0
    %2576 = vmatprep.subr.mxu0 0.0
    %2577 = vmatpush1.msra.mxu0 0.0
    %2578 = vmatprep.subr.mxu0 0.0
    %2579 = vmatpush1.msra.mxu0 0.0
    %2580 = vmatprep.subr.mxu0 0.0
    %2581 = vmatpush1.msra.mxu0 0.0
    %2582 = vmatprep.subr.mxu0 0.0
    %2583 = vmatpush1.msra.mxu0 0.0
    %2584 = vmatprep.subr.mxu0 0.0
    %2585 = vmatpush1.msra.mxu0 0.0
    %2586 = vmatprep.subr.mxu0 0.0
    %2587 = vmatpush1.msra.mxu0 0.0
    %2588 = vmatprep.subr.mxu0 0.0
    %2589 = vmatpush1.msra.mxu0 0.0
    %2590 = vmatprep.mubr.f32.mxu0 0.0
    %2591 = vmatmul.mubr.f32.gmra.mrb[0].mxu0 %v2512
    %v2592 = vpop.f32.mrb[0].mxu0
    %v2593 = vadd.f32 %v2509, %v2592
    %v2594 = vpop.f32.mrb[0].mxu0
    %2595 = vmatprep.mubr.f32.mxu0 0.0
    %2596 = vmatmul.mubr.f32.gmra.mrb[0].mxu0 %v2515
    %v2597 = vpop.f32.mrb[0].mxu0
    %v2598 = vadd.f32 %v2509, %v2597
    %v2599 = vpop.f32.mrb[0].mxu0
    %2600 = vmatprep.mubr.f32.mxu0 0.0
    %2601 = vmatmul.mubr.f32.gmra.mrb[0].mxu0 %v2518
    %v2602 = vpop.f32.mrb[0].mxu0
    %v2603 = vadd.f32 %v2509, %v2602
    %v2604 = vpop.f32.mrb[0].mxu0
    %2605 = vmatprep.mubr.f32.mxu0 0.0
    %2606 = vmatmul.mubr.f32.gmra.mrb[0].mxu0 %v2521
    %v2607 = vpop.f32.mrb[0].mxu0
    %v2608 = vadd.f32 %v2509, %v2607
    %v2609 = vpop.f32.mrb[0].mxu0
    %2610 = vmatprep.mubr.f32.mxu0 0.0
    %2611 = vmatmul.mubr.f32.gmra.mrb[0].mxu0 %v2524
    %v2612 = vpop.f32.mrb[0].mxu0
    %v2613 = vadd.f32 %v2509, %v2612
    %v2614 = vpop.f32.mrb[0].mxu0
    %2615 = vdwg.mxu0
    %v2616 = vadd.f32 %v2593, %v2148
    %v2617 = vadd.f32 %v2598, %v2149
    %v2618 = vadd.f32 %v2603, %v2150
    %v2619 = vadd.f32 %v2608, %v2151
    %v2620 = vadd.f32 %v2613, %v2152
    %v2621 = vsel %vm230, %v2616, 0.0
    %2622 = vadd.xlane.f32.xlu0 %v2621
    %v2623 = vpop.xlane.xlu0 %2622
    %v2624 = vsel %vm230, %v2617, 0.0
    %2625 = vadd.xlane.f32.xlu0 %v2624
    %v2626 = vpop.xlane.xlu0 %2625
    %v2627 = vsel %vm230, %v2618, 0.0
    %2628 = vadd.xlane.f32.xlu0 %v2627
    %v2629 = vpop.xlane.xlu0 %2628
    %v2630 = vsel %vm230, %v2619, 0.0
    %2631 = vadd.xlane.f32.xlu0 %v2630
    %v2632 = vpop.xlane.xlu0 %2631
    %v2633 = vsel %vm243, %v2620, 0.0
    %2634 = vadd.xlane.f32.xlu0 %v2633
    %v2635 = vpop.xlane.xlu0 %2634
    %v2636 = vmul.f32 %v2623, %v247
    %v2637 = vmul.f32 %v2626, %v247
    %v2638 = vmul.f32 %v2629, %v247
    %v2639 = vmul.f32 %v2632, %v247
    %v2640 = vmul.f32 %v2635, %v247
    %v2641 = vmul.f32 %v2616, %v2616
    %v2642 = vmul.f32 %v2617, %v2617
    %v2643 = vmul.f32 %v2618, %v2618
    %v2644 = vmul.f32 %v2619, %v2619
    %v2645 = vmul.f32 %v2620, %v2620
    %v2646 = vsel %vm230, %v2641, 0.0
    %2647 = vadd.xlane.f32.xlu0 %v2646
    %v2648 = vpop.xlane.xlu0 %2647
    %v2649 = vsel %vm230, %v2642, 0.0
    %2650 = vadd.xlane.f32.xlu0 %v2649
    %v2651 = vpop.xlane.xlu0 %2650
    %v2652 = vsel %vm230, %v2643, 0.0
    %2653 = vadd.xlane.f32.xlu0 %v2652
    %v2654 = vpop.xlane.xlu0 %2653
    %v2655 = vsel %vm230, %v2644, 0.0
    %2656 = vadd.xlane.f32.xlu0 %v2655
    %v2657 = vpop.xlane.xlu0 %2656
    %v2658 = vsel %vm243, %v2645, 0.0
    %2659 = vadd.xlane.f32.xlu0 %v2658
    %v2660 = vpop.xlane.xlu0 %2659
    %v2661 = vmul.f32 %v2648, %v247
    %v2662 = vmul.f32 %v2651, %v247
    %v2663 = vmul.f32 %v2654, %v247
    %v2664 = vmul.f32 %v2657, %v247
    %v2665 = vmul.f32 %v2660, %v247
    %v2666 = vsub.f32 %v2616, %v2636
    %v2667 = vsub.f32 %v2617, %v2637
    %v2668 = vsub.f32 %v2618, %v2638
    %v2669 = vsub.f32 %v2619, %v2639
    %v2670 = vsub.f32 %v2620, %v2640
    %v2671 = vmul.f32 %v2636, %v2636
    %v2672 = vmul.f32 %v2637, %v2637
    %v2673 = vmul.f32 %v2638, %v2638
    %v2674 = vmul.f32 %v2639, %v2639
    %v2675 = vmul.f32 %v2640, %v2640
    %v2676 = vsub.f32 %v2661, %v2671
    %v2677 = vsub.f32 %v2662, %v2672
    %v2678 = vsub.f32 %v2663, %v2673
    %v2679 = vsub.f32 %v2664, %v2674
    %v2680 = vsub.f32 %v2665, %v2675
    %v2681 = vadd.f32 %v2676, 1e-06
    %v2682 = vadd.f32 %v2677, 1e-06
    %v2683 = vadd.f32 %v2678, 1e-06
    %v2684 = vadd.f32 %v2679, 1e-06
    %v2685 = vadd.f32 %v2680, 1e-06
    %v2686 = vrsqrt.pop %v2681
    %v2687 = vrsqrt.pop %v2682
    %v2688 = vrsqrt.pop %v2683
    %v2689 = vrsqrt.pop %v2684
    %v2690 = vrsqrt.pop %v2685
    %v2691 = vmul.f32 %v2666, %v2686
    %v2692 = vmul.f32 %v2667, %v2687
    %v2693 = vmul.f32 %v2668, %v2688
    %v2694 = vmul.f32 %v2669, %v2689
    %v2695 = vmul.f32 %v2670, %v2690
    %v2696 = vld [vmem:[%s4 + $0x1a8] sm:$0x1]
    %v2697 = vlaneseq
    %v2698 = vshrl.u32 %v2697, 7
    %v2699 = vsub.s32 0, %v2698
    %v2700 = vrot.slane %v2696, %v2699
    %v2701 = vmul.f32 %v2691, %v2700
    %v2702 = vmul.f32 %v2692, %v2700
    %v2703 = vmul.f32 %v2693, %v2700
    %v2704 = vmul.f32 %v2694, %v2700
    %v2705 = vmul.f32 %v2695, %v2700
    %v2706 = vld [vmem:[%s4 + $0x1b0] sm:$0x1]
    %v2707 = vlaneseq
    %v2708 = vshrl.u32 %v2707, 7
    %v2709 = vsub.s32 0, %v2708
    %v2710 = vrot.slane %v2706, %v2709
    %v2711 = vadd.f32 %v2701, %v2710
    %v2712 = vadd.f32 %v2702, %v2710
    %v2713 = vadd.f32 %v2703, %v2710
    %v2714 = vadd.f32 %v2704, %v2710
    %v2715 = vadd.f32 %v2705, %v2710
    %v2716 = vld [vmem:[%s4 + $0x158] sm:$0xff]
    %v2717 = vld [vmem:[%s4 + $0x160] sm:$0xff]
    %v2718 = vld [vmem:[%s4 + $0x168] sm:$0xff]
    %v2719 = vld [vmem:[%s4 + $0x170] sm:$0xff]
    %v2720 = vld [vmem:[%s4 + $0x178] sm:$0x1]
    %v2721 = vlaneseq
    %v2722 = vshrl.u32 %v2721, 7
    %v2723 = vsub.s32 0, %v2722
    %v2724 = vrot.slane %v2720, %v2723
    %v2726 = vsel %vm230, %v2711, 0
    %v2729 = vsel %vm230, %v2712, 0
    %v2732 = vsel %vm230, %v2713, 0
    %v2735 = vsel %vm230, %v2714, 0
    %v2738 = vsel %vm230, %v2715, 0
    %2740 = vmatprep.subr.mxu0 0.0
    %2741 = vmatpush1.msra.mxu0 %v2716
    %2742 = vmatprep.subr.mxu0 0.0
    %2743 = vmatpush1.msra.mxu0 %v2717
    %2744 = vmatprep.subr.mxu0 0.0
    %2745 = vmatpush1.msra.mxu0 %v2718
    %2746 = vmatprep.subr.mxu0 0.0
    %2747 = vmatpush1.msra.mxu0 %v2719
    %2748 = vmatprep.subr.mxu0 0.0
    %2749 = vmatpush1.msra.mxu0 0.0
    %2750 = vmatprep.subr.mxu0 0.0
    %2751 = vmatpush1.msra.mxu0 0.0
    %2752 = vmatprep.subr.mxu0 0.0
    %2753 = vmatpush1.msra.mxu0 0.0
    %2754 = vmatprep.subr.mxu0 0.0
    %2755 = vmatpush1.msra.mxu0 0.0
    %2756 = vmatprep.subr.mxu0 0.0
    %2757 = vmatpush1.msra.mxu0 0.0
    %2758 = vmatprep.subr.mxu0 0.0
    %2759 = vmatpush1.msra.mxu0 0.0
    %2760 = vmatprep.subr.mxu0 0.0
    %2761 = vmatpush1.msra.mxu0 0.0
    %2762 = vmatprep.subr.mxu0 0.0
    %2763 = vmatpush1.msra.mxu0 0.0
    %2764 = vmatprep.subr.mxu0 0.0
    %2765 = vmatpush1.msra.mxu0 0.0
    %2766 = vmatprep.subr.mxu0 0.0
    %2767 = vmatpush1.msra.mxu0 0.0
    %2768 = vmatprep.subr.mxu0 0.0
    %2769 = vmatpush1.msra.mxu0 0.0
    %2770 = vmatprep.subr.mxu0 0.0
    %2771 = vmatpush1.msra.mxu0 0.0
    %2772 = vmatprep.subr.mxu0 0.0
    %2773 = vmatpush1.msra.mxu0 0.0
    %2774 = vmatprep.subr.mxu0 0.0
    %2775 = vmatpush1.msra.mxu0 0.0
    %2776 = vmatprep.subr.mxu0 0.0
    %2777 = vmatpush1.msra.mxu0 0.0
    %2778 = vmatprep.subr.mxu0 0.0
    %2779 = vmatpush1.msra.mxu0 0.0
    %2780 = vmatprep.subr.mxu0 0.0
    %2781 = vmatpush1.msra.mxu0 0.0
    %2782 = vmatprep.subr.mxu0 0.0
    %2783 = vmatpush1.msra.mxu0 0.0
    %2784 = vmatprep.subr.mxu0 0.0
    %2785 = vmatpush1.msra.mxu0 0.0
    %2786 = vmatprep.subr.mxu0 0.0
    %2787 = vmatpush1.msra.mxu0 0.0
    %2788 = vmatprep.subr.mxu0 0.0
    %2789 = vmatpush1.msra.mxu0 0.0
    %2790 = vmatprep.subr.mxu0 0.0
    %2791 = vmatpush1.msra.mxu0 0.0
    %2792 = vmatprep.subr.mxu0 0.0
    %2793 = vmatpush1.msra.mxu0 0.0
    %2794 = vmatprep.subr.mxu0 0.0
    %2795 = vmatpush1.msra.mxu0 0.0
    %2796 = vmatprep.subr.mxu0 0.0
    %2797 = vmatpush1.msra.mxu0 0.0
    %2798 = vmatprep.subr.mxu0 0.0
    %2799 = vmatpush1.msra.mxu0 0.0
    %2800 = vmatprep.subr.mxu0 0.0
    %2801 = vmatpush1.msra.mxu0 0.0
    %2802 = vmatprep.subr.mxu0 0.0
    %2803 = vmatpush1.msra.mxu0 0.0
    %2804 = vmatprep.mubr.f32.mxu0 0.0
    %2805 = vmatmul.mubr.f32.gmra.mrb[0].mxu0 %v2726
    %v2806 = vpop.f32.mrb[0].mxu0
    %v2807 = vadd.f32 %v2724, %v2806
    %v2808 = vpop.f32.mrb[0].mxu0
    %2809 = vmatprep.mubr.f32.mxu0 0.0
    %2810 = vmatmul.mubr.f32.gmra.mrb[0].mxu0 %v2729
    %v2811 = vpop.f32.mrb[0].mxu0
    %v2812 = vadd.f32 %v2724, %v2811
    %v2813 = vpop.f32.mrb[0].mxu0
    %2814 = vmatprep.mubr.f32.mxu0 0.0
    %2815 = vmatmul.mubr.f32.gmra.mrb[0].mxu0 %v2732
    %v2816 = vpop.f32.mrb[0].mxu0
    %v2817 = vadd.f32 %v2724, %v2816
    %v2818 = vpop.f32.mrb[0].mxu0
    %2819 = vmatprep.mubr.f32.mxu0 0.0
    %2820 = vmatmul.mubr.f32.gmra.mrb[0].mxu0 %v2735
    %v2821 = vpop.f32.mrb[0].mxu0
    %v2822 = vadd.f32 %v2724, %v2821
    %v2823 = vpop.f32.mrb[0].mxu0
    %2824 = vmatprep.mubr.f32.mxu0 0.0
    %2825 = vmatmul.mubr.f32.gmra.mrb[0].mxu0 %v2738
    %v2826 = vpop.f32.mrb[0].mxu0
    %v2827 = vadd.f32 %v2724, %v2826
    %v2828 = vpop.f32.mrb[0].mxu0
    %2829 = vdwg.mxu0
    %v2830 = vld [vmem:[%s4 + $0x180] sm:$0xff]
    %v2831 = vld [vmem:[%s4 + $0x188] sm:$0xff]
    %v2832 = vld [vmem:[%s4 + $0x190] sm:$0xff]
    %v2833 = vld [vmem:[%s4 + $0x198] sm:$0xff]
    %2839 = vrot.lane.b32.xlu0 %v2807, 96
    %v2840 = vpop.permute.xlu0 %2839
    %2841 = vrot.lane.b32.xlu0 %v2812, 96
    %v2842 = vpop.permute.xlu0 %2841
    %2843 = vrot.lane.b32.xlu0 %v2817, 96
    %v2844 = vpop.permute.xlu0 %2843
    %2845 = vrot.lane.b32.xlu0 %v2822, 96
    %v2846 = vpop.permute.xlu0 %2845
    %2847 = vrot.lane.b32.xlu0 %v2827, 96
    %v2848 = vpop.permute.xlu0 %2847
    %v2849 = vsel %vm39, %v2807, 0
    %v2851 = vsel %vm39, %v2812, 0
    %v2853 = vsel %vm39, %v2817, 0
    %v2855 = vsel %vm39, %v2822, 0
    %v2857 = vsel %vm39, %v2827, 0
    %v2859 = vsel %vm39, %v2840, 0
    %v2861 = vsel %vm39, %v2842, 0
    %v2863 = vsel %vm39, %v2844, 0
    %v2865 = vsel %vm39, %v2846, 0
    %v2867 = vsel %vm39, %v2848, 0
    %2869 = vmatprep.subr.mxu0 0.0
    %2870 = vmatpush1.xpose.msra.mxu0 %v2859
    %2871 = vmatprep.subr.mxu0 0.0
    %2872 = vmatpush1.xpose.msra.mxu0 %v2861
    %2873 = vmatprep.subr.mxu0 0.0
    %2874 = vmatpush1.xpose.msra.mxu0 %v2863
    %2875 = vmatprep.subr.mxu0 0.0
    %2876 = vmatpush1.xpose.msra.mxu0 %v2865
    %2877 = vmatprep.subr.mxu0 0.0
    %2878 = vmatpush1.xpose.msra.mxu0 %v2867
    %2879 = vmatprep.subr.mxu0 0.0
    %2880 = vmatpush1.xpose.msra.mxu0 0.0
    %2881 = vmatprep.subr.mxu0 0.0
    %2882 = vmatpush1.xpose.msra.mxu0 0.0
    %2883 = vmatprep.subr.mxu0 0.0
    %2884 = vmatpush1.xpose.msra.mxu0 0.0
    %2885 = vmatprep.subr.mxu0 0.0
    %2886 = vmatpush1.xpose.msra.mxu0 0.0
    %2887 = vmatprep.subr.mxu0 0.0
    %2888 = vmatpush1.xpose.msra.mxu0 0.0
    %2889 = vmatprep.subr.mxu0 0.0
    %2890 = vmatpush1.xpose.msra.mxu0 0.0
    %2891 = vmatprep.subr.mxu0 0.0
    %2892 = vmatpush1.xpose.msra.mxu0 0.0
    %2893 = vmatprep.subr.mxu0 0.0
    %2894 = vmatpush1.xpose.msra.mxu0 0.0
    %2895 = vmatprep.subr.mxu0 0.0
    %2896 = vmatpush1.xpose.msra.mxu0 0.0
    %2897 = vmatprep.subr.mxu0 0.0
    %2898 = vmatpush1.xpose.msra.mxu0 0.0
    %2899 = vmatprep.subr.mxu0 0.0
    %2900 = vmatpush1.xpose.msra.mxu0 0.0
    %2901 = vmatprep.subr.mxu0 0.0
    %2902 = vmatpush1.xpose.msra.mxu0 0.0
    %2903 = vmatprep.subr.mxu0 0.0
    %2904 = vmatpush1.xpose.msra.mxu0 0.0
    %2905 = vmatprep.subr.mxu0 0.0
    %2906 = vmatpush1.xpose.msra.mxu0 0.0
    %2907 = vmatprep.subr.mxu0 0.0
    %2908 = vmatpush1.xpose.msra.mxu0 0.0
    %2909 = vmatprep.subr.mxu0 0.0
    %2910 = vmatpush1.xpose.msra.mxu0 0.0
    %2911 = vmatprep.subr.mxu0 0.0
    %2912 = vmatpush1.xpose.msra.mxu0 0.0
    %2913 = vmatprep.subr.mxu0 0.0
    %2914 = vmatpush1.xpose.msra.mxu0 0.0
    %2915 = vmatprep.subr.mxu0 0.0
    %2916 = vmatpush1.xpose.msra.mxu0 0.0
    %2917 = vmatprep.subr.mxu0 0.0
    %2918 = vmatpush1.xpose.msra.mxu0 0.0
    %2919 = vmatprep.subr.mxu0 0.0
    %2920 = vmatpush1.xpose.msra.mxu0 0.0
    %2921 = vmatprep.subr.mxu0 0.0
    %2922 = vmatpush1.xpose.msra.mxu0 0.0
    %2923 = vmatprep.subr.mxu0 0.0
    %2924 = vmatpush1.xpose.msra.mxu0 0.0
    %2925 = vmatprep.subr.mxu0 0.0
    %2926 = vmatpush1.xpose.msra.mxu0 0.0
    %2927 = vmatprep.subr.mxu0 0.0
    %2928 = vmatpush1.xpose.msra.mxu0 0.0
    %2929 = vmatprep.subr.mxu0 0.0
    %2930 = vmatpush1.xpose.msra.mxu0 0.0
    %2931 = vmatprep.subr.mxu0 0.0
    %2932 = vmatpush1.xpose.msra.mxu0 0.0
    %2933 = vmatprep.mubr.f32.mxu0 0.0
    %2934 = vmatmul.mubr.f32.gmra.mrb[0].mxu0 %v2849
    %v2935 = vpop.f32.mrb[0].mxu0
    %v2936 = vadd.f32 0.0, %v2935
    %v2937 = vpop.f32.mrb[0].mxu0
    %2938 = vmatprep.mubr.f32.mxu0 0.0
    %2939 = vmatmul.mubr.f32.gmra.mrb[0].mxu0 %v2851
    %v2940 = vpop.f32.mrb[0].mxu0
    %v2941 = vadd.f32 0.0, %v2940
    %v2942 = vpop.f32.mrb[0].mxu0
    %2943 = vmatprep.mubr.f32.mxu0 0.0
    %2944 = vmatmul.mubr.f32.gmra.mrb[0].mxu0 %v2853
    %v2945 = vpop.f32.mrb[0].mxu0
    %v2946 = vadd.f32 0.0, %v2945
    %v2947 = vpop.f32.mrb[0].mxu0
    %2948 = vmatprep.mubr.f32.mxu0 0.0
    %2949 = vmatmul.mubr.f32.gmra.mrb[0].mxu0 %v2855
    %v2950 = vpop.f32.mrb[0].mxu0
    %v2951 = vadd.f32 0.0, %v2950
    %v2952 = vpop.f32.mrb[0].mxu0
    %2953 = vmatprep.mubr.f32.mxu0 0.0
    %2954 = vmatmul.mubr.f32.gmra.mrb[0].mxu0 %v2857
    %v2955 = vpop.f32.mrb[0].mxu0
    %v2956 = vadd.f32 0.0, %v2955
    %v2957 = vpop.f32.mrb[0].mxu0
    %2958 = vdwg.mxu0
    %v2959 = vmul.f32 %v2936, 0.35355338
    %v2960 = vmul.f32 %v2941, 0.35355338
    %v2961 = vmul.f32 %v2946, 0.35355338
    %v2962 = vmul.f32 %v2951, 0.35355338
    %v2963 = vmul.f32 %v2956, 0.35355338
    %v2964 = vadd.f32 %v2959, %v27
    %v2965 = vadd.f32 %v2960, %v28
    %v2966 = vadd.f32 %v2961, %v29
    %v2967 = vadd.f32 %v2962, %v30
    %v2968 = vadd.f32 %v2963, %v31
    %v2969 = vsel %vm581, %v2964, -inf
    %2970 = vmax.xlane.f32.xlu0 %v2969
    %v2971 = vpop.xlane.xlu0 %2970
    %v2972 = vsel %vm581, %v2965, -inf
    %2973 = vmax.xlane.f32.xlu0 %v2972
    %v2974 = vpop.xlane.xlu0 %2973
    %v2975 = vsel %vm581, %v2966, -inf
    %2976 = vmax.xlane.f32.xlu0 %v2975
    %v2977 = vpop.xlane.xlu0 %2976
    %v2978 = vsel %vm581, %v2967, -inf
    %2979 = vmax.xlane.f32.xlu0 %v2978
    %v2980 = vpop.xlane.xlu0 %2979
    %v2981 = vsel %vm594, %v2968, -inf
    %2982 = vmax.xlane.f32.xlu0 %v2981
    %v2983 = vpop.xlane.xlu0 %2982
    %v2984 = vsub.f32 %v2964, %v2971
    %v2985 = vsub.f32 %v2965, %v2974
    %v2986 = vsub.f32 %v2966, %v2977
    %v2987 = vsub.f32 %v2967, %v2980
    %v2988 = vsub.f32 %v2968, %v2983
    %v2989 = vmul.f32 %v2984, 1.442695
    %v2990 = vpow.pop %v2989
    %v2991 = vmul.f32 %v2985, 1.442695
    %v2992 = vpow.pop %v2991
    %v2993 = vmul.f32 %v2986, 1.442695
    %v2994 = vpow.pop %v2993
    %v2995 = vmul.f32 %v2987, 1.442695
    %v2996 = vpow.pop %v2995
    %v2997 = vmul.f32 %v2988, 1.442695
    %v2998 = vpow.pop %v2997
    %v2999 = vsel %vm581, %v2990, 0.0
    %3000 = vadd.xlane.f32.xlu0 %v2999
    %v3001 = vpop.xlane.xlu0 %3000
    %v3002 = vsel %vm581, %v2992, 0.0
    %3003 = vadd.xlane.f32.xlu0 %v3002
    %v3004 = vpop.xlane.xlu0 %3003
    %v3005 = vsel %vm581, %v2994, 0.0
    %3006 = vadd.xlane.f32.xlu0 %v3005
    %v3007 = vpop.xlane.xlu0 %3006
    %v3008 = vsel %vm581, %v2996, 0.0
    %3009 = vadd.xlane.f32.xlu0 %v3008
    %v3010 = vpop.xlane.xlu0 %3009
    %v3011 = vsel %vm594, %v2998, 0.0
    %3012 = vadd.xlane.f32.xlu0 %v3011
    %v3013 = vpop.xlane.xlu0 %3012
    %v3014 = vrcp.pop %v3001
    %v3015 = vrcp.pop %v3004
    %v3016 = vrcp.pop %v3007
    %v3017 = vrcp.pop %v3010
    %v3018 = vrcp.pop %v3013
    %v3019 = vmul.f32 %v2990, %v3014
    %v3020 = vmul.f32 %v2992, %v3015
    %v3021 = vmul.f32 %v2994, %v3016
    %v3022 = vmul.f32 %v2996, %v3017
    %v3023 = vmul.f32 %v2998, %v3018
    %3024 = vrot.lane.b32.xlu0 %v2807, 64
    %v3025 = vpop.permute.xlu0 %3024
    %3026 = vrot.lane.b32.xlu0 %v2812, 64
    %v3027 = vpop.permute.xlu0 %3026
    %3028 = vrot.lane.b32.xlu0 %v2817, 64
    %v3029 = vpop.permute.xlu0 %3028
    %3030 = vrot.lane.b32.xlu0 %v2822, 64
    %v3031 = vpop.permute.xlu0 %3030
    %3032 = vrot.lane.b32.xlu0 %v2827, 64
    %v3033 = vpop.permute.xlu0 %3032
    %v3039 = vsel %vm581, %v3019, 0
    %v3042 = vsel %vm581, %v3020, 0
    %v3045 = vsel %vm581, %v3021, 0
    %v3048 = vsel %vm581, %v3022, 0
    %v3051 = vsel %vm581, %v3023, 0
    %v3053 = vsel %vm667, %v3033, 0
    %3055 = vmatprep.subr.mxu0 0.0
    %3056 = vmatpush1.msra.mxu0 %v3025
    %3057 = vmatprep.subr.mxu0 0.0
    %3058 = vmatpush1.msra.mxu0 %v3027
    %3059 = vmatprep.subr.mxu0 0.0
    %3060 = vmatpush1.msra.mxu0 %v3029
    %3061 = vmatprep.subr.mxu0 0.0
    %3062 = vmatpush1.msra.mxu0 %v3031
    %3063 = vmatprep.subr.mxu0 0.0
    %3064 = vmatpush1.msra.mxu0 %v3053
    %3065 = vmatprep.subr.mxu0 0.0
    %3066 = vmatpush1.msra.mxu0 0.0
    %3067 = vmatprep.subr.mxu0 0.0
    %3068 = vmatpush1.msra.mxu0 0.0
    %3069 = vmatprep.subr.mxu0 0.0
    %3070 = vmatpush1.msra.mxu0 0.0
    %3071 = vmatprep.subr.mxu0 0.0
    %3072 = vmatpush1.msra.mxu0 0.0
    %3073 = vmatprep.subr.mxu0 0.0
    %3074 = vmatpush1.msra.mxu0 0.0
    %3075 = vmatprep.subr.mxu0 0.0
    %3076 = vmatpush1.msra.mxu0 0.0
    %3077 = vmatprep.subr.mxu0 0.0
    %3078 = vmatpush1.msra.mxu0 0.0
    %3079 = vmatprep.subr.mxu0 0.0
    %3080 = vmatpush1.msra.mxu0 0.0
    %3081 = vmatprep.subr.mxu0 0.0
    %3082 = vmatpush1.msra.mxu0 0.0
    %3083 = vmatprep.subr.mxu0 0.0
    %3084 = vmatpush1.msra.mxu0 0.0
    %3085 = vmatprep.subr.mxu0 0.0
    %3086 = vmatpush1.msra.mxu0 0.0
    %3087 = vmatprep.subr.mxu0 0.0
    %3088 = vmatpush1.msra.mxu0 0.0
    %3089 = vmatprep.subr.mxu0 0.0
    %3090 = vmatpush1.msra.mxu0 0.0
    %3091 = vmatprep.subr.mxu0 0.0
    %3092 = vmatpush1.msra.mxu0 0.0
    %3093 = vmatprep.subr.mxu0 0.0
    %3094 = vmatpush1.msra.mxu0 0.0
    %3095 = vmatprep.subr.mxu0 0.0
    %3096 = vmatpush1.msra.mxu0 0.0
    %3097 = vmatprep.subr.mxu0 0.0
    %3098 = vmatpush1.msra.mxu0 0.0
    %3099 = vmatprep.subr.mxu0 0.0
    %3100 = vmatpush1.msra.mxu0 0.0
    %3101 = vmatprep.subr.mxu0 0.0
    %3102 = vmatpush1.msra.mxu0 0.0
    %3103 = vmatprep.subr.mxu0 0.0
    %3104 = vmatpush1.msra.mxu0 0.0
    %3105 = vmatprep.subr.mxu0 0.0
    %3106 = vmatpush1.msra.mxu0 0.0
    %3107 = vmatprep.subr.mxu0 0.0
    %3108 = vmatpush1.msra.mxu0 0.0
    %3109 = vmatprep.subr.mxu0 0.0
    %3110 = vmatpush1.msra.mxu0 0.0
    %3111 = vmatprep.subr.mxu0 0.0
    %3112 = vmatpush1.msra.mxu0 0.0
    %3113 = vmatprep.subr.mxu0 0.0
    %3114 = vmatpush1.msra.mxu0 0.0
    %3115 = vmatprep.subr.mxu0 0.0
    %3116 = vmatpush1.msra.mxu0 0.0
    %3117 = vmatprep.subr.mxu0 0.0
    %3118 = vmatpush1.msra.mxu0 0.0
    %3119 = vmatprep.mubr.f32.mxu0 0.0
    %3120 = vmatmul.mubr.f32.gmra.mrb[0].mxu0 %v3039
    %v3121 = vpop.f32.mrb[0].mxu0
    %v3122 = vadd.f32 0.0, %v3121
    %v3123 = vpop.f32.mrb[0].mxu0
    %3124 = vmatprep.mubr.f32.mxu0 0.0
    %3125 = vmatmul.mubr.f32.gmra.mrb[0].mxu0 %v3042
    %v3126 = vpop.f32.mrb[0].mxu0
    %v3127 = vadd.f32 0.0, %v3126
    %v3128 = vpop.f32.mrb[0].mxu0
    %3129 = vmatprep.mubr.f32.mxu0 0.0
    %3130 = vmatmul.mubr.f32.gmra.mrb[0].mxu0 %v3045
    %v3131 = vpop.f32.mrb[0].mxu0
    %v3132 = vadd.f32 0.0, %v3131
    %v3133 = vpop.f32.mrb[0].mxu0
    %3134 = vmatprep.mubr.f32.mxu0 0.0
    %3135 = vmatmul.mubr.f32.gmra.mrb[0].mxu0 %v3048
    %v3136 = vpop.f32.mrb[0].mxu0
    %v3137 = vadd.f32 0.0, %v3136
    %v3138 = vpop.f32.mrb[0].mxu0
    %3139 = vmatprep.mubr.f32.mxu0 0.0
    %3140 = vmatmul.mubr.f32.gmra.mrb[0].mxu0 %v3051
    %v3141 = vpop.f32.mrb[0].mxu0
    %v3142 = vadd.f32 0.0, %v3141
    %v3143 = vpop.f32.mrb[0].mxu0
    %3144 = vdwg.mxu0
    %3145 = vrot.lane.b32.xlu0 %v2807, 120
    %v3146 = vpop.permute.xlu0 %3145
    %3147 = vrot.lane.b32.xlu0 %v2812, 120
    %v3148 = vpop.permute.xlu0 %3147
    %3149 = vrot.lane.b32.xlu0 %v2817, 120
    %v3150 = vpop.permute.xlu0 %3149
    %3151 = vrot.lane.b32.xlu0 %v2822, 120
    %v3152 = vpop.permute.xlu0 %3151
    %3153 = vrot.lane.b32.xlu0 %v2827, 120
    %v3154 = vpop.permute.xlu0 %3153
    %3155 = vrot.lane.b32.xlu0 %v2807, 88
    %v3156 = vpop.permute.xlu0 %3155
    %3157 = vrot.lane.b32.xlu0 %v2812, 88
    %v3158 = vpop.permute.xlu0 %3157
    %3159 = vrot.lane.b32.xlu0 %v2817, 88
    %v3160 = vpop.permute.xlu0 %3159
    %3161 = vrot.lane.b32.xlu0 %v2822, 88
    %v3162 = vpop.permute.xlu0 %3161
    %3163 = vrot.lane.b32.xlu0 %v2827, 88
    %v3164 = vpop.permute.xlu0 %3163
    %v3165 = vsel %vm39, %v3146, 0
    %v3167 = vsel %vm39, %v3148, 0
    %v3169 = vsel %vm39, %v3150, 0
    %v3171 = vsel %vm39, %v3152, 0
    %v3173 = vsel %vm39, %v3154, 0
    %v3175 = vsel %vm39, %v3156, 0
    %v3177 = vsel %vm39, %v3158, 0
    %v3179 = vsel %vm39, %v3160, 0
    %v3181 = vsel %vm39, %v3162, 0
    %v3183 = vsel %vm39, %v3164, 0
    %3185 = vmatprep.subr.mxu0 0.0
    %3186 = vmatpush1.xpose.msra.mxu0 %v3175
    %3187 = vmatprep.subr.mxu0 0.0
    %3188 = vmatpush1.xpose.msra.mxu0 %v3177
    %3189 = vmatprep.subr.mxu0 0.0
    %3190 = vmatpush1.xpose.msra.mxu0 %v3179
    %3191 = vmatprep.subr.mxu0 0.0
    %3192 = vmatpush1.xpose.msra.mxu0 %v3181
    %3193 = vmatprep.subr.mxu0 0.0
    %3194 = vmatpush1.xpose.msra.mxu0 %v3183
    %3195 = vmatprep.subr.mxu0 0.0
    %3196 = vmatpush1.xpose.msra.mxu0 0.0
    %3197 = vmatprep.subr.mxu0 0.0
    %3198 = vmatpush1.xpose.msra.mxu0 0.0
    %3199 = vmatprep.subr.mxu0 0.0
    %3200 = vmatpush1.xpose.msra.mxu0 0.0
    %3201 = vmatprep.subr.mxu0 0.0
    %3202 = vmatpush1.xpose.msra.mxu0 0.0
    %3203 = vmatprep.subr.mxu0 0.0
    %3204 = vmatpush1.xpose.msra.mxu0 0.0
    %3205 = vmatprep.subr.mxu0 0.0
    %3206 = vmatpush1.xpose.msra.mxu0 0.0
    %3207 = vmatprep.subr.mxu0 0.0
    %3208 = vmatpush1.xpose.msra.mxu0 0.0
    %3209 = vmatprep.subr.mxu0 0.0
    %3210 = vmatpush1.xpose.msra.mxu0 0.0
    %3211 = vmatprep.subr.mxu0 0.0
    %3212 = vmatpush1.xpose.msra.mxu0 0.0
    %3213 = vmatprep.subr.mxu0 0.0
    %3214 = vmatpush1.xpose.msra.mxu0 0.0
    %3215 = vmatprep.subr.mxu0 0.0
    %3216 = vmatpush1.xpose.msra.mxu0 0.0
    %3217 = vmatprep.subr.mxu0 0.0
    %3218 = vmatpush1.xpose.msra.mxu0 0.0
    %3219 = vmatprep.subr.mxu0 0.0
    %3220 = vmatpush1.xpose.msra.mxu0 0.0
    %3221 = vmatprep.subr.mxu0 0.0
    %3222 = vmatpush1.xpose.msra.mxu0 0.0
    %3223 = vmatprep.subr.mxu0 0.0
    %3224 = vmatpush1.xpose.msra.mxu0 0.0
    %3225 = vmatprep.subr.mxu0 0.0
    %3226 = vmatpush1.xpose.msra.mxu0 0.0
    %3227 = vmatprep.subr.mxu0 0.0
    %3228 = vmatpush1.xpose.msra.mxu0 0.0
    %3229 = vmatprep.subr.mxu0 0.0
    %3230 = vmatpush1.xpose.msra.mxu0 0.0
    %3231 = vmatprep.subr.mxu0 0.0
    %3232 = vmatpush1.xpose.msra.mxu0 0.0
    %3233 = vmatprep.subr.mxu0 0.0
    %3234 = vmatpush1.xpose.msra.mxu0 0.0
    %3235 = vmatprep.subr.mxu0 0.0
    %3236 = vmatpush1.xpose.msra.mxu0 0.0
    %3237 = vmatprep.subr.mxu0 0.0
    %3238 = vmatpush1.xpose.msra.mxu0 0.0
    %3239 = vmatprep.subr.mxu0 0.0
    %3240 = vmatpush1.xpose.msra.mxu0 0.0
    %3241 = vmatprep.subr.mxu0 0.0
    %3242 = vmatpush1.xpose.msra.mxu0 0.0
    %3243 = vmatprep.subr.mxu0 0.0
    %3244 = vmatpush1.xpose.msra.mxu0 0.0
    %3245 = vmatprep.subr.mxu0 0.0
    %3246 = vmatpush1.xpose.msra.mxu0 0.0
    %3247 = vmatprep.subr.mxu0 0.0
    %3248 = vmatpush1.xpose.msra.mxu0 0.0
    %3249 = vmatprep.mubr.f32.mxu0 0.0
    %3250 = vmatmul.mubr.f32.gmra.mrb[0].mxu0 %v3165
    %v3251 = vpop.f32.mrb[0].mxu0
    %v3252 = vadd.f32 0.0, %v3251
    %v3253 = vpop.f32.mrb[0].mxu0
    %3254 = vmatprep.mubr.f32.mxu0 0.0
    %3255 = vmatmul.mubr.f32.gmra.mrb[0].mxu0 %v3167
    %v3256 = vpop.f32.mrb[0].mxu0
    %v3257 = vadd.f32 0.0, %v3256
    %v3258 = vpop.f32.mrb[0].mxu0
    %3259 = vmatprep.mubr.f32.mxu0 0.0
    %3260 = vmatmul.mubr.f32.gmra.mrb[0].mxu0 %v3169
    %v3261 = vpop.f32.mrb[0].mxu0
    %v3262 = vadd.f32 0.0, %v3261
    %v3263 = vpop.f32.mrb[0].mxu0
    %3264 = vmatprep.mubr.f32.mxu0 0.0
    %3265 = vmatmul.mubr.f32.gmra.mrb[0].mxu0 %v3171
    %v3266 = vpop.f32.mrb[0].mxu0
    %v3267 = vadd.f32 0.0, %v3266
    %v3268 = vpop.f32.mrb[0].mxu0
    %3269 = vmatprep.mubr.f32.mxu0 0.0
    %3270 = vmatmul.mubr.f32.gmra.mrb[0].mxu0 %v3173
    %v3271 = vpop.f32.mrb[0].mxu0
    %v3272 = vadd.f32 0.0, %v3271
    %v3273 = vpop.f32.mrb[0].mxu0
    %3274 = vdwg.mxu0
    %v3275 = vmul.f32 %v3252, 0.35355338
    %v3276 = vmul.f32 %v3257, 0.35355338
    %v3277 = vmul.f32 %v3262, 0.35355338
    %v3278 = vmul.f32 %v3267, 0.35355338
    %v3279 = vmul.f32 %v3272, 0.35355338
    %v3280 = vadd.f32 %v3275, %v27
    %v3281 = vadd.f32 %v3276, %v28
    %v3282 = vadd.f32 %v3277, %v29
    %v3283 = vadd.f32 %v3278, %v30
    %v3284 = vadd.f32 %v3279, %v31
    %v3285 = vsel %vm581, %v3280, -inf
    %3286 = vmax.xlane.f32.xlu0 %v3285
    %v3287 = vpop.xlane.xlu0 %3286
    %v3288 = vsel %vm581, %v3281, -inf
    %3289 = vmax.xlane.f32.xlu0 %v3288
    %v3290 = vpop.xlane.xlu0 %3289
    %v3291 = vsel %vm581, %v3282, -inf
    %3292 = vmax.xlane.f32.xlu0 %v3291
    %v3293 = vpop.xlane.xlu0 %3292
    %v3294 = vsel %vm581, %v3283, -inf
    %3295 = vmax.xlane.f32.xlu0 %v3294
    %v3296 = vpop.xlane.xlu0 %3295
    %v3297 = vsel %vm594, %v3284, -inf
    %3298 = vmax.xlane.f32.xlu0 %v3297
    %v3299 = vpop.xlane.xlu0 %3298
    %v3300 = vsub.f32 %v3280, %v3287
    %v3301 = vsub.f32 %v3281, %v3290
    %v3302 = vsub.f32 %v3282, %v3293
    %v3303 = vsub.f32 %v3283, %v3296
    %v3304 = vsub.f32 %v3284, %v3299
    %v3305 = vmul.f32 %v3300, 1.442695
    %v3306 = vpow.pop %v3305
    %v3307 = vmul.f32 %v3301, 1.442695
    %v3308 = vpow.pop %v3307
    %v3309 = vmul.f32 %v3302, 1.442695
    %v3310 = vpow.pop %v3309
    %v3311 = vmul.f32 %v3303, 1.442695
    %v3312 = vpow.pop %v3311
    %v3313 = vmul.f32 %v3304, 1.442695
    %v3314 = vpow.pop %v3313
    %v3315 = vsel %vm581, %v3306, 0.0
    %3316 = vadd.xlane.f32.xlu0 %v3315
    %v3317 = vpop.xlane.xlu0 %3316
    %v3318 = vsel %vm581, %v3308, 0.0
    %3319 = vadd.xlane.f32.xlu0 %v3318
    %v3320 = vpop.xlane.xlu0 %3319
    %v3321 = vsel %vm581, %v3310, 0.0
    %3322 = vadd.xlane.f32.xlu0 %v3321
    %v3323 = vpop.xlane.xlu0 %3322
    %v3324 = vsel %vm581, %v3312, 0.0
    %3325 = vadd.xlane.f32.xlu0 %v3324
    %v3326 = vpop.xlane.xlu0 %3325
    %v3327 = vsel %vm594, %v3314, 0.0
    %3328 = vadd.xlane.f32.xlu0 %v3327
    %v3329 = vpop.xlane.xlu0 %3328
    %v3330 = vrcp.pop %v3317
    %v3331 = vrcp.pop %v3320
    %v3332 = vrcp.pop %v3323
    %v3333 = vrcp.pop %v3326
    %v3334 = vrcp.pop %v3329
    %v3335 = vmul.f32 %v3306, %v3330
    %v3336 = vmul.f32 %v3308, %v3331
    %v3337 = vmul.f32 %v3310, %v3332
    %v3338 = vmul.f32 %v3312, %v3333
    %v3339 = vmul.f32 %v3314, %v3334
    %3340 = vrot.lane.b32.xlu0 %v2807, 56
    %v3341 = vpop.permute.xlu0 %3340
    %3342 = vrot.lane.b32.xlu0 %v2812, 56
    %v3343 = vpop.permute.xlu0 %3342
    %3344 = vrot.lane.b32.xlu0 %v2817, 56
    %v3345 = vpop.permute.xlu0 %3344
    %3346 = vrot.lane.b32.xlu0 %v2822, 56
    %v3347 = vpop.permute.xlu0 %3346
    %3348 = vrot.lane.b32.xlu0 %v2827, 56
    %v3349 = vpop.permute.xlu0 %3348
    %v3355 = vsel %vm581, %v3335, 0
    %v3358 = vsel %vm581, %v3336, 0
    %v3361 = vsel %vm581, %v3337, 0
    %v3364 = vsel %vm581, %v3338, 0
    %v3367 = vsel %vm581, %v3339, 0
    %v3369 = vsel %vm667, %v3349, 0
    %3371 = vmatprep.subr.mxu0 0.0
    %3372 = vmatpush1.msra.mxu0 %v3341
    %3373 = vmatprep.subr.mxu0 0.0
    %3374 = vmatpush1.msra.mxu0 %v3343
    %3375 = vmatprep.subr.mxu0 0.0
    %3376 = vmatpush1.msra.mxu0 %v3345
    %3377 = vmatprep.subr.mxu0 0.0
    %3378 = vmatpush1.msra.mxu0 %v3347
    %3379 = vmatprep.subr.mxu0 0.0
    %3380 = vmatpush1.msra.mxu0 %v3369
    %3381 = vmatprep.subr.mxu0 0.0
    %3382 = vmatpush1.msra.mxu0 0.0
    %3383 = vmatprep.subr.mxu0 0.0
    %3384 = vmatpush1.msra.mxu0 0.0
    %3385 = vmatprep.subr.mxu0 0.0
    %3386 = vmatpush1.msra.mxu0 0.0
    %3387 = vmatprep.subr.mxu0 0.0
    %3388 = vmatpush1.msra.mxu0 0.0
    %3389 = vmatprep.subr.mxu0 0.0
    %3390 = vmatpush1.msra.mxu0 0.0
    %3391 = vmatprep.subr.mxu0 0.0
    %3392 = vmatpush1.msra.mxu0 0.0
    %3393 = vmatprep.subr.mxu0 0.0
    %3394 = vmatpush1.msra.mxu0 0.0
    %3395 = vmatprep.subr.mxu0 0.0
    %3396 = vmatpush1.msra.mxu0 0.0
    %3397 = vmatprep.subr.mxu0 0.0
    %3398 = vmatpush1.msra.mxu0 0.0
    %3399 = vmatprep.subr.mxu0 0.0
    %3400 = vmatpush1.msra.mxu0 0.0
    %3401 = vmatprep.subr.mxu0 0.0
    %3402 = vmatpush1.msra.mxu0 0.0
    %3403 = vmatprep.subr.mxu0 0.0
    %3404 = vmatpush1.msra.mxu0 0.0
    %3405 = vmatprep.subr.mxu0 0.0
    %3406 = vmatpush1.msra.mxu0 0.0
    %3407 = vmatprep.subr.mxu0 0.0
    %3408 = vmatpush1.msra.mxu0 0.0
    %3409 = vmatprep.subr.mxu0 0.0
    %3410 = vmatpush1.msra.mxu0 0.0
    %3411 = vmatprep.subr.mxu0 0.0
    %3412 = vmatpush1.msra.mxu0 0.0
    %3413 = vmatprep.subr.mxu0 0.0
    %3414 = vmatpush1.msra.mxu0 0.0
    %3415 = vmatprep.subr.mxu0 0.0
    %3416 = vmatpush1.msra.mxu0 0.0
    %3417 = vmatprep.subr.mxu0 0.0
    %3418 = vmatpush1.msra.mxu0 0.0
    %3419 = vmatprep.subr.mxu0 0.0
    %3420 = vmatpush1.msra.mxu0 0.0
    %3421 = vmatprep.subr.mxu0 0.0
    %3422 = vmatpush1.msra.mxu0 0.0
    %3423 = vmatprep.subr.mxu0 0.0
    %3424 = vmatpush1.msra.mxu0 0.0
    %3425 = vmatprep.subr.mxu0 0.0
    %3426 = vmatpush1.msra.mxu0 0.0
    %3427 = vmatprep.subr.mxu0 0.0
    %3428 = vmatpush1.msra.mxu0 0.0
    %3429 = vmatprep.subr.mxu0 0.0
    %3430 = vmatpush1.msra.mxu0 0.0
    %3431 = vmatprep.subr.mxu0 0.0
    %3432 = vmatpush1.msra.mxu0 0.0
    %3433 = vmatprep.subr.mxu0 0.0
    %3434 = vmatpush1.msra.mxu0 0.0
    %3435 = vmatprep.mubr.f32.mxu0 0.0
    %3436 = vmatmul.mubr.f32.gmra.mrb[0].mxu0 %v3355
    %v3437 = vpop.f32.mrb[0].mxu0
    %v3438 = vadd.f32 0.0, %v3437
    %v3439 = vpop.f32.mrb[0].mxu0
    %3440 = vmatprep.mubr.f32.mxu0 0.0
    %3441 = vmatmul.mubr.f32.gmra.mrb[0].mxu0 %v3358
    %v3442 = vpop.f32.mrb[0].mxu0
    %v3443 = vadd.f32 0.0, %v3442
    %v3444 = vpop.f32.mrb[0].mxu0
    %3445 = vmatprep.mubr.f32.mxu0 0.0
    %3446 = vmatmul.mubr.f32.gmra.mrb[0].mxu0 %v3361
    %v3447 = vpop.f32.mrb[0].mxu0
    %v3448 = vadd.f32 0.0, %v3447
    %v3449 = vpop.f32.mrb[0].mxu0
    %3450 = vmatprep.mubr.f32.mxu0 0.0
    %3451 = vmatmul.mubr.f32.gmra.mrb[0].mxu0 %v3364
    %v3452 = vpop.f32.mrb[0].mxu0
    %v3453 = vadd.f32 0.0, %v3452
    %v3454 = vpop.f32.mrb[0].mxu0
    %3455 = vmatprep.mubr.f32.mxu0 0.0
    %3456 = vmatmul.mubr.f32.gmra.mrb[0].mxu0 %v3367
    %v3457 = vpop.f32.mrb[0].mxu0
    %v3458 = vadd.f32 0.0, %v3457
    %v3459 = vpop.f32.mrb[0].mxu0
    %3460 = vdwg.mxu0
    %v3462 = vsel %vm39, %v3438, 0
    %v3465 = vsel %vm39, %v3443, 0
    %v3468 = vsel %vm39, %v3448, 0
    %v3471 = vsel %vm39, %v3453, 0
    %v3474 = vsel %vm39, %v3458, 0
    %3476 = vmatprep.subr.mxu0 0.0
    %3477 = vmatpush1.msra.mxu0 %v2831
    %3478 = vmatprep.subr.mxu0 0.0
    %3479 = vmatpush1.msra.mxu0 0.0
    %3480 = vmatprep.subr.mxu0 0.0
    %3481 = vmatpush1.msra.mxu0 0.0
    %3482 = vmatprep.subr.mxu0 0.0
    %3483 = vmatpush1.msra.mxu0 0.0
    %3484 = vmatprep.subr.mxu0 0.0
    %3485 = vmatpush1.msra.mxu0 0.0
    %3486 = vmatprep.subr.mxu0 0.0
    %3487 = vmatpush1.msra.mxu0 0.0
    %3488 = vmatprep.subr.mxu0 0.0
    %3489 = vmatpush1.msra.mxu0 0.0
    %3490 = vmatprep.subr.mxu0 0.0
    %3491 = vmatpush1.msra.mxu0 0.0
    %3492 = vmatprep.subr.mxu0 0.0
    %3493 = vmatpush1.msra.mxu0 0.0
    %3494 = vmatprep.subr.mxu0 0.0
    %3495 = vmatpush1.msra.mxu0 0.0
    %3496 = vmatprep.subr.mxu0 0.0
    %3497 = vmatpush1.msra.mxu0 0.0
    %3498 = vmatprep.subr.mxu0 0.0
    %3499 = vmatpush1.msra.mxu0 0.0
    %3500 = vmatprep.subr.mxu0 0.0
    %3501 = vmatpush1.msra.mxu0 0.0
    %3502 = vmatprep.subr.mxu0 0.0
    %3503 = vmatpush1.msra.mxu0 0.0
    %3504 = vmatprep.subr.mxu0 0.0
    %3505 = vmatpush1.msra.mxu0 0.0
    %3506 = vmatprep.subr.mxu0 0.0
    %3507 = vmatpush1.msra.mxu0 0.0
    %3508 = vmatprep.subr.mxu0 0.0
    %3509 = vmatpush1.msra.mxu0 0.0
    %3510 = vmatprep.subr.mxu0 0.0
    %3511 = vmatpush1.msra.mxu0 0.0
    %3512 = vmatprep.subr.mxu0 0.0
    %3513 = vmatpush1.msra.mxu0 0.0
    %3514 = vmatprep.subr.mxu0 0.0
    %3515 = vmatpush1.msra.mxu0 0.0
    %3516 = vmatprep.subr.mxu0 0.0
    %3517 = vmatpush1.msra.mxu0 0.0
    %3518 = vmatprep.subr.mxu0 0.0
    %3519 = vmatpush1.msra.mxu0 0.0
    %3520 = vmatprep.subr.mxu0 0.0
    %3521 = vmatpush1.msra.mxu0 0.0
    %3522 = vmatprep.subr.mxu0 0.0
    %3523 = vmatpush1.msra.mxu0 0.0
    %3524 = vmatprep.subr.mxu0 0.0
    %3525 = vmatpush1.msra.mxu0 0.0
    %3526 = vmatprep.subr.mxu0 0.0
    %3527 = vmatpush1.msra.mxu0 0.0
    %3528 = vmatprep.subr.mxu0 0.0
    %3529 = vmatpush1.msra.mxu0 0.0
    %3530 = vmatprep.subr.mxu0 0.0
    %3531 = vmatpush1.msra.mxu0 0.0
    %3532 = vmatprep.subr.mxu0 0.0
    %3533 = vmatpush1.msra.mxu0 0.0
    %3534 = vmatprep.subr.mxu0 0.0
    %3535 = vmatpush1.msra.mxu0 0.0
    %3536 = vmatprep.subr.mxu0 0.0
    %3537 = vmatpush1.msra.mxu0 0.0
    %3538 = vmatprep.subr.mxu0 0.0
    %3539 = vmatpush1.msra.mxu0 0.0
    %3540 = vmatprep.mubr.f32.mxu0 0.0
    %3541 = vmatmul.mubr.f32.gmra.mrb[0].mxu0 %v3462
    %v3542 = vpop.f32.mrb[0].mxu0
    %v3543 = vadd.f32 0.0, %v3542
    %v3544 = vpop.f32.mrb[0].mxu0
    %3545 = vmatprep.mubr.f32.mxu0 0.0
    %3546 = vmatmul.mubr.f32.gmra.mrb[0].mxu0 %v3465
    %v3547 = vpop.f32.mrb[0].mxu0
    %v3548 = vadd.f32 0.0, %v3547
    %v3549 = vpop.f32.mrb[0].mxu0
    %3550 = vmatprep.mubr.f32.mxu0 0.0
    %3551 = vmatmul.mubr.f32.gmra.mrb[0].mxu0 %v3468
    %v3552 = vpop.f32.mrb[0].mxu0
    %v3553 = vadd.f32 0.0, %v3552
    %v3554 = vpop.f32.mrb[0].mxu0
    %3555 = vmatprep.mubr.f32.mxu0 0.0
    %3556 = vmatmul.mubr.f32.gmra.mrb[0].mxu0 %v3471
    %v3557 = vpop.f32.mrb[0].mxu0
    %v3558 = vadd.f32 0.0, %v3557
    %v3559 = vpop.f32.mrb[0].mxu0
    %3560 = vmatprep.mubr.f32.mxu0 0.0
    %3561 = vmatmul.mubr.f32.gmra.mrb[0].mxu0 %v3474
    %v3562 = vpop.f32.mrb[0].mxu0
    %v3563 = vadd.f32 0.0, %v3562
    %v3564 = vpop.f32.mrb[0].mxu0
    %3565 = vdwg.mxu0
    %v3567 = vsel %vm39, %v3122, 0
    %v3570 = vsel %vm39, %v3127, 0
    %v3573 = vsel %vm39, %v3132, 0
    %v3576 = vsel %vm39, %v3137, 0
    %v3579 = vsel %vm39, %v3142, 0
    %3581 = vmatprep.subr.mxu0 0.0
    %3582 = vmatpush1.msra.mxu0 %v2830
    %3583 = vmatprep.subr.mxu0 0.0
    %3584 = vmatpush1.msra.mxu0 0.0
    %3585 = vmatprep.subr.mxu0 0.0
    %3586 = vmatpush1.msra.mxu0 0.0
    %3587 = vmatprep.subr.mxu0 0.0
    %3588 = vmatpush1.msra.mxu0 0.0
    %3589 = vmatprep.subr.mxu0 0.0
    %3590 = vmatpush1.msra.mxu0 0.0
    %3591 = vmatprep.subr.mxu0 0.0
    %3592 = vmatpush1.msra.mxu0 0.0
    %3593 = vmatprep.subr.mxu0 0.0
    %3594 = vmatpush1.msra.mxu0 0.0
    %3595 = vmatprep.subr.mxu0 0.0
    %3596 = vmatpush1.msra.mxu0 0.0
    %3597 = vmatprep.subr.mxu0 0.0
    %3598 = vmatpush1.msra.mxu0 0.0
    %3599 = vmatprep.subr.mxu0 0.0
    %3600 = vmatpush1.msra.mxu0 0.0
    %3601 = vmatprep.subr.mxu0 0.0
    %3602 = vmatpush1.msra.mxu0 0.0
    %3603 = vmatprep.subr.mxu0 0.0
    %3604 = vmatpush1.msra.mxu0 0.0
    %3605 = vmatprep.subr.mxu0 0.0
    %3606 = vmatpush1.msra.mxu0 0.0
    %3607 = vmatprep.subr.mxu0 0.0
    %3608 = vmatpush1.msra.mxu0 0.0
    %3609 = vmatprep.subr.mxu0 0.0
    %3610 = vmatpush1.msra.mxu0 0.0
    %3611 = vmatprep.subr.mxu0 0.0
    %3612 = vmatpush1.msra.mxu0 0.0
    %3613 = vmatprep.subr.mxu0 0.0
    %3614 = vmatpush1.msra.mxu0 0.0
    %3615 = vmatprep.subr.mxu0 0.0
    %3616 = vmatpush1.msra.mxu0 0.0
    %3617 = vmatprep.subr.mxu0 0.0
    %3618 = vmatpush1.msra.mxu0 0.0
    %3619 = vmatprep.subr.mxu0 0.0
    %3620 = vmatpush1.msra.mxu0 0.0
    %3621 = vmatprep.subr.mxu0 0.0
    %3622 = vmatpush1.msra.mxu0 0.0
    %3623 = vmatprep.subr.mxu0 0.0
    %3624 = vmatpush1.msra.mxu0 0.0
    %3625 = vmatprep.subr.mxu0 0.0
    %3626 = vmatpush1.msra.mxu0 0.0
    %3627 = vmatprep.subr.mxu0 0.0
    %3628 = vmatpush1.msra.mxu0 0.0
    %3629 = vmatprep.subr.mxu0 0.0
    %3630 = vmatpush1.msra.mxu0 0.0
    %3631 = vmatprep.subr.mxu0 0.0
    %3632 = vmatpush1.msra.mxu0 0.0
    %3633 = vmatprep.subr.mxu0 0.0
    %3634 = vmatpush1.msra.mxu0 0.0
    %3635 = vmatprep.subr.mxu0 0.0
    %3636 = vmatpush1.msra.mxu0 0.0
    %3637 = vmatprep.subr.mxu0 0.0
    %3638 = vmatpush1.msra.mxu0 0.0
    %3639 = vmatprep.subr.mxu0 0.0
    %3640 = vmatpush1.msra.mxu0 0.0
    %3641 = vmatprep.subr.mxu0 0.0
    %3642 = vmatpush1.msra.mxu0 0.0
    %3643 = vmatprep.subr.mxu0 0.0
    %3644 = vmatpush1.msra.mxu0 0.0
    %3645 = vmatprep.mubr.f32.mxu0 0.0
    %3646 = vmatmul.mubr.f32.gmra.mrb[0].mxu0 %v3567
    %v3647 = vpop.f32.mrb[0].mxu0
    %v3648 = vadd.f32 %v3543, %v3647
    %v3649 = vpop.f32.mrb[0].mxu0
    %3650 = vmatprep.mubr.f32.mxu0 0.0
    %3651 = vmatmul.mubr.f32.gmra.mrb[0].mxu0 %v3570
    %v3652 = vpop.f32.mrb[0].mxu0
    %v3653 = vadd.f32 %v3548, %v3652
    %v3654 = vpop.f32.mrb[0].mxu0
    %3655 = vmatprep.mubr.f32.mxu0 0.0
    %3656 = vmatmul.mubr.f32.gmra.mrb[0].mxu0 %v3573
    %v3657 = vpop.f32.mrb[0].mxu0
    %v3658 = vadd.f32 %v3553, %v3657
    %v3659 = vpop.f32.mrb[0].mxu0
    %3660 = vmatprep.mubr.f32.mxu0 0.0
    %3661 = vmatmul.mubr.f32.gmra.mrb[0].mxu0 %v3576
    %v3662 = vpop.f32.mrb[0].mxu0
    %v3663 = vadd.f32 %v3558, %v3662
    %v3664 = vpop.f32.mrb[0].mxu0
    %3665 = vmatprep.mubr.f32.mxu0 0.0
    %3666 = vmatmul.mubr.f32.gmra.mrb[0].mxu0 %v3579
    %v3667 = vpop.f32.mrb[0].mxu0
    %v3668 = vadd.f32 %v3563, %v3667
    %v3669 = vpop.f32.mrb[0].mxu0
    %3670 = vdwg.mxu0
    %3671 = vrot.lane.b32.xlu0 %v2807, 112
    %v3672 = vpop.permute.xlu0 %3671
    %3673 = vrot.lane.b32.xlu0 %v2812, 112
    %v3674 = vpop.permute.xlu0 %3673
    %3675 = vrot.lane.b32.xlu0 %v2817, 112
    %v3676 = vpop.permute.xlu0 %3675
    %3677 = vrot.lane.b32.xlu0 %v2822, 112
    %v3678 = vpop.permute.xlu0 %3677
    %3679 = vrot.lane.b32.xlu0 %v2827, 112
    %v3680 = vpop.permute.xlu0 %3679
    %3681 = vrot.lane.b32.xlu0 %v2807, 80
    %v3682 = vpop.permute.xlu0 %3681
    %3683 = vrot.lane.b32.xlu0 %v2812, 80
    %v3684 = vpop.permute.xlu0 %3683
    %3685 = vrot.lane.b32.xlu0 %v2817, 80
    %v3686 = vpop.permute.xlu0 %3685
    %3687 = vrot.lane.b32.xlu0 %v2822, 80
    %v3688 = vpop.permute.xlu0 %3687
    %3689 = vrot.lane.b32.xlu0 %v2827, 80
    %v3690 = vpop.permute.xlu0 %3689
    %v3691 = vsel %vm39, %v3672, 0
    %v3693 = vsel %vm39, %v3674, 0
    %v3695 = vsel %vm39, %v3676, 0
    %v3697 = vsel %vm39, %v3678, 0
    %v3699 = vsel %vm39, %v3680, 0
    %v3701 = vsel %vm39, %v3682, 0
    %v3703 = vsel %vm39, %v3684, 0
    %v3705 = vsel %vm39, %v3686, 0
    %v3707 = vsel %vm39, %v3688, 0
    %v3709 = vsel %vm39, %v3690, 0
    %3711 = vmatprep.subr.mxu0 0.0
    %3712 = vmatpush1.xpose.msra.mxu0 %v3701
    %3713 = vmatprep.subr.mxu0 0.0
    %3714 = vmatpush1.xpose.msra.mxu0 %v3703
    %3715 = vmatprep.subr.mxu0 0.0
    %3716 = vmatpush1.xpose.msra.mxu0 %v3705
    %3717 = vmatprep.subr.mxu0 0.0
    %3718 = vmatpush1.xpose.msra.mxu0 %v3707
    %3719 = vmatprep.subr.mxu0 0.0
    %3720 = vmatpush1.xpose.msra.mxu0 %v3709
    %3721 = vmatprep.subr.mxu0 0.0
    %3722 = vmatpush1.xpose.msra.mxu0 0.0
    %3723 = vmatprep.subr.mxu0 0.0
    %3724 = vmatpush1.xpose.msra.mxu0 0.0
    %3725 = vmatprep.subr.mxu0 0.0
    %3726 = vmatpush1.xpose.msra.mxu0 0.0
    %3727 = vmatprep.subr.mxu0 0.0
    %3728 = vmatpush1.xpose.msra.mxu0 0.0
    %3729 = vmatprep.subr.mxu0 0.0
    %3730 = vmatpush1.xpose.msra.mxu0 0.0
    %3731 = vmatprep.subr.mxu0 0.0
    %3732 = vmatpush1.xpose.msra.mxu0 0.0
    %3733 = vmatprep.subr.mxu0 0.0
    %3734 = vmatpush1.xpose.msra.mxu0 0.0
    %3735 = vmatprep.subr.mxu0 0.0
    %3736 = vmatpush1.xpose.msra.mxu0 0.0
    %3737 = vmatprep.subr.mxu0 0.0
    %3738 = vmatpush1.xpose.msra.mxu0 0.0
    %3739 = vmatprep.subr.mxu0 0.0
    %3740 = vmatpush1.xpose.msra.mxu0 0.0
    %3741 = vmatprep.subr.mxu0 0.0
    %3742 = vmatpush1.xpose.msra.mxu0 0.0
    %3743 = vmatprep.subr.mxu0 0.0
    %3744 = vmatpush1.xpose.msra.mxu0 0.0
    %3745 = vmatprep.subr.mxu0 0.0
    %3746 = vmatpush1.xpose.msra.mxu0 0.0
    %3747 = vmatprep.subr.mxu0 0.0
    %3748 = vmatpush1.xpose.msra.mxu0 0.0
    %3749 = vmatprep.subr.mxu0 0.0
    %3750 = vmatpush1.xpose.msra.mxu0 0.0
    %3751 = vmatprep.subr.mxu0 0.0
    %3752 = vmatpush1.xpose.msra.mxu0 0.0
    %3753 = vmatprep.subr.mxu0 0.0
    %3754 = vmatpush1.xpose.msra.mxu0 0.0
    %3755 = vmatprep.subr.mxu0 0.0
    %3756 = vmatpush1.xpose.msra.mxu0 0.0
    %3757 = vmatprep.subr.mxu0 0.0
    %3758 = vmatpush1.xpose.msra.mxu0 0.0
    %3759 = vmatprep.subr.mxu0 0.0
    %3760 = vmatpush1.xpose.msra.mxu0 0.0
    %3761 = vmatprep.subr.mxu0 0.0
    %3762 = vmatpush1.xpose.msra.mxu0 0.0
    %3763 = vmatprep.subr.mxu0 0.0
    %3764 = vmatpush1.xpose.msra.mxu0 0.0
    %3765 = vmatprep.subr.mxu0 0.0
    %3766 = vmatpush1.xpose.msra.mxu0 0.0
    %3767 = vmatprep.subr.mxu0 0.0
    %3768 = vmatpush1.xpose.msra.mxu0 0.0
    %3769 = vmatprep.subr.mxu0 0.0
    %3770 = vmatpush1.xpose.msra.mxu0 0.0
    %3771 = vmatprep.subr.mxu0 0.0
    %3772 = vmatpush1.xpose.msra.mxu0 0.0
    %3773 = vmatprep.subr.mxu0 0.0
    %3774 = vmatpush1.xpose.msra.mxu0 0.0
    %3775 = vmatprep.mubr.f32.mxu0 0.0
    %3776 = vmatmul.mubr.f32.gmra.mrb[0].mxu0 %v3691
    %v3777 = vpop.f32.mrb[0].mxu0
    %v3778 = vadd.f32 0.0, %v3777
    %v3779 = vpop.f32.mrb[0].mxu0
    %3780 = vmatprep.mubr.f32.mxu0 0.0
    %3781 = vmatmul.mubr.f32.gmra.mrb[0].mxu0 %v3693
    %v3782 = vpop.f32.mrb[0].mxu0
    %v3783 = vadd.f32 0.0, %v3782
    %v3784 = vpop.f32.mrb[0].mxu0
    %3785 = vmatprep.mubr.f32.mxu0 0.0
    %3786 = vmatmul.mubr.f32.gmra.mrb[0].mxu0 %v3695
    %v3787 = vpop.f32.mrb[0].mxu0
    %v3788 = vadd.f32 0.0, %v3787
    %v3789 = vpop.f32.mrb[0].mxu0
    %3790 = vmatprep.mubr.f32.mxu0 0.0
    %3791 = vmatmul.mubr.f32.gmra.mrb[0].mxu0 %v3697
    %v3792 = vpop.f32.mrb[0].mxu0
    %v3793 = vadd.f32 0.0, %v3792
    %v3794 = vpop.f32.mrb[0].mxu0
    %3795 = vmatprep.mubr.f32.mxu0 0.0
    %3796 = vmatmul.mubr.f32.gmra.mrb[0].mxu0 %v3699
    %v3797 = vpop.f32.mrb[0].mxu0
    %v3798 = vadd.f32 0.0, %v3797
    %v3799 = vpop.f32.mrb[0].mxu0
    %3800 = vdwg.mxu0
    %v3801 = vmul.f32 %v3778, 0.35355338
    %v3802 = vmul.f32 %v3783, 0.35355338
    %v3803 = vmul.f32 %v3788, 0.35355338
    %v3804 = vmul.f32 %v3793, 0.35355338
    %v3805 = vmul.f32 %v3798, 0.35355338
    %v3806 = vadd.f32 %v3801, %v27
    %v3807 = vadd.f32 %v3802, %v28
    %v3808 = vadd.f32 %v3803, %v29
    %v3809 = vadd.f32 %v3804, %v30
    %v3810 = vadd.f32 %v3805, %v31
    %v3811 = vsel %vm581, %v3806, -inf
    %3812 = vmax.xlane.f32.xlu0 %v3811
    %v3813 = vpop.xlane.xlu0 %3812
    %v3814 = vsel %vm581, %v3807, -inf
    %3815 = vmax.xlane.f32.xlu0 %v3814
    %v3816 = vpop.xlane.xlu0 %3815
    %v3817 = vsel %vm581, %v3808, -inf
    %3818 = vmax.xlane.f32.xlu0 %v3817
    %v3819 = vpop.xlane.xlu0 %3818
    %v3820 = vsel %vm581, %v3809, -inf
    %3821 = vmax.xlane.f32.xlu0 %v3820
    %v3822 = vpop.xlane.xlu0 %3821
    %v3823 = vsel %vm594, %v3810, -inf
    %3824 = vmax.xlane.f32.xlu0 %v3823
    %v3825 = vpop.xlane.xlu0 %3824
    %v3826 = vsub.f32 %v3806, %v3813
    %v3827 = vsub.f32 %v3807, %v3816
    %v3828 = vsub.f32 %v3808, %v3819
    %v3829 = vsub.f32 %v3809, %v3822
    %v3830 = vsub.f32 %v3810, %v3825
    %v3831 = vmul.f32 %v3826, 1.442695
    %v3832 = vpow.pop %v3831
    %v3833 = vmul.f32 %v3827, 1.442695
    %v3834 = vpow.pop %v3833
    %v3835 = vmul.f32 %v3828, 1.442695
    %v3836 = vpow.pop %v3835
    %v3837 = vmul.f32 %v3829, 1.442695
    %v3838 = vpow.pop %v3837
    %v3839 = vmul.f32 %v3830, 1.442695
    %v3840 = vpow.pop %v3839
    %v3841 = vsel %vm581, %v3832, 0.0
    %3842 = vadd.xlane.f32.xlu0 %v3841
    %v3843 = vpop.xlane.xlu0 %3842
    %v3844 = vsel %vm581, %v3834, 0.0
    %3845 = vadd.xlane.f32.xlu0 %v3844
    %v3846 = vpop.xlane.xlu0 %3845
    %v3847 = vsel %vm581, %v3836, 0.0
    %3848 = vadd.xlane.f32.xlu0 %v3847
    %v3849 = vpop.xlane.xlu0 %3848
    %v3850 = vsel %vm581, %v3838, 0.0
    %3851 = vadd.xlane.f32.xlu0 %v3850
    %v3852 = vpop.xlane.xlu0 %3851
    %v3853 = vsel %vm594, %v3840, 0.0
    %3854 = vadd.xlane.f32.xlu0 %v3853
    %v3855 = vpop.xlane.xlu0 %3854
    %v3856 = vrcp.pop %v3843
    %v3857 = vrcp.pop %v3846
    %v3858 = vrcp.pop %v3849
    %v3859 = vrcp.pop %v3852
    %v3860 = vrcp.pop %v3855
    %v3861 = vmul.f32 %v3832, %v3856
    %v3862 = vmul.f32 %v3834, %v3857
    %v3863 = vmul.f32 %v3836, %v3858
    %v3864 = vmul.f32 %v3838, %v3859
    %v3865 = vmul.f32 %v3840, %v3860
    %3866 = vrot.lane.b32.xlu0 %v2807, 48
    %v3867 = vpop.permute.xlu0 %3866
    %3868 = vrot.lane.b32.xlu0 %v2812, 48
    %v3869 = vpop.permute.xlu0 %3868
    %3870 = vrot.lane.b32.xlu0 %v2817, 48
    %v3871 = vpop.permute.xlu0 %3870
    %3872 = vrot.lane.b32.xlu0 %v2822, 48
    %v3873 = vpop.permute.xlu0 %3872
    %3874 = vrot.lane.b32.xlu0 %v2827, 48
    %v3875 = vpop.permute.xlu0 %3874
    %v3881 = vsel %vm581, %v3861, 0
    %v3884 = vsel %vm581, %v3862, 0
    %v3887 = vsel %vm581, %v3863, 0
    %v3890 = vsel %vm581, %v3864, 0
    %v3893 = vsel %vm581, %v3865, 0
    %v3895 = vsel %vm667, %v3875, 0
    %3897 = vmatprep.subr.mxu0 0.0
    %3898 = vmatpush1.msra.mxu0 %v3867
    %3899 = vmatprep.subr.mxu0 0.0
    %3900 = vmatpush1.msra.mxu0 %v3869
    %3901 = vmatprep.subr.mxu0 0.0
    %3902 = vmatpush1.msra.mxu0 %v3871
    %3903 = vmatprep.subr.mxu0 0.0
    %3904 = vmatpush1.msra.mxu0 %v3873
    %3905 = vmatprep.subr.mxu0 0.0
    %3906 = vmatpush1.msra.mxu0 %v3895
    %3907 = vmatprep.subr.mxu0 0.0
    %3908 = vmatpush1.msra.mxu0 0.0
    %3909 = vmatprep.subr.mxu0 0.0
    %3910 = vmatpush1.msra.mxu0 0.0
    %3911 = vmatprep.subr.mxu0 0.0
    %3912 = vmatpush1.msra.mxu0 0.0
    %3913 = vmatprep.subr.mxu0 0.0
    %3914 = vmatpush1.msra.mxu0 0.0
    %3915 = vmatprep.subr.mxu0 0.0
    %3916 = vmatpush1.msra.mxu0 0.0
    %3917 = vmatprep.subr.mxu0 0.0
    %3918 = vmatpush1.msra.mxu0 0.0
    %3919 = vmatprep.subr.mxu0 0.0
    %3920 = vmatpush1.msra.mxu0 0.0
    %3921 = vmatprep.subr.mxu0 0.0
    %3922 = vmatpush1.msra.mxu0 0.0
    %3923 = vmatprep.subr.mxu0 0.0
    %3924 = vmatpush1.msra.mxu0 0.0
    %3925 = vmatprep.subr.mxu0 0.0
    %3926 = vmatpush1.msra.mxu0 0.0
    %3927 = vmatprep.subr.mxu0 0.0
    %3928 = vmatpush1.msra.mxu0 0.0
    %3929 = vmatprep.subr.mxu0 0.0
    %3930 = vmatpush1.msra.mxu0 0.0
    %3931 = vmatprep.subr.mxu0 0.0
    %3932 = vmatpush1.msra.mxu0 0.0
    %3933 = vmatprep.subr.mxu0 0.0
    %3934 = vmatpush1.msra.mxu0 0.0
    %3935 = vmatprep.subr.mxu0 0.0
    %3936 = vmatpush1.msra.mxu0 0.0
    %3937 = vmatprep.subr.mxu0 0.0
    %3938 = vmatpush1.msra.mxu0 0.0
    %3939 = vmatprep.subr.mxu0 0.0
    %3940 = vmatpush1.msra.mxu0 0.0
    %3941 = vmatprep.subr.mxu0 0.0
    %3942 = vmatpush1.msra.mxu0 0.0
    %3943 = vmatprep.subr.mxu0 0.0
    %3944 = vmatpush1.msra.mxu0 0.0
    %3945 = vmatprep.subr.mxu0 0.0
    %3946 = vmatpush1.msra.mxu0 0.0
    %3947 = vmatprep.subr.mxu0 0.0
    %3948 = vmatpush1.msra.mxu0 0.0
    %3949 = vmatprep.subr.mxu0 0.0
    %3950 = vmatpush1.msra.mxu0 0.0
    %3951 = vmatprep.subr.mxu0 0.0
    %3952 = vmatpush1.msra.mxu0 0.0
    %3953 = vmatprep.subr.mxu0 0.0
    %3954 = vmatpush1.msra.mxu0 0.0
    %3955 = vmatprep.subr.mxu0 0.0
    %3956 = vmatpush1.msra.mxu0 0.0
    %3957 = vmatprep.subr.mxu0 0.0
    %3958 = vmatpush1.msra.mxu0 0.0
    %3959 = vmatprep.subr.mxu0 0.0
    %3960 = vmatpush1.msra.mxu0 0.0
    %3961 = vmatprep.mubr.f32.mxu0 0.0
    %3962 = vmatmul.mubr.f32.gmra.mrb[0].mxu0 %v3881
    %v3963 = vpop.f32.mrb[0].mxu0
    %v3964 = vadd.f32 0.0, %v3963
    %v3965 = vpop.f32.mrb[0].mxu0
    %3966 = vmatprep.mubr.f32.mxu0 0.0
    %3967 = vmatmul.mubr.f32.gmra.mrb[0].mxu0 %v3884
    %v3968 = vpop.f32.mrb[0].mxu0
    %v3969 = vadd.f32 0.0, %v3968
    %v3970 = vpop.f32.mrb[0].mxu0
    %3971 = vmatprep.mubr.f32.mxu0 0.0
    %3972 = vmatmul.mubr.f32.gmra.mrb[0].mxu0 %v3887
    %v3973 = vpop.f32.mrb[0].mxu0
    %v3974 = vadd.f32 0.0, %v3973
    %v3975 = vpop.f32.mrb[0].mxu0
    %3976 = vmatprep.mubr.f32.mxu0 0.0
    %3977 = vmatmul.mubr.f32.gmra.mrb[0].mxu0 %v3890
    %v3978 = vpop.f32.mrb[0].mxu0
    %v3979 = vadd.f32 0.0, %v3978
    %v3980 = vpop.f32.mrb[0].mxu0
    %3981 = vmatprep.mubr.f32.mxu0 0.0
    %3982 = vmatmul.mubr.f32.gmra.mrb[0].mxu0 %v3893
    %v3983 = vpop.f32.mrb[0].mxu0
    %v3984 = vadd.f32 0.0, %v3983
    %v3985 = vpop.f32.mrb[0].mxu0
    %3986 = vdwg.mxu0
    %v3988 = vsel %vm39, %v3964, 0
    %v3991 = vsel %vm39, %v3969, 0
    %v3994 = vsel %vm39, %v3974, 0
    %v3997 = vsel %vm39, %v3979, 0
    %v4000 = vsel %vm39, %v3984, 0
    %4002 = vmatprep.subr.mxu0 0.0
    %4003 = vmatpush1.msra.mxu0 %v2832
    %4004 = vmatprep.subr.mxu0 0.0
    %4005 = vmatpush1.msra.mxu0 0.0
    %4006 = vmatprep.subr.mxu0 0.0
    %4007 = vmatpush1.msra.mxu0 0.0
    %4008 = vmatprep.subr.mxu0 0.0
    %4009 = vmatpush1.msra.mxu0 0.0
    %4010 = vmatprep.subr.mxu0 0.0
    %4011 = vmatpush1.msra.mxu0 0.0
    %4012 = vmatprep.subr.mxu0 0.0
    %4013 = vmatpush1.msra.mxu0 0.0
    %4014 = vmatprep.subr.mxu0 0.0
    %4015 = vmatpush1.msra.mxu0 0.0
    %4016 = vmatprep.subr.mxu0 0.0
    %4017 = vmatpush1.msra.mxu0 0.0
    %4018 = vmatprep.subr.mxu0 0.0
    %4019 = vmatpush1.msra.mxu0 0.0
    %4020 = vmatprep.subr.mxu0 0.0
    %4021 = vmatpush1.msra.mxu0 0.0
    %4022 = vmatprep.subr.mxu0 0.0
    %4023 = vmatpush1.msra.mxu0 0.0
    %4024 = vmatprep.subr.mxu0 0.0
    %4025 = vmatpush1.msra.mxu0 0.0
    %4026 = vmatprep.subr.mxu0 0.0
    %4027 = vmatpush1.msra.mxu0 0.0
    %4028 = vmatprep.subr.mxu0 0.0
    %4029 = vmatpush1.msra.mxu0 0.0
    %4030 = vmatprep.subr.mxu0 0.0
    %4031 = vmatpush1.msra.mxu0 0.0
    %4032 = vmatprep.subr.mxu0 0.0
    %4033 = vmatpush1.msra.mxu0 0.0
    %4034 = vmatprep.subr.mxu0 0.0
    %4035 = vmatpush1.msra.mxu0 0.0
    %4036 = vmatprep.subr.mxu0 0.0
    %4037 = vmatpush1.msra.mxu0 0.0
    %4038 = vmatprep.subr.mxu0 0.0
    %4039 = vmatpush1.msra.mxu0 0.0
    %4040 = vmatprep.subr.mxu0 0.0
    %4041 = vmatpush1.msra.mxu0 0.0
    %4042 = vmatprep.subr.mxu0 0.0
    %4043 = vmatpush1.msra.mxu0 0.0
    %4044 = vmatprep.subr.mxu0 0.0
    %4045 = vmatpush1.msra.mxu0 0.0
    %4046 = vmatprep.subr.mxu0 0.0
    %4047 = vmatpush1.msra.mxu0 0.0
    %4048 = vmatprep.subr.mxu0 0.0
    %4049 = vmatpush1.msra.mxu0 0.0
    %4050 = vmatprep.subr.mxu0 0.0
    %4051 = vmatpush1.msra.mxu0 0.0
    %4052 = vmatprep.subr.mxu0 0.0
    %4053 = vmatpush1.msra.mxu0 0.0
    %4054 = vmatprep.subr.mxu0 0.0
    %4055 = vmatpush1.msra.mxu0 0.0
    %4056 = vmatprep.subr.mxu0 0.0
    %4057 = vmatpush1.msra.mxu0 0.0
    %4058 = vmatprep.subr.mxu0 0.0
    %4059 = vmatpush1.msra.mxu0 0.0
    %4060 = vmatprep.subr.mxu0 0.0
    %4061 = vmatpush1.msra.mxu0 0.0
    %4062 = vmatprep.subr.mxu0 0.0
    %4063 = vmatpush1.msra.mxu0 0.0
    %4064 = vmatprep.subr.mxu0 0.0
    %4065 = vmatpush1.msra.mxu0 0.0
    %4066 = vmatprep.mubr.f32.mxu0 0.0
    %4067 = vmatmul.mubr.f32.gmra.mrb[0].mxu0 %v3988
    %v4068 = vpop.f32.mrb[0].mxu0
    %v4069 = vadd.f32 0.0, %v4068
    %v4070 = vpop.f32.mrb[0].mxu0
    %4071 = vmatprep.mubr.f32.mxu0 0.0
    %4072 = vmatmul.mubr.f32.gmra.mrb[0].mxu0 %v3991
    %v4073 = vpop.f32.mrb[0].mxu0
    %v4074 = vadd.f32 0.0, %v4073
    %v4075 = vpop.f32.mrb[0].mxu0
    %4076 = vmatprep.mubr.f32.mxu0 0.0
    %4077 = vmatmul.mubr.f32.gmra.mrb[0].mxu0 %v3994
    %v4078 = vpop.f32.mrb[0].mxu0
    %v4079 = vadd.f32 0.0, %v4078
    %v4080 = vpop.f32.mrb[0].mxu0
    %4081 = vmatprep.mubr.f32.mxu0 0.0
    %4082 = vmatmul.mubr.f32.gmra.mrb[0].mxu0 %v3997
    %v4083 = vpop.f32.mrb[0].mxu0
    %v4084 = vadd.f32 0.0, %v4083
    %v4085 = vpop.f32.mrb[0].mxu0
    %4086 = vmatprep.mubr.f32.mxu0 0.0
    %4087 = vmatmul.mubr.f32.gmra.mrb[0].mxu0 %v4000
    %v4088 = vpop.f32.mrb[0].mxu0
    %v4089 = vadd.f32 0.0, %v4088
    %v4090 = vpop.f32.mrb[0].mxu0
    %4091 = vdwg.mxu0
    %v4092 = vadd.f32 %v3648, %v4069
    %v4093 = vadd.f32 %v3653, %v4074
    %v4094 = vadd.f32 %v3658, %v4079
    %v4095 = vadd.f32 %v3663, %v4084
    %v4096 = vadd.f32 %v3668, %v4089
    %4097 = vrot.lane.b32.xlu0 %v2807, 104
    %v4098 = vpop.permute.xlu0 %4097
    %4099 = vrot.lane.b32.xlu0 %v2812, 104
    %v4100 = vpop.permute.xlu0 %4099
    %4101 = vrot.lane.b32.xlu0 %v2817, 104
    %v4102 = vpop.permute.xlu0 %4101
    %4103 = vrot.lane.b32.xlu0 %v2822, 104
    %v4104 = vpop.permute.xlu0 %4103
    %4105 = vrot.lane.b32.xlu0 %v2827, 104
    %v4106 = vpop.permute.xlu0 %4105
    %4107 = vrot.lane.b32.xlu0 %v2807, 72
    %v4108 = vpop.permute.xlu0 %4107
    %4109 = vrot.lane.b32.xlu0 %v2812, 72
    %v4110 = vpop.permute.xlu0 %4109
    %4111 = vrot.lane.b32.xlu0 %v2817, 72
    %v4112 = vpop.permute.xlu0 %4111
    %4113 = vrot.lane.b32.xlu0 %v2822, 72
    %v4114 = vpop.permute.xlu0 %4113
    %4115 = vrot.lane.b32.xlu0 %v2827, 72
    %v4116 = vpop.permute.xlu0 %4115
    %v4117 = vsel %vm39, %v4098, 0
    %v4119 = vsel %vm39, %v4100, 0
    %v4121 = vsel %vm39, %v4102, 0
    %v4123 = vsel %vm39, %v4104, 0
    %v4125 = vsel %vm39, %v4106, 0
    %v4127 = vsel %vm39, %v4108, 0
    %v4129 = vsel %vm39, %v4110, 0
    %v4131 = vsel %vm39, %v4112, 0
    %v4133 = vsel %vm39, %v4114, 0
    %v4135 = vsel %vm39, %v4116, 0
    %4137 = vmatprep.subr.mxu0 0.0
    %4138 = vmatpush1.xpose.msra.mxu0 %v4127
    %4139 = vmatprep.subr.mxu0 0.0
    %4140 = vmatpush1.xpose.msra.mxu0 %v4129
    %4141 = vmatprep.subr.mxu0 0.0
    %4142 = vmatpush1.xpose.msra.mxu0 %v4131
    %4143 = vmatprep.subr.mxu0 0.0
    %4144 = vmatpush1.xpose.msra.mxu0 %v4133
    %4145 = vmatprep.subr.mxu0 0.0
    %4146 = vmatpush1.xpose.msra.mxu0 %v4135
    %4147 = vmatprep.subr.mxu0 0.0
    %4148 = vmatpush1.xpose.msra.mxu0 0.0
    %4149 = vmatprep.subr.mxu0 0.0
    %4150 = vmatpush1.xpose.msra.mxu0 0.0
    %4151 = vmatprep.subr.mxu0 0.0
    %4152 = vmatpush1.xpose.msra.mxu0 0.0
    %4153 = vmatprep.subr.mxu0 0.0
    %4154 = vmatpush1.xpose.msra.mxu0 0.0
    %4155 = vmatprep.subr.mxu0 0.0
    %4156 = vmatpush1.xpose.msra.mxu0 0.0
    %4157 = vmatprep.subr.mxu0 0.0
    %4158 = vmatpush1.xpose.msra.mxu0 0.0
    %4159 = vmatprep.subr.mxu0 0.0
    %4160 = vmatpush1.xpose.msra.mxu0 0.0
    %4161 = vmatprep.subr.mxu0 0.0
    %4162 = vmatpush1.xpose.msra.mxu0 0.0
    %4163 = vmatprep.subr.mxu0 0.0
    %4164 = vmatpush1.xpose.msra.mxu0 0.0
    %4165 = vmatprep.subr.mxu0 0.0
    %4166 = vmatpush1.xpose.msra.mxu0 0.0
    %4167 = vmatprep.subr.mxu0 0.0
    %4168 = vmatpush1.xpose.msra.mxu0 0.0
    %4169 = vmatprep.subr.mxu0 0.0
    %4170 = vmatpush1.xpose.msra.mxu0 0.0
    %4171 = vmatprep.subr.mxu0 0.0
    %4172 = vmatpush1.xpose.msra.mxu0 0.0
    %4173 = vmatprep.subr.mxu0 0.0
    %4174 = vmatpush1.xpose.msra.mxu0 0.0
    %4175 = vmatprep.subr.mxu0 0.0
    %4176 = vmatpush1.xpose.msra.mxu0 0.0
    %4177 = vmatprep.subr.mxu0 0.0
    %4178 = vmatpush1.xpose.msra.mxu0 0.0
    %4179 = vmatprep.subr.mxu0 0.0
    %4180 = vmatpush1.xpose.msra.mxu0 0.0
    %4181 = vmatprep.subr.mxu0 0.0
    %4182 = vmatpush1.xpose.msra.mxu0 0.0
    %4183 = vmatprep.subr.mxu0 0.0
    %4184 = vmatpush1.xpose.msra.mxu0 0.0
    %4185 = vmatprep.subr.mxu0 0.0
    %4186 = vmatpush1.xpose.msra.mxu0 0.0
    %4187 = vmatprep.subr.mxu0 0.0
    %4188 = vmatpush1.xpose.msra.mxu0 0.0
    %4189 = vmatprep.subr.mxu0 0.0
    %4190 = vmatpush1.xpose.msra.mxu0 0.0
    %4191 = vmatprep.subr.mxu0 0.0
    %4192 = vmatpush1.xpose.msra.mxu0 0.0
    %4193 = vmatprep.subr.mxu0 0.0
    %4194 = vmatpush1.xpose.msra.mxu0 0.0
    %4195 = vmatprep.subr.mxu0 0.0
    %4196 = vmatpush1.xpose.msra.mxu0 0.0
    %4197 = vmatprep.subr.mxu0 0.0
    %4198 = vmatpush1.xpose.msra.mxu0 0.0
    %4199 = vmatprep.subr.mxu0 0.0
    %4200 = vmatpush1.xpose.msra.mxu0 0.0
    %4201 = vmatprep.mubr.f32.mxu0 0.0
    %4202 = vmatmul.mubr.f32.gmra.mrb[0].mxu0 %v4117
    %v4203 = vpop.f32.mrb[0].mxu0
    %v4204 = vadd.f32 0.0, %v4203
    %v4205 = vpop.f32.mrb[0].mxu0
    %4206 = vmatprep.mubr.f32.mxu0 0.0
    %4207 = vmatmul.mubr.f32.gmra.mrb[0].mxu0 %v4119
    %v4208 = vpop.f32.mrb[0].mxu0
    %v4209 = vadd.f32 0.0, %v4208
    %v4210 = vpop.f32.mrb[0].mxu0
    %4211 = vmatprep.mubr.f32.mxu0 0.0
    %4212 = vmatmul.mubr.f32.gmra.mrb[0].mxu0 %v4121
    %v4213 = vpop.f32.mrb[0].mxu0
    %v4214 = vadd.f32 0.0, %v4213
    %v4215 = vpop.f32.mrb[0].mxu0
    %4216 = vmatprep.mubr.f32.mxu0 0.0
    %4217 = vmatmul.mubr.f32.gmra.mrb[0].mxu0 %v4123
    %v4218 = vpop.f32.mrb[0].mxu0
    %v4219 = vadd.f32 0.0, %v4218
    %v4220 = vpop.f32.mrb[0].mxu0
    %4221 = vmatprep.mubr.f32.mxu0 0.0
    %4222 = vmatmul.mubr.f32.gmra.mrb[0].mxu0 %v4125
    %v4223 = vpop.f32.mrb[0].mxu0
    %v4224 = vadd.f32 0.0, %v4223
    %v4225 = vpop.f32.mrb[0].mxu0
    %4226 = vdwg.mxu0
    %v4227 = vmul.f32 %v4204, 0.35355338
    %v4228 = vmul.f32 %v4209, 0.35355338
    %v4229 = vmul.f32 %v4214, 0.35355338
    %v4230 = vmul.f32 %v4219, 0.35355338
    %v4231 = vmul.f32 %v4224, 0.35355338
    %v4232 = vadd.f32 %v4227, %v27
    %v4233 = vadd.f32 %v4228, %v28
    %v4234 = vadd.f32 %v4229, %v29
    %v4235 = vadd.f32 %v4230, %v30
    %v4236 = vadd.f32 %v4231, %v31
    %v4237 = vsel %vm581, %v4232, -inf
    %4238 = vmax.xlane.f32.xlu0 %v4237
    %v4239 = vpop.xlane.xlu0 %4238
    %v4240 = vsel %vm581, %v4233, -inf
    %4241 = vmax.xlane.f32.xlu0 %v4240
    %v4242 = vpop.xlane.xlu0 %4241
    %v4243 = vsel %vm581, %v4234, -inf
    %4244 = vmax.xlane.f32.xlu0 %v4243
    %v4245 = vpop.xlane.xlu0 %4244
    %v4246 = vsel %vm581, %v4235, -inf
    %4247 = vmax.xlane.f32.xlu0 %v4246
    %v4248 = vpop.xlane.xlu0 %4247
    %v4249 = vsel %vm594, %v4236, -inf
    %4250 = vmax.xlane.f32.xlu0 %v4249
    %v4251 = vpop.xlane.xlu0 %4250
    %v4252 = vsub.f32 %v4232, %v4239
    %v4253 = vsub.f32 %v4233, %v4242
    %v4254 = vsub.f32 %v4234, %v4245
    %v4255 = vsub.f32 %v4235, %v4248
    %v4256 = vsub.f32 %v4236, %v4251
    %v4257 = vmul.f32 %v4252, 1.442695
    %v4258 = vpow.pop %v4257
    %v4259 = vmul.f32 %v4253, 1.442695
    %v4260 = vpow.pop %v4259
    %v4261 = vmul.f32 %v4254, 1.442695
    %v4262 = vpow.pop %v4261
    %v4263 = vmul.f32 %v4255, 1.442695
    %v4264 = vpow.pop %v4263
    %v4265 = vmul.f32 %v4256, 1.442695
    %v4266 = vpow.pop %v4265
    %v4267 = vsel %vm581, %v4258, 0.0
    %4268 = vadd.xlane.f32.xlu0 %v4267
    %v4269 = vpop.xlane.xlu0 %4268
    %v4270 = vsel %vm581, %v4260, 0.0
    %4271 = vadd.xlane.f32.xlu0 %v4270
    %v4272 = vpop.xlane.xlu0 %4271
    %v4273 = vsel %vm581, %v4262, 0.0
    %4274 = vadd.xlane.f32.xlu0 %v4273
    %v4275 = vpop.xlane.xlu0 %4274
    %v4276 = vsel %vm581, %v4264, 0.0
    %4277 = vadd.xlane.f32.xlu0 %v4276
    %v4278 = vpop.xlane.xlu0 %4277
    %v4279 = vsel %vm594, %v4266, 0.0
    %4280 = vadd.xlane.f32.xlu0 %v4279
    %v4281 = vpop.xlane.xlu0 %4280
    %v4282 = vrcp.pop %v4269
    %v4283 = vrcp.pop %v4272
    %v4284 = vrcp.pop %v4275
    %v4285 = vrcp.pop %v4278
    %v4286 = vrcp.pop %v4281
    %v4287 = vmul.f32 %v4258, %v4282
    %v4288 = vmul.f32 %v4260, %v4283
    %v4289 = vmul.f32 %v4262, %v4284
    %v4290 = vmul.f32 %v4264, %v4285
    %v4291 = vmul.f32 %v4266, %v4286
    %4292 = vrot.lane.b32.xlu0 %v2807, 40
    %v4293 = vpop.permute.xlu0 %4292
    %4294 = vrot.lane.b32.xlu0 %v2812, 40
    %v4295 = vpop.permute.xlu0 %4294
    %4296 = vrot.lane.b32.xlu0 %v2817, 40
    %v4297 = vpop.permute.xlu0 %4296
    %4298 = vrot.lane.b32.xlu0 %v2822, 40
    %v4299 = vpop.permute.xlu0 %4298
    %4300 = vrot.lane.b32.xlu0 %v2827, 40
    %v4301 = vpop.permute.xlu0 %4300
    %v4307 = vsel %vm581, %v4287, 0
    %v4310 = vsel %vm581, %v4288, 0
    %v4313 = vsel %vm581, %v4289, 0
    %v4316 = vsel %vm581, %v4290, 0
    %v4319 = vsel %vm581, %v4291, 0
    %v4321 = vsel %vm667, %v4301, 0
    %4323 = vmatprep.subr.mxu0 0.0
    %4324 = vmatpush1.msra.mxu0 %v4293
    %4325 = vmatprep.subr.mxu0 0.0
    %4326 = vmatpush1.msra.mxu0 %v4295
    %4327 = vmatprep.subr.mxu0 0.0
    %4328 = vmatpush1.msra.mxu0 %v4297
    %4329 = vmatprep.subr.mxu0 0.0
    %4330 = vmatpush1.msra.mxu0 %v4299
    %4331 = vmatprep.subr.mxu0 0.0
    %4332 = vmatpush1.msra.mxu0 %v4321
    %4333 = vmatprep.subr.mxu0 0.0
    %4334 = vmatpush1.msra.mxu0 0.0
    %4335 = vmatprep.subr.mxu0 0.0
    %4336 = vmatpush1.msra.mxu0 0.0
    %4337 = vmatprep.subr.mxu0 0.0
    %4338 = vmatpush1.msra.mxu0 0.0
    %4339 = vmatprep.subr.mxu0 0.0
    %4340 = vmatpush1.msra.mxu0 0.0
    %4341 = vmatprep.subr.mxu0 0.0
    %4342 = vmatpush1.msra.mxu0 0.0
    %4343 = vmatprep.subr.mxu0 0.0
    %4344 = vmatpush1.msra.mxu0 0.0
    %4345 = vmatprep.subr.mxu0 0.0
    %4346 = vmatpush1.msra.mxu0 0.0
    %4347 = vmatprep.subr.mxu0 0.0
    %4348 = vmatpush1.msra.mxu0 0.0
    %4349 = vmatprep.subr.mxu0 0.0
    %4350 = vmatpush1.msra.mxu0 0.0
    %4351 = vmatprep.subr.mxu0 0.0
    %4352 = vmatpush1.msra.mxu0 0.0
    %4353 = vmatprep.subr.mxu0 0.0
    %4354 = vmatpush1.msra.mxu0 0.0
    %4355 = vmatprep.subr.mxu0 0.0
    %4356 = vmatpush1.msra.mxu0 0.0
    %4357 = vmatprep.subr.mxu0 0.0
    %4358 = vmatpush1.msra.mxu0 0.0
    %4359 = vmatprep.subr.mxu0 0.0
    %4360 = vmatpush1.msra.mxu0 0.0
    %4361 = vmatprep.subr.mxu0 0.0
    %4362 = vmatpush1.msra.mxu0 0.0
    %4363 = vmatprep.subr.mxu0 0.0
    %4364 = vmatpush1.msra.mxu0 0.0
    %4365 = vmatprep.subr.mxu0 0.0
    %4366 = vmatpush1.msra.mxu0 0.0
    %4367 = vmatprep.subr.mxu0 0.0
    %4368 = vmatpush1.msra.mxu0 0.0
    %4369 = vmatprep.subr.mxu0 0.0
    %4370 = vmatpush1.msra.mxu0 0.0
    %4371 = vmatprep.subr.mxu0 0.0
    %4372 = vmatpush1.msra.mxu0 0.0
    %4373 = vmatprep.subr.mxu0 0.0
    %4374 = vmatpush1.msra.mxu0 0.0
    %4375 = vmatprep.subr.mxu0 0.0
    %4376 = vmatpush1.msra.mxu0 0.0
    %4377 = vmatprep.subr.mxu0 0.0
    %4378 = vmatpush1.msra.mxu0 0.0
    %4379 = vmatprep.subr.mxu0 0.0
    %4380 = vmatpush1.msra.mxu0 0.0
    %4381 = vmatprep.subr.mxu0 0.0
    %4382 = vmatpush1.msra.mxu0 0.0
    %4383 = vmatprep.subr.mxu0 0.0
    %4384 = vmatpush1.msra.mxu0 0.0
    %4385 = vmatprep.subr.mxu0 0.0
    %4386 = vmatpush1.msra.mxu0 0.0
    %4387 = vmatprep.mubr.f32.mxu0 0.0
    %4388 = vmatmul.mubr.f32.gmra.mrb[0].mxu0 %v4307
    %v4389 = vpop.f32.mrb[0].mxu0
    %v4390 = vadd.f32 0.0, %v4389
    %v4391 = vpop.f32.mrb[0].mxu0
    %4392 = vmatprep.mubr.f32.mxu0 0.0
    %4393 = vmatmul.mubr.f32.gmra.mrb[0].mxu0 %v4310
    %v4394 = vpop.f32.mrb[0].mxu0
    %v4395 = vadd.f32 0.0, %v4394
    %v4396 = vpop.f32.mrb[0].mxu0
    %4397 = vmatprep.mubr.f32.mxu0 0.0
    %4398 = vmatmul.mubr.f32.gmra.mrb[0].mxu0 %v4313
    %v4399 = vpop.f32.mrb[0].mxu0
    %v4400 = vadd.f32 0.0, %v4399
    %v4401 = vpop.f32.mrb[0].mxu0
    %4402 = vmatprep.mubr.f32.mxu0 0.0
    %4403 = vmatmul.mubr.f32.gmra.mrb[0].mxu0 %v4316
    %v4404 = vpop.f32.mrb[0].mxu0
    %v4405 = vadd.f32 0.0, %v4404
    %v4406 = vpop.f32.mrb[0].mxu0
    %4407 = vmatprep.mubr.f32.mxu0 0.0
    %4408 = vmatmul.mubr.f32.gmra.mrb[0].mxu0 %v4319
    %v4409 = vpop.f32.mrb[0].mxu0
    %v4410 = vadd.f32 0.0, %v4409
    %v4411 = vpop.f32.mrb[0].mxu0
    %4412 = vdwg.mxu0
    %v4414 = vsel %vm39, %v4390, 0
    %v4417 = vsel %vm39, %v4395, 0
    %v4420 = vsel %vm39, %v4400, 0
    %v4423 = vsel %vm39, %v4405, 0
    %v4426 = vsel %vm39, %v4410, 0
    %4428 = vmatprep.subr.mxu0 0.0
    %4429 = vmatpush1.msra.mxu0 %v2833
    %4430 = vmatprep.subr.mxu0 0.0
    %4431 = vmatpush1.msra.mxu0 0.0
    %4432 = vmatprep.subr.mxu0 0.0
    %4433 = vmatpush1.msra.mxu0 0.0
    %4434 = vmatprep.subr.mxu0 0.0
    %4435 = vmatpush1.msra.mxu0 0.0
    %4436 = vmatprep.subr.mxu0 0.0
    %4437 = vmatpush1.msra.mxu0 0.0
    %4438 = vmatprep.subr.mxu0 0.0
    %4439 = vmatpush1.msra.mxu0 0.0
    %4440 = vmatprep.subr.mxu0 0.0
    %4441 = vmatpush1.msra.mxu0 0.0
    %4442 = vmatprep.subr.mxu0 0.0
    %4443 = vmatpush1.msra.mxu0 0.0
    %4444 = vmatprep.subr.mxu0 0.0
    %4445 = vmatpush1.msra.mxu0 0.0
    %4446 = vmatprep.subr.mxu0 0.0
    %4447 = vmatpush1.msra.mxu0 0.0
    %4448 = vmatprep.subr.mxu0 0.0
    %4449 = vmatpush1.msra.mxu0 0.0
    %4450 = vmatprep.subr.mxu0 0.0
    %4451 = vmatpush1.msra.mxu0 0.0
    %4452 = vmatprep.subr.mxu0 0.0
    %4453 = vmatpush1.msra.mxu0 0.0
    %4454 = vmatprep.subr.mxu0 0.0
    %4455 = vmatpush1.msra.mxu0 0.0
    %4456 = vmatprep.subr.mxu0 0.0
    %4457 = vmatpush1.msra.mxu0 0.0
    %4458 = vmatprep.subr.mxu0 0.0
    %4459 = vmatpush1.msra.mxu0 0.0
    %4460 = vmatprep.subr.mxu0 0.0
    %4461 = vmatpush1.msra.mxu0 0.0
    %4462 = vmatprep.subr.mxu0 0.0
    %4463 = vmatpush1.msra.mxu0 0.0
    %4464 = vmatprep.subr.mxu0 0.0
    %4465 = vmatpush1.msra.mxu0 0.0
    %4466 = vmatprep.subr.mxu0 0.0
    %4467 = vmatpush1.msra.mxu0 0.0
    %4468 = vmatprep.subr.mxu0 0.0
    %4469 = vmatpush1.msra.mxu0 0.0
    %4470 = vmatprep.subr.mxu0 0.0
    %4471 = vmatpush1.msra.mxu0 0.0
    %4472 = vmatprep.subr.mxu0 0.0
    %4473 = vmatpush1.msra.mxu0 0.0
    %4474 = vmatprep.subr.mxu0 0.0
    %4475 = vmatpush1.msra.mxu0 0.0
    %4476 = vmatprep.subr.mxu0 0.0
    %4477 = vmatpush1.msra.mxu0 0.0
    %4478 = vmatprep.subr.mxu0 0.0
    %4479 = vmatpush1.msra.mxu0 0.0
    %4480 = vmatprep.subr.mxu0 0.0
    %4481 = vmatpush1.msra.mxu0 0.0
    %4482 = vmatprep.subr.mxu0 0.0
    %4483 = vmatpush1.msra.mxu0 0.0
    %4484 = vmatprep.subr.mxu0 0.0
    %4485 = vmatpush1.msra.mxu0 0.0
    %4486 = vmatprep.subr.mxu0 0.0
    %4487 = vmatpush1.msra.mxu0 0.0
    %4488 = vmatprep.subr.mxu0 0.0
    %4489 = vmatpush1.msra.mxu0 0.0
    %4490 = vmatprep.subr.mxu0 0.0
    %4491 = vmatpush1.msra.mxu0 0.0
    %4492 = vmatprep.mubr.f32.mxu0 0.0
    %4493 = vmatmul.mubr.f32.gmra.mrb[0].mxu0 %v4414
    %v4494 = vpop.f32.mrb[0].mxu0
    %v4495 = vadd.f32 0.0, %v4494
    %v4496 = vpop.f32.mrb[0].mxu0
    %4497 = vmatprep.mubr.f32.mxu0 0.0
    %4498 = vmatmul.mubr.f32.gmra.mrb[0].mxu0 %v4417
    %v4499 = vpop.f32.mrb[0].mxu0
    %v4500 = vadd.f32 0.0, %v4499
    %v4501 = vpop.f32.mrb[0].mxu0
    %4502 = vmatprep.mubr.f32.mxu0 0.0
    %4503 = vmatmul.mubr.f32.gmra.mrb[0].mxu0 %v4420
    %v4504 = vpop.f32.mrb[0].mxu0
    %v4505 = vadd.f32 0.0, %v4504
    %v4506 = vpop.f32.mrb[0].mxu0
    %4507 = vmatprep.mubr.f32.mxu0 0.0
    %4508 = vmatmul.mubr.f32.gmra.mrb[0].mxu0 %v4423
    %v4509 = vpop.f32.mrb[0].mxu0
    %v4510 = vadd.f32 0.0, %v4509
    %v4511 = vpop.f32.mrb[0].mxu0
    %4512 = vmatprep.mubr.f32.mxu0 0.0
    %4513 = vmatmul.mubr.f32.gmra.mrb[0].mxu0 %v4426
    %v4514 = vpop.f32.mrb[0].mxu0
    %v4515 = vadd.f32 0.0, %v4514
    %v4516 = vpop.f32.mrb[0].mxu0
    %4517 = vdwg.mxu0
    %v4518 = vadd.f32 %v4092, %v4495
    %v4519 = vadd.f32 %v4093, %v4500
    %v4520 = vadd.f32 %v4094, %v4505
    %v4521 = vadd.f32 %v4095, %v4510
    %v4522 = vadd.f32 %v4096, %v4515
    %v4523 = vld [vmem:[%s4 + $0x1a0] sm:$0x1]
    %v4524 = vlaneseq
    %v4525 = vshrl.u32 %v4524, 7
    %v4526 = vsub.s32 0, %v4525
    %v4527 = vrot.slane %v4523, %v4526
    %v4528 = vadd.f32 %v4518, %v4527
    %v4529 = vadd.f32 %v4519, %v4527
    %v4530 = vadd.f32 %v4520, %v4527
    %v4531 = vadd.f32 %v4521, %v4527
    %v4532 = vadd.f32 %v4522, %v4527
    %v4533 = vadd.f32 %v4528, %v2616
    %v4534 = vadd.f32 %v4529, %v2617
    %v4535 = vadd.f32 %v4530, %v2618
    %v4536 = vadd.f32 %v4531, %v2619
    %v4537 = vadd.f32 %v4532, %v2620
    %v4538 = vsel %vm230, %v4533, 0.0
    %4539 = vadd.xlane.f32.xlu0 %v4538
    %v4540 = vpop.xlane.xlu0 %4539
    %v4541 = vsel %vm230, %v4534, 0.0
    %4542 = vadd.xlane.f32.xlu0 %v4541
    %v4543 = vpop.xlane.xlu0 %4542
    %v4544 = vsel %vm230, %v4535, 0.0
    %4545 = vadd.xlane.f32.xlu0 %v4544
    %v4546 = vpop.xlane.xlu0 %4545
    %v4547 = vsel %vm230, %v4536, 0.0
    %4548 = vadd.xlane.f32.xlu0 %v4547
    %v4549 = vpop.xlane.xlu0 %4548
    %v4550 = vsel %vm243, %v4537, 0.0
    %4551 = vadd.xlane.f32.xlu0 %v4550
    %v4552 = vpop.xlane.xlu0 %4551
    %v4553 = vmul.f32 %v4540, %v247
    %v4554 = vmul.f32 %v4543, %v247
    %v4555 = vmul.f32 %v4546, %v247
    %v4556 = vmul.f32 %v4549, %v247
    %v4557 = vmul.f32 %v4552, %v247
    %v4558 = vmul.f32 %v4533, %v4533
    %v4559 = vmul.f32 %v4534, %v4534
    %v4560 = vmul.f32 %v4535, %v4535
    %v4561 = vmul.f32 %v4536, %v4536
    %v4562 = vmul.f32 %v4537, %v4537
    %v4563 = vsel %vm230, %v4558, 0.0
    %4564 = vadd.xlane.f32.xlu0 %v4563
    %v4565 = vpop.xlane.xlu0 %4564
    %v4566 = vsel %vm230, %v4559, 0.0
    %4567 = vadd.xlane.f32.xlu0 %v4566
    %v4568 = vpop.xlane.xlu0 %4567
    %v4569 = vsel %vm230, %v4560, 0.0
    %4570 = vadd.xlane.f32.xlu0 %v4569
    %v4571 = vpop.xlane.xlu0 %4570
    %v4572 = vsel %vm230, %v4561, 0.0
    %4573 = vadd.xlane.f32.xlu0 %v4572
    %v4574 = vpop.xlane.xlu0 %4573
    %v4575 = vsel %vm243, %v4562, 0.0
    %4576 = vadd.xlane.f32.xlu0 %v4575
    %v4577 = vpop.xlane.xlu0 %4576
    %v4578 = vmul.f32 %v4565, %v247
    %v4579 = vmul.f32 %v4568, %v247
    %v4580 = vmul.f32 %v4571, %v247
    %v4581 = vmul.f32 %v4574, %v247
    %v4582 = vmul.f32 %v4577, %v247
    %v4583 = vsub.f32 %v4533, %v4553
    %v4584 = vsub.f32 %v4534, %v4554
    %v4585 = vsub.f32 %v4535, %v4555
    %v4586 = vsub.f32 %v4536, %v4556
    %v4587 = vsub.f32 %v4537, %v4557
    %v4588 = vmul.f32 %v4553, %v4553
    %v4589 = vmul.f32 %v4554, %v4554
    %v4590 = vmul.f32 %v4555, %v4555
    %v4591 = vmul.f32 %v4556, %v4556
    %v4592 = vmul.f32 %v4557, %v4557
    %v4593 = vsub.f32 %v4578, %v4588
    %v4594 = vsub.f32 %v4579, %v4589
    %v4595 = vsub.f32 %v4580, %v4590
    %v4596 = vsub.f32 %v4581, %v4591
    %v4597 = vsub.f32 %v4582, %v4592
    %v4598 = vadd.f32 %v4593, 1e-06
    %v4599 = vadd.f32 %v4594, 1e-06
    %v4600 = vadd.f32 %v4595, 1e-06
    %v4601 = vadd.f32 %v4596, 1e-06
    %v4602 = vadd.f32 %v4597, 1e-06
    %v4603 = vrsqrt.pop %v4598
    %v4604 = vrsqrt.pop %v4599
    %v4605 = vrsqrt.pop %v4600
    %v4606 = vrsqrt.pop %v4601
    %v4607 = vrsqrt.pop %v4602
    %v4608 = vmul.f32 %v4583, %v4603
    %v4609 = vmul.f32 %v4584, %v4604
    %v4610 = vmul.f32 %v4585, %v4605
    %v4611 = vmul.f32 %v4586, %v4606
    %v4612 = vmul.f32 %v4587, %v4607
    %v4613 = vld [vmem:[%s4 + $0x1b8] sm:$0x1]
    %v4614 = vlaneseq
    %v4615 = vshrl.u32 %v4614, 7
    %v4616 = vsub.s32 0, %v4615
    %v4617 = vrot.slane %v4613, %v4616
    %v4618 = vmul.f32 %v4608, %v4617
    %v4619 = vmul.f32 %v4609, %v4617
    %v4620 = vmul.f32 %v4610, %v4617
    %v4621 = vmul.f32 %v4611, %v4617
    %v4622 = vmul.f32 %v4612, %v4617
    %v4623 = vld [vmem:[%s4 + $0x1c0] sm:$0x1]
    %v4624 = vlaneseq
    %v4625 = vshrl.u32 %v4624, 7
    %v4626 = vsub.s32 0, %v4625
    %v4627 = vrot.slane %v4623, %v4626
    %v4628 = vadd.f32 %v4618, %v4627
    %v4629 = vadd.f32 %v4619, %v4627
    %v4630 = vadd.f32 %v4620, %v4627
    %v4631 = vadd.f32 %v4621, %v4627
    %v4632 = vadd.f32 %v4622, %v4627
    %v4633 = vld [vmem:[%s4 + $0x1c8] sm:$0xff]
    %v4634 = vld [vmem:[%s4 + $0x1d0] sm:$0xff]
    %v4635 = vld [vmem:[%s4 + $0x1d8] sm:$0xff]
    %v4636 = vld [vmem:[%s4 + $0x1e0] sm:$0xff]
    %v4637 = vld [vmem:[%s4 + $0x1e8] sm:$0x1]
    %v4638 = vlaneseq
    %v4639 = vshrl.u32 %v4638, 7
    %v4640 = vsub.s32 0, %v4639
    %v4641 = vrot.slane %v4637, %v4640
    %v4643 = vsel %vm230, %v4628, 0
    %v4646 = vsel %vm230, %v4629, 0
    %v4649 = vsel %vm230, %v4630, 0
    %v4652 = vsel %vm230, %v4631, 0
    %v4655 = vsel %vm230, %v4632, 0
    %4657 = vmatprep.subr.mxu0 0.0
    %4658 = vmatpush1.msra.mxu0 %v4633
    %4659 = vmatprep.subr.mxu0 0.0
    %4660 = vmatpush1.msra.mxu0 %v4634
    %4661 = vmatprep.subr.mxu0 0.0
    %4662 = vmatpush1.msra.mxu0 %v4635
    %4663 = vmatprep.subr.mxu0 0.0
    %4664 = vmatpush1.msra.mxu0 %v4636
    %4665 = vmatprep.subr.mxu0 0.0
    %4666 = vmatpush1.msra.mxu0 0.0
    %4667 = vmatprep.subr.mxu0 0.0
    %4668 = vmatpush1.msra.mxu0 0.0
    %4669 = vmatprep.subr.mxu0 0.0
    %4670 = vmatpush1.msra.mxu0 0.0
    %4671 = vmatprep.subr.mxu0 0.0
    %4672 = vmatpush1.msra.mxu0 0.0
    %4673 = vmatprep.subr.mxu0 0.0
    %4674 = vmatpush1.msra.mxu0 0.0
    %4675 = vmatprep.subr.mxu0 0.0
    %4676 = vmatpush1.msra.mxu0 0.0
    %4677 = vmatprep.subr.mxu0 0.0
    %4678 = vmatpush1.msra.mxu0 0.0
    %4679 = vmatprep.subr.mxu0 0.0
    %4680 = vmatpush1.msra.mxu0 0.0
    %4681 = vmatprep.subr.mxu0 0.0
    %4682 = vmatpush1.msra.mxu0 0.0
    %4683 = vmatprep.subr.mxu0 0.0
    %4684 = vmatpush1.msra.mxu0 0.0
    %4685 = vmatprep.subr.mxu0 0.0
    %4686 = vmatpush1.msra.mxu0 0.0
    %4687 = vmatprep.subr.mxu0 0.0
    %4688 = vmatpush1.msra.mxu0 0.0
    %4689 = vmatprep.subr.mxu0 0.0
    %4690 = vmatpush1.msra.mxu0 0.0
    %4691 = vmatprep.subr.mxu0 0.0
    %4692 = vmatpush1.msra.mxu0 0.0
    %4693 = vmatprep.subr.mxu0 0.0
    %4694 = vmatpush1.msra.mxu0 0.0
    %4695 = vmatprep.subr.mxu0 0.0
    %4696 = vmatpush1.msra.mxu0 0.0
    %4697 = vmatprep.subr.mxu0 0.0
    %4698 = vmatpush1.msra.mxu0 0.0
    %4699 = vmatprep.subr.mxu0 0.0
    %4700 = vmatpush1.msra.mxu0 0.0
    %4701 = vmatprep.subr.mxu0 0.0
    %4702 = vmatpush1.msra.mxu0 0.0
    %4703 = vmatprep.subr.mxu0 0.0
    %4704 = vmatpush1.msra.mxu0 0.0
    %4705 = vmatprep.subr.mxu0 0.0
    %4706 = vmatpush1.msra.mxu0 0.0
    %4707 = vmatprep.subr.mxu0 0.0
    %4708 = vmatpush1.msra.mxu0 0.0
    %4709 = vmatprep.subr.mxu0 0.0
    %4710 = vmatpush1.msra.mxu0 0.0
    %4711 = vmatprep.subr.mxu0 0.0
    %4712 = vmatpush1.msra.mxu0 0.0
    %4713 = vmatprep.subr.mxu0 0.0
    %4714 = vmatpush1.msra.mxu0 0.0
    %4715 = vmatprep.subr.mxu0 0.0
    %4716 = vmatpush1.msra.mxu0 0.0
    %4717 = vmatprep.subr.mxu0 0.0
    %4718 = vmatpush1.msra.mxu0 0.0
    %4719 = vmatprep.subr.mxu0 0.0
    %4720 = vmatpush1.msra.mxu0 0.0
    %4721 = vmatprep.mubr.f32.mxu0 0.0
    %4722 = vmatmul.mubr.f32.gmra.mrb[0].mxu0 %v4643
    %v4723 = vpop.f32.mrb[0].mxu0
    %v4724 = vadd.f32 %v4641, %v4723
    %v4725 = vpop.f32.mrb[0].mxu0
    %4726 = vmatprep.mubr.f32.mxu0 0.0
    %4727 = vmatmul.mubr.f32.gmra.mrb[0].mxu0 %v4646
    %v4728 = vpop.f32.mrb[0].mxu0
    %v4729 = vadd.f32 %v4641, %v4728
    %v4730 = vpop.f32.mrb[0].mxu0
    %4731 = vmatprep.mubr.f32.mxu0 0.0
    %4732 = vmatmul.mubr.f32.gmra.mrb[0].mxu0 %v4649
    %v4733 = vpop.f32.mrb[0].mxu0
    %v4734 = vadd.f32 %v4641, %v4733
    %v4735 = vpop.f32.mrb[0].mxu0
    %4736 = vmatprep.mubr.f32.mxu0 0.0
    %4737 = vmatmul.mubr.f32.gmra.mrb[0].mxu0 %v4652
    %v4738 = vpop.f32.mrb[0].mxu0
    %v4739 = vadd.f32 %v4641, %v4738
    %v4740 = vpop.f32.mrb[0].mxu0
    %4741 = vmatprep.mubr.f32.mxu0 0.0
    %4742 = vmatmul.mubr.f32.gmra.mrb[0].mxu0 %v4655
    %v4743 = vpop.f32.mrb[0].mxu0
    %v4744 = vadd.f32 %v4641, %v4743
    %v4745 = vpop.f32.mrb[0].mxu0
    %4746 = vdwg.mxu0
    %v4747 = vmul.f32 %v4724, 0.5
    %v4748 = vmul.f32 %v4729, 0.5
    %v4749 = vmul.f32 %v4734, 0.5
    %v4750 = vmul.f32 %v4739, 0.5
    %v4751 = vmul.f32 %v4744, 0.5
    %v4752 = vmul.f32 %v4724, 0.70710677
    %v4753 = vmul.f32 %v4729, 0.70710677
    %v4754 = vmul.f32 %v4734, 0.70710677
    %v4755 = vmul.f32 %v4739, 0.70710677
    %v4756 = vmul.f32 %v4744, 0.70710677
    %vm4757 = vcmp.lt.f32.partialorder %v4752, 0.0
    %vm4758 = vcmp.lt.f32.partialorder %v4753, 0.0
    %vm4759 = vcmp.lt.f32.partialorder %v4754, 0.0
    %vm4760 = vcmp.lt.f32.partialorder %v4755, 0.0
    %vm4761 = vcmp.lt.f32.partialorder %v4756, 0.0
    %v4762 = vsel %vm4757, -1.0, 1.0
    %v4763 = vsel %vm4758, -1.0, 1.0
    %v4764 = vsel %vm4759, -1.0, 1.0
    %v4765 = vsel %vm4760, -1.0, 1.0
    %v4766 = vsel %vm4761, -1.0, 1.0
    %v4767 = vand.u32 2147483647, %v4752
    %v4768 = vand.u32 2147483647, %v4753
    %v4769 = vand.u32 2147483647, %v4754
    %v4770 = vand.u32 2147483647, %v4755
    %v4771 = vand.u32 2147483647, %v4756
    %v4772 = vmul.f32 %v4767, 0.3275911
    %v4773 = vmul.f32 %v4768, 0.3275911
    %v4774 = vmul.f32 %v4769, 0.3275911
    %v4775 = vmul.f32 %v4770, 0.3275911
    %v4776 = vmul.f32 %v4771, 0.3275911
    %v4777 = vadd.f32 %v4772, 1.0
    %v4778 = vadd.f32 %v4773, 1.0
    %v4779 = vadd.f32 %v4774, 1.0
    %v4780 = vadd.f32 %v4775, 1.0
    %v4781 = vadd.f32 %v4776, 1.0
    %v4782 = vrcp.pop %v4777
    %v4783 = vmul.f32 1.0, %v4782
    %v4784 = vrcp.pop %v4778
    %v4785 = vmul.f32 1.0, %v4784
    %v4786 = vrcp.pop %v4779
    %v4787 = vmul.f32 1.0, %v4786
    %v4788 = vrcp.pop %v4780
    %v4789 = vmul.f32 1.0, %v4788
    %v4790 = vrcp.pop %v4781
    %v4791 = vmul.f32 1.0, %v4790
    %v4792 = vmul.f32 %v4783, 1.0614054
    %v4793 = vmul.f32 %v4785, 1.0614054
    %v4794 = vmul.f32 %v4787, 1.0614054
    %v4795 = vmul.f32 %v4789, 1.0614054
    %v4796 = vmul.f32 %v4791, 1.0614054
    %v4797 = vadd.f32 %v4792, -1.4531521
    %v4798 = vadd.f32 %v4793, -1.4531521
    %v4799 = vadd.f32 %v4794, -1.4531521
    %v4800 = vadd.f32 %v4795, -1.4531521
    %v4801 = vadd.f32 %v4796, -1.4531521
    %v4802 = vmul.f32 %v4797, %v4783
    %v4803 = vmul.f32 %v4798, %v4785
    %v4804 = vmul.f32 %v4799, %v4787
    %v4805 = vmul.f32 %v4800, %v4789
    %v4806 = vmul.f32 %v4801, %v4791
    %v4807 = vadd.f32 %v4802, 1.4214138
    %v4808 = vadd.f32 %v4803, 1.4214138
    %v4809 = vadd.f32 %v4804, 1.4214138
    %v4810 = vadd.f32 %v4805, 1.4214138
    %v4811 = vadd.f32 %v4806, 1.4214138
    %v4812 = vmul.f32 %v4807, %v4783
    %v4813 = vmul.f32 %v4808, %v4785
    %v4814 = vmul.f32 %v4809, %v4787
    %v4815 = vmul.f32 %v4810, %v4789
    %v4816 = vmul.f32 %v4811, %v4791
    %v4817 = vadd.f32 %v4812, -0.28449672
    %v4818 = vadd.f32 %v4813, -0.28449672
    %v4819 = vadd.f32 %v4814, -0.28449672
    %v4820 = vadd.f32 %v4815, -0.28449672
    %v4821 = vadd.f32 %v4816, -0.28449672
    %v4822 = vmul.f32 %v4817, %v4783
    %v4823 = vmul.f32 %v4818, %v4785
    %v4824 = vmul.f32 %v4819, %v4787
    %v4825 = vmul.f32 %v4820, %v4789
    %v4826 = vmul.f32 %v4821, %v4791
    %v4827 = vadd.f32 %v4822, 0.2548296
    %v4828 = vadd.f32 %v4823, 0.2548296
    %v4829 = vadd.f32 %v4824, 0.2548296
    %v4830 = vadd.f32 %v4825, 0.2548296
    %v4831 = vadd.f32 %v4826, 0.2548296
    %v4832 = vmul.f32 %v4827, %v4783
    %v4833 = vmul.f32 %v4828, %v4785
    %v4834 = vmul.f32 %v4829, %v4787
    %v4835 = vmul.f32 %v4830, %v4789
    %v4836 = vmul.f32 %v4831, %v4791
    %v4837 = vsub.f32 0.0, %v4767
    %v4838 = vsub.f32 0.0, %v4768
    %v4839 = vsub.f32 0.0, %v4769
    %v4840 = vsub.f32 0.0, %v4770
    %v4841 = vsub.f32 0.0, %v4771
    %v4842 = vmul.f32 %v4837, %v4767
    %v4843 = vmul.f32 %v4838, %v4768
    %v4844 = vmul.f32 %v4839, %v4769
    %v4845 = vmul.f32 %v4840, %v4770
    %v4846 = vmul.f32 %v4841, %v4771
    %v4847 = vmul.f32 %v4842, 1.442695
    %v4848 = vpow.pop %v4847
    %v4849 = vmul.f32 %v4843, 1.442695
    %v4850 = vpow.pop %v4849
    %v4851 = vmul.f32 %v4844, 1.442695
    %v4852 = vpow.pop %v4851
    %v4853 = vmul.f32 %v4845, 1.442695
    %v4854 = vpow.pop %v4853
    %v4855 = vmul.f32 %v4846, 1.442695
    %v4856 = vpow.pop %v4855
    %v4857 = vmul.f32 %v4832, %v4848
    %v4858 = vmul.f32 %v4833, %v4850
    %v4859 = vmul.f32 %v4834, %v4852
    %v4860 = vmul.f32 %v4835, %v4854
    %v4861 = vmul.f32 %v4836, %v4856
    %v4862 = vsub.f32 1.0, %v4857
    %v4863 = vsub.f32 1.0, %v4858
    %v4864 = vsub.f32 1.0, %v4859
    %v4865 = vsub.f32 1.0, %v4860
    %v4866 = vsub.f32 1.0, %v4861
    %v4867 = vmul.f32 %v4762, %v4862
    %v4868 = vmul.f32 %v4763, %v4863
    %v4869 = vmul.f32 %v4764, %v4864
    %v4870 = vmul.f32 %v4765, %v4865
    %v4871 = vmul.f32 %v4766, %v4866
    %v4872 = vadd.f32 %v4867, 1.0
    %v4873 = vadd.f32 %v4868, 1.0
    %v4874 = vadd.f32 %v4869, 1.0
    %v4875 = vadd.f32 %v4870, 1.0
    %v4876 = vadd.f32 %v4871, 1.0
    %v4877 = vmul.f32 %v4747, %v4872
    %v4878 = vmul.f32 %v4748, %v4873
    %v4879 = vmul.f32 %v4749, %v4874
    %v4880 = vmul.f32 %v4750, %v4875
    %v4881 = vmul.f32 %v4751, %v4876
    %v4882 = vld [vmem:[%s4 + $0x1f0] sm:$0xff]
    %v4883 = vld [vmem:[%s4 + $0x1f8] sm:$0xff]
    %v4884 = vld [vmem:[%s4 + $0x200] sm:$0xff]
    %v4885 = vld [vmem:[%s4 + $0x208] sm:$0xff]
    %v4886 = vld [vmem:[%s4 + $0x210] sm:$0xff]
    %v4887 = vld [vmem:[%s4 + $0x218] sm:$0xff]
    %v4888 = vld [vmem:[%s4 + $0x220] sm:$0xff]
    %v4889 = vld [vmem:[%s4 + $0x228] sm:$0xff]
    %v4890 = vld [vmem:[%s4 + $0x230] sm:$0x1]
    %v4891 = vlaneseq
    %v4892 = vshrl.u32 %v4891, 7
    %v4893 = vsub.s32 0, %v4892
    %v4894 = vrot.slane %v4890, %v4893
    %v4896 = vsel %vm2510, %v4877, 0
    %v4899 = vsel %vm2510, %v4878, 0
    %v4902 = vsel %vm2510, %v4879, 0
    %v4905 = vsel %vm2510, %v4880, 0
    %v4908 = vsel %vm2510, %v4881, 0
    %4910 = vmatprep.subr.mxu0 0.0
    %4911 = vmatpush1.msra.mxu0 %v4882
    %4912 = vmatprep.subr.mxu0 0.0
    %4913 = vmatpush1.msra.mxu0 %v4883
    %4914 = vmatprep.subr.mxu0 0.0
    %4915 = vmatpush1.msra.mxu0 %v4884
    %4916 = vmatprep.subr.mxu0 0.0
    %4917 = vmatpush1.msra.mxu0 %v4885
    %4918 = vmatprep.subr.mxu0 0.0
    %4919 = vmatpush1.msra.mxu0 %v4886
    %4920 = vmatprep.subr.mxu0 0.0
    %4921 = vmatpush1.msra.mxu0 %v4887
    %4922 = vmatprep.subr.mxu0 0.0
    %4923 = vmatpush1.msra.mxu0 %v4888
    %4924 = vmatprep.subr.mxu0 0.0
    %4925 = vmatpush1.msra.mxu0 %v4889
    %4926 = vmatprep.subr.mxu0 0.0
    %4927 = vmatpush1.msra.mxu0 0.0
    %4928 = vmatprep.subr.mxu0 0.0
    %4929 = vmatpush1.msra.mxu0 0.0
    %4930 = vmatprep.subr.mxu0 0.0
    %4931 = vmatpush1.msra.mxu0 0.0
    %4932 = vmatprep.subr.mxu0 0.0
    %4933 = vmatpush1.msra.mxu0 0.0
    %4934 = vmatprep.subr.mxu0 0.0
    %4935 = vmatpush1.msra.mxu0 0.0
    %4936 = vmatprep.subr.mxu0 0.0
    %4937 = vmatpush1.msra.mxu0 0.0
    %4938 = vmatprep.subr.mxu0 0.0
    %4939 = vmatpush1.msra.mxu0 0.0
    %4940 = vmatprep.subr.mxu0 0.0
    %4941 = vmatpush1.msra.mxu0 0.0
    %4942 = vmatprep.subr.mxu0 0.0
    %4943 = vmatpush1.msra.mxu0 0.0
    %4944 = vmatprep.subr.mxu0 0.0
    %4945 = vmatpush1.msra.mxu0 0.0
    %4946 = vmatprep.subr.mxu0 0.0
    %4947 = vmatpush1.msra.mxu0 0.0
    %4948 = vmatprep.subr.mxu0 0.0
    %4949 = vmatpush1.msra.mxu0 0.0
    %4950 = vmatprep.subr.mxu0 0.0
    %4951 = vmatpush1.msra.mxu0 0.0
    %4952 = vmatprep.subr.mxu0 0.0
    %4953 = vmatpush1.msra.mxu0 0.0
    %4954 = vmatprep.subr.mxu0 0.0
    %4955 = vmatpush1.msra.mxu0 0.0
    %4956 = vmatprep.subr.mxu0 0.0
    %4957 = vmatpush1.msra.mxu0 0.0
    %4958 = vmatprep.subr.mxu0 0.0
    %4959 = vmatpush1.msra.mxu0 0.0
    %4960 = vmatprep.subr.mxu0 0.0
    %4961 = vmatpush1.msra.mxu0 0.0
    %4962 = vmatprep.subr.mxu0 0.0
    %4963 = vmatpush1.msra.mxu0 0.0
    %4964 = vmatprep.subr.mxu0 0.0
    %4965 = vmatpush1.msra.mxu0 0.0
    %4966 = vmatprep.subr.mxu0 0.0
    %4967 = vmatpush1.msra.mxu0 0.0
    %4968 = vmatprep.subr.mxu0 0.0
    %4969 = vmatpush1.msra.mxu0 0.0
    %4970 = vmatprep.subr.mxu0 0.0
    %4971 = vmatpush1.msra.mxu0 0.0
    %4972 = vmatprep.subr.mxu0 0.0
    %4973 = vmatpush1.msra.mxu0 0.0
    %4974 = vmatprep.mubr.f32.mxu0 0.0
    %4975 = vmatmul.mubr.f32.gmra.mrb[0].mxu0 %v4896
    %v4976 = vpop.f32.mrb[0].mxu0
    %v4977 = vadd.f32 %v4894, %v4976
    %v4978 = vpop.f32.mrb[0].mxu0
    %4979 = vmatprep.mubr.f32.mxu0 0.0
    %4980 = vmatmul.mubr.f32.gmra.mrb[0].mxu0 %v4899
    %v4981 = vpop.f32.mrb[0].mxu0
    %v4982 = vadd.f32 %v4894, %v4981
    %v4983 = vpop.f32.mrb[0].mxu0
    %4984 = vmatprep.mubr.f32.mxu0 0.0
    %4985 = vmatmul.mubr.f32.gmra.mrb[0].mxu0 %v4902
    %v4986 = vpop.f32.mrb[0].mxu0
    %v4987 = vadd.f32 %v4894, %v4986
    %v4988 = vpop.f32.mrb[0].mxu0
    %4989 = vmatprep.mubr.f32.mxu0 0.0
    %4990 = vmatmul.mubr.f32.gmra.mrb[0].mxu0 %v4905
    %v4991 = vpop.f32.mrb[0].mxu0
    %v4992 = vadd.f32 %v4894, %v4991
    %v4993 = vpop.f32.mrb[0].mxu0
    %4994 = vmatprep.mubr.f32.mxu0 0.0
    %4995 = vmatmul.mubr.f32.gmra.mrb[0].mxu0 %v4908
    %v4996 = vpop.f32.mrb[0].mxu0
    %v4997 = vadd.f32 %v4894, %v4996
    %v4998 = vpop.f32.mrb[0].mxu0
    %4999 = vdwg.mxu0
    %v5000 = vadd.f32 %v4977, %v4533
    %v5001 = vadd.f32 %v4982, %v4534
    %v5002 = vadd.f32 %v4987, %v4535
    %v5003 = vadd.f32 %v4992, %v4536
    %v5004 = vadd.f32 %v4997, %v4537
    %v5005 = vld [vmem:[%s4 + $0x68] sm:$0x1]
    %v5006 = vlaneseq
    %v5007 = vshrl.u32 %v5006, 7
    %v5008 = vsub.s32 0, %v5007
    %v5009 = vrot.slane %v5005, %v5008
    %v5010 = vadd.f32 %v110, %v5009
    %v5011 = vld [vmem:[%s4 + $0x70] sm:$0x1]
    %v5012 = vlaneseq
    %v5013 = vshrl.u32 %v5012, 7
    %v5014 = vsub.s32 0, %v5013
    %v5015 = vrot.slane %v5011, %v5014
    %v5016 = vadd.f32 %v5000, %v5015
    %v5017 = vadd.f32 %v5001, %v5015
    %v5018 = vadd.f32 %v5002, %v5015
    %v5019 = vadd.f32 %v5003, %v5015
    %v5020 = vadd.f32 %v5004, %v5015
    %v5021 = vsel %vm230, %v5016, 0.0
    %5022 = vadd.xlane.f32.xlu0 %v5021
    %v5023 = vpop.xlane.xlu0 %5022
    %v5024 = vsel %vm230, %v5017, 0.0
    %5025 = vadd.xlane.f32.xlu0 %v5024
    %v5026 = vpop.xlane.xlu0 %5025
    %v5027 = vsel %vm230, %v5018, 0.0
    %5028 = vadd.xlane.f32.xlu0 %v5027
    %v5029 = vpop.xlane.xlu0 %5028
    %v5030 = vsel %vm230, %v5019, 0.0
    %5031 = vadd.xlane.f32.xlu0 %v5030
    %v5032 = vpop.xlane.xlu0 %5031
    %v5033 = vsel %vm243, %v5020, 0.0
    %5034 = vadd.xlane.f32.xlu0 %v5033
    %v5035 = vpop.xlane.xlu0 %5034
    %v5036 = vmul.f32 %v5023, %v247
    %v5037 = vmul.f32 %v5026, %v247
    %v5038 = vmul.f32 %v5029, %v247
    %v5039 = vmul.f32 %v5032, %v247
    %v5040 = vmul.f32 %v5035, %v247
    %v5041 = vmul.f32 %v5016, %v5016
    %v5042 = vmul.f32 %v5017, %v5017
    %v5043 = vmul.f32 %v5018, %v5018
    %v5044 = vmul.f32 %v5019, %v5019
    %v5045 = vmul.f32 %v5020, %v5020
    %v5046 = vsel %vm230, %v5041, 0.0
    %5047 = vadd.xlane.f32.xlu0 %v5046
    %v5048 = vpop.xlane.xlu0 %5047
    %v5049 = vsel %vm230, %v5042, 0.0
    %5050 = vadd.xlane.f32.xlu0 %v5049
    %v5051 = vpop.xlane.xlu0 %5050
    %v5052 = vsel %vm230, %v5043, 0.0
    %5053 = vadd.xlane.f32.xlu0 %v5052
    %v5054 = vpop.xlane.xlu0 %5053
    %v5055 = vsel %vm230, %v5044, 0.0
    %5056 = vadd.xlane.f32.xlu0 %v5055
    %v5057 = vpop.xlane.xlu0 %5056
    %v5058 = vsel %vm243, %v5045, 0.0
    %5059 = vadd.xlane.f32.xlu0 %v5058
    %v5060 = vpop.xlane.xlu0 %5059
    %v5061 = vmul.f32 %v5048, %v247
    %v5062 = vmul.f32 %v5051, %v247
    %v5063 = vmul.f32 %v5054, %v247
    %v5064 = vmul.f32 %v5057, %v247
    %v5065 = vmul.f32 %v5060, %v247
    %v5066 = vsub.f32 %v5016, %v5036
    %v5067 = vsub.f32 %v5017, %v5037
    %v5068 = vsub.f32 %v5018, %v5038
    %v5069 = vsub.f32 %v5019, %v5039
    %v5070 = vsub.f32 %v5020, %v5040
    %v5071 = vmul.f32 %v5036, %v5036
    %v5072 = vmul.f32 %v5037, %v5037
    %v5073 = vmul.f32 %v5038, %v5038
    %v5074 = vmul.f32 %v5039, %v5039
    %v5075 = vmul.f32 %v5040, %v5040
    %v5076 = vsub.f32 %v5061, %v5071
    %v5077 = vsub.f32 %v5062, %v5072
    %v5078 = vsub.f32 %v5063, %v5073
    %v5079 = vsub.f32 %v5064, %v5074
    %v5080 = vsub.f32 %v5065, %v5075
    %v5081 = vadd.f32 %v5076, 1e-06
    %v5082 = vadd.f32 %v5077, 1e-06
    %v5083 = vadd.f32 %v5078, 1e-06
    %v5084 = vadd.f32 %v5079, 1e-06
    %v5085 = vadd.f32 %v5080, 1e-06
    %v5086 = vrsqrt.pop %v5081
    %v5087 = vrsqrt.pop %v5082
    %v5088 = vrsqrt.pop %v5083
    %v5089 = vrsqrt.pop %v5084
    %v5090 = vrsqrt.pop %v5085
    %v5091 = vmul.f32 %v5066, %v5086
    %v5092 = vmul.f32 %v5067, %v5087
    %v5093 = vmul.f32 %v5068, %v5088
    %v5094 = vmul.f32 %v5069, %v5089
    %v5095 = vmul.f32 %v5070, %v5090
    %v5096 = vld [vmem:[%s4 + $0x238] sm:$0x1]
    %v5097 = vlaneseq
    %v5098 = vshrl.u32 %v5097, 7
    %v5099 = vsub.s32 0, %v5098
    %v5100 = vrot.slane %v5096, %v5099
    %v5101 = vmul.f32 %v5091, %v5100
    %v5102 = vmul.f32 %v5092, %v5100
    %v5103 = vmul.f32 %v5093, %v5100
    %v5104 = vmul.f32 %v5094, %v5100
    %v5105 = vmul.f32 %v5095, %v5100
    %v5106 = vld [vmem:[%s4 + $0x240] sm:$0x1]
    %v5107 = vlaneseq
    %v5108 = vshrl.u32 %v5107, 7
    %v5109 = vsub.s32 0, %v5108
    %v5110 = vrot.slane %v5106, %v5109
    %v5111 = vadd.f32 %v5101, %v5110
    %v5112 = vadd.f32 %v5102, %v5110
    %v5113 = vadd.f32 %v5103, %v5110
    %v5114 = vadd.f32 %v5104, %v5110
    %v5115 = vadd.f32 %v5105, %v5110
    %v5116 = vsel %vm243, %v5010, 0.0
    %5117 = vadd.xlane.f32.xlu0 %v5116
    %v5118 = vpop.xlane.xlu0 %5117
    %v5119 = vmul.f32 %v5118, %v247
    %v5120 = vmul.f32 %v5010, %v5010
    %v5121 = vsel %vm243, %v5120, 0.0
    %5122 = vadd.xlane.f32.xlu0 %v5121
    %v5123 = vpop.xlane.xlu0 %5122
    %v5124 = vmul.f32 %v5123, %v247
    %v5125 = vsub.f32 %v5010, %v5119
    %v5126 = vmul.f32 %v5119, %v5119
    %v5127 = vsub.f32 %v5124, %v5126
    %v5128 = vadd.f32 %v5127, 1e-06
    %v5129 = vrsqrt.pop %v5128
    %v5130 = vmul.f32 %v5125, %v5129
    %v5131 = vmul.f32 %v5130, %v5100
    %v5132 = vadd.f32 %v5131, %v5110
    %v5133 = vld [vmem:[%s4 + $0x248] sm:$0xff]
    %v5134 = vld [vmem:[%s4 + $0x250] sm:$0xff]
    %v5135 = vld [vmem:[%s4 + $0x258] sm:$0xff]
    %v5136 = vld [vmem:[%s4 + $0x260] sm:$0xff]
    %v5137 = vld [vmem:[%s4 + $0x268] sm:$0x1]
    %v5138 = vlaneseq
    %v5139 = vshrl.u32 %v5138, 7
    %v5140 = vsub.s32 0, %v5139
    %v5141 = vrot.slane %v5137, %v5140
    %v5143 = vsel %vm230, %v5132, 0
    %5145 = vmatprep.subr.mxu0 0.0
    %5146 = vmatpush1.msra.mxu0 %v5133
    %5147 = vmatprep.subr.mxu0 0.0
    %5148 = vmatpush1.msra.mxu0 %v5134
    %5149 = vmatprep.subr.mxu0 0.0
    %5150 = vmatpush1.msra.mxu0 %v5135
    %5151 = vmatprep.subr.mxu0 0.0
    %5152 = vmatpush1.msra.mxu0 %v5136
    %5153 = vmatprep.subr.mxu0 0.0
    %5154 = vmatpush1.msra.mxu0 0.0
    %5155 = vmatprep.subr.mxu0 0.0
    %5156 = vmatpush1.msra.mxu0 0.0
    %5157 = vmatprep.subr.mxu0 0.0
    %5158 = vmatpush1.msra.mxu0 0.0
    %5159 = vmatprep.subr.mxu0 0.0
    %5160 = vmatpush1.msra.mxu0 0.0
    %5161 = vmatprep.subr.mxu0 0.0
    %5162 = vmatpush1.msra.mxu0 0.0
    %5163 = vmatprep.subr.mxu0 0.0
    %5164 = vmatpush1.msra.mxu0 0.0
    %5165 = vmatprep.subr.mxu0 0.0
    %5166 = vmatpush1.msra.mxu0 0.0
    %5167 = vmatprep.subr.mxu0 0.0
    %5168 = vmatpush1.msra.mxu0 0.0
    %5169 = vmatprep.subr.mxu0 0.0
    %5170 = vmatpush1.msra.mxu0 0.0
    %5171 = vmatprep.subr.mxu0 0.0
    %5172 = vmatpush1.msra.mxu0 0.0
    %5173 = vmatprep.subr.mxu0 0.0
    %5174 = vmatpush1.msra.mxu0 0.0
    %5175 = vmatprep.subr.mxu0 0.0
    %5176 = vmatpush1.msra.mxu0 0.0
    %5177 = vmatprep.subr.mxu0 0.0
    %5178 = vmatpush1.msra.mxu0 0.0
    %5179 = vmatprep.subr.mxu0 0.0
    %5180 = vmatpush1.msra.mxu0 0.0
    %5181 = vmatprep.subr.mxu0 0.0
    %5182 = vmatpush1.msra.mxu0 0.0
    %5183 = vmatprep.subr.mxu0 0.0
    %5184 = vmatpush1.msra.mxu0 0.0
    %5185 = vmatprep.subr.mxu0 0.0
    %5186 = vmatpush1.msra.mxu0 0.0
    %5187 = vmatprep.subr.mxu0 0.0
    %5188 = vmatpush1.msra.mxu0 0.0
    %5189 = vmatprep.subr.mxu0 0.0
    %5190 = vmatpush1.msra.mxu0 0.0
    %5191 = vmatprep.subr.mxu0 0.0
    %5192 = vmatpush1.msra.mxu0 0.0
    %5193 = vmatprep.subr.mxu0 0.0
    %5194 = vmatpush1.msra.mxu0 0.0
    %5195 = vmatprep.subr.mxu0 0.0
    %5196 = vmatpush1.msra.mxu0 0.0
    %5197 = vmatprep.subr.mxu0 0.0
    %5198 = vmatpush1.msra.mxu0 0.0
    %5199 = vmatprep.subr.mxu0 0.0
    %5200 = vmatpush1.msra.mxu0 0.0
    %5201 = vmatprep.subr.mxu0 0.0
    %5202 = vmatpush1.msra.mxu0 0.0
    %5203 = vmatprep.subr.mxu0 0.0
    %5204 = vmatpush1.msra.mxu0 0.0
    %5205 = vmatprep.subr.mxu0 0.0
    %5206 = vmatpush1.msra.mxu0 0.0
    %5207 = vmatprep.subr.mxu0 0.0
    %5208 = vmatpush1.msra.mxu0 0.0
    %5209 = vmatprep.mubr.f32.mxu0 0.0
    %5210 = vmatmul.mubr.f32.gmra.mrb[0].mxu0 %v5143
    %v5211 = vpop.f32.mrb[0].mxu0
    %v5212 = vadd.f32 %v5141, %v5211
    %v5213 = vpop.f32.mrb[0].mxu0
    %5214 = vdwg.mxu0
    %v5215 = vld [vmem:[%s4 + $0x270] sm:$0xff]
    %v5216 = vld [vmem:[%s4 + $0x278] sm:$0xff]
    %v5217 = vld [vmem:[%s4 + $0x280] sm:$0xff]
    %v5218 = vld [vmem:[%s4 + $0x288] sm:$0xff]
    %v5219 = vld [vmem:[%s4 + $0x290] sm:$0x1]
    %v5220 = vlaneseq
    %v5221 = vshrl.u32 %v5220, 7
    %v5222 = vsub.s32 0, %v5221
    %v5223 = vrot.slane %v5219, %v5222
    %v5225 = vsel %vm230, %v5111, 0
    %v5228 = vsel %vm230, %v5112, 0
    %v5231 = vsel %vm230, %v5113, 0
    %v5234 = vsel %vm230, %v5114, 0
    %v5237 = vsel %vm230, %v5115, 0
    %5239 = vmatprep.subr.mxu0 0.0
    %5240 = vmatpush1.msra.mxu0 %v5215
    %5241 = vmatprep.subr.mxu0 0.0
    %5242 = vmatpush1.msra.mxu0 %v5216
    %5243 = vmatprep.subr.mxu0 0.0
    %5244 = vmatpush1.msra.mxu0 %v5217
    %5245 = vmatprep.subr.mxu0 0.0
    %5246 = vmatpush1.msra.mxu0 %v5218
    %5247 = vmatprep.subr.mxu0 0.0
    %5248 = vmatpush1.msra.mxu0 0.0
    %5249 = vmatprep.subr.mxu0 0.0
    %5250 = vmatpush1.msra.mxu0 0.0
    %5251 = vmatprep.subr.mxu0 0.0
    %5252 = vmatpush1.msra.mxu0 0.0
    %5253 = vmatprep.subr.mxu0 0.0
    %5254 = vmatpush1.msra.mxu0 0.0
    %5255 = vmatprep.subr.mxu0 0.0
    %5256 = vmatpush1.msra.mxu0 0.0
    %5257 = vmatprep.subr.mxu0 0.0
    %5258 = vmatpush1.msra.mxu0 0.0
    %5259 = vmatprep.subr.mxu0 0.0
    %5260 = vmatpush1.msra.mxu0 0.0
    %5261 = vmatprep.subr.mxu0 0.0
    %5262 = vmatpush1.msra.mxu0 0.0
    %5263 = vmatprep.subr.mxu0 0.0
    %5264 = vmatpush1.msra.mxu0 0.0
    %5265 = vmatprep.subr.mxu0 0.0
    %5266 = vmatpush1.msra.mxu0 0.0
    %5267 = vmatprep.subr.mxu0 0.0
    %5268 = vmatpush1.msra.mxu0 0.0
    %5269 = vmatprep.subr.mxu0 0.0
    %5270 = vmatpush1.msra.mxu0 0.0
    %5271 = vmatprep.subr.mxu0 0.0
    %5272 = vmatpush1.msra.mxu0 0.0
    %5273 = vmatprep.subr.mxu0 0.0
    %5274 = vmatpush1.msra.mxu0 0.0
    %5275 = vmatprep.subr.mxu0 0.0
    %5276 = vmatpush1.msra.mxu0 0.0
    %5277 = vmatprep.subr.mxu0 0.0
    %5278 = vmatpush1.msra.mxu0 0.0
    %5279 = vmatprep.subr.mxu0 0.0
    %5280 = vmatpush1.msra.mxu0 0.0
    %5281 = vmatprep.subr.mxu0 0.0
    %5282 = vmatpush1.msra.mxu0 0.0
    %5283 = vmatprep.subr.mxu0 0.0
    %5284 = vmatpush1.msra.mxu0 0.0
    %5285 = vmatprep.subr.mxu0 0.0
    %5286 = vmatpush1.msra.mxu0 0.0
    %5287 = vmatprep.subr.mxu0 0.0
    %5288 = vmatpush1.msra.mxu0 0.0
    %5289 = vmatprep.subr.mxu0 0.0
    %5290 = vmatpush1.msra.mxu0 0.0
    %5291 = vmatprep.subr.mxu0 0.0
    %5292 = vmatpush1.msra.mxu0 0.0
    %5293 = vmatprep.subr.mxu0 0.0
    %5294 = vmatpush1.msra.mxu0 0.0
    %5295 = vmatprep.subr.mxu0 0.0
    %5296 = vmatpush1.msra.mxu0 0.0
    %5297 = vmatprep.subr.mxu0 0.0
    %5298 = vmatpush1.msra.mxu0 0.0
    %5299 = vmatprep.subr.mxu0 0.0
    %5300 = vmatpush1.msra.mxu0 0.0
    %5301 = vmatprep.subr.mxu0 0.0
    %5302 = vmatpush1.msra.mxu0 0.0
    %5303 = vmatprep.mubr.f32.mxu0 0.0
    %5304 = vmatmul.mubr.f32.gmra.mrb[0].mxu0 %v5225
    %v5305 = vpop.f32.mrb[0].mxu0
    %v5306 = vadd.f32 %v5223, %v5305
    %v5307 = vpop.f32.mrb[0].mxu0
    %5308 = vmatprep.mubr.f32.mxu0 0.0
    %5309 = vmatmul.mubr.f32.gmra.mrb[0].mxu0 %v5228
    %v5310 = vpop.f32.mrb[0].mxu0
    %v5311 = vadd.f32 %v5223, %v5310
    %v5312 = vpop.f32.mrb[0].mxu0
    %5313 = vmatprep.mubr.f32.mxu0 0.0
    %5314 = vmatmul.mubr.f32.gmra.mrb[0].mxu0 %v5231
    %v5315 = vpop.f32.mrb[0].mxu0
    %v5316 = vadd.f32 %v5223, %v5315
    %v5317 = vpop.f32.mrb[0].mxu0
    %5318 = vmatprep.mubr.f32.mxu0 0.0
    %5319 = vmatmul.mubr.f32.gmra.mrb[0].mxu0 %v5234
    %v5320 = vpop.f32.mrb[0].mxu0
    %v5321 = vadd.f32 %v5223, %v5320
    %v5322 = vpop.f32.mrb[0].mxu0
    %5323 = vmatprep.mubr.f32.mxu0 0.0
    %5324 = vmatmul.mubr.f32.gmra.mrb[0].mxu0 %v5237
    %v5325 = vpop.f32.mrb[0].mxu0
    %v5326 = vadd.f32 %v5223, %v5325
    %v5327 = vpop.f32.mrb[0].mxu0
    %5328 = vdwg.mxu0
    %v5329 = vld [vmem:[%s4 + $0x298] sm:$0xff]
    %v5330 = vld [vmem:[%s4 + $0x2a0] sm:$0xff]
    %v5331 = vld [vmem:[%s4 + $0x2a8] sm:$0xff]
    %v5332 = vld [vmem:[%s4 + $0x2b0] sm:$0xff]
    %v5334 = vsel %vm39, %v5212, 0
    %v5337 = vsel %vm39, %v5306, 0
    %v5340 = vsel %vm39, %v5311, 0
    %v5343 = vsel %vm39, %v5316, 0
    %v5346 = vsel %vm39, %v5321, 0
    %v5349 = vsel %vm39, %v5326, 0
    %5351 = vmatprep.subr.mxu0 0.0
    %5352 = vmatpush1.xpose.msra.mxu0 %v5337
    %5353 = vmatprep.subr.mxu0 0.0
    %5354 = vmatpush1.xpose.msra.mxu0 %v5340
    %5355 = vmatprep.subr.mxu0 0.0
    %5356 = vmatpush1.xpose.msra.mxu0 %v5343
    %5357 = vmatprep.subr.mxu0 0.0
    %5358 = vmatpush1.xpose.msra.mxu0 %v5346
    %5359 = vmatprep.subr.mxu0 0.0
    %5360 = vmatpush1.xpose.msra.mxu0 %v5349
    %5361 = vmatprep.subr.mxu0 0.0
    %5362 = vmatpush1.xpose.msra.mxu0 0.0
    %5363 = vmatprep.subr.mxu0 0.0
    %5364 = vmatpush1.xpose.msra.mxu0 0.0
    %5365 = vmatprep.subr.mxu0 0.0
    %5366 = vmatpush1.xpose.msra.mxu0 0.0
    %5367 = vmatprep.subr.mxu0 0.0
    %5368 = vmatpush1.xpose.msra.mxu0 0.0
    %5369 = vmatprep.subr.mxu0 0.0
    %5370 = vmatpush1.xpose.msra.mxu0 0.0
    %5371 = vmatprep.subr.mxu0 0.0
    %5372 = vmatpush1.xpose.msra.mxu0 0.0
    %5373 = vmatprep.subr.mxu0 0.0
    %5374 = vmatpush1.xpose.msra.mxu0 0.0
    %5375 = vmatprep.subr.mxu0 0.0
    %5376 = vmatpush1.xpose.msra.mxu0 0.0
    %5377 = vmatprep.subr.mxu0 0.0
    %5378 = vmatpush1.xpose.msra.mxu0 0.0
    %5379 = vmatprep.subr.mxu0 0.0
    %5380 = vmatpush1.xpose.msra.mxu0 0.0
    %5381 = vmatprep.subr.mxu0 0.0
    %5382 = vmatpush1.xpose.msra.mxu0 0.0
    %5383 = vmatprep.subr.mxu0 0.0
    %5384 = vmatpush1.xpose.msra.mxu0 0.0
    %5385 = vmatprep.subr.mxu0 0.0
    %5386 = vmatpush1.xpose.msra.mxu0 0.0
    %5387 = vmatprep.subr.mxu0 0.0
    %5388 = vmatpush1.xpose.msra.mxu0 0.0
    %5389 = vmatprep.subr.mxu0 0.0
    %5390 = vmatpush1.xpose.msra.mxu0 0.0
    %5391 = vmatprep.subr.mxu0 0.0
    %5392 = vmatpush1.xpose.msra.mxu0 0.0
    %5393 = vmatprep.subr.mxu0 0.0
    %5394 = vmatpush1.xpose.msra.mxu0 0.0
    %5395 = vmatprep.subr.mxu0 0.0
    %5396 = vmatpush1.xpose.msra.mxu0 0.0
    %5397 = vmatprep.subr.mxu0 0.0
    %5398 = vmatpush1.xpose.msra.mxu0 0.0
    %5399 = vmatprep.subr.mxu0 0.0
    %5400 = vmatpush1.xpose.msra.mxu0 0.0
    %5401 = vmatprep.subr.mxu0 0.0
    %5402 = vmatpush1.xpose.msra.mxu0 0.0
    %5403 = vmatprep.subr.mxu0 0.0
    %5404 = vmatpush1.xpose.msra.mxu0 0.0
    %5405 = vmatprep.subr.mxu0 0.0
    %5406 = vmatpush1.xpose.msra.mxu0 0.0
    %5407 = vmatprep.subr.mxu0 0.0
    %5408 = vmatpush1.xpose.msra.mxu0 0.0
    %5409 = vmatprep.subr.mxu0 0.0
    %5410 = vmatpush1.xpose.msra.mxu0 0.0
    %5411 = vmatprep.subr.mxu0 0.0
    %5412 = vmatpush1.xpose.msra.mxu0 0.0
    %5413 = vmatprep.subr.mxu0 0.0
    %5414 = vmatpush1.xpose.msra.mxu0 0.0
    %5415 = vmatprep.mubr.f32.mxu0 0.0
    %5416 = vmatmul.mubr.f32.gmra.mrb[0].mxu0 %v5334
    %v5417 = vpop.f32.mrb[0].mxu0
    %v5418 = vadd.f32 0.0, %v5417
    %v5419 = vpop.f32.mrb[0].mxu0
    %5420 = vdwg.mxu0
    %v5421 = vmul.f32 %v5418, 0.35355338
    %v5422 = vadd.f32 %v5421, %v32
    %v5423 = vsel %vm594, %v5422, -inf
    %5424 = vmax.xlane.f32.xlu0 %v5423
    %v5425 = vpop.xlane.xlu0 %5424
    %v5426 = vsub.f32 %v5422, %v5425
    %v5427 = vmul.f32 %v5426, 1.442695
    %v5428 = vpow.pop %v5427
    %v5429 = vsel %vm594, %v5428, 0.0
    %5430 = vadd.xlane.f32.xlu0 %v5429
    %v5431 = vpop.xlane.xlu0 %5430
    %v5432 = vrcp.pop %v5431
    %v5433 = vmul.f32 %v5428, %v5432
    %5434 = vrot.lane.b32.xlu0 %v5306, 96
    %v5435 = vpop.permute.xlu0 %5434
    %5436 = vrot.lane.b32.xlu0 %v5311, 96
    %v5437 = vpop.permute.xlu0 %5436
    %5438 = vrot.lane.b32.xlu0 %v5316, 96
    %v5439 = vpop.permute.xlu0 %5438
    %5440 = vrot.lane.b32.xlu0 %v5321, 96
    %v5441 = vpop.permute.xlu0 %5440
    %5442 = vrot.lane.b32.xlu0 %v5326, 96
    %v5443 = vpop.permute.xlu0 %5442
    %v5449 = vsel %vm581, %v5433, 0
    %v5451 = vsel %vm667, %v5443, 0
    %5453 = vmatprep.subr.mxu0 0.0
    %5454 = vmatpush1.msra.mxu0 %v5435
    %5455 = vmatprep.subr.mxu0 0.0
    %5456 = vmatpush1.msra.mxu0 %v5437
    %5457 = vmatprep.subr.mxu0 0.0
    %5458 = vmatpush1.msra.mxu0 %v5439
    %5459 = vmatprep.subr.mxu0 0.0
    %5460 = vmatpush1.msra.mxu0 %v5441
    %5461 = vmatprep.subr.mxu0 0.0
    %5462 = vmatpush1.msra.mxu0 %v5451
    %5463 = vmatprep.subr.mxu0 0.0
    %5464 = vmatpush1.msra.mxu0 0.0
    %5465 = vmatprep.subr.mxu0 0.0
    %5466 = vmatpush1.msra.mxu0 0.0
    %5467 = vmatprep.subr.mxu0 0.0
    %5468 = vmatpush1.msra.mxu0 0.0
    %5469 = vmatprep.subr.mxu0 0.0
    %5470 = vmatpush1.msra.mxu0 0.0
    %5471 = vmatprep.subr.mxu0 0.0
    %5472 = vmatpush1.msra.mxu0 0.0
    %5473 = vmatprep.subr.mxu0 0.0
    %5474 = vmatpush1.msra.mxu0 0.0
    %5475 = vmatprep.subr.mxu0 0.0
    %5476 = vmatpush1.msra.mxu0 0.0
    %5477 = vmatprep.subr.mxu0 0.0
    %5478 = vmatpush1.msra.mxu0 0.0
    %5479 = vmatprep.subr.mxu0 0.0
    %5480 = vmatpush1.msra.mxu0 0.0
    %5481 = vmatprep.subr.mxu0 0.0
    %5482 = vmatpush1.msra.mxu0 0.0
    %5483 = vmatprep.subr.mxu0 0.0
    %5484 = vmatpush1.msra.mxu0 0.0
    %5485 = vmatprep.subr.mxu0 0.0
    %5486 = vmatpush1.msra.mxu0 0.0
    %5487 = vmatprep.subr.mxu0 0.0
    %5488 = vmatpush1.msra.mxu0 0.0
    %5489 = vmatprep.subr.mxu0 0.0
    %5490 = vmatpush1.msra.mxu0 0.0
    %5491 = vmatprep.subr.mxu0 0.0
    %5492 = vmatpush1.msra.mxu0 0.0
    %5493 = vmatprep.subr.mxu0 0.0
    %5494 = vmatpush1.msra.mxu0 0.0
    %5495 = vmatprep.subr.mxu0 0.0
    %5496 = vmatpush1.msra.mxu0 0.0
    %5497 = vmatprep.subr.mxu0 0.0
    %5498 = vmatpush1.msra.mxu0 0.0
    %5499 = vmatprep.subr.mxu0 0.0
    %5500 = vmatpush1.msra.mxu0 0.0
    %5501 = vmatprep.subr.mxu0 0.0
    %5502 = vmatpush1.msra.mxu0 0.0
    %5503 = vmatprep.subr.mxu0 0.0
    %5504 = vmatpush1.msra.mxu0 0.0
    %5505 = vmatprep.subr.mxu0 0.0
    %5506 = vmatpush1.msra.mxu0 0.0
    %5507 = vmatprep.subr.mxu0 0.0
    %5508 = vmatpush1.msra.mxu0 0.0
    %5509 = vmatprep.subr.mxu0 0.0
    %5510 = vmatpush1.msra.mxu0 0.0
    %5511 = vmatprep.subr.mxu0 0.0
    %5512 = vmatpush1.msra.mxu0 0.0
    %5513 = vmatprep.subr.mxu0 0.0
    %5514 = vmatpush1.msra.mxu0 0.0
    %5515 = vmatprep.subr.mxu0 0.0
    %5516 = vmatpush1.msra.mxu0 0.0
    %5517 = vmatprep.mubr.f32.mxu0 0.0
    %5518 = vmatmul.mubr.f32.gmra.mrb[0].mxu0 %v5449
    %v5519 = vpop.f32.mrb[0].mxu0
    %v5520 = vadd.f32 0.0, %v5519
    %v5521 = vpop.f32.mrb[0].mxu0
    %5522 = vdwg.mxu0
    %5523 = vrot.lane.b32.xlu0 %v5212, 120
    %v5524 = vpop.permute.xlu0 %5523
    %5525 = vrot.lane.b32.xlu0 %v5306, 120
    %v5526 = vpop.permute.xlu0 %5525
    %5527 = vrot.lane.b32.xlu0 %v5311, 120
    %v5528 = vpop.permute.xlu0 %5527
    %5529 = vrot.lane.b32.xlu0 %v5316, 120
    %v5530 = vpop.permute.xlu0 %5529
    %5531 = vrot.lane.b32.xlu0 %v5321, 120
    %v5532 = vpop.permute.xlu0 %5531
    %5533 = vrot.lane.b32.xlu0 %v5326, 120
    %v5534 = vpop.permute.xlu0 %5533
    %v5535 = vsel %vm39, %v5524, 0
    %v5537 = vsel %vm39, %v5526, 0
    %v5539 = vsel %vm39, %v5528, 0
    %v5541 = vsel %vm39, %v5530, 0
    %v5543 = vsel %vm39, %v5532, 0
    %v5545 = vsel %vm39, %v5534, 0
    %5547 = vmatprep.subr.mxu0 0.0
    %5548 = vmatpush1.xpose.msra.mxu0 %v5537
    %5549 = vmatprep.subr.mxu0 0.0
    %5550 = vmatpush1.xpose.msra.mxu0 %v5539
    %5551 = vmatprep.subr.mxu0 0.0
    %5552 = vmatpush1.xpose.msra.mxu0 %v5541
    %5553 = vmatprep.subr.mxu0 0.0
    %5554 = vmatpush1.xpose.msra.mxu0 %v5543
    %5555 = vmatprep.subr.mxu0 0.0
    %5556 = vmatpush1.xpose.msra.mxu0 %v5545
    %5557 = vmatprep.subr.mxu0 0.0
    %5558 = vmatpush1.xpose.msra.mxu0 0.0
    %5559 = vmatprep.subr.mxu0 0.0
    %5560 = vmatpush1.xpose.msra.mxu0 0.0
    %5561 = vmatprep.subr.mxu0 0.0
    %5562 = vmatpush1.xpose.msra.mxu0 0.0
    %5563 = vmatprep.subr.mxu0 0.0
    %5564 = vmatpush1.xpose.msra.mxu0 0.0
    %5565 = vmatprep.subr.mxu0 0.0
    %5566 = vmatpush1.xpose.msra.mxu0 0.0
    %5567 = vmatprep.subr.mxu0 0.0
    %5568 = vmatpush1.xpose.msra.mxu0 0.0
    %5569 = vmatprep.subr.mxu0 0.0
    %5570 = vmatpush1.xpose.msra.mxu0 0.0
    %5571 = vmatprep.subr.mxu0 0.0
    %5572 = vmatpush1.xpose.msra.mxu0 0.0
    %5573 = vmatprep.subr.mxu0 0.0
    %5574 = vmatpush1.xpose.msra.mxu0 0.0
    %5575 = vmatprep.subr.mxu0 0.0
    %5576 = vmatpush1.xpose.msra.mxu0 0.0
    %5577 = vmatprep.subr.mxu0 0.0
    %5578 = vmatpush1.xpose.msra.mxu0 0.0
    %5579 = vmatprep.subr.mxu0 0.0
    %5580 = vmatpush1.xpose.msra.mxu0 0.0
    %5581 = vmatprep.subr.mxu0 0.0
    %5582 = vmatpush1.xpose.msra.mxu0 0.0
    %5583 = vmatprep.subr.mxu0 0.0
    %5584 = vmatpush1.xpose.msra.mxu0 0.0
    %5585 = vmatprep.subr.mxu0 0.0
    %5586 = vmatpush1.xpose.msra.mxu0 0.0
    %5587 = vmatprep.subr.mxu0 0.0
    %5588 = vmatpush1.xpose.msra.mxu0 0.0
    %5589 = vmatprep.subr.mxu0 0.0
    %5590 = vmatpush1.xpose.msra.mxu0 0.0
    %5591 = vmatprep.subr.mxu0 0.0
    %5592 = vmatpush1.xpose.msra.mxu0 0.0
    %5593 = vmatprep.subr.mxu0 0.0
    %5594 = vmatpush1.xpose.msra.mxu0 0.0
    %5595 = vmatprep.subr.mxu0 0.0
    %5596 = vmatpush1.xpose.msra.mxu0 0.0
    %5597 = vmatprep.subr.mxu0 0.0
    %5598 = vmatpush1.xpose.msra.mxu0 0.0
    %5599 = vmatprep.subr.mxu0 0.0
    %5600 = vmatpush1.xpose.msra.mxu0 0.0
    %5601 = vmatprep.subr.mxu0 0.0
    %5602 = vmatpush1.xpose.msra.mxu0 0.0
    %5603 = vmatprep.subr.mxu0 0.0
    %5604 = vmatpush1.xpose.msra.mxu0 0.0
    %5605 = vmatprep.subr.mxu0 0.0
    %5606 = vmatpush1.xpose.msra.mxu0 0.0
    %5607 = vmatprep.subr.mxu0 0.0
    %5608 = vmatpush1.xpose.msra.mxu0 0.0
    %5609 = vmatprep.subr.mxu0 0.0
    %5610 = vmatpush1.xpose.msra.mxu0 0.0
    %5611 = vmatprep.mubr.f32.mxu0 0.0
    %5612 = vmatmul.mubr.f32.gmra.mrb[0].mxu0 %v5535
    %v5613 = vpop.f32.mrb[0].mxu0
    %v5614 = vadd.f32 0.0, %v5613
    %v5615 = vpop.f32.mrb[0].mxu0
    %5616 = vdwg.mxu0
    %v5617 = vmul.f32 %v5614, 0.35355338
    %v5618 = vadd.f32 %v5617, %v32
    %v5619 = vsel %vm594, %v5618, -inf
    %5620 = vmax.xlane.f32.xlu0 %v5619
    %v5621 = vpop.xlane.xlu0 %5620
    %v5622 = vsub.f32 %v5618, %v5621
    %v5623 = vmul.f32 %v5622, 1.442695
    %v5624 = vpow.pop %v5623
    %v5625 = vsel %vm594, %v5624, 0.0
    %5626 = vadd.xlane.f32.xlu0 %v5625
    %v5627 = vpop.xlane.xlu0 %5626
    %v5628 = vrcp.pop %v5627
    %v5629 = vmul.f32 %v5624, %v5628
    %5630 = vrot.lane.b32.xlu0 %v5306, 88
    %v5631 = vpop.permute.xlu0 %5630
    %5632 = vrot.lane.b32.xlu0 %v5311, 88
    %v5633 = vpop.permute.xlu0 %5632
    %5634 = vrot.lane.b32.xlu0 %v5316, 88
    %v5635 = vpop.permute.xlu0 %5634
    %5636 = vrot.lane.b32.xlu0 %v5321, 88
    %v5637 = vpop.permute.xlu0 %5636
    %5638 = vrot.lane.b32.xlu0 %v5326, 88
    %v5639 = vpop.permute.xlu0 %5638
    %v5645 = vsel %vm581, %v5629, 0
    %v5647 = vsel %vm667, %v5639, 0
    %5649 = vmatprep.subr.mxu0 0.0
    %5650 = vmatpush1.msra.mxu0 %v5631
    %5651 = vmatprep.subr.mxu0 0.0
    %5652 = vmatpush1.msra.mxu0 %v5633
    %5653 = vmatprep.subr.mxu0 0.0
    %5654 = vmatpush1.msra.mxu0 %v5635
    %5655 = vmatprep.subr.mxu0 0.0
    %5656 = vmatpush1.msra.mxu0 %v5637
    %5657 = vmatprep.subr.mxu0 0.0
    %5658 = vmatpush1.msra.mxu0 %v5647
    %5659 = vmatprep.subr.mxu0 0.0
    %5660 = vmatpush1.msra.mxu0 0.0
    %5661 = vmatprep.subr.mxu0 0.0
    %5662 = vmatpush1.msra.mxu0 0.0
    %5663 = vmatprep.subr.mxu0 0.0
    %5664 = vmatpush1.msra.mxu0 0.0
    %5665 = vmatprep.subr.mxu0 0.0
    %5666 = vmatpush1.msra.mxu0 0.0
    %5667 = vmatprep.subr.mxu0 0.0
    %5668 = vmatpush1.msra.mxu0 0.0
    %5669 = vmatprep.subr.mxu0 0.0
    %5670 = vmatpush1.msra.mxu0 0.0
    %5671 = vmatprep.subr.mxu0 0.0
    %5672 = vmatpush1.msra.mxu0 0.0
    %5673 = vmatprep.subr.mxu0 0.0
    %5674 = vmatpush1.msra.mxu0 0.0
    %5675 = vmatprep.subr.mxu0 0.0
    %5676 = vmatpush1.msra.mxu0 0.0
    %5677 = vmatprep.subr.mxu0 0.0
    %5678 = vmatpush1.msra.mxu0 0.0
    %5679 = vmatprep.subr.mxu0 0.0
    %5680 = vmatpush1.msra.mxu0 0.0
    %5681 = vmatprep.subr.mxu0 0.0
    %5682 = vmatpush1.msra.mxu0 0.0
    %5683 = vmatprep.subr.mxu0 0.0
    %5684 = vmatpush1.msra.mxu0 0.0
    %5685 = vmatprep.subr.mxu0 0.0
    %5686 = vmatpush1.msra.mxu0 0.0
    %5687 = vmatprep.subr.mxu0 0.0
    %5688 = vmatpush1.msra.mxu0 0.0
    %5689 = vmatprep.subr.mxu0 0.0
    %5690 = vmatpush1.msra.mxu0 0.0
    %5691 = vmatprep.subr.mxu0 0.0
    %5692 = vmatpush1.msra.mxu0 0.0
    %5693 = vmatprep.subr.mxu0 0.0
    %5694 = vmatpush1.msra.mxu0 0.0
    %5695 = vmatprep.subr.mxu0 0.0
    %5696 = vmatpush1.msra.mxu0 0.0
    %5697 = vmatprep.subr.mxu0 0.0
    %5698 = vmatpush1.msra.mxu0 0.0
    %5699 = vmatprep.subr.mxu0 0.0
    %5700 = vmatpush1.msra.mxu0 0.0
    %5701 = vmatprep.subr.mxu0 0.0
    %5702 = vmatpush1.msra.mxu0 0.0
    %5703 = vmatprep.subr.mxu0 0.0
    %5704 = vmatpush1.msra.mxu0 0.0
    %5705 = vmatprep.subr.mxu0 0.0
    %5706 = vmatpush1.msra.mxu0 0.0
    %5707 = vmatprep.subr.mxu0 0.0
    %5708 = vmatpush1.msra.mxu0 0.0
    %5709 = vmatprep.subr.mxu0 0.0
    %5710 = vmatpush1.msra.mxu0 0.0
    %5711 = vmatprep.subr.mxu0 0.0
    %5712 = vmatpush1.msra.mxu0 0.0
    %5713 = vmatprep.mubr.f32.mxu0 0.0
    %5714 = vmatmul.mubr.f32.gmra.mrb[0].mxu0 %v5645
    %v5715 = vpop.f32.mrb[0].mxu0
    %v5716 = vadd.f32 0.0, %v5715
    %v5717 = vpop.f32.mrb[0].mxu0
    %5718 = vdwg.mxu0
    %v5720 = vsel %vm39, %v5716, 0
    %5722 = vmatprep.subr.mxu0 0.0
    %5723 = vmatpush1.msra.mxu0 %v5330
    %5724 = vmatprep.subr.mxu0 0.0
    %5725 = vmatpush1.msra.mxu0 0.0
    %5726 = vmatprep.subr.mxu0 0.0
    %5727 = vmatpush1.msra.mxu0 0.0
    %5728 = vmatprep.subr.mxu0 0.0
    %5729 = vmatpush1.msra.mxu0 0.0
    %5730 = vmatprep.subr.mxu0 0.0
    %5731 = vmatpush1.msra.mxu0 0.0
    %5732 = vmatprep.subr.mxu0 0.0
    %5733 = vmatpush1.msra.mxu0 0.0
    %5734 = vmatprep.subr.mxu0 0.0
    %5735 = vmatpush1.msra.mxu0 0.0
    %5736 = vmatprep.subr.mxu0 0.0
    %5737 = vmatpush1.msra.mxu0 0.0
    %5738 = vmatprep.subr.mxu0 0.0
    %5739 = vmatpush1.msra.mxu0 0.0
    %5740 = vmatprep.subr.mxu0 0.0
    %5741 = vmatpush1.msra.mxu0 0.0
    %5742 = vmatprep.subr.mxu0 0.0
    %5743 = vmatpush1.msra.mxu0 0.0
    %5744 = vmatprep.subr.mxu0 0.0
    %5745 = vmatpush1.msra.mxu0 0.0
    %5746 = vmatprep.subr.mxu0 0.0
    %5747 = vmatpush1.msra.mxu0 0.0
    %5748 = vmatprep.subr.mxu0 0.0
    %5749 = vmatpush1.msra.mxu0 0.0
    %5750 = vmatprep.subr.mxu0 0.0
    %5751 = vmatpush1.msra.mxu0 0.0
    %5752 = vmatprep.subr.mxu0 0.0
    %5753 = vmatpush1.msra.mxu0 0.0
    %5754 = vmatprep.subr.mxu0 0.0
    %5755 = vmatpush1.msra.mxu0 0.0
    %5756 = vmatprep.subr.mxu0 0.0
    %5757 = vmatpush1.msra.mxu0 0.0
    %5758 = vmatprep.subr.mxu0 0.0
    %5759 = vmatpush1.msra.mxu0 0.0
    %5760 = vmatprep.subr.mxu0 0.0
    %5761 = vmatpush1.msra.mxu0 0.0
    %5762 = vmatprep.subr.mxu0 0.0
    %5763 = vmatpush1.msra.mxu0 0.0
    %5764 = vmatprep.subr.mxu0 0.0
    %5765 = vmatpush1.msra.mxu0 0.0
    %5766 = vmatprep.subr.mxu0 0.0
    %5767 = vmatpush1.msra.mxu0 0.0
    %5768 = vmatprep.subr.mxu0 0.0
    %5769 = vmatpush1.msra.mxu0 0.0
    %5770 = vmatprep.subr.mxu0 0.0
    %5771 = vmatpush1.msra.mxu0 0.0
    %5772 = vmatprep.subr.mxu0 0.0
    %5773 = vmatpush1.msra.mxu0 0.0
    %5774 = vmatprep.subr.mxu0 0.0
    %5775 = vmatpush1.msra.mxu0 0.0
    %5776 = vmatprep.subr.mxu0 0.0
    %5777 = vmatpush1.msra.mxu0 0.0
    %5778 = vmatprep.subr.mxu0 0.0
    %5779 = vmatpush1.msra.mxu0 0.0
    %5780 = vmatprep.subr.mxu0 0.0
    %5781 = vmatpush1.msra.mxu0 0.0
    %5782 = vmatprep.subr.mxu0 0.0
    %5783 = vmatpush1.msra.mxu0 0.0
    %5784 = vmatprep.subr.mxu0 0.0
    %5785 = vmatpush1.msra.mxu0 0.0
    %5786 = vmatprep.mubr.f32.mxu0 0.0
    %5787 = vmatmul.mubr.f32.gmra.mrb[0].mxu0 %v5720
    %v5788 = vpop.f32.mrb[0].mxu0
    %v5789 = vadd.f32 0.0, %v5788
    %v5790 = vpop.f32.mrb[0].mxu0
    %5791 = vdwg.mxu0
    %v5793 = vsel %vm39, %v5520, 0
    %5795 = vmatprep.subr.mxu0 0.0
    %5796 = vmatpush1.msra.mxu0 %v5329
    %5797 = vmatprep.subr.mxu0 0.0
    %5798 = vmatpush1.msra.mxu0 0.0
    %5799 = vmatprep.subr.mxu0 0.0
    %5800 = vmatpush1.msra.mxu0 0.0
    %5801 = vmatprep.subr.mxu0 0.0
    %5802 = vmatpush1.msra.mxu0 0.0
    %5803 = vmatprep.subr.mxu0 0.0
    %5804 = vmatpush1.msra.mxu0 0.0
    %5805 = vmatprep.subr.mxu0 0.0
    %5806 = vmatpush1.msra.mxu0 0.0
    %5807 = vmatprep.subr.mxu0 0.0
    %5808 = vmatpush1.msra.mxu0 0.0
    %5809 = vmatprep.subr.mxu0 0.0
    %5810 = vmatpush1.msra.mxu0 0.0
    %5811 = vmatprep.subr.mxu0 0.0
    %5812 = vmatpush1.msra.mxu0 0.0
    %5813 = vmatprep.subr.mxu0 0.0
    %5814 = vmatpush1.msra.mxu0 0.0
    %5815 = vmatprep.subr.mxu0 0.0
    %5816 = vmatpush1.msra.mxu0 0.0
    %5817 = vmatprep.subr.mxu0 0.0
    %5818 = vmatpush1.msra.mxu0 0.0
    %5819 = vmatprep.subr.mxu0 0.0
    %5820 = vmatpush1.msra.mxu0 0.0
    %5821 = vmatprep.subr.mxu0 0.0
    %5822 = vmatpush1.msra.mxu0 0.0
    %5823 = vmatprep.subr.mxu0 0.0
    %5824 = vmatpush1.msra.mxu0 0.0
    %5825 = vmatprep.subr.mxu0 0.0
    %5826 = vmatpush1.msra.mxu0 0.0
    %5827 = vmatprep.subr.mxu0 0.0
    %5828 = vmatpush1.msra.mxu0 0.0
    %5829 = vmatprep.subr.mxu0 0.0
    %5830 = vmatpush1.msra.mxu0 0.0
    %5831 = vmatprep.subr.mxu0 0.0
    %5832 = vmatpush1.msra.mxu0 0.0
    %5833 = vmatprep.subr.mxu0 0.0
    %5834 = vmatpush1.msra.mxu0 0.0
    %5835 = vmatprep.subr.mxu0 0.0
    %5836 = vmatpush1.msra.mxu0 0.0
    %5837 = vmatprep.subr.mxu0 0.0
    %5838 = vmatpush1.msra.mxu0 0.0
    %5839 = vmatprep.subr.mxu0 0.0
    %5840 = vmatpush1.msra.mxu0 0.0
    %5841 = vmatprep.subr.mxu0 0.0
    %5842 = vmatpush1.msra.mxu0 0.0
    %5843 = vmatprep.subr.mxu0 0.0
    %5844 = vmatpush1.msra.mxu0 0.0
    %5845 = vmatprep.subr.mxu0 0.0
    %5846 = vmatpush1.msra.mxu0 0.0
    %5847 = vmatprep.subr.mxu0 0.0
    %5848 = vmatpush1.msra.mxu0 0.0
    %5849 = vmatprep.subr.mxu0 0.0
    %5850 = vmatpush1.msra.mxu0 0.0
    %5851 = vmatprep.subr.mxu0 0.0
    %5852 = vmatpush1.msra.mxu0 0.0
    %5853 = vmatprep.subr.mxu0 0.0
    %5854 = vmatpush1.msra.mxu0 0.0
    %5855 = vmatprep.subr.mxu0 0.0
    %5856 = vmatpush1.msra.mxu0 0.0
    %5857 = vmatprep.subr.mxu0 0.0
    %5858 = vmatpush1.msra.mxu0 0.0
    %5859 = vmatprep.mubr.f32.mxu0 0.0
    %5860 = vmatmul.mubr.f32.gmra.mrb[0].mxu0 %v5793
    %v5861 = vpop.f32.mrb[0].mxu0
    %v5862 = vadd.f32 %v5789, %v5861
    %v5863 = vpop.f32.mrb[0].mxu0
    %5864 = vdwg.mxu0
    %5865 = vrot.lane.b32.xlu0 %v5212, 112
    %v5866 = vpop.permute.xlu0 %5865
    %5867 = vrot.lane.b32.xlu0 %v5306, 112
    %v5868 = vpop.permute.xlu0 %5867
    %5869 = vrot.lane.b32.xlu0 %v5311, 112
    %v5870 = vpop.permute.xlu0 %5869
    %5871 = vrot.lane.b32.xlu0 %v5316, 112
    %v5872 = vpop.permute.xlu0 %5871
    %5873 = vrot.lane.b32.xlu0 %v5321, 112
    %v5874 = vpop.permute.xlu0 %5873
    %5875 = vrot.lane.b32.xlu0 %v5326, 112
    %v5876 = vpop.permute.xlu0 %5875
    %v5877 = vsel %vm39, %v5866, 0
    %v5879 = vsel %vm39, %v5868, 0
    %v5881 = vsel %vm39, %v5870, 0
    %v5883 = vsel %vm39, %v5872, 0
    %v5885 = vsel %vm39, %v5874, 0
    %v5887 = vsel %vm39, %v5876, 0
    %5889 = vmatprep.subr.mxu0 0.0
    %5890 = vmatpush1.xpose.msra.mxu0 %v5879
    %5891 = vmatprep.subr.mxu0 0.0
    %5892 = vmatpush1.xpose.msra.mxu0 %v5881
    %5893 = vmatprep.subr.mxu0 0.0
    %5894 = vmatpush1.xpose.msra.mxu0 %v5883
    %5895 = vmatprep.subr.mxu0 0.0
    %5896 = vmatpush1.xpose.msra.mxu0 %v5885
    %5897 = vmatprep.subr.mxu0 0.0
    %5898 = vmatpush1.xpose.msra.mxu0 %v5887
    %5899 = vmatprep.subr.mxu0 0.0
    %5900 = vmatpush1.xpose.msra.mxu0 0.0
    %5901 = vmatprep.subr.mxu0 0.0
    %5902 = vmatpush1.xpose.msra.mxu0 0.0
    %5903 = vmatprep.subr.mxu0 0.0
    %5904 = vmatpush1.xpose.msra.mxu0 0.0
    %5905 = vmatprep.subr.mxu0 0.0
    %5906 = vmatpush1.xpose.msra.mxu0 0.0
    %5907 = vmatprep.subr.mxu0 0.0
    %5908 = vmatpush1.xpose.msra.mxu0 0.0
    %5909 = vmatprep.subr.mxu0 0.0
    %5910 = vmatpush1.xpose.msra.mxu0 0.0
    %5911 = vmatprep.subr.mxu0 0.0
    %5912 = vmatpush1.xpose.msra.mxu0 0.0
    %5913 = vmatprep.subr.mxu0 0.0
    %5914 = vmatpush1.xpose.msra.mxu0 0.0
    %5915 = vmatprep.subr.mxu0 0.0
    %5916 = vmatpush1.xpose.msra.mxu0 0.0
    %5917 = vmatprep.subr.mxu0 0.0
    %5918 = vmatpush1.xpose.msra.mxu0 0.0
    %5919 = vmatprep.subr.mxu0 0.0
    %5920 = vmatpush1.xpose.msra.mxu0 0.0
    %5921 = vmatprep.subr.mxu0 0.0
    %5922 = vmatpush1.xpose.msra.mxu0 0.0
    %5923 = vmatprep.subr.mxu0 0.0
    %5924 = vmatpush1.xpose.msra.mxu0 0.0
    %5925 = vmatprep.subr.mxu0 0.0
    %5926 = vmatpush1.xpose.msra.mxu0 0.0
    %5927 = vmatprep.subr.mxu0 0.0
    %5928 = vmatpush1.xpose.msra.mxu0 0.0
    %5929 = vmatprep.subr.mxu0 0.0
    %5930 = vmatpush1.xpose.msra.mxu0 0.0
    %5931 = vmatprep.subr.mxu0 0.0
    %5932 = vmatpush1.xpose.msra.mxu0 0.0
    %5933 = vmatprep.subr.mxu0 0.0
    %5934 = vmatpush1.xpose.msra.mxu0 0.0
    %5935 = vmatprep.subr.mxu0 0.0
    %5936 = vmatpush1.xpose.msra.mxu0 0.0
    %5937 = vmatprep.subr.mxu0 0.0
    %5938 = vmatpush1.xpose.msra.mxu0 0.0
    %5939 = vmatprep.subr.mxu0 0.0
    %5940 = vmatpush1.xpose.msra.mxu0 0.0
    %5941 = vmatprep.subr.mxu0 0.0
    %5942 = vmatpush1.xpose.msra.mxu0 0.0
    %5943 = vmatprep.subr.mxu0 0.0
    %5944 = vmatpush1.xpose.msra.mxu0 0.0
    %5945 = vmatprep.subr.mxu0 0.0
    %5946 = vmatpush1.xpose.msra.mxu0 0.0
    %5947 = vmatprep.subr.mxu0 0.0
    %5948 = vmatpush1.xpose.msra.mxu0 0.0
    %5949 = vmatprep.subr.mxu0 0.0
    %5950 = vmatpush1.xpose.msra.mxu0 0.0
    %5951 = vmatprep.subr.mxu0 0.0
    %5952 = vmatpush1.xpose.msra.mxu0 0.0
    %5953 = vmatprep.mubr.f32.mxu0 0.0
    %5954 = vmatmul.mubr.f32.gmra.mrb[0].mxu0 %v5877
    %v5955 = vpop.f32.mrb[0].mxu0
    %v5956 = vadd.f32 0.0, %v5955
    %v5957 = vpop.f32.mrb[0].mxu0
    %5958 = vdwg.mxu0
    %v5959 = vmul.f32 %v5956, 0.35355338
    %v5960 = vadd.f32 %v5959, %v32
    %v5961 = vsel %vm594, %v5960, -inf
    %5962 = vmax.xlane.f32.xlu0 %v5961
    %v5963 = vpop.xlane.xlu0 %5962
    %v5964 = vsub.f32 %v5960, %v5963
    %v5965 = vmul.f32 %v5964, 1.442695
    %v5966 = vpow.pop %v5965
    %v5967 = vsel %vm594, %v5966, 0.0
    %5968 = vadd.xlane.f32.xlu0 %v5967
    %v5969 = vpop.xlane.xlu0 %5968
    %v5970 = vrcp.pop %v5969
    %v5971 = vmul.f32 %v5966, %v5970
    %5972 = vrot.lane.b32.xlu0 %v5306, 80
    %v5973 = vpop.permute.xlu0 %5972
    %5974 = vrot.lane.b32.xlu0 %v5311, 80
    %v5975 = vpop.permute.xlu0 %5974
    %5976 = vrot.lane.b32.xlu0 %v5316, 80
    %v5977 = vpop.permute.xlu0 %5976
    %5978 = vrot.lane.b32.xlu0 %v5321, 80
    %v5979 = vpop.permute.xlu0 %5978
    %5980 = vrot.lane.b32.xlu0 %v5326, 80
    %v5981 = vpop.permute.xlu0 %5980
    %v5987 = vsel %vm581, %v5971, 0
    %v5989 = vsel %vm667, %v5981, 0
    %5991 = vmatprep.subr.mxu0 0.0
    %5992 = vmatpush1.msra.mxu0 %v5973
    %5993 = vmatprep.subr.mxu0 0.0
    %5994 = vmatpush1.msra.mxu0 %v5975
    %5995 = vmatprep.subr.mxu0 0.0
    %5996 = vmatpush1.msra.mxu0 %v5977
    %5997 = vmatprep.subr.mxu0 0.0
    %5998 = vmatpush1.msra.mxu0 %v5979
    %5999 = vmatprep.subr.mxu0 0.0
    %6000 = vmatpush1.msra.mxu0 %v5989
    %6001 = vmatprep.subr.mxu0 0.0
    %6002 = vmatpush1.msra.mxu0 0.0
    %6003 = vmatprep.subr.mxu0 0.0
    %6004 = vmatpush1.msra.mxu0 0.0
    %6005 = vmatprep.subr.mxu0 0.0
    %6006 = vmatpush1.msra.mxu0 0.0
    %6007 = vmatprep.subr.mxu0 0.0
    %6008 = vmatpush1.msra.mxu0 0.0
    %6009 = vmatprep.subr.mxu0 0.0
    %6010 = vmatpush1.msra.mxu0 0.0
    %6011 = vmatprep.subr.mxu0 0.0
    %6012 = vmatpush1.msra.mxu0 0.0
    %6013 = vmatprep.subr.mxu0 0.0
    %6014 = vmatpush1.msra.mxu0 0.0
    %6015 = vmatprep.subr.mxu0 0.0
    %6016 = vmatpush1.msra.mxu0 0.0
    %6017 = vmatprep.subr.mxu0 0.0
    %6018 = vmatpush1.msra.mxu0 0.0
    %6019 = vmatprep.subr.mxu0 0.0
    %6020 = vmatpush1.msra.mxu0 0.0
    %6021 = vmatprep.subr.mxu0 0.0
    %6022 = vmatpush1.msra.mxu0 0.0
    %6023 = vmatprep.subr.mxu0 0.0
    %6024 = vmatpush1.msra.mxu0 0.0
    %6025 = vmatprep.subr.mxu0 0.0
    %6026 = vmatpush1.msra.mxu0 0.0
    %6027 = vmatprep.subr.mxu0 0.0
    %6028 = vmatpush1.msra.mxu0 0.0
    %6029 = vmatprep.subr.mxu0 0.0
    %6030 = vmatpush1.msra.mxu0 0.0
    %6031 = vmatprep.subr.mxu0 0.0
    %6032 = vmatpush1.msra.mxu0 0.0
    %6033 = vmatprep.subr.mxu0 0.0
    %6034 = vmatpush1.msra.mxu0 0.0
    %6035 = vmatprep.subr.mxu0 0.0
    %6036 = vmatpush1.msra.mxu0 0.0
    %6037 = vmatprep.subr.mxu0 0.0
    %6038 = vmatpush1.msra.mxu0 0.0
    %6039 = vmatprep.subr.mxu0 0.0
    %6040 = vmatpush1.msra.mxu0 0.0
    %6041 = vmatprep.subr.mxu0 0.0
    %6042 = vmatpush1.msra.mxu0 0.0
    %6043 = vmatprep.subr.mxu0 0.0
    %6044 = vmatpush1.msra.mxu0 0.0
    %6045 = vmatprep.subr.mxu0 0.0
    %6046 = vmatpush1.msra.mxu0 0.0
    %6047 = vmatprep.subr.mxu0 0.0
    %6048 = vmatpush1.msra.mxu0 0.0
    %6049 = vmatprep.subr.mxu0 0.0
    %6050 = vmatpush1.msra.mxu0 0.0
    %6051 = vmatprep.subr.mxu0 0.0
    %6052 = vmatpush1.msra.mxu0 0.0
    %6053 = vmatprep.subr.mxu0 0.0
    %6054 = vmatpush1.msra.mxu0 0.0
    %6055 = vmatprep.mubr.f32.mxu0 0.0
    %6056 = vmatmul.mubr.f32.gmra.mrb[0].mxu0 %v5987
    %v6057 = vpop.f32.mrb[0].mxu0
    %v6058 = vadd.f32 0.0, %v6057
    %v6059 = vpop.f32.mrb[0].mxu0
    %6060 = vdwg.mxu0
    %v6062 = vsel %vm39, %v6058, 0
    %6064 = vmatprep.subr.mxu0 0.0
    %6065 = vmatpush1.msra.mxu0 %v5331
    %6066 = vmatprep.subr.mxu0 0.0
    %6067 = vmatpush1.msra.mxu0 0.0
    %6068 = vmatprep.subr.mxu0 0.0
    %6069 = vmatpush1.msra.mxu0 0.0
    %6070 = vmatprep.subr.mxu0 0.0
    %6071 = vmatpush1.msra.mxu0 0.0
    %6072 = vmatprep.subr.mxu0 0.0
    %6073 = vmatpush1.msra.mxu0 0.0
    %6074 = vmatprep.subr.mxu0 0.0
    %6075 = vmatpush1.msra.mxu0 0.0
    %6076 = vmatprep.subr.mxu0 0.0
    %6077 = vmatpush1.msra.mxu0 0.0
    %6078 = vmatprep.subr.mxu0 0.0
    %6079 = vmatpush1.msra.mxu0 0.0
    %6080 = vmatprep.subr.mxu0 0.0
    %6081 = vmatpush1.msra.mxu0 0.0
    %6082 = vmatprep.subr.mxu0 0.0
    %6083 = vmatpush1.msra.mxu0 0.0
    %6084 = vmatprep.subr.mxu0 0.0
    %6085 = vmatpush1.msra.mxu0 0.0
    %6086 = vmatprep.subr.mxu0 0.0
    %6087 = vmatpush1.msra.mxu0 0.0
    %6088 = vmatprep.subr.mxu0 0.0
    %6089 = vmatpush1.msra.mxu0 0.0
    %6090 = vmatprep.subr.mxu0 0.0
    %6091 = vmatpush1.msra.mxu0 0.0
    %6092 = vmatprep.subr.mxu0 0.0
    %6093 = vmatpush1.msra.mxu0 0.0
    %6094 = vmatprep.subr.mxu0 0.0
    %6095 = vmatpush1.msra.mxu0 0.0
    %6096 = vmatprep.subr.mxu0 0.0
    %6097 = vmatpush1.msra.mxu0 0.0
    %6098 = vmatprep.subr.mxu0 0.0
    %6099 = vmatpush1.msra.mxu0 0.0
    %6100 = vmatprep.subr.mxu0 0.0
    %6101 = vmatpush1.msra.mxu0 0.0
    %6102 = vmatprep.subr.mxu0 0.0
    %6103 = vmatpush1.msra.mxu0 0.0
    %6104 = vmatprep.subr.mxu0 0.0
    %6105 = vmatpush1.msra.mxu0 0.0
    %6106 = vmatprep.subr.mxu0 0.0
    %6107 = vmatpush1.msra.mxu0 0.0
    %6108 = vmatprep.subr.mxu0 0.0
    %6109 = vmatpush1.msra.mxu0 0.0
    %6110 = vmatprep.subr.mxu0 0.0
    %6111 = vmatpush1.msra.mxu0 0.0
    %6112 = vmatprep.subr.mxu0 0.0
    %6113 = vmatpush1.msra.mxu0 0.0
    %6114 = vmatprep.subr.mxu0 0.0
    %6115 = vmatpush1.msra.mxu0 0.0
    %6116 = vmatprep.subr.mxu0 0.0
    %6117 = vmatpush1.msra.mxu0 0.0
    %6118 = vmatprep.subr.mxu0 0.0
    %6119 = vmatpush1.msra.mxu0 0.0
    %6120 = vmatprep.subr.mxu0 0.0
    %6121 = vmatpush1.msra.mxu0 0.0
    %6122 = vmatprep.subr.mxu0 0.0
    %6123 = vmatpush1.msra.mxu0 0.0
    %6124 = vmatprep.subr.mxu0 0.0
    %6125 = vmatpush1.msra.mxu0 0.0
    %6126 = vmatprep.subr.mxu0 0.0
    %6127 = vmatpush1.msra.mxu0 0.0
    %6128 = vmatprep.mubr.f32.mxu0 0.0
    %6129 = vmatmul.mubr.f32.gmra.mrb[0].mxu0 %v6062
    %v6130 = vpop.f32.mrb[0].mxu0
    %v6131 = vadd.f32 0.0, %v6130
    %v6132 = vpop.f32.mrb[0].mxu0
    %6133 = vdwg.mxu0
    %v6134 = vadd.f32 %v5862, %v6131
    %6135 = vrot.lane.b32.xlu0 %v5212, 104
    %v6136 = vpop.permute.xlu0 %6135
    %6137 = vrot.lane.b32.xlu0 %v5306, 104
    %v6138 = vpop.permute.xlu0 %6137
    %6139 = vrot.lane.b32.xlu0 %v5311, 104
    %v6140 = vpop.permute.xlu0 %6139
    %6141 = vrot.lane.b32.xlu0 %v5316, 104
    %v6142 = vpop.permute.xlu0 %6141
    %6143 = vrot.lane.b32.xlu0 %v5321, 104
    %v6144 = vpop.permute.xlu0 %6143
    %6145 = vrot.lane.b32.xlu0 %v5326, 104
    %v6146 = vpop.permute.xlu0 %6145
    %v6147 = vsel %vm39, %v6136, 0
    %v6149 = vsel %vm39, %v6138, 0
    %v6151 = vsel %vm39, %v6140, 0
    %v6153 = vsel %vm39, %v6142, 0
    %v6155 = vsel %vm39, %v6144, 0
    %v6157 = vsel %vm39, %v6146, 0
    %6159 = vmatprep.subr.mxu0 0.0
    %6160 = vmatpush1.xpose.msra.mxu0 %v6149
    %6161 = vmatprep.subr.mxu0 0.0
    %6162 = vmatpush1.xpose.msra.mxu0 %v6151
    %6163 = vmatprep.subr.mxu0 0.0
    %6164 = vmatpush1.xpose.msra.mxu0 %v6153
    %6165 = vmatprep.subr.mxu0 0.0
    %6166 = vmatpush1.xpose.msra.mxu0 %v6155
    %6167 = vmatprep.subr.mxu0 0.0
    %6168 = vmatpush1.xpose.msra.mxu0 %v6157
    %6169 = vmatprep.subr.mxu0 0.0
    %6170 = vmatpush1.xpose.msra.mxu0 0.0
    %6171 = vmatprep.subr.mxu0 0.0
    %6172 = vmatpush1.xpose.msra.mxu0 0.0
    %6173 = vmatprep.subr.mxu0 0.0
    %6174 = vmatpush1.xpose.msra.mxu0 0.0
    %6175 = vmatprep.subr.mxu0 0.0
    %6176 = vmatpush1.xpose.msra.mxu0 0.0
    %6177 = vmatprep.subr.mxu0 0.0
    %6178 = vmatpush1.xpose.msra.mxu0 0.0
    %6179 = vmatprep.subr.mxu0 0.0
    %6180 = vmatpush1.xpose.msra.mxu0 0.0
    %6181 = vmatprep.subr.mxu0 0.0
    %6182 = vmatpush1.xpose.msra.mxu0 0.0
    %6183 = vmatprep.subr.mxu0 0.0
    %6184 = vmatpush1.xpose.msra.mxu0 0.0
    %6185 = vmatprep.subr.mxu0 0.0
    %6186 = vmatpush1.xpose.msra.mxu0 0.0
    %6187 = vmatprep.subr.mxu0 0.0
    %6188 = vmatpush1.xpose.msra.mxu0 0.0
    %6189 = vmatprep.subr.mxu0 0.0
    %6190 = vmatpush1.xpose.msra.mxu0 0.0
    %6191 = vmatprep.subr.mxu0 0.0
    %6192 = vmatpush1.xpose.msra.mxu0 0.0
    %6193 = vmatprep.subr.mxu0 0.0
    %6194 = vmatpush1.xpose.msra.mxu0 0.0
    %6195 = vmatprep.subr.mxu0 0.0
    %6196 = vmatpush1.xpose.msra.mxu0 0.0
    %6197 = vmatprep.subr.mxu0 0.0
    %6198 = vmatpush1.xpose.msra.mxu0 0.0
    %6199 = vmatprep.subr.mxu0 0.0
    %6200 = vmatpush1.xpose.msra.mxu0 0.0
    %6201 = vmatprep.subr.mxu0 0.0
    %6202 = vmatpush1.xpose.msra.mxu0 0.0
    %6203 = vmatprep.subr.mxu0 0.0
    %6204 = vmatpush1.xpose.msra.mxu0 0.0
    %6205 = vmatprep.subr.mxu0 0.0
    %6206 = vmatpush1.xpose.msra.mxu0 0.0
    %6207 = vmatprep.subr.mxu0 0.0
    %6208 = vmatpush1.xpose.msra.mxu0 0.0
    %6209 = vmatprep.subr.mxu0 0.0
    %6210 = vmatpush1.xpose.msra.mxu0 0.0
    %6211 = vmatprep.subr.mxu0 0.0
    %6212 = vmatpush1.xpose.msra.mxu0 0.0
    %6213 = vmatprep.subr.mxu0 0.0
    %6214 = vmatpush1.xpose.msra.mxu0 0.0
    %6215 = vmatprep.subr.mxu0 0.0
    %6216 = vmatpush1.xpose.msra.mxu0 0.0
    %6217 = vmatprep.subr.mxu0 0.0
    %6218 = vmatpush1.xpose.msra.mxu0 0.0
    %6219 = vmatprep.subr.mxu0 0.0
    %6220 = vmatpush1.xpose.msra.mxu0 0.0
    %6221 = vmatprep.subr.mxu0 0.0
    %6222 = vmatpush1.xpose.msra.mxu0 0.0
    %6223 = vmatprep.mubr.f32.mxu0 0.0
    %6224 = vmatmul.mubr.f32.gmra.mrb[0].mxu0 %v6147
    %v6225 = vpop.f32.mrb[0].mxu0
    %v6226 = vadd.f32 0.0, %v6225
    %v6227 = vpop.f32.mrb[0].mxu0
    %6228 = vdwg.mxu0
    %v6229 = vmul.f32 %v6226, 0.35355338
    %v6230 = vadd.f32 %v6229, %v32
    %v6231 = vsel %vm594, %v6230, -inf
    %6232 = vmax.xlane.f32.xlu0 %v6231
    %v6233 = vpop.xlane.xlu0 %6232
    %v6234 = vsub.f32 %v6230, %v6233
    %v6235 = vmul.f32 %v6234, 1.442695
    %v6236 = vpow.pop %v6235
    %v6237 = vsel %vm594, %v6236, 0.0
    %6238 = vadd.xlane.f32.xlu0 %v6237
    %v6239 = vpop.xlane.xlu0 %6238
    %v6240 = vrcp.pop %v6239
    %v6241 = vmul.f32 %v6236, %v6240
    %6242 = vrot.lane.b32.xlu0 %v5306, 72
    %v6243 = vpop.permute.xlu0 %6242
    %6244 = vrot.lane.b32.xlu0 %v5311, 72
    %v6245 = vpop.permute.xlu0 %6244
    %6246 = vrot.lane.b32.xlu0 %v5316, 72
    %v6247 = vpop.permute.xlu0 %6246
    %6248 = vrot.lane.b32.xlu0 %v5321, 72
    %v6249 = vpop.permute.xlu0 %6248
    %6250 = vrot.lane.b32.xlu0 %v5326, 72
    %v6251 = vpop.permute.xlu0 %6250
    %v6257 = vsel %vm581, %v6241, 0
    %v6259 = vsel %vm667, %v6251, 0
    %6261 = vmatprep.subr.mxu0 0.0
    %6262 = vmatpush1.msra.mxu0 %v6243
    %6263 = vmatprep.subr.mxu0 0.0
    %6264 = vmatpush1.msra.mxu0 %v6245
    %6265 = vmatprep.subr.mxu0 0.0
    %6266 = vmatpush1.msra.mxu0 %v6247
    %6267 = vmatprep.subr.mxu0 0.0
    %6268 = vmatpush1.msra.mxu0 %v6249
    %6269 = vmatprep.subr.mxu0 0.0
    %6270 = vmatpush1.msra.mxu0 %v6259
    %6271 = vmatprep.subr.mxu0 0.0
    %6272 = vmatpush1.msra.mxu0 0.0
    %6273 = vmatprep.subr.mxu0 0.0
    %6274 = vmatpush1.msra.mxu0 0.0
    %6275 = vmatprep.subr.mxu0 0.0
    %6276 = vmatpush1.msra.mxu0 0.0
    %6277 = vmatprep.subr.mxu0 0.0
    %6278 = vmatpush1.msra.mxu0 0.0
    %6279 = vmatprep.subr.mxu0 0.0
    %6280 = vmatpush1.msra.mxu0 0.0
    %6281 = vmatprep.subr.mxu0 0.0
    %6282 = vmatpush1.msra.mxu0 0.0
    %6283 = vmatprep.subr.mxu0 0.0
    %6284 = vmatpush1.msra.mxu0 0.0
    %6285 = vmatprep.subr.mxu0 0.0
    %6286 = vmatpush1.msra.mxu0 0.0
    %6287 = vmatprep.subr.mxu0 0.0
    %6288 = vmatpush1.msra.mxu0 0.0
    %6289 = vmatprep.subr.mxu0 0.0
    %6290 = vmatpush1.msra.mxu0 0.0
    %6291 = vmatprep.subr.mxu0 0.0
    %6292 = vmatpush1.msra.mxu0 0.0
    %6293 = vmatprep.subr.mxu0 0.0
    %6294 = vmatpush1.msra.mxu0 0.0
    %6295 = vmatprep.subr.mxu0 0.0
    %6296 = vmatpush1.msra.mxu0 0.0
    %6297 = vmatprep.subr.mxu0 0.0
    %6298 = vmatpush1.msra.mxu0 0.0
    %6299 = vmatprep.subr.mxu0 0.0
    %6300 = vmatpush1.msra.mxu0 0.0
    %6301 = vmatprep.subr.mxu0 0.0
    %6302 = vmatpush1.msra.mxu0 0.0
    %6303 = vmatprep.subr.mxu0 0.0
    %6304 = vmatpush1.msra.mxu0 0.0
    %6305 = vmatprep.subr.mxu0 0.0
    %6306 = vmatpush1.msra.mxu0 0.0
    %6307 = vmatprep.subr.mxu0 0.0
    %6308 = vmatpush1.msra.mxu0 0.0
    %6309 = vmatprep.subr.mxu0 0.0
    %6310 = vmatpush1.msra.mxu0 0.0
    %6311 = vmatprep.subr.mxu0 0.0
    %6312 = vmatpush1.msra.mxu0 0.0
    %6313 = vmatprep.subr.mxu0 0.0
    %6314 = vmatpush1.msra.mxu0 0.0
    %6315 = vmatprep.subr.mxu0 0.0
    %6316 = vmatpush1.msra.mxu0 0.0
    %6317 = vmatprep.subr.mxu0 0.0
    %6318 = vmatpush1.msra.mxu0 0.0
    %6319 = vmatprep.subr.mxu0 0.0
    %6320 = vmatpush1.msra.mxu0 0.0
    %6321 = vmatprep.subr.mxu0 0.0
    %6322 = vmatpush1.msra.mxu0 0.0
    %6323 = vmatprep.subr.mxu0 0.0
    %6324 = vmatpush1.msra.mxu0 0.0
    %6325 = vmatprep.mubr.f32.mxu0 0.0
    %6326 = vmatmul.mubr.f32.gmra.mrb[0].mxu0 %v6257
    %v6327 = vpop.f32.mrb[0].mxu0
    %v6328 = vadd.f32 0.0, %v6327
    %v6329 = vpop.f32.mrb[0].mxu0
    %6330 = vdwg.mxu0
    %v6332 = vsel %vm39, %v6328, 0
    %6334 = vmatprep.subr.mxu0 0.0
    %6335 = vmatpush1.msra.mxu0 %v5332
    %6336 = vmatprep.subr.mxu0 0.0
    %6337 = vmatpush1.msra.mxu0 0.0
    %6338 = vmatprep.subr.mxu0 0.0
    %6339 = vmatpush1.msra.mxu0 0.0
    %6340 = vmatprep.subr.mxu0 0.0
    %6341 = vmatpush1.msra.mxu0 0.0
    %6342 = vmatprep.subr.mxu0 0.0
    %6343 = vmatpush1.msra.mxu0 0.0
    %6344 = vmatprep.subr.mxu0 0.0
    %6345 = vmatpush1.msra.mxu0 0.0
    %6346 = vmatprep.subr.mxu0 0.0
    %6347 = vmatpush1.msra.mxu0 0.0
    %6348 = vmatprep.subr.mxu0 0.0
    %6349 = vmatpush1.msra.mxu0 0.0
    %6350 = vmatprep.subr.mxu0 0.0
    %6351 = vmatpush1.msra.mxu0 0.0
    %6352 = vmatprep.subr.mxu0 0.0
    %6353 = vmatpush1.msra.mxu0 0.0
    %6354 = vmatprep.subr.mxu0 0.0
    %6355 = vmatpush1.msra.mxu0 0.0
    %6356 = vmatprep.subr.mxu0 0.0
    %6357 = vmatpush1.msra.mxu0 0.0
    %6358 = vmatprep.subr.mxu0 0.0
    %6359 = vmatpush1.msra.mxu0 0.0
    %6360 = vmatprep.subr.mxu0 0.0
    %6361 = vmatpush1.msra.mxu0 0.0
    %6362 = vmatprep.subr.mxu0 0.0
    %6363 = vmatpush1.msra.mxu0 0.0
    %6364 = vmatprep.subr.mxu0 0.0
    %6365 = vmatpush1.msra.mxu0 0.0
    %6366 = vmatprep.subr.mxu0 0.0
    %6367 = vmatpush1.msra.mxu0 0.0
    %6368 = vmatprep.subr.mxu0 0.0
    %6369 = vmatpush1.msra.mxu0 0.0
    %6370 = vmatprep.subr.mxu0 0.0
    %6371 = vmatpush1.msra.mxu0 0.0
    %6372 = vmatprep.subr.mxu0 0.0
    %6373 = vmatpush1.msra.mxu0 0.0
    %6374 = vmatprep.subr.mxu0 0.0
    %6375 = vmatpush1.msra.mxu0 0.0
    %6376 = vmatprep.subr.mxu0 0.0
    %6377 = vmatpush1.msra.mxu0 0.0
    %6378 = vmatprep.subr.mxu0 0.0
    %6379 = vmatpush1.msra.mxu0 0.0
    %6380 = vmatprep.subr.mxu0 0.0
    %6381 = vmatpush1.msra.mxu0 0.0
    %6382 = vmatprep.subr.mxu0 0.0
    %6383 = vmatpush1.msra.mxu0 0.0
    %6384 = vmatprep.subr.mxu0 0.0
    %6385 = vmatpush1.msra.mxu0 0.0
    %6386 = vmatprep.subr.mxu0 0.0
    %6387 = vmatpush1.msra.mxu0 0.0
    %6388 = vmatprep.subr.mxu0 0.0
    %6389 = vmatpush1.msra.mxu0 0.0
    %6390 = vmatprep.subr.mxu0 0.0
    %6391 = vmatpush1.msra.mxu0 0.0
    %6392 = vmatprep.subr.mxu0 0.0
    %6393 = vmatpush1.msra.mxu0 0.0
    %6394 = vmatprep.subr.mxu0 0.0
    %6395 = vmatpush1.msra.mxu0 0.0
    %6396 = vmatprep.subr.mxu0 0.0
    %6397 = vmatpush1.msra.mxu0 0.0
    %6398 = vmatprep.mubr.f32.mxu0 0.0
    %6399 = vmatmul.mubr.f32.gmra.mrb[0].mxu0 %v6332
    %v6400 = vpop.f32.mrb[0].mxu0
    %v6401 = vadd.f32 0.0, %v6400
    %v6402 = vpop.f32.mrb[0].mxu0
    %6403 = vdwg.mxu0
    %v6404 = vadd.f32 %v6134, %v6401
    %v6405 = vld [vmem:[%s4 + $0x2b8] sm:$0x1]
    %v6406 = vlaneseq
    %v6407 = vshrl.u32 %v6406, 7
    %v6408 = vsub.s32 0, %v6407
    %v6409 = vrot.slane %v6405, %v6408
    %v6410 = vadd.f32 %v6404, %v6409
    %v6411 = vld [vmem:[%s4 + $0x2c0] sm:$0xff]
    %v6412 = vld [vmem:[%s4 + $0x2c8] sm:$0xff]
    %v6413 = vld [vmem:[%s4 + $0x2d0] sm:$0xff]
    %v6414 = vld [vmem:[%s4 + $0x2d8] sm:$0xff]
    %v6415 = vld [vmem:[%s4 + $0x2e0] sm:$0x1]
    %v6416 = vlaneseq
    %v6417 = vshrl.u32 %v6416, 7
    %v6418 = vsub.s32 0, %v6417
    %v6419 = vrot.slane %v6415, %v6418
    %v6421 = vsel %vm230, %v6410, 0
    %6423 = vmatprep.subr.mxu0 0.0
    %6424 = vmatpush1.msra.mxu0 %v6411
    %6425 = vmatprep.subr.mxu0 0.0
    %6426 = vmatpush1.msra.mxu0 %v6412
    %6427 = vmatprep.subr.mxu0 0.0
    %6428 = vmatpush1.msra.mxu0 %v6413
    %6429 = vmatprep.subr.mxu0 0.0
    %6430 = vmatpush1.msra.mxu0 %v6414
    %6431 = vmatprep.subr.mxu0 0.0
    %6432 = vmatpush1.msra.mxu0 0.0
    %6433 = vmatprep.subr.mxu0 0.0
    %6434 = vmatpush1.msra.mxu0 0.0
    %6435 = vmatprep.subr.mxu0 0.0
    %6436 = vmatpush1.msra.mxu0 0.0
    %6437 = vmatprep.subr.mxu0 0.0
    %6438 = vmatpush1.msra.mxu0 0.0
    %6439 = vmatprep.subr.mxu0 0.0
    %6440 = vmatpush1.msra.mxu0 0.0
    %6441 = vmatprep.subr.mxu0 0.0
    %6442 = vmatpush1.msra.mxu0 0.0
    %6443 = vmatprep.subr.mxu0 0.0
    %6444 = vmatpush1.msra.mxu0 0.0
    %6445 = vmatprep.subr.mxu0 0.0
    %6446 = vmatpush1.msra.mxu0 0.0
    %6447 = vmatprep.subr.mxu0 0.0
    %6448 = vmatpush1.msra.mxu0 0.0
    %6449 = vmatprep.subr.mxu0 0.0
    %6450 = vmatpush1.msra.mxu0 0.0
    %6451 = vmatprep.subr.mxu0 0.0
    %6452 = vmatpush1.msra.mxu0 0.0
    %6453 = vmatprep.subr.mxu0 0.0
    %6454 = vmatpush1.msra.mxu0 0.0
    %6455 = vmatprep.subr.mxu0 0.0
    %6456 = vmatpush1.msra.mxu0 0.0
    %6457 = vmatprep.subr.mxu0 0.0
    %6458 = vmatpush1.msra.mxu0 0.0
    %6459 = vmatprep.subr.mxu0 0.0
    %6460 = vmatpush1.msra.mxu0 0.0
    %6461 = vmatprep.subr.mxu0 0.0
    %6462 = vmatpush1.msra.mxu0 0.0
    %6463 = vmatprep.subr.mxu0 0.0
    %6464 = vmatpush1.msra.mxu0 0.0
    %6465 = vmatprep.subr.mxu0 0.0
    %6466 = vmatpush1.msra.mxu0 0.0
    %6467 = vmatprep.subr.mxu0 0.0
    %6468 = vmatpush1.msra.mxu0 0.0
    %6469 = vmatprep.subr.mxu0 0.0
    %6470 = vmatpush1.msra.mxu0 0.0
    %6471 = vmatprep.subr.mxu0 0.0
    %6472 = vmatpush1.msra.mxu0 0.0
    %6473 = vmatprep.subr.mxu0 0.0
    %6474 = vmatpush1.msra.mxu0 0.0
    %6475 = vmatprep.subr.mxu0 0.0
    %6476 = vmatpush1.msra.mxu0 0.0
    %6477 = vmatprep.subr.mxu0 0.0
    %6478 = vmatpush1.msra.mxu0 0.0
    %6479 = vmatprep.subr.mxu0 0.0
    %6480 = vmatpush1.msra.mxu0 0.0
    %6481 = vmatprep.subr.mxu0 0.0
    %6482 = vmatpush1.msra.mxu0 0.0
    %6483 = vmatprep.subr.mxu0 0.0
    %6484 = vmatpush1.msra.mxu0 0.0
    %6485 = vmatprep.subr.mxu0 0.0
    %6486 = vmatpush1.msra.mxu0 0.0
    %6487 = vmatprep.mubr.f32.mxu0 0.0
    %6488 = vmatmul.mubr.f32.gmra.mrb[0].mxu0 %v6421
    %v6489 = vpop.f32.mrb[0].mxu0
    %v6490 = vadd.f32 %v6419, %v6489
    %v6491 = vpop.f32.mrb[0].mxu0
    %6492 = vdwg.mxu0
    %v6493 = vsel %vm243, %v6490, 0.0
    %6494 = vadd.xlane.f32.xlu0 %v6493
    %v6495 = vpop.xlane.xlu0 %6494
    %v6496 = vmul.f32 %v6495, %v247
    %v6497 = vmul.f32 %v6490, %v6490
    %v6498 = vsel %vm243, %v6497, 0.0
    %6499 = vadd.xlane.f32.xlu0 %v6498
    %v6500 = vpop.xlane.xlu0 %6499
    %v6501 = vmul.f32 %v6500, %v247
    %v6502 = vsub.f32 %v6490, %v6496
    %v6503 = vmul.f32 %v6496, %v6496
    %v6504 = vsub.f32 %v6501, %v6503
    %v6505 = vadd.f32 %v6504, 1e-06
    %v6506 = vrsqrt.pop %v6505
    %v6507 = vmul.f32 %v6502, %v6506
    %v6508 = vld [vmem:[%s4 + $0x2e8] sm:$0x1]
    %v6509 = vlaneseq
    %v6510 = vshrl.u32 %v6509, 7
    %v6511 = vsub.s32 0, %v6510
    %v6512 = vrot.slane %v6508, %v6511
    %v6513 = vmul.f32 %v6507, %v6512
    %v6514 = vld [vmem:[%s4 + $0x2f0] sm:$0x1]
    %v6515 = vlaneseq
    %v6516 = vshrl.u32 %v6515, 7
    %v6517 = vsub.s32 0, %v6516
    %v6518 = vrot.slane %v6514, %v6517
    %v6519 = vadd.f32 %v6513, %v6518
    %v6520 = vld [vmem:[%s4 + $0x2f8] sm:$0xff]
    %v6521 = vld [vmem:[%s4 + $0x300] sm:$0xff]
    %v6522 = vld [vmem:[%s4 + $0x308] sm:$0xff]
    %v6523 = vld [vmem:[%s4 + $0x310] sm:$0xff]
    %v6524 = vld [vmem:[%s4 + $0x318] sm:$0x1]
    %v6525 = vlaneseq
    %v6526 = vshrl.u32 %v6525, 7
    %v6527 = vsub.s32 0, %v6526
    %v6528 = vrot.slane %v6524, %v6527
    %v6530 = vsel %vm230, %v6519, 0
    %6532 = vmatprep.subr.mxu0 0.0
    %6533 = vmatpush1.msra.mxu0 %v6520
    %6534 = vmatprep.subr.mxu0 0.0
    %6535 = vmatpush1.msra.mxu0 %v6521
    %6536 = vmatprep.subr.mxu0 0.0
    %6537 = vmatpush1.msra.mxu0 %v6522
    %6538 = vmatprep.subr.mxu0 0.0
    %6539 = vmatpush1.msra.mxu0 %v6523
    %6540 = vmatprep.subr.mxu0 0.0
    %6541 = vmatpush1.msra.mxu0 0.0
    %6542 = vmatprep.subr.mxu0 0.0
    %6543 = vmatpush1.msra.mxu0 0.0
    %6544 = vmatprep.subr.mxu0 0.0
    %6545 = vmatpush1.msra.mxu0 0.0
    %6546 = vmatprep.subr.mxu0 0.0
    %6547 = vmatpush1.msra.mxu0 0.0
    %6548 = vmatprep.subr.mxu0 0.0
    %6549 = vmatpush1.msra.mxu0 0.0
    %6550 = vmatprep.subr.mxu0 0.0
    %6551 = vmatpush1.msra.mxu0 0.0
    %6552 = vmatprep.subr.mxu0 0.0
    %6553 = vmatpush1.msra.mxu0 0.0
    %6554 = vmatprep.subr.mxu0 0.0
    %6555 = vmatpush1.msra.mxu0 0.0
    %6556 = vmatprep.subr.mxu0 0.0
    %6557 = vmatpush1.msra.mxu0 0.0
    %6558 = vmatprep.subr.mxu0 0.0
    %6559 = vmatpush1.msra.mxu0 0.0
    %6560 = vmatprep.subr.mxu0 0.0
    %6561 = vmatpush1.msra.mxu0 0.0
    %6562 = vmatprep.subr.mxu0 0.0
    %6563 = vmatpush1.msra.mxu0 0.0
    %6564 = vmatprep.subr.mxu0 0.0
    %6565 = vmatpush1.msra.mxu0 0.0
    %6566 = vmatprep.subr.mxu0 0.0
    %6567 = vmatpush1.msra.mxu0 0.0
    %6568 = vmatprep.subr.mxu0 0.0
    %6569 = vmatpush1.msra.mxu0 0.0
    %6570 = vmatprep.subr.mxu0 0.0
    %6571 = vmatpush1.msra.mxu0 0.0
    %6572 = vmatprep.subr.mxu0 0.0
    %6573 = vmatpush1.msra.mxu0 0.0
    %6574 = vmatprep.subr.mxu0 0.0
    %6575 = vmatpush1.msra.mxu0 0.0
    %6576 = vmatprep.subr.mxu0 0.0
    %6577 = vmatpush1.msra.mxu0 0.0
    %6578 = vmatprep.subr.mxu0 0.0
    %6579 = vmatpush1.msra.mxu0 0.0
    %6580 = vmatprep.subr.mxu0 0.0
    %6581 = vmatpush1.msra.mxu0 0.0
    %6582 = vmatprep.subr.mxu0 0.0
    %6583 = vmatpush1.msra.mxu0 0.0
    %6584 = vmatprep.subr.mxu0 0.0
    %6585 = vmatpush1.msra.mxu0 0.0
    %6586 = vmatprep.subr.mxu0 0.0
    %6587 = vmatpush1.msra.mxu0 0.0
    %6588 = vmatprep.subr.mxu0 0.0
    %6589 = vmatpush1.msra.mxu0 0.0
    %6590 = vmatprep.subr.mxu0 0.0
    %6591 = vmatpush1.msra.mxu0 0.0
    %6592 = vmatprep.subr.mxu0 0.0
    %6593 = vmatpush1.msra.mxu0 0.0
    %6594 = vmatprep.subr.mxu0 0.0
    %6595 = vmatpush1.msra.mxu0 0.0
    %6596 = vmatprep.mubr.f32.mxu0 0.0
    %6597 = vmatmul.mubr.f32.gmra.mrb[0].mxu0 %v6530
    %v6598 = vpop.f32.mrb[0].mxu0
    %v6599 = vadd.f32 %v6528, %v6598
    %v6600 = vpop.f32.mrb[0].mxu0
    %6601 = vdwg.mxu0
    %v6602 = vmul.f32 %v6599, 0.5
    %v6603 = vmul.f32 %v6599, 0.70710677
    %vm6604 = vcmp.lt.f32.partialorder %v6603, 0.0
    %v6605 = vsel %vm6604, -1.0, 1.0
    %v6606 = vand.u32 2147483647, %v6603
    %v6607 = vmul.f32 %v6606, 0.3275911
    %v6608 = vadd.f32 %v6607, 1.0
    %v6609 = vrcp.pop %v6608
    %v6610 = vmul.f32 1.0, %v6609
    %v6611 = vmul.f32 %v6610, 1.0614054
    %v6612 = vadd.f32 %v6611, -1.4531521
    %v6613 = vmul.f32 %v6612, %v6610
    %v6614 = vadd.f32 %v6613, 1.4214138
    %v6615 = vmul.f32 %v6614, %v6610
    %v6616 = vadd.f32 %v6615, -0.28449672
    %v6617 = vmul.f32 %v6616, %v6610
    %v6618 = vadd.f32 %v6617, 0.2548296
    %v6619 = vmul.f32 %v6618, %v6610
    %v6620 = vsub.f32 0.0, %v6606
    %v6621 = vmul.f32 %v6620, %v6606
    %v6622 = vmul.f32 %v6621, 1.442695
    %v6623 = vpow.pop %v6622
    %v6624 = vmul.f32 %v6619, %v6623
    %v6625 = vsub.f32 1.0, %v6624
    %v6626 = vmul.f32 %v6605, %v6625
    %v6627 = vadd.f32 %v6626, 1.0
    %v6628 = vmul.f32 %v6602, %v6627
    %v6629 = vld [vmem:[%s4 + $0x320] sm:$0xff]
    %v6630 = vld [vmem:[%s4 + $0x328] sm:$0xff]
    %v6631 = vld [vmem:[%s4 + $0x330] sm:$0x1]
    %v6632 = vlaneseq
    %v6633 = vshrl.u32 %v6632, 7
    %v6634 = vsub.s32 0, %v6633
    %v6635 = vrot.slane %v6631, %v6634
    %vm6636 = vcmask 130048
    %v6638 = vsel %vm6636, %v6628, 0
    %6640 = vmatprep.subr.mxu0 0.0
    %6641 = vmatpush1.msra.mxu0 %v6629
    %6642 = vmatprep.subr.mxu0 0.0
    %6643 = vmatpush1.msra.mxu0 %v6630
    %6644 = vmatprep.subr.mxu0 0.0
    %6645 = vmatpush1.msra.mxu0 0.0
    %6646 = vmatprep.subr.mxu0 0.0
    %6647 = vmatpush1.msra.mxu0 0.0
    %6648 = vmatprep.subr.mxu0 0.0
    %6649 = vmatpush1.msra.mxu0 0.0
    %6650 = vmatprep.subr.mxu0 0.0
    %6651 = vmatpush1.msra.mxu0 0.0
    %6652 = vmatprep.subr.mxu0 0.0
    %6653 = vmatpush1.msra.mxu0 0.0
    %6654 = vmatprep.subr.mxu0 0.0
    %6655 = vmatpush1.msra.mxu0 0.0
    %6656 = vmatprep.subr.mxu0 0.0
    %6657 = vmatpush1.msra.mxu0 0.0
    %6658 = vmatprep.subr.mxu0 0.0
    %6659 = vmatpush1.msra.mxu0 0.0
    %6660 = vmatprep.subr.mxu0 0.0
    %6661 = vmatpush1.msra.mxu0 0.0
    %6662 = vmatprep.subr.mxu0 0.0
    %6663 = vmatpush1.msra.mxu0 0.0
    %6664 = vmatprep.subr.mxu0 0.0
    %6665 = vmatpush1.msra.mxu0 0.0
    %6666 = vmatprep.subr.mxu0 0.0
    %6667 = vmatpush1.msra.mxu0 0.0
    %6668 = vmatprep.subr.mxu0 0.0
    %6669 = vmatpush1.msra.mxu0 0.0
    %6670 = vmatprep.subr.mxu0 0.0
    %6671 = vmatpush1.msra.mxu0 0.0
    %6672 = vmatprep.subr.mxu0 0.0
    %6673 = vmatpush1.msra.mxu0 0.0
    %6674 = vmatprep.subr.mxu0 0.0
    %6675 = vmatpush1.msra.mxu0 0.0
    %6676 = vmatprep.subr.mxu0 0.0
    %6677 = vmatpush1.msra.mxu0 0.0
    %6678 = vmatprep.subr.mxu0 0.0
    %6679 = vmatpush1.msra.mxu0 0.0
    %6680 = vmatprep.subr.mxu0 0.0
    %6681 = vmatpush1.msra.mxu0 0.0
    %6682 = vmatprep.subr.mxu0 0.0
    %6683 = vmatpush1.msra.mxu0 0.0
    %6684 = vmatprep.subr.mxu0 0.0
    %6685 = vmatpush1.msra.mxu0 0.0
    %6686 = vmatprep.subr.mxu0 0.0
    %6687 = vmatpush1.msra.mxu0 0.0
    %6688 = vmatprep.subr.mxu0 0.0
    %6689 = vmatpush1.msra.mxu0 0.0
    %6690 = vmatprep.subr.mxu0 0.0
    %6691 = vmatpush1.msra.mxu0 0.0
    %6692 = vmatprep.subr.mxu0 0.0
    %6693 = vmatpush1.msra.mxu0 0.0
    %6694 = vmatprep.subr.mxu0 0.0
    %6695 = vmatpush1.msra.mxu0 0.0
    %6696 = vmatprep.subr.mxu0 0.0
    %6697 = vmatpush1.msra.mxu0 0.0
    %6698 = vmatprep.subr.mxu0 0.0
    %6699 = vmatpush1.msra.mxu0 0.0
    %6700 = vmatprep.subr.mxu0 0.0
    %6701 = vmatpush1.msra.mxu0 0.0
    %6702 = vmatprep.subr.mxu0 0.0
    %6703 = vmatpush1.msra.mxu0 0.0
    %6704 = vmatprep.mubr.f32.mxu0 0.0
    %6705 = vmatmul.mubr.f32.gmra.mrb[0].mxu0 %v6638
    %v6706 = vpop.f32.mrb[0].mxu0
    %v6707 = vadd.f32 %v6635, %v6706
    %v6708 = vpop.f32.mrb[0].mxu0
    %6709 = vdwg.mxu0
    %v6710 = vadd.f32 %v6707, %v6490
    %v6711 = vsel %vm243, %v6710, 0.0
    %6712 = vadd.xlane.f32.xlu0 %v6711
    %v6713 = vpop.xlane.xlu0 %6712
    %v6714 = vmul.f32 %v6713, %v247
    %v6715 = vmul.f32 %v6710, %v6710
    %v6716 = vsel %vm243, %v6715, 0.0
    %6717 = vadd.xlane.f32.xlu0 %v6716
    %v6718 = vpop.xlane.xlu0 %6717
    %v6719 = vmul.f32 %v6718, %v247
    %v6720 = vsub.f32 %v6710, %v6714
    %v6721 = vmul.f32 %v6714, %v6714
    %v6722 = vsub.f32 %v6719, %v6721
    %v6723 = vadd.f32 %v6722, 1e-06
    %v6724 = vrsqrt.pop %v6723
    %v6725 = vmul.f32 %v6720, %v6724
    %v6726 = vld [vmem:[%s4 + $0x338] sm:$0x1]
    %v6727 = vlaneseq
    %v6728 = vshrl.u32 %v6727, 7
    %v6729 = vsub.s32 0, %v6728
    %v6730 = vrot.slane %v6726, %v6729
    %v6731 = vmul.f32 %v6725, %v6730
    %v6732 = vld [vmem:[%s4 + $0x340] sm:$0x1]
    %v6733 = vlaneseq
    %v6734 = vshrl.u32 %v6733, 7
    %v6735 = vsub.s32 0, %v6734
    %v6736 = vrot.slane %v6732, %v6735
    %v6737 = vadd.f32 %v6731, %v6736
    %6738 = vst.msk [vmem:[#allocation2] sm:$0x3] %vm243, %v6737
    // Predicated region
    $region22: #{fwd.1} parent=1 // pred_check
      _
    $region23: #{fwd.1} parent=1 // pred_check_branch
      %6740 = sbr.rel (0) target = $region25
    $region24: #{fwd.1} parent=1 // pred_region
      %s6742 = ssub.s32 32, 32
      %6743 = vsyncadd [#allocation3], %s6742
      %s6745 = sshll.u32 [#allocation2], 4
      %s6746 = int_to_ptr.vmem [resolvable:$true] %s6745
      %6748 = dma.vmem_to_hbm [thread:$0]  %s6746, 32, %s5, [#allocation3]
    $region25: #{fwd.1} parent=1 // pred_fallthru
      _
    // Predicated region
    $region26: #{fwd.1} parent=1 // pred_check
      _
    $region27: #{fwd.1} parent=1 // pred_check_branch
      %6750 = sbr.rel (0) target = $region29
    $region28: #{fwd.1} parent=1 // pred_region
      %6751 = dma.done [#allocation3], 32
    $region29: #{fwd.1} parent=1 // pred_fallthru
      _
    %6752 = vsyncpa [#allocation3], 1

</llo_original>
